<compile_context>
chip_gen: v7x
topology: tpu7x:2x2x1
jax: 0.10.0
libtpu: 0.0.40
codegen_flags: <defaults>
</compile_context>

<pallas_src>
import jax
import jax.numpy as jnp
from jax import lax
from jax.experimental import pallas as pl
from jax.experimental.pallas import tpu as pltpu


def _round_up(x, m):
    return ((x + m - 1) // m) * m


def _largest_divisor_leq(n, cap, mult=8):
    """Largest d <= cap with d % mult == 0 and n % d == 0 (n is a multiple of mult)."""
    best = mult
    d = mult
    lim = min(n, cap)
    while d <= lim:
        if n % d == 0:
            best = d
        d += mult
    return best


# ----------------------------- Pallas kernels ------------------------------ #

def char_cnn_kernel(x_ref, w_ref, b_ref, out_ref):
    """Conv1d(padding=K-1) -> max over output positions -> tanh.

    x_ref:   [Lc, TN, C]  bf16  char embeddings, position-major (TN % 8 == 0)
    w_ref:   [C, K*Fp]    bf16  w[c, k*Fp + f] = conv_w[f, c, k]  (F padded to Fp)
    b_ref:   [1, Fp]      f32
    out_ref: [TN, Fp]     bf16  (lane-dense: Fp is a multiple of 128)
    """
    Lc, TN, C = x_ref.shape
    Fp = out_ref.shape[1]
    K = w_ref.shape[1] // Fp
    # One MXU matmul computes every (input position, tap) contribution at once;
    # the im2col never touches HBM and no reshape crosses the lane axis.
    a = jnp.dot(x_ref[...].reshape(Lc * TN, C), w_ref[...],
                preferred_element_type=jnp.float32)             # [Lc*TN, K*Fp]
    best = None
    for l in range(Lc + K - 1):                                  # conv output positions
        acc = None
        for k in range(K):
            m = l - (K - 1) + k                                  # original char position
            if 0 <= m < Lc:                                      # zero padding contributes 0
                term = a[m * TN:(m + 1) * TN, k * Fp:(k + 1) * Fp]
                acc = term if acc is None else acc + term
        best = acc if best is None else jnp.maximum(best, acc)
    # bias once after the max (max(y)+b == max(y+b)), then tanh, store bf16.
    out_ref[...] = jnp.tanh(best + b_ref[...]).astype(out_ref.dtype)


def bilstm_kernel(word_f_ref, char_f_ref, m_f_ref,
                  word_b_ref, char_b_ref, m_b_ref,
                  wih_w_ref, wih_c_ref, b_ref, gb_ref,
                  whh_f_ref, whh_b_ref,
                  out_f_ref, out_b_ref,
                  zin_f_ref, zin_b_ref, h_ref, c_ref):
    """Bidirectional LSTM, one (batch-chunk, time-chunk) grid step.

    Grid = (NB, NT); at step (nb, tc) the forward direction consumes time-chunk tc
    and the backward direction consumes time-chunk NT-1-tc (separate input blocks).
    Rows within a chunk are ordered (time, batch-in-chunk): row = s*TB + b.
    Gate lane layout per direction: [i f g o], each padded to G (multiple of 128).

    word_*: [Tc*TB, Wd] bf16   char_*: [Tc*TB, Fp] bf16   m_*: [Tc*TB, 1] f32
    wih_w:  [Wd, 8G] bf16      wih_c:  [Fp, 8G] bf16      b:   [1, 8G] f32
    gb:     [1, 4G] f32  (mask logit bias: -1e9 on i lanes, +1e9 on f lanes)
    whh_f / whh_b: [G, 4G] bf16
    out_f / out_b: [Tc*TB, G] f32
    scratch: zin_f/zin_b [Tc*TB, 4G] f32, h [TB, 2G] bf16, c [TB, 2G] f32
    """
    G = out_f_ref.shape[1]
    G4 = 4 * G
    TB = h_ref.shape[0]
    Tc = zin_f_ref.shape[0] // TB
    tc = pl.program_id(1)

    @pl.when(tc == 0)                       # fresh h0 / c0 at the start of each batch chunk
    def _():
        h_ref[...] = jnp.zeros_like(h_ref)
        c_ref[...] = jnp.zeros_like(c_ref)

    # Hoisted input projection for this time chunk (both directions, concat(word,
    # char) folded into the split weight blocks).  Packed-sequence masking is
    # folded in here: padded steps get i-gate logit -1e9 (sigmoid -> 0 exactly) and
    # f-gate logit +1e9 (sigmoid -> 1 exactly), so c is frozen (fwd) / held at 0
    # (bwd) with no per-step mask work inside the serial recurrence.
    zin_f_ref[...] = (
        jnp.dot(word_f_ref[...], wih_w_ref[:, 0:G4], preferred_element_type=jnp.float32)
        + jnp.dot(char_f_ref[...], wih_c_ref[:, 0:G4], preferred_element_type=jnp.float32)
        + b_ref[:, 0:G4] + (1.0 - m_f_ref[...]) * gb_ref[...])
    zin_b_ref[...] = (
        jnp.dot(word_b_ref[...], wih_w_ref[:, G4:2 * G4], preferred_element_type=jnp.float32)
        + jnp.dot(char_b_ref[...], wih_c_ref[:, G4:2 * G4], preferred_element_type=jnp.float32)
        + b_ref[:, G4:2 * G4] + (1.0 - m_b_ref[...]) * gb_ref[...])

    whh_f = whh_f_ref[...]
    whh_b = whh_b_ref[...]

    def step(t, carry):
        rf = pl.ds(pl.multiple_of(t * TB, TB), TB)                 # forward rows (local time t)
        rb = pl.ds(pl.multiple_of((Tc - 1 - t) * TB, TB), TB)      # backward rows (reversed)

        # Two separate recurrent dots (no zero block-diagonal MXU work).
        zr_f = jnp.dot(h_ref[:, 0:G], whh_f, preferred_element_type=jnp.float32)
        zr_b = jnp.dot(h_ref[:, G:2 * G], whh_b, preferred_element_type=jnp.float32)
        z_f = zin_f_ref[rf, :] + zr_f
        z_b = zin_b_ref[rb, :] + zr_b

        def gates(z, c):                                           # PyTorch gate order i,f,g,o
            i = jax.nn.sigmoid(z[:, 0:G])
            f = jax.nn.sigmoid(z[:, G:2 * G])
            g = jnp.tanh(z[:, 2 * G:3 * G])
            o = jax.nn.sigmoid(z[:, 3 * G:4 * G])
            c_new = f * c + i * g
            return o * jnp.tanh(c_new), c_new

        h_f, c_f = gates(z_f, c_ref[:, 0:G])
        h_b, c_b = gates(z_b, c_ref[:, G:2 * G])
        c_ref[:, 0:G] = c_f
        c_ref[:, G:2 * G] = c_b
        h_ref[:, 0:G] = h_f.astype(h_ref.dtype)        # bf16 copy feeds next step's matmul
        h_ref[:, G:2 * G] = h_b.astype(h_ref.dtype)
        out_f_ref[rf, :] = h_f
        out_b_ref[rb, :] = h_b
        return carry

    lax.fori_loop(0, Tc, step, 0, unroll=True if Tc <= 8 else 2)

    # Zero outputs at padded positions (pad_packed_sequence semantics) in one
    # vectorized pass, outside the serial recurrence.
    out_f_ref[...] = out_f_ref[...] * m_f_ref[...]
    out_b_ref[...] = out_b_ref[...] * m_b_ref[...]


# --------------------------- weight / layout prep --------------------------- #

def _pad_gates(w, H, G):
    """Pad each of the 4 gate blocks along the last axis from H to G lanes."""
    if G == H:
        return w
    lead = w.shape[:-1]
    wg = w.reshape(lead + (4, H))
    wg = jnp.pad(wg, [(0, 0)] * len(lead) + [(0, 0), (0, G - H)])
    return wg.reshape(lead + (4 * G,))


def _pad_rows(w, H, G):
    if G == H:
        return w
    return jnp.pad(w, ((0, G - H), (0, 0)))


# ------------------------------ parameters --------------------------------- #

def init_params(key, num_words, word_dim, num_chars, char_dim,
                num_filters, kernel_size, hidden_size):
    ks = jax.random.split(key, 12)
    D = word_dim + num_filters
    H = hidden_size
    n = lambda k, s: jax.random.normal(k, s, dtype=jnp.float32) * 0.1
    return dict(
        word_embedd=n(ks[0], (num_words, word_dim)),
        char_embedd=n(ks[1], (num_chars, char_dim)),
        conv_w=n(ks[2], (num_filters, char_dim, kernel_size)),    # PyTorch [F, C, K]
        conv_b=n(ks[3], (num_filters,)),
        wih_f=n(ks[4], (D, 4 * H)),
        whh_f=n(ks[5], (H, 4 * H)),
        b_f=n(ks[6], (1, 4 * H)) + n(ks[7], (1, 4 * H)),           # b_ih + b_hh
        wih_b=n(ks[8], (D, 4 * H)),
        whh_b=n(ks[9], (H, 4 * H)),
        b_b=n(ks[10], (1, 4 * H)) + n(ks[11], (1, 4 * H)),
    )


# ------------------------------ forward pass ------------------------------- #

@jax.jit
def rnn_shared_forward(params, input_word, input_char, mask):
    word_tbl = params['word_embedd'].astype(jnp.bfloat16)
    char_tbl = params['char_embedd'].astype(jnp.bfloat16)
    B, T = input_word.shape
    Lc = input_char.shape[2]
    C = char_tbl.shape[1]
    Fnum, _, K = params['conv_w'].shape
    Wd = word_tbl.shape[1]
    H = params['whh_f'].shape[0]

    G = _round_up(H, 128)       # per-gate lane width (lane aligned)
    # TODO(synk): when the production hidden_size is < 128, packing the 4 gates of
    # one direction into a single 128-lane group would avoid the 4x gate padding.
    Fp = _round_up(Fnum, 128)   # conv filters padded to a lane-dense width

    # Batch / time tiling.  Rows are chunked time-major: row = nb*T_pad*TB + t*TB + b.
    TB = min(128, _round_up(B, 8))            # always >= 8 so row slices stay aligned
    Bp = _round_up(B, TB)
    NB = Bp // TB
    Tc = max(1, min(T, 2048 // TB))           # time chunk: keeps zin scratch small
    T_pad = _round_up(T, Tc)
    NT = T_pad // Tc
    rows_chunk = Tc * TB
    rows_total = NB * NT * rows_chunk

    # Permuted-index gathers: the embeddings come out of jnp.take already in the
    # chunked time-major layout (and in bf16) -> no HBM transpose of embedded data.
    iw = jnp.pad(input_word, ((0, Bp - B), (0, T_pad - T)))
    iw = jnp.transpose(iw.reshape(NB, TB, T_pad), (0, 2, 1)).reshape(rows_total)
    word_cm = jnp.take(word_tbl, iw, axis=0)                           # [rows, Wd] bf16

    ic = jnp.pad(input_char, ((0, Bp - B), (0, T_pad - T), (0, 0)))
    ic = jnp.transpose(ic.reshape(NB, TB, T_pad, Lc), (3, 0, 2, 1)).reshape(Lc, rows_total)
    char_cm = jnp.take(char_tbl, ic, axis=0)                           # [Lc, rows, C] bf16

    mask_f32 = mask.astype(jnp.float32)
    m = jnp.pad(mask_f32, ((0, Bp - B), (0, T_pad - T)))
    mask_cm = jnp.transpose(m.reshape(NB, TB, T_pad), (0, 2, 1)).reshape(rows_total, 1)

    # ---- char CNN: Conv1d(padding=K-1) -> max over positions -> tanh ----------
    w2 = jnp.transpose(params['conv_w'], (1, 2, 0))                    # [C, K, F]
    w2 = jnp.pad(w2, ((0, 0), (0, 0), (0, Fp - Fnum))).reshape(C, K * Fp).astype(jnp.bfloat16)
    b2 = jnp.pad(params['conv_b'], (0, Fp - Fnum)).reshape(1, Fp).astype(jnp.float32)

    TN = _largest_divisor_leq(rows_total, 512, 8)
    char_feat = pl.pallas_call(
        char_cnn_kernel,
        out_shape=jax.ShapeDtypeStruct((rows_total, Fp), jnp.bfloat16),
        grid=(rows_total // TN,),
        in_specs=[pl.BlockSpec((Lc, TN, C), lambda i: (0, i, 0)),
                  pl.BlockSpec((C, K * Fp), lambda i: (0, 0)),
                  pl.BlockSpec((1, Fp), lambda i: (0, 0))],
        out_specs=pl.BlockSpec((TN, Fp), lambda i: (i, 0)),
        compiler_params=pltpu.CompilerParams(
            dimension_semantics=("parallel",),
            vmem_limit_bytes=48 * 1024 * 1024),
    )(char_cm, w2, b2)

    # dropout_in / dropout_rnn_in / dropout_out are identity in eval mode.

    # ---- bidirectional LSTM (packed-sequence semantics via gate-logit masking) --
    wih_all = jnp.concatenate([_pad_gates(params['wih_f'], H, G),
                               _pad_gates(params['wih_b'], H, G)], axis=1)   # [Wd+F, 8G]
    wih_w = wih_all[:Wd].astype(jnp.bfloat16)                                # [Wd, 8G]
    wih_c = jnp.pad(wih_all[Wd:], ((0, Fp - Fnum), (0, 0))).astype(jnp.bfloat16)  # [Fp, 8G]
    b_all = jnp.concatenate([_pad_gates(params['b_f'], H, G),
                             _pad_gates(params['b_b'], H, G)], axis=1).astype(jnp.float32)
    whh_f = _pad_gates(_pad_rows(params['whh_f'], H, G), H, G).astype(jnp.bfloat16)  # [G, 4G]
    whh_b = _pad_gates(_pad_rows(params['whh_b'], H, G), H, G).astype(jnp.bfloat16)
    BIG = jnp.float32(1e9)
    gbias = jnp.concatenate([jnp.full((1, G), -BIG, jnp.float32),    # i gate -> 0 when padded
                             jnp.full((1, G), BIG, jnp.float32),     # f gate -> 1 when padded
                             jnp.zeros((1, 2 * G), jnp.float32)], axis=1)     # [1, 4G]

    fwd_idx = lambda nb, tc, NT=NT: (nb * NT + tc, 0)
    bwd_idx = lambda nb, tc, NT=NT: (nb * NT + (NT - 1 - tc), 0)
    wgt_idx = lambda nb, tc: (0, 0)

    # TODO(synk): on v7x with NB == 1 a size-2 "direction" parallel grid axis would
    # use both TensorCores; omitted here for simplicity.
    out_fw, out_bw = pl.pallas_call(
        bilstm_kernel,
        out_shape=(jax.ShapeDtypeStruct((rows_total, G), jnp.float32),
                   jax.ShapeDtypeStruct((rows_total, G), jnp.float32)),
        grid=(NB, NT),
        in_specs=[pl.BlockSpec((rows_chunk, Wd), fwd_idx),
                  pl.BlockSpec((rows_chunk, Fp), fwd_idx),
                  pl.BlockSpec((rows_chunk, 1), fwd_idx),
                  pl.BlockSpec((rows_chunk, Wd), bwd_idx),
                  pl.BlockSpec((rows_chunk, Fp), bwd_idx),
                  pl.BlockSpec((rows_chunk, 1), bwd_idx),
                  pl.BlockSpec((Wd, 8 * G), wgt_idx),
                  pl.BlockSpec((Fp, 8 * G), wgt_idx),
                  pl.BlockSpec((1, 8 * G), wgt_idx),
                  pl.BlockSpec((1, 4 * G), wgt_idx),
                  pl.BlockSpec((G, 4 * G), wgt_idx),
                  pl.BlockSpec((G, 4 * G), wgt_idx)],
        out_specs=[pl.BlockSpec((rows_chunk, G), fwd_idx),
                   pl.BlockSpec((rows_chunk, G), bwd_idx)],
        scratch_shapes=[pltpu.VMEM((rows_chunk, 4 * G), jnp.float32),   # zin fwd
                        pltpu.VMEM((rows_chunk, 4 * G), jnp.float32),   # zin bwd
                        pltpu.VMEM((TB, 2 * G), jnp.bfloat16),          # h (both dirs)
                        pltpu.VMEM((TB, 2 * G), jnp.float32)],          # c (both dirs)
        compiler_params=pltpu.CompilerParams(
            dimension_semantics=("parallel", "arbitrary"),
            vmem_limit_bytes=48 * 1024 * 1024),
    )(word_cm, char_feat, mask_cm, word_cm, char_feat, mask_cm,
      wih_w, wih_c, b_all, gbias, whh_f, whh_b)

    # Un-chunk the outputs back to [B, T, H] (the only layout transpose left).
    def unchunk(y):
        y = y.reshape(NB, NT * Tc, TB, G)
        y = jnp.transpose(y, (0, 2, 1, 3)).reshape(Bp, T_pad, G)
        return y[:B, :T, :H]

    lm_fw = unchunk(out_fw)                      # == output.view(B, T, 2, H)[:, :, 0]
    lm_bw = unchunk(out_bw)                      # == output.view(B, T, 2, H)[:, :, 1]
    output = jnp.concatenate([lm_fw, lm_bw], axis=-1)                  # [B, T, 2H]
    length = mask_f32.sum(axis=1).astype(jnp.int32)
    # TODO(synk): `self.crf(output, mask=mask)` in the reference forward() references
    # an attribute that is never defined (ChainCRF is external); we return the
    # _get_rnn_output results (BiLSTM features, mask, length, LM splits) instead.
    return output, mask, length, lm_fw, lm_bw


# --------------------------------- main ------------------------------------ #

if __name__ == "__main__":
    key = jax.random.PRNGKey(0)
    kp, kw, kc, _ = jax.random.split(key, 4)

    # Small config consistent with the module (num_layers=1, rnn_mode='LSTM', eval).
    num_words, word_dim = 100, 16
    num_chars, char_dim = 50, 8
    num_filters, kernel_size = 16, 3
    hidden_size = 32
    B, T, Lc = 2, 8, 4

    params = init_params(kp, num_words, word_dim, num_chars, char_dim,
                         num_filters, kernel_size, hidden_size)

    input_word = jax.random.randint(kw, (B, T), 0, num_words, dtype=jnp.int32)
    input_char = jax.random.randint(kc, (B, T, Lc), 0, num_chars, dtype=jnp.int32)
    mask = jnp.ones((B, T), dtype=jnp.float32).at[1, 6:].set(0.0)  # batch 1 has length 6

    out = rnn_shared_forward(params, input_word, input_char, mask)
    jax.block_until_ready(out)
    assert bool(jnp.isfinite(out[0]).all())
    print("KERNEL_OK")
</pallas_src>

<mosaic_0001>
module attributes {stable_mosaic.version = 11 : i64} {
  func.func @char_cnn_kernel(%arg0: i32, %arg1: memref<4x64x8xbf16, #tpu.memory_space<vmem>>, %arg2: memref<8x384xbf16, #tpu.memory_space<vmem>>, %arg3: memref<1x128xf32, #tpu.memory_space<vmem>>, %arg4: memref<64x128xbf16, #tpu.memory_space<vmem>>) attributes {dimension_semantics = [#tpu.dimension_semantics<parallel>], iteration_bounds = array<i64: 1>, scalar_prefetch = 0 : i64, scratch_operands = 0 : i64, tpu.core_type = #tpu.core_type<tc>, window_params = [{transform_indices = @transform_0, window_bounds = array<i64: 4, 64, 8>}, {pipeline_mode = #tpu.pipeline_mode<synchronous>, transform_indices = @transform_1, window_bounds = array<i64: 8, 384>}, {pipeline_mode = #tpu.pipeline_mode<synchronous>, transform_indices = @transform_2, window_bounds = array<i64: 1, 128>}, {transform_indices = @transform_3, window_bounds = array<i64: 64, 128>}]} {
    %c0 = arith.constant 0 : index
    %c0_0 = arith.constant 0 : index
    %c0_1 = arith.constant 0 : index
    %0 = vector.load %arg1[%c0, %c0_0, %c0_1] : memref<4x64x8xbf16, #tpu.memory_space<vmem>>, vector<4x64x8xbf16>
    %1 = vector.shape_cast %0 : vector<4x64x8xbf16> to vector<256x8xbf16>
    %c0_2 = arith.constant 0 : index
    %c0_3 = arith.constant 0 : index
    %2 = vector.load %arg2[%c0_2, %c0_3] : memref<8x384xbf16, #tpu.memory_space<vmem>>, vector<8x384xbf16>
    %cst = arith.constant dense<0.000000e+00> : vector<256x384xf32>
    %3 = tpu.matmul %1, %2, %cst {dimension_numbers = #tpu.dot_dimension_numbers<[1], [0], [0], [1], [0, 0, 1, 1], [], []>} : vector<256x8xbf16>, vector<8x384xbf16>, vector<256x384xf32> -> vector<256x384xf32>
    %4 = vector.extract_strided_slice %3 {offsets = [0, 256], sizes = [64, 128], strides = [1, 1]} : vector<256x384xf32> to vector<64x128xf32>
    %5 = vector.extract_strided_slice %3 {offsets = [0, 128], sizes = [64, 128], strides = [1, 1]} : vector<256x384xf32> to vector<64x128xf32>
    %6 = vector.extract_strided_slice %3 {offsets = [64, 256], sizes = [64, 128], strides = [1, 1]} : vector<256x384xf32> to vector<64x128xf32>
    %7 = arith.addf %5, %6 : vector<64x128xf32>
    %8 = arith.maximumf %4, %7 : vector<64x128xf32>
    %9 = vector.extract_strided_slice %3 {offsets = [0, 0], sizes = [64, 128], strides = [1, 1]} : vector<256x384xf32> to vector<64x128xf32>
    %10 = vector.extract_strided_slice %3 {offsets = [64, 128], sizes = [64, 128], strides = [1, 1]} : vector<256x384xf32> to vector<64x128xf32>
    %11 = arith.addf %9, %10 : vector<64x128xf32>
    %12 = vector.extract_strided_slice %3 {offsets = [128, 256], sizes = [64, 128], strides = [1, 1]} : vector<256x384xf32> to vector<64x128xf32>
    %13 = arith.addf %11, %12 : vector<64x128xf32>
    %14 = arith.maximumf %8, %13 : vector<64x128xf32>
    %15 = vector.extract_strided_slice %3 {offsets = [64, 0], sizes = [64, 128], strides = [1, 1]} : vector<256x384xf32> to vector<64x128xf32>
    %16 = vector.extract_strided_slice %3 {offsets = [128, 128], sizes = [64, 128], strides = [1, 1]} : vector<256x384xf32> to vector<64x128xf32>
    %17 = arith.addf %15, %16 : vector<64x128xf32>
    %18 = vector.extract_strided_slice %3 {offsets = [192, 256], sizes = [64, 128], strides = [1, 1]} : vector<256x384xf32> to vector<64x128xf32>
    %19 = arith.addf %17, %18 : vector<64x128xf32>
    %20 = arith.maximumf %14, %19 : vector<64x128xf32>
    %21 = vector.extract_strided_slice %3 {offsets = [128, 0], sizes = [64, 128], strides = [1, 1]} : vector<256x384xf32> to vector<64x128xf32>
    %22 = vector.extract_strided_slice %3 {offsets = [192, 128], sizes = [64, 128], strides = [1, 1]} : vector<256x384xf32> to vector<64x128xf32>
    %23 = arith.addf %21, %22 : vector<64x128xf32>
    %24 = arith.maximumf %20, %23 : vector<64x128xf32>
    %25 = vector.extract_strided_slice %3 {offsets = [192, 0], sizes = [64, 128], strides = [1, 1]} : vector<256x384xf32> to vector<64x128xf32>
    %26 = arith.maximumf %24, %25 : vector<64x128xf32>
    %c0_4 = arith.constant 0 : index
    %c0_5 = arith.constant 0 : index
    %27 = vector.load %arg3[%c0_4, %c0_5] : memref<1x128xf32, #tpu.memory_space<vmem>>, vector<1x128xf32>
    %28 = vector.broadcast %27 : vector<1x128xf32> to vector<64x128xf32>
    %29 = arith.addf %26, %28 : vector<64x128xf32>
    %30 = math.tanh %29 : vector<64x128xf32>
    %31 = arith.truncf %30 : vector<64x128xf32> to vector<64x128xbf16>
    %c0_6 = arith.constant 0 : index
    %c0_7 = arith.constant 0 : index
    %32 = vector.load %arg4[%c0_6, %c0_7] : memref<64x128xbf16, #tpu.memory_space<vmem>>, vector<64x128xbf16>
    tpu.vector_store %arg4[%c0_6, %c0_7], %31 {strides = array<i32>} : memref<64x128xbf16, #tpu.memory_space<vmem>>, vector<64x128xbf16>,
    return
  }
  func.func @transform_0(%arg0: i32) -> (i32, i32, i32) {
    %c0_i32 = arith.constant 0 : i32
    %c0_i32_0 = arith.constant 0 : i32
    %c0_i32_1 = arith.constant 0 : i32
    return %c0_i32, %arg0, %c0_i32_0 : i32, i32, i32
  }
  func.func @transform_1(%arg0: i32) -> (i32, i32) {
    %c0_i32 = arith.constant 0 : i32
    %c0_i32_0 = arith.constant 0 : i32
    %c0_i32_1 = arith.constant 0 : i32
    return %c0_i32, %c0_i32_0 : i32, i32
  }
  func.func @transform_2(%arg0: i32) -> (i32, i32) {
    %c0_i32 = arith.constant 0 : i32
    %c0_i32_0 = arith.constant 0 : i32
    %c0_i32_1 = arith.constant 0 : i32
    return %c0_i32, %c0_i32_0 : i32, i32
  }
  func.func @transform_3(%arg0: i32) -> (i32, i32) {
    %c0_i32 = arith.constant 0 : i32
    %c0_i32_0 = arith.constant 0 : i32
    return %arg0, %c0_i32 : i32, i32
  }
}

module attributes {stable_mosaic.version = 11 : i64} {
  func.func @bilstm_kernel(%arg0: i32, %arg1: i32, %arg2: memref<64x16xbf16, #tpu.memory_space<vmem>>, %arg3: memref<64x128xbf16, #tpu.memory_space<vmem>>, %arg4: memref<64x1xf32, #tpu.memory_space<vmem>>, %arg5: memref<64x16xbf16, #tpu.memory_space<vmem>>, %arg6: memref<64x128xbf16, #tpu.memory_space<vmem>>, %arg7: memref<64x1xf32, #tpu.memory_space<vmem>>, %arg8: memref<16x1024xbf16, #tpu.memory_space<vmem>>, %arg9: memref<128x1024xbf16, #tpu.memory_space<vmem>>, %arg10: memref<1x1024xf32, #tpu.memory_space<vmem>>, %arg11: memref<1x512xf32, #tpu.memory_space<vmem>>, %arg12: memref<128x512xbf16, #tpu.memory_space<vmem>>, %arg13: memref<128x512xbf16, #tpu.memory_space<vmem>>, %arg14: memref<64x128xf32, #tpu.memory_space<vmem>>, %arg15: memref<64x128xf32, #tpu.memory_space<vmem>>, %arg16: memref<64x512xf32, #tpu.memory_space<vmem>>, %arg17: memref<64x512xf32, #tpu.memory_space<vmem>>, %arg18: memref<8x256xbf16, #tpu.memory_space<vmem>>, %arg19: memref<8x256xf32, #tpu.memory_space<vmem>>) attributes {dimension_semantics = [#tpu.dimension_semantics<parallel>, #tpu.dimension_semantics<arbitrary>], iteration_bounds = array<i64: 1, 1>, scalar_prefetch = 0 : i64, scratch_operands = 4 : i64, tpu.core_type = #tpu.core_type<tc>, window_params = [{transform_indices = @transform_0, window_bounds = array<i64: 64, 16>}, {transform_indices = @transform_1, window_bounds = array<i64: 64, 128>}, {transform_indices = @transform_2, window_bounds = array<i64: 64, 1>}, {transform_indices = @transform_3, window_bounds = array<i64: 64, 16>}, {transform_indices = @transform_4, window_bounds = array<i64: 64, 128>}, {transform_indices = @transform_5, window_bounds = array<i64: 64, 1>}, {pipeline_mode = #tpu.pipeline_mode<synchronous>, transform_indices = @transform_6, window_bounds = array<i64: 16, 1024>}, {pipeline_mode = #tpu.pipeline_mode<synchronous>, transform_indices = @transform_7, window_bounds = array<i64: 128, 1024>}, {pipeline_mode = #tpu.pipeline_mode<synchronous>, transform_indices = @transform_8, window_bounds = array<i64: 1, 1024>}, {pipeline_mode = #tpu.pipeline_mode<synchronous>, transform_indices = @transform_9, window_bounds = array<i64: 1, 512>}, {pipeline_mode = #tpu.pipeline_mode<synchronous>, transform_indices = @transform_10, window_bounds = array<i64: 128, 512>}, {pipeline_mode = #tpu.pipeline_mode<synchronous>, transform_indices = @transform_11, window_bounds = array<i64: 128, 512>}, {transform_indices = @transform_12, window_bounds = array<i64: 64, 128>}, {transform_indices = @transform_13, window_bounds = array<i64: 64, 128>}]} {
    %c0_i32 = arith.constant 0 : i32
    %0 = arith.cmpi eq, %arg1, %c0_i32 : i32
    %1 = arith.extui %0 : i1 to i32
    %c0_i32_0 = arith.constant 0 : i32
    %2 = arith.cmpi ne, %1, %c0_i32_0 : i32
    scf.if %2 {
      %cst_300 = arith.constant 0.000000e+00 : bf16
      %669 = vector.broadcast %cst_300 : bf16 to vector<8x256xbf16>
      %c0_301 = arith.constant 0 : index
      %c0_302 = arith.constant 0 : index
      %670 = vector.load %arg18[%c0_301, %c0_302] : memref<8x256xbf16, #tpu.memory_space<vmem>>, vector<8x256xbf16>
      tpu.vector_store %arg18[%c0_301, %c0_302], %669 {strides = array<i32>} : memref<8x256xbf16, #tpu.memory_space<vmem>>, vector<8x256xbf16>,
      %cst_303 = arith.constant 0.000000e+00 : f32
      %671 = vector.broadcast %cst_303 : f32 to vector<8x256xf32>
      %c0_304 = arith.constant 0 : index
      %c0_305 = arith.constant 0 : index
      %672 = vector.load %arg19[%c0_304, %c0_305] : memref<8x256xf32, #tpu.memory_space<vmem>>, vector<8x256xf32>
      tpu.vector_store %arg19[%c0_304, %c0_305], %671 {strides = array<i32>} : memref<8x256xf32, #tpu.memory_space<vmem>>, vector<8x256xf32>,
    } else {
    }
    %c0 = arith.constant 0 : index
    %c0_1 = arith.constant 0 : index
    %3 = vector.load %arg2[%c0, %c0_1] : memref<64x16xbf16, #tpu.memory_space<vmem>>, vector<64x16xbf16>
    %c0_2 = arith.constant 0 : index
    %c0_3 = arith.constant 0 : index
    %4 = vector.load %arg8[%c0_2, %c0_3] : memref<16x1024xbf16, #tpu.memory_space<vmem>>, vector<16x512xbf16>
    %cst = arith.constant dense<0.000000e+00> : vector<64x512xf32>
    %5 = tpu.matmul %3, %4, %cst {dimension_numbers = #tpu.dot_dimension_numbers<[1], [0], [0], [1], [0, 0, 1, 1], [], []>} : vector<64x16xbf16>, vector<16x512xbf16>, vector<64x512xf32> -> vector<64x512xf32>
    %c0_4 = arith.constant 0 : index
    %c0_5 = arith.constant 0 : index
    %6 = vector.load %arg3[%c0_4, %c0_5] : memref<64x128xbf16, #tpu.memory_space<vmem>>, vector<64x128xbf16>
    %c0_6 = arith.constant 0 : index
    %c0_7 = arith.constant 0 : index
    %7 = vector.load %arg9[%c0_6, %c0_7] : memref<128x1024xbf16, #tpu.memory_space<vmem>>, vector<128x512xbf16>
    %cst_8 = arith.constant dense<0.000000e+00> : vector<64x512xf32>
    %8 = tpu.matmul %6, %7, %cst_8 {dimension_numbers = #tpu.dot_dimension_numbers<[1], [0], [0], [1], [0, 0, 1, 1], [], []>} : vector<64x128xbf16>, vector<128x512xbf16>, vector<64x512xf32> -> vector<64x512xf32>
    %9 = arith.addf %5, %8 : vector<64x512xf32>
    %c0_9 = arith.constant 0 : index
    %c0_10 = arith.constant 0 : index
    %10 = vector.load %arg10[%c0_9, %c0_10] : memref<1x1024xf32, #tpu.memory_space<vmem>>, vector<1x512xf32>
    %11 = vector.broadcast %10 : vector<1x512xf32> to vector<64x512xf32>
    %12 = arith.addf %9, %11 : vector<64x512xf32>
    %c0_11 = arith.constant 0 : index
    %c0_12 = arith.constant 0 : index
    %13 = vector.load %arg4[%c0_11, %c0_12] : memref<64x1xf32, #tpu.memory_space<vmem>>, vector<64x1xf32>
    %cst_13 = arith.constant 1.000000e+00 : f32
    %14 = vector.broadcast %cst_13 : f32 to vector<64x1xf32>
    %15 = arith.subf %14, %13 : vector<64x1xf32>
    %c0_14 = arith.constant 0 : index
    %c0_15 = arith.constant 0 : index
    %16 = vector.load %arg11[%c0_14, %c0_15] : memref<1x512xf32, #tpu.memory_space<vmem>>, vector<1x512xf32>
    %17 = vector.broadcast %15 : vector<64x1xf32> to vector<64x512xf32>
    %18 = vector.broadcast %16 : vector<1x512xf32> to vector<64x512xf32>
    %19 = arith.mulf %17, %18 : vector<64x512xf32>
    %20 = arith.addf %12, %19 : vector<64x512xf32>
    %c0_16 = arith.constant 0 : index
    %c0_17 = arith.constant 0 : index
    %21 = vector.load %arg16[%c0_16, %c0_17] : memref<64x512xf32, #tpu.memory_space<vmem>>, vector<64x512xf32>
    tpu.vector_store %arg16[%c0_16, %c0_17], %20 {strides = array<i32>} : memref<64x512xf32, #tpu.memory_space<vmem>>, vector<64x512xf32>,
    %c0_18 = arith.constant 0 : index
    %c0_19 = arith.constant 0 : index
    %22 = vector.load %arg5[%c0_18, %c0_19] : memref<64x16xbf16, #tpu.memory_space<vmem>>, vector<64x16xbf16>
    %c0_20 = arith.constant 0 : index
    %c512 = arith.constant 512 : index
    %23 = vector.load %arg8[%c0_20, %c512] : memref<16x1024xbf16, #tpu.memory_space<vmem>>, vector<16x512xbf16>
    %cst_21 = arith.constant dense<0.000000e+00> : vector<64x512xf32>
    %24 = tpu.matmul %22, %23, %cst_21 {dimension_numbers = #tpu.dot_dimension_numbers<[1], [0], [0], [1], [0, 0, 1, 1], [], []>} : vector<64x16xbf16>, vector<16x512xbf16>, vector<64x512xf32> -> vector<64x512xf32>
    %c0_22 = arith.constant 0 : index
    %c0_23 = arith.constant 0 : index
    %25 = vector.load %arg6[%c0_22, %c0_23] : memref<64x128xbf16, #tpu.memory_space<vmem>>, vector<64x128xbf16>
    %c0_24 = arith.constant 0 : index
    %c512_25 = arith.constant 512 : index
    %26 = vector.load %arg9[%c0_24, %c512_25] : memref<128x1024xbf16, #tpu.memory_space<vmem>>, vector<128x512xbf16>
    %cst_26 = arith.constant dense<0.000000e+00> : vector<64x512xf32>
    %27 = tpu.matmul %25, %26, %cst_26 {dimension_numbers = #tpu.dot_dimension_numbers<[1], [0], [0], [1], [0, 0, 1, 1], [], []>} : vector<64x128xbf16>, vector<128x512xbf16>, vector<64x512xf32> -> vector<64x512xf32>
    %28 = arith.addf %24, %27 : vector<64x512xf32>
    %c0_27 = arith.constant 0 : index
    %c512_28 = arith.constant 512 : index
    %29 = vector.load %arg10[%c0_27, %c512_28] : memref<1x1024xf32, #tpu.memory_space<vmem>>, vector<1x512xf32>
    %30 = vector.broadcast %29 : vector<1x512xf32> to vector<64x512xf32>
    %31 = arith.addf %28, %30 : vector<64x512xf32>
    %c0_29 = arith.constant 0 : index
    %c0_30 = arith.constant 0 : index
    %32 = vector.load %arg7[%c0_29, %c0_30] : memref<64x1xf32, #tpu.memory_space<vmem>>, vector<64x1xf32>
    %cst_31 = arith.constant 1.000000e+00 : f32
    %33 = vector.broadcast %cst_31 : f32 to vector<64x1xf32>
    %34 = arith.subf %33, %32 : vector<64x1xf32>
    %c0_32 = arith.constant 0 : index
    %c0_33 = arith.constant 0 : index
    %35 = vector.load %arg11[%c0_32, %c0_33] : memref<1x512xf32, #tpu.memory_space<vmem>>, vector<1x512xf32>
    %36 = vector.broadcast %34 : vector<64x1xf32> to vector<64x512xf32>
    %37 = vector.broadcast %35 : vector<1x512xf32> to vector<64x512xf32>
    %38 = arith.mulf %36, %37 : vector<64x512xf32>
    %39 = arith.addf %31, %38 : vector<64x512xf32>
    %c0_34 = arith.constant 0 : index
    %c0_35 = arith.constant 0 : index
    %40 = vector.load %arg17[%c0_34, %c0_35] : memref<64x512xf32, #tpu.memory_space<vmem>>, vector<64x512xf32>
    tpu.vector_store %arg17[%c0_34, %c0_35], %39 {strides = array<i32>} : memref<64x512xf32, #tpu.memory_space<vmem>>, vector<64x512xf32>,
    %c0_36 = arith.constant 0 : index
    %c0_37 = arith.constant 0 : index
    %41 = vector.load %arg12[%c0_36, %c0_37] : memref<128x512xbf16, #tpu.memory_space<vmem>>, vector<128x512xbf16>
    %c0_38 = arith.constant 0 : index
    %c0_39 = arith.constant 0 : index
    %42 = vector.load %arg13[%c0_38, %c0_39] : memref<128x512xbf16, #tpu.memory_space<vmem>>, vector<128x512xbf16>
    %c0_i32_40 = arith.constant 0 : i32
    %c8_i32 = arith.constant 8 : i32
    %43 = arith.muli %c0_i32_40, %c8_i32 : i32
    %44 = tpu.assume_multiple %43, 8 : i32
    %c7_i32 = arith.constant 7 : i32
    %45 = arith.subi %c7_i32, %c0_i32_40 : i32
    %c8_i32_41 = arith.constant 8 : i32
    %46 = arith.muli %45, %c8_i32_41 : i32
    %47 = tpu.assume_multiple %46, 8 : i32
    %c0_42 = arith.constant 0 : index
    %c0_43 = arith.constant 0 : index
    %48 = vector.load %arg18[%c0_42, %c0_43] : memref<8x256xbf16, #tpu.memory_space<vmem>>, vector<8x128xbf16>
    %cst_44 = arith.constant dense<0.000000e+00> : vector<8x512xf32>
    %49 = tpu.matmul %48, %41, %cst_44 {dimension_numbers = #tpu.dot_dimension_numbers<[1], [0], [0], [1], [0, 0, 1, 1], [], []>} : vector<8x128xbf16>, vector<128x512xbf16>, vector<8x512xf32> -> vector<8x512xf32>
    %c0_45 = arith.constant 0 : index
    %c128 = arith.constant 128 : index
    %50 = vector.load %arg18[%c0_45, %c128] : memref<8x256xbf16, #tpu.memory_space<vmem>>, vector<8x128xbf16>
    %cst_46 = arith.constant dense<0.000000e+00> : vector<8x512xf32>
    %51 = tpu.matmul %50, %42, %cst_46 {dimension_numbers = #tpu.dot_dimension_numbers<[1], [0], [0], [1], [0, 0, 1, 1], [], []>} : vector<8x128xbf16>, vector<128x512xbf16>, vector<8x512xf32> -> vector<8x512xf32>
    %52 = arith.index_cast %44 : i32 to index
    %c0_47 = arith.constant 0 : index
    %53 = vector.load %arg16[%52, %c0_47] : memref<64x512xf32, #tpu.memory_space<vmem>>, vector<8x512xf32>
    %54 = arith.addf %53, %49 : vector<8x512xf32>
    %55 = arith.index_cast %47 : i32 to index
    %c0_48 = arith.constant 0 : index
    %56 = vector.load %arg17[%55, %c0_48] : memref<64x512xf32, #tpu.memory_space<vmem>>, vector<8x512xf32>
    %57 = arith.addf %56, %51 : vector<8x512xf32>
    %c0_49 = arith.constant 0 : index
    %c0_50 = arith.constant 0 : index
    %58 = vector.load %arg19[%c0_49, %c0_50] : memref<8x256xf32, #tpu.memory_space<vmem>>, vector<8x128xf32>
    %59 = vector.extract_strided_slice %54 {offsets = [0, 0], sizes = [8, 128], strides = [1, 1]} : vector<8x512xf32> to vector<8x128xf32>
    %60 = arith.negf %59 : vector<8x128xf32>
    %61 = math.exp %60 : vector<8x128xf32>
    %cst_51 = arith.constant 1.000000e+00 : f32
    %62 = vector.broadcast %cst_51 : f32 to vector<8x128xf32>
    %63 = arith.addf %62, %61 : vector<8x128xf32>
    %64 = arith.divf %62, %63 : vector<8x128xf32>
    %65 = vector.extract_strided_slice %54 {offsets = [0, 128], sizes = [8, 128], strides = [1, 1]} : vector<8x512xf32> to vector<8x128xf32>
    %66 = arith.negf %65 : vector<8x128xf32>
    %67 = math.exp %66 : vector<8x128xf32>
    %cst_52 = arith.constant 1.000000e+00 : f32
    %68 = vector.broadcast %cst_52 : f32 to vector<8x128xf32>
    %69 = arith.addf %68, %67 : vector<8x128xf32>
    %70 = arith.divf %68, %69 : vector<8x128xf32>
    %71 = vector.extract_strided_slice %54 {offsets = [0, 256], sizes = [8, 128], strides = [1, 1]} : vector<8x512xf32> to vector<8x128xf32>
    %72 = math.tanh %71 : vector<8x128xf32>
    %73 = vector.extract_strided_slice %54 {offsets = [0, 384], sizes = [8, 128], strides = [1, 1]} : vector<8x512xf32> to vector<8x128xf32>
    %74 = arith.negf %73 : vector<8x128xf32>
    %75 = math.exp %74 : vector<8x128xf32>
    %cst_53 = arith.constant 1.000000e+00 : f32
    %76 = vector.broadcast %cst_53 : f32 to vector<8x128xf32>
    %77 = arith.addf %76, %75 : vector<8x128xf32>
    %78 = arith.divf %76, %77 : vector<8x128xf32>
    %79 = arith.mulf %70, %58 : vector<8x128xf32>
    %80 = arith.mulf %64, %72 : vector<8x128xf32>
    %81 = arith.addf %79, %80 : vector<8x128xf32>
    %82 = math.tanh %81 : vector<8x128xf32>
    %83 = arith.mulf %78, %82 : vector<8x128xf32>
    %c0_54 = arith.constant 0 : index
    %c128_55 = arith.constant 128 : index
    %84 = vector.load %arg19[%c0_54, %c128_55] : memref<8x256xf32, #tpu.memory_space<vmem>>, vector<8x128xf32>
    %85 = vector.extract_strided_slice %57 {offsets = [0, 0], sizes = [8, 128], strides = [1, 1]} : vector<8x512xf32> to vector<8x128xf32>
    %86 = arith.negf %85 : vector<8x128xf32>
    %87 = math.exp %86 : vector<8x128xf32>
    %cst_56 = arith.constant 1.000000e+00 : f32
    %88 = vector.broadcast %cst_56 : f32 to vector<8x128xf32>
    %89 = arith.addf %88, %87 : vector<8x128xf32>
    %90 = arith.divf %88, %89 : vector<8x128xf32>
    %91 = vector.extract_strided_slice %57 {offsets = [0, 128], sizes = [8, 128], strides = [1, 1]} : vector<8x512xf32> to vector<8x128xf32>
    %92 = arith.negf %91 : vector<8x128xf32>
    %93 = math.exp %92 : vector<8x128xf32>
    %cst_57 = arith.constant 1.000000e+00 : f32
    %94 = vector.broadcast %cst_57 : f32 to vector<8x128xf32>
    %95 = arith.addf %94, %93 : vector<8x128xf32>
    %96 = arith.divf %94, %95 : vector<8x128xf32>
    %97 = vector.extract_strided_slice %57 {offsets = [0, 256], sizes = [8, 128], strides = [1, 1]} : vector<8x512xf32> to vector<8x128xf32>
    %98 = math.tanh %97 : vector<8x128xf32>
    %99 = vector.extract_strided_slice %57 {offsets = [0, 384], sizes = [8, 128], strides = [1, 1]} : vector<8x512xf32> to vector<8x128xf32>
    %100 = arith.negf %99 : vector<8x128xf32>
    %101 = math.exp %100 : vector<8x128xf32>
    %cst_58 = arith.constant 1.000000e+00 : f32
    %102 = vector.broadcast %cst_58 : f32 to vector<8x128xf32>
    %103 = arith.addf %102, %101 : vector<8x128xf32>
    %104 = arith.divf %102, %103 : vector<8x128xf32>
    %105 = arith.mulf %96, %84 : vector<8x128xf32>
    %106 = arith.mulf %90, %98 : vector<8x128xf32>
    %107 = arith.addf %105, %106 : vector<8x128xf32>
    %108 = math.tanh %107 : vector<8x128xf32>
    %109 = arith.mulf %104, %108 : vector<8x128xf32>
    %c0_59 = arith.constant 0 : index
    %c0_60 = arith.constant 0 : index
    %110 = vector.load %arg19[%c0_59, %c0_60] : memref<8x256xf32, #tpu.memory_space<vmem>>, vector<8x128xf32>
    tpu.vector_store %arg19[%c0_59, %c0_60], %81 {strides = array<i32>} : memref<8x256xf32, #tpu.memory_space<vmem>>, vector<8x128xf32>,
    %c0_61 = arith.constant 0 : index
    %c128_62 = arith.constant 128 : index
    %111 = vector.load %arg19[%c0_61, %c128_62] : memref<8x256xf32, #tpu.memory_space<vmem>>, vector<8x128xf32>
    tpu.vector_store %arg19[%c0_61, %c128_62], %107 {strides = array<i32>} : memref<8x256xf32, #tpu.memory_space<vmem>>, vector<8x128xf32>,
    %112 = arith.truncf %83 : vector<8x128xf32> to vector<8x128xbf16>
    %c0_63 = arith.constant 0 : index
    %c0_64 = arith.constant 0 : index
    %113 = vector.load %arg18[%c0_63, %c0_64] : memref<8x256xbf16, #tpu.memory_space<vmem>>, vector<8x128xbf16>
    tpu.vector_store %arg18[%c0_63, %c0_64], %112 {strides = array<i32>} : memref<8x256xbf16, #tpu.memory_space<vmem>>, vector<8x128xbf16>,
    %114 = arith.truncf %109 : vector<8x128xf32> to vector<8x128xbf16>
    %c0_65 = arith.constant 0 : index
    %c128_66 = arith.constant 128 : index
    %115 = vector.load %arg18[%c0_65, %c128_66] : memref<8x256xbf16, #tpu.memory_space<vmem>>, vector<8x128xbf16>
    tpu.vector_store %arg18[%c0_65, %c128_66], %114 {strides = array<i32>} : memref<8x256xbf16, #tpu.memory_space<vmem>>, vector<8x128xbf16>,
    %116 = arith.index_cast %44 : i32 to index
    %c0_67 = arith.constant 0 : index
    %117 = vector.load %arg14[%116, %c0_67] : memref<64x128xf32, #tpu.memory_space<vmem>>, vector<8x128xf32>
    tpu.vector_store %arg14[%116, %c0_67], %83 {strides = array<i32>} : memref<64x128xf32, #tpu.memory_space<vmem>>, vector<8x128xf32>,
    %118 = arith.index_cast %47 : i32 to index
    %c0_68 = arith.constant 0 : index
    %119 = vector.load %arg15[%118, %c0_68] : memref<64x128xf32, #tpu.memory_space<vmem>>, vector<8x128xf32>
    tpu.vector_store %arg15[%118, %c0_68], %109 {strides = array<i32>} : memref<64x128xf32, #tpu.memory_space<vmem>>, vector<8x128xf32>,
    %c1_i32 = arith.constant 1 : i32
    %c8_i32_69 = arith.constant 8 : i32
    %120 = arith.muli %c1_i32, %c8_i32_69 : i32
    %121 = tpu.assume_multiple %120, 8 : i32
    %c7_i32_70 = arith.constant 7 : i32
    %122 = arith.subi %c7_i32_70, %c1_i32 : i32
    %c8_i32_71 = arith.constant 8 : i32
    %123 = arith.muli %122, %c8_i32_71 : i32
    %124 = tpu.assume_multiple %123, 8 : i32
    %c0_72 = arith.constant 0 : index
    %c0_73 = arith.constant 0 : index
    %125 = vector.load %arg18[%c0_72, %c0_73] : memref<8x256xbf16, #tpu.memory_space<vmem>>, vector<8x128xbf16>
    %cst_74 = arith.constant dense<0.000000e+00> : vector<8x512xf32>
    %126 = tpu.matmul %125, %41, %cst_74 {dimension_numbers = #tpu.dot_dimension_numbers<[1], [0], [0], [1], [0, 0, 1, 1], [], []>} : vector<8x128xbf16>, vector<128x512xbf16>, vector<8x512xf32> -> vector<8x512xf32>
    %c0_75 = arith.constant 0 : index
    %c128_76 = arith.constant 128 : index
    %127 = vector.load %arg18[%c0_75, %c128_76] : memref<8x256xbf16, #tpu.memory_space<vmem>>, vector<8x128xbf16>
    %cst_77 = arith.constant dense<0.000000e+00> : vector<8x512xf32>
    %128 = tpu.matmul %127, %42, %cst_77 {dimension_numbers = #tpu.dot_dimension_numbers<[1], [0], [0], [1], [0, 0, 1, 1], [], []>} : vector<8x128xbf16>, vector<128x512xbf16>, vector<8x512xf32> -> vector<8x512xf32>
    %129 = arith.index_cast %121 : i32 to index
    %c0_78 = arith.constant 0 : index
    %130 = vector.load %arg16[%129, %c0_78] : memref<64x512xf32, #tpu.memory_space<vmem>>, vector<8x512xf32>
    %131 = arith.addf %130, %126 : vector<8x512xf32>
    %132 = arith.index_cast %124 : i32 to index
    %c0_79 = arith.constant 0 : index
    %133 = vector.load %arg17[%132, %c0_79] : memref<64x512xf32, #tpu.memory_space<vmem>>, vector<8x512xf32>
    %134 = arith.addf %133, %128 : vector<8x512xf32>
    %c0_80 = arith.constant 0 : index
    %c0_81 = arith.constant 0 : index
    %135 = vector.load %arg19[%c0_80, %c0_81] : memref<8x256xf32, #tpu.memory_space<vmem>>, vector<8x128xf32>
    %136 = vector.extract_strided_slice %131 {offsets = [0, 0], sizes = [8, 128], strides = [1, 1]} : vector<8x512xf32> to vector<8x128xf32>
    %137 = arith.negf %136 : vector<8x128xf32>
    %138 = math.exp %137 : vector<8x128xf32>
    %cst_82 = arith.constant 1.000000e+00 : f32
    %139 = vector.broadcast %cst_82 : f32 to vector<8x128xf32>
    %140 = arith.addf %139, %138 : vector<8x128xf32>
    %141 = arith.divf %139, %140 : vector<8x128xf32>
    %142 = vector.extract_strided_slice %131 {offsets = [0, 128], sizes = [8, 128], strides = [1, 1]} : vector<8x512xf32> to vector<8x128xf32>
    %143 = arith.negf %142 : vector<8x128xf32>
    %144 = math.exp %143 : vector<8x128xf32>
    %cst_83 = arith.constant 1.000000e+00 : f32
    %145 = vector.broadcast %cst_83 : f32 to vector<8x128xf32>
    %146 = arith.addf %145, %144 : vector<8x128xf32>
    %147 = arith.divf %145, %146 : vector<8x128xf32>
    %148 = vector.extract_strided_slice %131 {offsets = [0, 256], sizes = [8, 128], strides = [1, 1]} : vector<8x512xf32> to vector<8x128xf32>
    %149 = math.tanh %148 : vector<8x128xf32>
    %150 = vector.extract_strided_slice %131 {offsets = [0, 384], sizes = [8, 128], strides = [1, 1]} : vector<8x512xf32> to vector<8x128xf32>
    %151 = arith.negf %150 : vector<8x128xf32>
    %152 = math.exp %151 : vector<8x128xf32>
    %cst_84 = arith.constant 1.000000e+00 : f32
    %153 = vector.broadcast %cst_84 : f32 to vector<8x128xf32>
    %154 = arith.addf %153, %152 : vector<8x128xf32>
    %155 = arith.divf %153, %154 : vector<8x128xf32>
    %156 = arith.mulf %147, %135 : vector<8x128xf32>
    %157 = arith.mulf %141, %149 : vector<8x128xf32>
    %158 = arith.addf %156, %157 : vector<8x128xf32>
    %159 = math.tanh %158 : vector<8x128xf32>
    %160 = arith.mulf %155, %159 : vector<8x128xf32>
    %c0_85 = arith.constant 0 : index
    %c128_86 = arith.constant 128 : index
    %161 = vector.load %arg19[%c0_85, %c128_86] : memref<8x256xf32, #tpu.memory_space<vmem>>, vector<8x128xf32>
    %162 = vector.extract_strided_slice %134 {offsets = [0, 0], sizes = [8, 128], strides = [1, 1]} : vector<8x512xf32> to vector<8x128xf32>
    %163 = arith.negf %162 : vector<8x128xf32>
    %164 = math.exp %163 : vector<8x128xf32>
    %cst_87 = arith.constant 1.000000e+00 : f32
    %165 = vector.broadcast %cst_87 : f32 to vector<8x128xf32>
    %166 = arith.addf %165, %164 : vector<8x128xf32>
    %167 = arith.divf %165, %166 : vector<8x128xf32>
    %168 = vector.extract_strided_slice %134 {offsets = [0, 128], sizes = [8, 128], strides = [1, 1]} : vector<8x512xf32> to vector<8x128xf32>
    %169 = arith.negf %168 : vector<8x128xf32>
    %170 = math.exp %169 : vector<8x128xf32>
    %cst_88 = arith.constant 1.000000e+00 : f32
    %171 = vector.broadcast %cst_88 : f32 to vector<8x128xf32>
    %172 = arith.addf %171, %170 : vector<8x128xf32>
    %173 = arith.divf %171, %172 : vector<8x128xf32>
    %174 = vector.extract_strided_slice %134 {offsets = [0, 256], sizes = [8, 128], strides = [1, 1]} : vector<8x512xf32> to vector<8x128xf32>
    %175 = math.tanh %174 : vector<8x128xf32>
    %176 = vector.extract_strided_slice %134 {offsets = [0, 384], sizes = [8, 128], strides = [1, 1]} : vector<8x512xf32> to vector<8x128xf32>
    %177 = arith.negf %176 : vector<8x128xf32>
    %178 = math.exp %177 : vector<8x128xf32>
    %cst_89 = arith.constant 1.000000e+00 : f32
    %179 = vector.broadcast %cst_89 : f32 to vector<8x128xf32>
    %180 = arith.addf %179, %178 : vector<8x128xf32>
    %181 = arith.divf %179, %180 : vector<8x128xf32>
    %182 = arith.mulf %173, %161 : vector<8x128xf32>
    %183 = arith.mulf %167, %175 : vector<8x128xf32>
    %184 = arith.addf %182, %183 : vector<8x128xf32>
    %185 = math.tanh %184 : vector<8x128xf32>
    %186 = arith.mulf %181, %185 : vector<8x128xf32>
    %c0_90 = arith.constant 0 : index
    %c0_91 = arith.constant 0 : index
    %187 = vector.load %arg19[%c0_90, %c0_91] : memref<8x256xf32, #tpu.memory_space<vmem>>, vector<8x128xf32>
    tpu.vector_store %arg19[%c0_90, %c0_91], %158 {strides = array<i32>} : memref<8x256xf32, #tpu.memory_space<vmem>>, vector<8x128xf32>,
    %c0_92 = arith.constant 0 : index
    %c128_93 = arith.constant 128 : index
    %188 = vector.load %arg19[%c0_92, %c128_93] : memref<8x256xf32, #tpu.memory_space<vmem>>, vector<8x128xf32>
    tpu.vector_store %arg19[%c0_92, %c128_93], %184 {strides = array<i32>} : memref<8x256xf32, #tpu.memory_space<vmem>>, vector<8x128xf32>,
    %189 = arith.truncf %160 : vector<8x128xf32> to vector<8x128xbf16>
    %c0_94 = arith.constant 0 : index
    %c0_95 = arith.constant 0 : index
    %190 = vector.load %arg18[%c0_94, %c0_95] : memref<8x256xbf16, #tpu.memory_space<vmem>>, vector<8x128xbf16>
    tpu.vector_store %arg18[%c0_94, %c0_95], %189 {strides = array<i32>} : memref<8x256xbf16, #tpu.memory_space<vmem>>, vector<8x128xbf16>,
    %191 = arith.truncf %186 : vector<8x128xf32> to vector<8x128xbf16>
    %c0_96 = arith.constant 0 : index
    %c128_97 = arith.constant 128 : index
    %192 = vector.load %arg18[%c0_96, %c128_97] : memref<8x256xbf16, #tpu.memory_space<vmem>>, vector<8x128xbf16>
    tpu.vector_store %arg18[%c0_96, %c128_97], %191 {strides = array<i32>} : memref<8x256xbf16, #tpu.memory_space<vmem>>, vector<8x128xbf16>,
    %193 = arith.index_cast %121 : i32 to index
    %c0_98 = arith.constant 0 : index
    %194 = vector.load %arg14[%193, %c0_98] : memref<64x128xf32, #tpu.memory_space<vmem>>, vector<8x128xf32>
    tpu.vector_store %arg14[%193, %c0_98], %160 {strides = array<i32>} : memref<64x128xf32, #tpu.memory_space<vmem>>, vector<8x128xf32>,
    %195 = arith.index_cast %124 : i32 to index
    %c0_99 = arith.constant 0 : index
    %196 = vector.load %arg15[%195, %c0_99] : memref<64x128xf32, #tpu.memory_space<vmem>>, vector<8x128xf32>
    tpu.vector_store %arg15[%195, %c0_99], %186 {strides = array<i32>} : memref<64x128xf32, #tpu.memory_space<vmem>>, vector<8x128xf32>,
    %c2_i32 = arith.constant 2 : i32
    %c8_i32_100 = arith.constant 8 : i32
    %197 = arith.muli %c2_i32, %c8_i32_100 : i32
    %198 = tpu.assume_multiple %197, 8 : i32
    %c7_i32_101 = arith.constant 7 : i32
    %199 = arith.subi %c7_i32_101, %c2_i32 : i32
    %c8_i32_102 = arith.constant 8 : i32
    %200 = arith.muli %199, %c8_i32_102 : i32
    %201 = tpu.assume_multiple %200, 8 : i32
    %c0_103 = arith.constant 0 : index
    %c0_104 = arith.constant 0 : index
    %202 = vector.load %arg18[%c0_103, %c0_104] : memref<8x256xbf16, #tpu.memory_space<vmem>>, vector<8x128xbf16>
    %cst_105 = arith.constant dense<0.000000e+00> : vector<8x512xf32>
    %203 = tpu.matmul %202, %41, %cst_105 {dimension_numbers = #tpu.dot_dimension_numbers<[1], [0], [0], [1], [0, 0, 1, 1], [], []>} : vector<8x128xbf16>, vector<128x512xbf16>, vector<8x512xf32> -> vector<8x512xf32>
    %c0_106 = arith.constant 0 : index
    %c128_107 = arith.constant 128 : index
    %204 = vector.load %arg18[%c0_106, %c128_107] : memref<8x256xbf16, #tpu.memory_space<vmem>>, vector<8x128xbf16>
    %cst_108 = arith.constant dense<0.000000e+00> : vector<8x512xf32>
    %205 = tpu.matmul %204, %42, %cst_108 {dimension_numbers = #tpu.dot_dimension_numbers<[1], [0], [0], [1], [0, 0, 1, 1], [], []>} : vector<8x128xbf16>, vector<128x512xbf16>, vector<8x512xf32> -> vector<8x512xf32>
    %206 = arith.index_cast %198 : i32 to index
    %c0_109 = arith.constant 0 : index
    %207 = vector.load %arg16[%206, %c0_109] : memref<64x512xf32, #tpu.memory_space<vmem>>, vector<8x512xf32>
    %208 = arith.addf %207, %203 : vector<8x512xf32>
    %209 = arith.index_cast %201 : i32 to index
    %c0_110 = arith.constant 0 : index
    %210 = vector.load %arg17[%209, %c0_110] : memref<64x512xf32, #tpu.memory_space<vmem>>, vector<8x512xf32>
    %211 = arith.addf %210, %205 : vector<8x512xf32>
    %c0_111 = arith.constant 0 : index
    %c0_112 = arith.constant 0 : index
    %212 = vector.load %arg19[%c0_111, %c0_112] : memref<8x256xf32, #tpu.memory_space<vmem>>, vector<8x128xf32>
    %213 = vector.extract_strided_slice %208 {offsets = [0, 0], sizes = [8, 128], strides = [1, 1]} : vector<8x512xf32> to vector<8x128xf32>
    %214 = arith.negf %213 : vector<8x128xf32>
    %215 = math.exp %214 : vector<8x128xf32>
    %cst_113 = arith.constant 1.000000e+00 : f32
    %216 = vector.broadcast %cst_113 : f32 to vector<8x128xf32>
    %217 = arith.addf %216, %215 : vector<8x128xf32>
    %218 = arith.divf %216, %217 : vector<8x128xf32>
    %219 = vector.extract_strided_slice %208 {offsets = [0, 128], sizes = [8, 128], strides = [1, 1]} : vector<8x512xf32> to vector<8x128xf32>
    %220 = arith.negf %219 : vector<8x128xf32>
    %221 = math.exp %220 : vector<8x128xf32>
    %cst_114 = arith.constant 1.000000e+00 : f32
    %222 = vector.broadcast %cst_114 : f32 to vector<8x128xf32>
    %223 = arith.addf %222, %221 : vector<8x128xf32>
    %224 = arith.divf %222, %223 : vector<8x128xf32>
    %225 = vector.extract_strided_slice %208 {offsets = [0, 256], sizes = [8, 128], strides = [1, 1]} : vector<8x512xf32> to vector<8x128xf32>
    %226 = math.tanh %225 : vector<8x128xf32>
    %227 = vector.extract_strided_slice %208 {offsets = [0, 384], sizes = [8, 128], strides = [1, 1]} : vector<8x512xf32> to vector<8x128xf32>
    %228 = arith.negf %227 : vector<8x128xf32>
    %229 = math.exp %228 : vector<8x128xf32>
    %cst_115 = arith.constant 1.000000e+00 : f32
    %230 = vector.broadcast %cst_115 : f32 to vector<8x128xf32>
    %231 = arith.addf %230, %229 : vector<8x128xf32>
    %232 = arith.divf %230, %231 : vector<8x128xf32>
    %233 = arith.mulf %224, %212 : vector<8x128xf32>
    %234 = arith.mulf %218, %226 : vector<8x128xf32>
    %235 = arith.addf %233, %234 : vector<8x128xf32>
    %236 = math.tanh %235 : vector<8x128xf32>
    %237 = arith.mulf %232, %236 : vector<8x128xf32>
    %c0_116 = arith.constant 0 : index
    %c128_117 = arith.constant 128 : index
    %238 = vector.load %arg19[%c0_116, %c128_117] : memref<8x256xf32, #tpu.memory_space<vmem>>, vector<8x128xf32>
    %239 = vector.extract_strided_slice %211 {offsets = [0, 0], sizes = [8, 128], strides = [1, 1]} : vector<8x512xf32> to vector<8x128xf32>
    %240 = arith.negf %239 : vector<8x128xf32>
    %241 = math.exp %240 : vector<8x128xf32>
    %cst_118 = arith.constant 1.000000e+00 : f32
    %242 = vector.broadcast %cst_118 : f32 to vector<8x128xf32>
    %243 = arith.addf %242, %241 : vector<8x128xf32>
    %244 = arith.divf %242, %243 : vector<8x128xf32>
    %245 = vector.extract_strided_slice %211 {offsets = [0, 128], sizes = [8, 128], strides = [1, 1]} : vector<8x512xf32> to vector<8x128xf32>
    %246 = arith.negf %245 : vector<8x128xf32>
    %247 = math.exp %246 : vector<8x128xf32>
    %cst_119 = arith.constant 1.000000e+00 : f32
    %248 = vector.broadcast %cst_119 : f32 to vector<8x128xf32>
    %249 = arith.addf %248, %247 : vector<8x128xf32>
    %250 = arith.divf %248, %249 : vector<8x128xf32>
    %251 = vector.extract_strided_slice %211 {offsets = [0, 256], sizes = [8, 128], strides = [1, 1]} : vector<8x512xf32> to vector<8x128xf32>
    %252 = math.tanh %251 : vector<8x128xf32>
    %253 = vector.extract_strided_slice %211 {offsets = [0, 384], sizes = [8, 128], strides = [1, 1]} : vector<8x512xf32> to vector<8x128xf32>
    %254 = arith.negf %253 : vector<8x128xf32>
    %255 = math.exp %254 : vector<8x128xf32>
    %cst_120 = arith.constant 1.000000e+00 : f32
    %256 = vector.broadcast %cst_120 : f32 to vector<8x128xf32>
    %257 = arith.addf %256, %255 : vector<8x128xf32>
    %258 = arith.divf %256, %257 : vector<8x128xf32>
    %259 = arith.mulf %250, %238 : vector<8x128xf32>
    %260 = arith.mulf %244, %252 : vector<8x128xf32>
    %261 = arith.addf %259, %260 : vector<8x128xf32>
    %262 = math.tanh %261 : vector<8x128xf32>
    %263 = arith.mulf %258, %262 : vector<8x128xf32>
    %c0_121 = arith.constant 0 : index
    %c0_122 = arith.constant 0 : index
    %264 = vector.load %arg19[%c0_121, %c0_122] : memref<8x256xf32, #tpu.memory_space<vmem>>, vector<8x128xf32>
    tpu.vector_store %arg19[%c0_121, %c0_122], %235 {strides = array<i32>} : memref<8x256xf32, #tpu.memory_space<vmem>>, vector<8x128xf32>,
    %c0_123 = arith.constant 0 : index
    %c128_124 = arith.constant 128 : index
    %265 = vector.load %arg19[%c0_123, %c128_124] : memref<8x256xf32, #tpu.memory_space<vmem>>, vector<8x128xf32>
    tpu.vector_store %arg19[%c0_123, %c128_124], %261 {strides = array<i32>} : memref<8x256xf32, #tpu.memory_space<vmem>>, vector<8x128xf32>,
    %266 = arith.truncf %237 : vector<8x128xf32> to vector<8x128xbf16>
    %c0_125 = arith.constant 0 : index
    %c0_126 = arith.constant 0 : index
    %267 = vector.load %arg18[%c0_125, %c0_126] : memref<8x256xbf16, #tpu.memory_space<vmem>>, vector<8x128xbf16>
    tpu.vector_store %arg18[%c0_125, %c0_126], %266 {strides = array<i32>} : memref<8x256xbf16, #tpu.memory_space<vmem>>, vector<8x128xbf16>,
    %268 = arith.truncf %263 : vector<8x128xf32> to vector<8x128xbf16>
    %c0_127 = arith.constant 0 : index
    %c128_128 = arith.constant 128 : index
    %269 = vector.load %arg18[%c0_127, %c128_128] : memref<8x256xbf16, #tpu.memory_space<vmem>>, vector<8x128xbf16>
    tpu.vector_store %arg18[%c0_127, %c128_128], %268 {strides = array<i32>} : memref<8x256xbf16, #tpu.memory_space<vmem>>, vector<8x128xbf16>,
    %270 = arith.index_cast %198 : i32 to index
    %c0_129 = arith.constant 0 : index
    %271 = vector.load %arg14[%270, %c0_129] : memref<64x128xf32, #tpu.memory_space<vmem>>, vector<8x128xf32>
    tpu.vector_store %arg14[%270, %c0_129], %237 {strides = array<i32>} : memref<64x128xf32, #tpu.memory_space<vmem>>, vector<8x128xf32>,
    %272 = arith.index_cast %201 : i32 to index
    %c0_130 = arith.constant 0 : index
    %273 = vector.load %arg15[%272, %c0_130] : memref<64x128xf32, #tpu.memory_space<vmem>>, vector<8x128xf32>
    tpu.vector_store %arg15[%272, %c0_130], %263 {strides = array<i32>} : memref<64x128xf32, #tpu.memory_space<vmem>>, vector<8x128xf32>,
    %c3_i32 = arith.constant 3 : i32
    %c8_i32_131 = arith.constant 8 : i32
    %274 = arith.muli %c3_i32, %c8_i32_131 : i32
    %275 = tpu.assume_multiple %274, 8 : i32
    %c7_i32_132 = arith.constant 7 : i32
    %276 = arith.subi %c7_i32_132, %c3_i32 : i32
    %c8_i32_133 = arith.constant 8 : i32
    %277 = arith.muli %276, %c8_i32_133 : i32
    %278 = tpu.assume_multiple %277, 8 : i32
    %c0_134 = arith.constant 0 : index
    %c0_135 = arith.constant 0 : index
    %279 = vector.load %arg18[%c0_134, %c0_135] : memref<8x256xbf16, #tpu.memory_space<vmem>>, vector<8x128xbf16>
    %cst_136 = arith.constant dense<0.000000e+00> : vector<8x512xf32>
    %280 = tpu.matmul %279, %41, %cst_136 {dimension_numbers = #tpu.dot_dimension_numbers<[1], [0], [0], [1], [0, 0, 1, 1], [], []>} : vector<8x128xbf16>, vector<128x512xbf16>, vector<8x512xf32> -> vector<8x512xf32>
    %c0_137 = arith.constant 0 : index
    %c128_138 = arith.constant 128 : index
    %281 = vector.load %arg18[%c0_137, %c128_138] : memref<8x256xbf16, #tpu.memory_space<vmem>>, vector<8x128xbf16>
    %cst_139 = arith.constant dense<0.000000e+00> : vector<8x512xf32>
    %282 = tpu.matmul %281, %42, %cst_139 {dimension_numbers = #tpu.dot_dimension_numbers<[1], [0], [0], [1], [0, 0, 1, 1], [], []>} : vector<8x128xbf16>, vector<128x512xbf16>, vector<8x512xf32> -> vector<8x512xf32>
    %283 = arith.index_cast %275 : i32 to index
    %c0_140 = arith.constant 0 : index
    %284 = vector.load %arg16[%283, %c0_140] : memref<64x512xf32, #tpu.memory_space<vmem>>, vector<8x512xf32>
    %285 = arith.addf %284, %280 : vector<8x512xf32>
    %286 = arith.index_cast %278 : i32 to index
    %c0_141 = arith.constant 0 : index
    %287 = vector.load %arg17[%286, %c0_141] : memref<64x512xf32, #tpu.memory_space<vmem>>, vector<8x512xf32>
    %288 = arith.addf %287, %282 : vector<8x512xf32>
    %c0_142 = arith.constant 0 : index
    %c0_143 = arith.constant 0 : index
    %289 = vector.load %arg19[%c0_142, %c0_143] : memref<8x256xf32, #tpu.memory_space<vmem>>, vector<8x128xf32>
    %290 = vector.extract_strided_slice %285 {offsets = [0, 0], sizes = [8, 128], strides = [1, 1]} : vector<8x512xf32> to vector<8x128xf32>
    %291 = arith.negf %290 : vector<8x128xf32>
    %292 = math.exp %291 : vector<8x128xf32>
    %cst_144 = arith.constant 1.000000e+00 : f32
    %293 = vector.broadcast %cst_144 : f32 to vector<8x128xf32>
    %294 = arith.addf %293, %292 : vector<8x128xf32>
    %295 = arith.divf %293, %294 : vector<8x128xf32>
    %296 = vector.extract_strided_slice %285 {offsets = [0, 128], sizes = [8, 128], strides = [1, 1]} : vector<8x512xf32> to vector<8x128xf32>
    %297 = arith.negf %296 : vector<8x128xf32>
    %298 = math.exp %297 : vector<8x128xf32>
    %cst_145 = arith.constant 1.000000e+00 : f32
    %299 = vector.broadcast %cst_145 : f32 to vector<8x128xf32>
    %300 = arith.addf %299, %298 : vector<8x128xf32>
    %301 = arith.divf %299, %300 : vector<8x128xf32>
    %302 = vector.extract_strided_slice %285 {offsets = [0, 256], sizes = [8, 128], strides = [1, 1]} : vector<8x512xf32> to vector<8x128xf32>
    %303 = math.tanh %302 : vector<8x128xf32>
    %304 = vector.extract_strided_slice %285 {offsets = [0, 384], sizes = [8, 128], strides = [1, 1]} : vector<8x512xf32> to vector<8x128xf32>
    %305 = arith.negf %304 : vector<8x128xf32>
    %306 = math.exp %305 : vector<8x128xf32>
    %cst_146 = arith.constant 1.000000e+00 : f32
    %307 = vector.broadcast %cst_146 : f32 to vector<8x128xf32>
    %308 = arith.addf %307, %306 : vector<8x128xf32>
    %309 = arith.divf %307, %308 : vector<8x128xf32>
    %310 = arith.mulf %301, %289 : vector<8x128xf32>
    %311 = arith.mulf %295, %303 : vector<8x128xf32>
    %312 = arith.addf %310, %311 : vector<8x128xf32>
    %313 = math.tanh %312 : vector<8x128xf32>
    %314 = arith.mulf %309, %313 : vector<8x128xf32>
    %c0_147 = arith.constant 0 : index
    %c128_148 = arith.constant 128 : index
    %315 = vector.load %arg19[%c0_147, %c128_148] : memref<8x256xf32, #tpu.memory_space<vmem>>, vector<8x128xf32>
    %316 = vector.extract_strided_slice %288 {offsets = [0, 0], sizes = [8, 128], strides = [1, 1]} : vector<8x512xf32> to vector<8x128xf32>
    %317 = arith.negf %316 : vector<8x128xf32>
    %318 = math.exp %317 : vector<8x128xf32>
    %cst_149 = arith.constant 1.000000e+00 : f32
    %319 = vector.broadcast %cst_149 : f32 to vector<8x128xf32>
    %320 = arith.addf %319, %318 : vector<8x128xf32>
    %321 = arith.divf %319, %320 : vector<8x128xf32>
    %322 = vector.extract_strided_slice %288 {offsets = [0, 128], sizes = [8, 128], strides = [1, 1]} : vector<8x512xf32> to vector<8x128xf32>
    %323 = arith.negf %322 : vector<8x128xf32>
    %324 = math.exp %323 : vector<8x128xf32>
    %cst_150 = arith.constant 1.000000e+00 : f32
    %325 = vector.broadcast %cst_150 : f32 to vector<8x128xf32>
    %326 = arith.addf %325, %324 : vector<8x128xf32>
    %327 = arith.divf %325, %326 : vector<8x128xf32>
    %328 = vector.extract_strided_slice %288 {offsets = [0, 256], sizes = [8, 128], strides = [1, 1]} : vector<8x512xf32> to vector<8x128xf32>
    %329 = math.tanh %328 : vector<8x128xf32>
    %330 = vector.extract_strided_slice %288 {offsets = [0, 384], sizes = [8, 128], strides = [1, 1]} : vector<8x512xf32> to vector<8x128xf32>
    %331 = arith.negf %330 : vector<8x128xf32>
    %332 = math.exp %331 : vector<8x128xf32>
    %cst_151 = arith.constant 1.000000e+00 : f32
    %333 = vector.broadcast %cst_151 : f32 to vector<8x128xf32>
    %334 = arith.addf %333, %332 : vector<8x128xf32>
    %335 = arith.divf %333, %334 : vector<8x128xf32>
    %336 = arith.mulf %327, %315 : vector<8x128xf32>
    %337 = arith.mulf %321, %329 : vector<8x128xf32>
    %338 = arith.addf %336, %337 : vector<8x128xf32>
    %339 = math.tanh %338 : vector<8x128xf32>
    %340 = arith.mulf %335, %339 : vector<8x128xf32>
    %c0_152 = arith.constant 0 : index
    %c0_153 = arith.constant 0 : index
    %341 = vector.load %arg19[%c0_152, %c0_153] : memref<8x256xf32, #tpu.memory_space<vmem>>, vector<8x128xf32>
    tpu.vector_store %arg19[%c0_152, %c0_153], %312 {strides = array<i32>} : memref<8x256xf32, #tpu.memory_space<vmem>>, vector<8x128xf32>,
    %c0_154 = arith.constant 0 : index
    %c128_155 = arith.constant 128 : index
    %342 = vector.load %arg19[%c0_154, %c128_155] : memref<8x256xf32, #tpu.memory_space<vmem>>, vector<8x128xf32>
    tpu.vector_store %arg19[%c0_154, %c128_155], %338 {strides = array<i32>} : memref<8x256xf32, #tpu.memory_space<vmem>>, vector<8x128xf32>,
    %343 = arith.truncf %314 : vector<8x128xf32> to vector<8x128xbf16>
    %c0_156 = arith.constant 0 : index
    %c0_157 = arith.constant 0 : index
    %344 = vector.load %arg18[%c0_156, %c0_157] : memref<8x256xbf16, #tpu.memory_space<vmem>>, vector<8x128xbf16>
    tpu.vector_store %arg18[%c0_156, %c0_157], %343 {strides = array<i32>} : memref<8x256xbf16, #tpu.memory_space<vmem>>, vector<8x128xbf16>,
    %345 = arith.truncf %340 : vector<8x128xf32> to vector<8x128xbf16>
    %c0_158 = arith.constant 0 : index
    %c128_159 = arith.constant 128 : index
    %346 = vector.load %arg18[%c0_158, %c128_159] : memref<8x256xbf16, #tpu.memory_space<vmem>>, vector<8x128xbf16>
    tpu.vector_store %arg18[%c0_158, %c128_159], %345 {strides = array<i32>} : memref<8x256xbf16, #tpu.memory_space<vmem>>, vector<8x128xbf16>,
    %347 = arith.index_cast %275 : i32 to index
    %c0_160 = arith.constant 0 : index
    %348 = vector.load %arg14[%347, %c0_160] : memref<64x128xf32, #tpu.memory_space<vmem>>, vector<8x128xf32>
    tpu.vector_store %arg14[%347, %c0_160], %314 {strides = array<i32>} : memref<64x128xf32, #tpu.memory_space<vmem>>, vector<8x128xf32>,
    %349 = arith.index_cast %278 : i32 to index
    %c0_161 = arith.constant 0 : index
    %350 = vector.load %arg15[%349, %c0_161] : memref<64x128xf32, #tpu.memory_space<vmem>>, vector<8x128xf32>
    tpu.vector_store %arg15[%349, %c0_161], %340 {strides = array<i32>} : memref<64x128xf32, #tpu.memory_space<vmem>>, vector<8x128xf32>,
    %c4_i32 = arith.constant 4 : i32
    %c8_i32_162 = arith.constant 8 : i32
    %351 = arith.muli %c4_i32, %c8_i32_162 : i32
    %352 = tpu.assume_multiple %351, 8 : i32
    %c7_i32_163 = arith.constant 7 : i32
    %353 = arith.subi %c7_i32_163, %c4_i32 : i32
    %c8_i32_164 = arith.constant 8 : i32
    %354 = arith.muli %353, %c8_i32_164 : i32
    %355 = tpu.assume_multiple %354, 8 : i32
    %c0_165 = arith.constant 0 : index
    %c0_166 = arith.constant 0 : index
    %356 = vector.load %arg18[%c0_165, %c0_166] : memref<8x256xbf16, #tpu.memory_space<vmem>>, vector<8x128xbf16>
    %cst_167 = arith.constant dense<0.000000e+00> : vector<8x512xf32>
    %357 = tpu.matmul %356, %41, %cst_167 {dimension_numbers = #tpu.dot_dimension_numbers<[1], [0], [0], [1], [0, 0, 1, 1], [], []>} : vector<8x128xbf16>, vector<128x512xbf16>, vector<8x512xf32> -> vector<8x512xf32>
    %c0_168 = arith.constant 0 : index
    %c128_169 = arith.constant 128 : index
    %358 = vector.load %arg18[%c0_168, %c128_169] : memref<8x256xbf16, #tpu.memory_space<vmem>>, vector<8x128xbf16>
    %cst_170 = arith.constant dense<0.000000e+00> : vector<8x512xf32>
    %359 = tpu.matmul %358, %42, %cst_170 {dimension_numbers = #tpu.dot_dimension_numbers<[1], [0], [0], [1], [0, 0, 1, 1], [], []>} : vector<8x128xbf16>, vector<128x512xbf16>, vector<8x512xf32> -> vector<8x512xf32>
    %360 = arith.index_cast %352 : i32 to index
    %c0_171 = arith.constant 0 : index
    %361 = vector.load %arg16[%360, %c0_171] : memref<64x512xf32, #tpu.memory_space<vmem>>, vector<8x512xf32>
    %362 = arith.addf %361, %357 : vector<8x512xf32>
    %363 = arith.index_cast %355 : i32 to index
    %c0_172 = arith.constant 0 : index
    %364 = vector.load %arg17[%363, %c0_172] : memref<64x512xf32, #tpu.memory_space<vmem>>, vector<8x512xf32>
    %365 = arith.addf %364, %359 : vector<8x512xf32>
    %c0_173 = arith.constant 0 : index
    %c0_174 = arith.constant 0 : index
    %366 = vector.load %arg19[%c0_173, %c0_174] : memref<8x256xf32, #tpu.memory_space<vmem>>, vector<8x128xf32>
    %367 = vector.extract_strided_slice %362 {offsets = [0, 0], sizes = [8, 128], strides = [1, 1]} : vector<8x512xf32> to vector<8x128xf32>
    %368 = arith.negf %367 : vector<8x128xf32>
    %369 = math.exp %368 : vector<8x128xf32>
    %cst_175 = arith.constant 1.000000e+00 : f32
    %370 = vector.broadcast %cst_175 : f32 to vector<8x128xf32>
    %371 = arith.addf %370, %369 : vector<8x128xf32>
    %372 = arith.divf %370, %371 : vector<8x128xf32>
    %373 = vector.extract_strided_slice %362 {offsets = [0, 128], sizes = [8, 128], strides = [1, 1]} : vector<8x512xf32> to vector<8x128xf32>
    %374 = arith.negf %373 : vector<8x128xf32>
    %375 = math.exp %374 : vector<8x128xf32>
    %cst_176 = arith.constant 1.000000e+00 : f32
    %376 = vector.broadcast %cst_176 : f32 to vector<8x128xf32>
    %377 = arith.addf %376, %375 : vector<8x128xf32>
    %378 = arith.divf %376, %377 : vector<8x128xf32>
    %379 = vector.extract_strided_slice %362 {offsets = [0, 256], sizes = [8, 128], strides = [1, 1]} : vector<8x512xf32> to vector<8x128xf32>
    %380 = math.tanh %379 : vector<8x128xf32>
    %381 = vector.extract_strided_slice %362 {offsets = [0, 384], sizes = [8, 128], strides = [1, 1]} : vector<8x512xf32> to vector<8x128xf32>
    %382 = arith.negf %381 : vector<8x128xf32>
    %383 = math.exp %382 : vector<8x128xf32>
    %cst_177 = arith.constant 1.000000e+00 : f32
    %384 = vector.broadcast %cst_177 : f32 to vector<8x128xf32>
    %385 = arith.addf %384, %383 : vector<8x128xf32>
    %386 = arith.divf %384, %385 : vector<8x128xf32>
    %387 = arith.mulf %378, %366 : vector<8x128xf32>
    %388 = arith.mulf %372, %380 : vector<8x128xf32>
    %389 = arith.addf %387, %388 : vector<8x128xf32>
    %390 = math.tanh %389 : vector<8x128xf32>
    %391 = arith.mulf %386, %390 : vector<8x128xf32>
    %c0_178 = arith.constant 0 : index
    %c128_179 = arith.constant 128 : index
    %392 = vector.load %arg19[%c0_178, %c128_179] : memref<8x256xf32, #tpu.memory_space<vmem>>, vector<8x128xf32>
    %393 = vector.extract_strided_slice %365 {offsets = [0, 0], sizes = [8, 128], strides = [1, 1]} : vector<8x512xf32> to vector<8x128xf32>
    %394 = arith.negf %393 : vector<8x128xf32>
    %395 = math.exp %394 : vector<8x128xf32>
    %cst_180 = arith.constant 1.000000e+00 : f32
    %396 = vector.broadcast %cst_180 : f32 to vector<8x128xf32>
    %397 = arith.addf %396, %395 : vector<8x128xf32>
    %398 = arith.divf %396, %397 : vector<8x128xf32>
    %399 = vector.extract_strided_slice %365 {offsets = [0, 128], sizes = [8, 128], strides = [1, 1]} : vector<8x512xf32> to vector<8x128xf32>
    %400 = arith.negf %399 : vector<8x128xf32>
    %401 = math.exp %400 : vector<8x128xf32>
    %cst_181 = arith.constant 1.000000e+00 : f32
    %402 = vector.broadcast %cst_181 : f32 to vector<8x128xf32>
    %403 = arith.addf %402, %401 : vector<8x128xf32>
    %404 = arith.divf %402, %403 : vector<8x128xf32>
    %405 = vector.extract_strided_slice %365 {offsets = [0, 256], sizes = [8, 128], strides = [1, 1]} : vector<8x512xf32> to vector<8x128xf32>
    %406 = math.tanh %405 : vector<8x128xf32>
    %407 = vector.extract_strided_slice %365 {offsets = [0, 384], sizes = [8, 128], strides = [1, 1]} : vector<8x512xf32> to vector<8x128xf32>
    %408 = arith.negf %407 : vector<8x128xf32>
    %409 = math.exp %408 : vector<8x128xf32>
    %cst_182 = arith.constant 1.000000e+00 : f32
    %410 = vector.broadcast %cst_182 : f32 to vector<8x128xf32>
    %411 = arith.addf %410, %409 : vector<8x128xf32>
    %412 = arith.divf %410, %411 : vector<8x128xf32>
    %413 = arith.mulf %404, %392 : vector<8x128xf32>
    %414 = arith.mulf %398, %406 : vector<8x128xf32>
    %415 = arith.addf %413, %414 : vector<8x128xf32>
    %416 = math.tanh %415 : vector<8x128xf32>
    %417 = arith.mulf %412, %416 : vector<8x128xf32>
    %c0_183 = arith.constant 0 : index
    %c0_184 = arith.constant 0 : index
    %418 = vector.load %arg19[%c0_183, %c0_184] : memref<8x256xf32, #tpu.memory_space<vmem>>, vector<8x128xf32>
    tpu.vector_store %arg19[%c0_183, %c0_184], %389 {strides = array<i32>} : memref<8x256xf32, #tpu.memory_space<vmem>>, vector<8x128xf32>,
    %c0_185 = arith.constant 0 : index
    %c128_186 = arith.constant 128 : index
    %419 = vector.load %arg19[%c0_185, %c128_186] : memref<8x256xf32, #tpu.memory_space<vmem>>, vector<8x128xf32>
    tpu.vector_store %arg19[%c0_185, %c128_186], %415 {strides = array<i32>} : memref<8x256xf32, #tpu.memory_space<vmem>>, vector<8x128xf32>,
    %420 = arith.truncf %391 : vector<8x128xf32> to vector<8x128xbf16>
    %c0_187 = arith.constant 0 : index
    %c0_188 = arith.constant 0 : index
    %421 = vector.load %arg18[%c0_187, %c0_188] : memref<8x256xbf16, #tpu.memory_space<vmem>>, vector<8x128xbf16>
    tpu.vector_store %arg18[%c0_187, %c0_188], %420 {strides = array<i32>} : memref<8x256xbf16, #tpu.memory_space<vmem>>, vector<8x128xbf16>,
    %422 = arith.truncf %417 : vector<8x128xf32> to vector<8x128xbf16>
    %c0_189 = arith.constant 0 : index
    %c128_190 = arith.constant 128 : index
    %423 = vector.load %arg18[%c0_189, %c128_190] : memref<8x256xbf16, #tpu.memory_space<vmem>>, vector<8x128xbf16>
    tpu.vector_store %arg18[%c0_189, %c128_190], %422 {strides = array<i32>} : memref<8x256xbf16, #tpu.memory_space<vmem>>, vector<8x128xbf16>,
    %424 = arith.index_cast %352 : i32 to index
    %c0_191 = arith.constant 0 : index
    %425 = vector.load %arg14[%424, %c0_191] : memref<64x128xf32, #tpu.memory_space<vmem>>, vector<8x128xf32>
    tpu.vector_store %arg14[%424, %c0_191], %391 {strides = array<i32>} : memref<64x128xf32, #tpu.memory_space<vmem>>, vector<8x128xf32>,
    %426 = arith.index_cast %355 : i32 to index
    %c0_192 = arith.constant 0 : index
    %427 = vector.load %arg15[%426, %c0_192] : memref<64x128xf32, #tpu.memory_space<vmem>>, vector<8x128xf32>
    tpu.vector_store %arg15[%426, %c0_192], %417 {strides = array<i32>} : memref<64x128xf32, #tpu.memory_space<vmem>>, vector<8x128xf32>,
    %c5_i32 = arith.constant 5 : i32
    %c8_i32_193 = arith.constant 8 : i32
    %428 = arith.muli %c5_i32, %c8_i32_193 : i32
    %429 = tpu.assume_multiple %428, 8 : i32
    %c7_i32_194 = arith.constant 7 : i32
    %430 = arith.subi %c7_i32_194, %c5_i32 : i32
    %c8_i32_195 = arith.constant 8 : i32
    %431 = arith.muli %430, %c8_i32_195 : i32
    %432 = tpu.assume_multiple %431, 8 : i32
    %c0_196 = arith.constant 0 : index
    %c0_197 = arith.constant 0 : index
    %433 = vector.load %arg18[%c0_196, %c0_197] : memref<8x256xbf16, #tpu.memory_space<vmem>>, vector<8x128xbf16>
    %cst_198 = arith.constant dense<0.000000e+00> : vector<8x512xf32>
    %434 = tpu.matmul %433, %41, %cst_198 {dimension_numbers = #tpu.dot_dimension_numbers<[1], [0], [0], [1], [0, 0, 1, 1], [], []>} : vector<8x128xbf16>, vector<128x512xbf16>, vector<8x512xf32> -> vector<8x512xf32>
    %c0_199 = arith.constant 0 : index
    %c128_200 = arith.constant 128 : index
    %435 = vector.load %arg18[%c0_199, %c128_200] : memref<8x256xbf16, #tpu.memory_space<vmem>>, vector<8x128xbf16>
    %cst_201 = arith.constant dense<0.000000e+00> : vector<8x512xf32>
    %436 = tpu.matmul %435, %42, %cst_201 {dimension_numbers = #tpu.dot_dimension_numbers<[1], [0], [0], [1], [0, 0, 1, 1], [], []>} : vector<8x128xbf16>, vector<128x512xbf16>, vector<8x512xf32> -> vector<8x512xf32>
    %437 = arith.index_cast %429 : i32 to index
    %c0_202 = arith.constant 0 : index
    %438 = vector.load %arg16[%437, %c0_202] : memref<64x512xf32, #tpu.memory_space<vmem>>, vector<8x512xf32>
    %439 = arith.addf %438, %434 : vector<8x512xf32>
    %440 = arith.index_cast %432 : i32 to index
    %c0_203 = arith.constant 0 : index
    %441 = vector.load %arg17[%440, %c0_203] : memref<64x512xf32, #tpu.memory_space<vmem>>, vector<8x512xf32>
    %442 = arith.addf %441, %436 : vector<8x512xf32>
    %c0_204 = arith.constant 0 : index
    %c0_205 = arith.constant 0 : index
    %443 = vector.load %arg19[%c0_204, %c0_205] : memref<8x256xf32, #tpu.memory_space<vmem>>, vector<8x128xf32>
    %444 = vector.extract_strided_slice %439 {offsets = [0, 0], sizes = [8, 128], strides = [1, 1]} : vector<8x512xf32> to vector<8x128xf32>
    %445 = arith.negf %444 : vector<8x128xf32>
    %446 = math.exp %445 : vector<8x128xf32>
    %cst_206 = arith.constant 1.000000e+00 : f32
    %447 = vector.broadcast %cst_206 : f32 to vector<8x128xf32>
    %448 = arith.addf %447, %446 : vector<8x128xf32>
    %449 = arith.divf %447, %448 : vector<8x128xf32>
    %450 = vector.extract_strided_slice %439 {offsets = [0, 128], sizes = [8, 128], strides = [1, 1]} : vector<8x512xf32> to vector<8x128xf32>
    %451 = arith.negf %450 : vector<8x128xf32>
    %452 = math.exp %451 : vector<8x128xf32>
    %cst_207 = arith.constant 1.000000e+00 : f32
    %453 = vector.broadcast %cst_207 : f32 to vector<8x128xf32>
    %454 = arith.addf %453, %452 : vector<8x128xf32>
    %455 = arith.divf %453, %454 : vector<8x128xf32>
    %456 = vector.extract_strided_slice %439 {offsets = [0, 256], sizes = [8, 128], strides = [1, 1]} : vector<8x512xf32> to vector<8x128xf32>
    %457 = math.tanh %456 : vector<8x128xf32>
    %458 = vector.extract_strided_slice %439 {offsets = [0, 384], sizes = [8, 128], strides = [1, 1]} : vector<8x512xf32> to vector<8x128xf32>
    %459 = arith.negf %458 : vector<8x128xf32>
    %460 = math.exp %459 : vector<8x128xf32>
    %cst_208 = arith.constant 1.000000e+00 : f32
    %461 = vector.broadcast %cst_208 : f32 to vector<8x128xf32>
    %462 = arith.addf %461, %460 : vector<8x128xf32>
    %463 = arith.divf %461, %462 : vector<8x128xf32>
    %464 = arith.mulf %455, %443 : vector<8x128xf32>
    %465 = arith.mulf %449, %457 : vector<8x128xf32>
    %466 = arith.addf %464, %465 : vector<8x128xf32>
    %467 = math.tanh %466 : vector<8x128xf32>
    %468 = arith.mulf %463, %467 : vector<8x128xf32>
    %c0_209 = arith.constant 0 : index
    %c128_210 = arith.constant 128 : index
    %469 = vector.load %arg19[%c0_209, %c128_210] : memref<8x256xf32, #tpu.memory_space<vmem>>, vector<8x128xf32>
    %470 = vector.extract_strided_slice %442 {offsets = [0, 0], sizes = [8, 128], strides = [1, 1]} : vector<8x512xf32> to vector<8x128xf32>
    %471 = arith.negf %470 : vector<8x128xf32>
    %472 = math.exp %471 : vector<8x128xf32>
    %cst_211 = arith.constant 1.000000e+00 : f32
    %473 = vector.broadcast %cst_211 : f32 to vector<8x128xf32>
    %474 = arith.addf %473, %472 : vector<8x128xf32>
    %475 = arith.divf %473, %474 : vector<8x128xf32>
    %476 = vector.extract_strided_slice %442 {offsets = [0, 128], sizes = [8, 128], strides = [1, 1]} : vector<8x512xf32> to vector<8x128xf32>
    %477 = arith.negf %476 : vector<8x128xf32>
    %478 = math.exp %477 : vector<8x128xf32>
    %cst_212 = arith.constant 1.000000e+00 : f32
    %479 = vector.broadcast %cst_212 : f32 to vector<8x128xf32>
    %480 = arith.addf %479, %478 : vector<8x128xf32>
    %481 = arith.divf %479, %480 : vector<8x128xf32>
    %482 = vector.extract_strided_slice %442 {offsets = [0, 256], sizes = [8, 128], strides = [1, 1]} : vector<8x512xf32> to vector<8x128xf32>
    %483 = math.tanh %482 : vector<8x128xf32>
    %484 = vector.extract_strided_slice %442 {offsets = [0, 384], sizes = [8, 128], strides = [1, 1]} : vector<8x512xf32> to vector<8x128xf32>
    %485 = arith.negf %484 : vector<8x128xf32>
    %486 = math.exp %485 : vector<8x128xf32>
    %cst_213 = arith.constant 1.000000e+00 : f32
    %487 = vector.broadcast %cst_213 : f32 to vector<8x128xf32>
    %488 = arith.addf %487, %486 : vector<8x128xf32>
    %489 = arith.divf %487, %488 : vector<8x128xf32>
    %490 = arith.mulf %481, %469 : vector<8x128xf32>
    %491 = arith.mulf %475, %483 : vector<8x128xf32>
    %492 = arith.addf %490, %491 : vector<8x128xf32>
    %493 = math.tanh %492 : vector<8x128xf32>
    %494 = arith.mulf %489, %493 : vector<8x128xf32>
    %c0_214 = arith.constant 0 : index
    %c0_215 = arith.constant 0 : index
    %495 = vector.load %arg19[%c0_214, %c0_215] : memref<8x256xf32, #tpu.memory_space<vmem>>, vector<8x128xf32>
    tpu.vector_store %arg19[%c0_214, %c0_215], %466 {strides = array<i32>} : memref<8x256xf32, #tpu.memory_space<vmem>>, vector<8x128xf32>,
    %c0_216 = arith.constant 0 : index
    %c128_217 = arith.constant 128 : index
    %496 = vector.load %arg19[%c0_216, %c128_217] : memref<8x256xf32, #tpu.memory_space<vmem>>, vector<8x128xf32>
    tpu.vector_store %arg19[%c0_216, %c128_217], %492 {strides = array<i32>} : memref<8x256xf32, #tpu.memory_space<vmem>>, vector<8x128xf32>,
    %497 = arith.truncf %468 : vector<8x128xf32> to vector<8x128xbf16>
    %c0_218 = arith.constant 0 : index
    %c0_219 = arith.constant 0 : index
    %498 = vector.load %arg18[%c0_218, %c0_219] : memref<8x256xbf16, #tpu.memory_space<vmem>>, vector<8x128xbf16>
    tpu.vector_store %arg18[%c0_218, %c0_219], %497 {strides = array<i32>} : memref<8x256xbf16, #tpu.memory_space<vmem>>, vector<8x128xbf16>,
    %499 = arith.truncf %494 : vector<8x128xf32> to vector<8x128xbf16>
    %c0_220 = arith.constant 0 : index
    %c128_221 = arith.constant 128 : index
    %500 = vector.load %arg18[%c0_220, %c128_221] : memref<8x256xbf16, #tpu.memory_space<vmem>>, vector<8x128xbf16>
    tpu.vector_store %arg18[%c0_220, %c128_221], %499 {strides = array<i32>} : memref<8x256xbf16, #tpu.memory_space<vmem>>, vector<8x128xbf16>,
    %501 = arith.index_cast %429 : i32 to index
    %c0_222 = arith.constant 0 : index
    %502 = vector.load %arg14[%501, %c0_222] : memref<64x128xf32, #tpu.memory_space<vmem>>, vector<8x128xf32>
    tpu.vector_store %arg14[%501, %c0_222], %468 {strides = array<i32>} : memref<64x128xf32, #tpu.memory_space<vmem>>, vector<8x128xf32>,
    %503 = arith.index_cast %432 : i32 to index
    %c0_223 = arith.constant 0 : index
    %504 = vector.load %arg15[%503, %c0_223] : memref<64x128xf32, #tpu.memory_space<vmem>>, vector<8x128xf32>
    tpu.vector_store %arg15[%503, %c0_223], %494 {strides = array<i32>} : memref<64x128xf32, #tpu.memory_space<vmem>>, vector<8x128xf32>,
    %c6_i32 = arith.constant 6 : i32
    %c8_i32_224 = arith.constant 8 : i32
    %505 = arith.muli %c6_i32, %c8_i32_224 : i32
    %506 = tpu.assume_multiple %505, 8 : i32
    %c7_i32_225 = arith.constant 7 : i32
    %507 = arith.subi %c7_i32_225, %c6_i32 : i32
    %c8_i32_226 = arith.constant 8 : i32
    %508 = arith.muli %507, %c8_i32_226 : i32
    %509 = tpu.assume_multiple %508, 8 : i32
    %c0_227 = arith.constant 0 : index
    %c0_228 = arith.constant 0 : index
    %510 = vector.load %arg18[%c0_227, %c0_228] : memref<8x256xbf16, #tpu.memory_space<vmem>>, vector<8x128xbf16>
    %cst_229 = arith.constant dense<0.000000e+00> : vector<8x512xf32>
    %511 = tpu.matmul %510, %41, %cst_229 {dimension_numbers = #tpu.dot_dimension_numbers<[1], [0], [0], [1], [0, 0, 1, 1], [], []>} : vector<8x128xbf16>, vector<128x512xbf16>, vector<8x512xf32> -> vector<8x512xf32>
    %c0_230 = arith.constant 0 : index
    %c128_231 = arith.constant 128 : index
    %512 = vector.load %arg18[%c0_230, %c128_231] : memref<8x256xbf16, #tpu.memory_space<vmem>>, vector<8x128xbf16>
    %cst_232 = arith.constant dense<0.000000e+00> : vector<8x512xf32>
    %513 = tpu.matmul %512, %42, %cst_232 {dimension_numbers = #tpu.dot_dimension_numbers<[1], [0], [0], [1], [0, 0, 1, 1], [], []>} : vector<8x128xbf16>, vector<128x512xbf16>, vector<8x512xf32> -> vector<8x512xf32>
    %514 = arith.index_cast %506 : i32 to index
    %c0_233 = arith.constant 0 : index
    %515 = vector.load %arg16[%514, %c0_233] : memref<64x512xf32, #tpu.memory_space<vmem>>, vector<8x512xf32>
    %516 = arith.addf %515, %511 : vector<8x512xf32>
    %517 = arith.index_cast %509 : i32 to index
    %c0_234 = arith.constant 0 : index
    %518 = vector.load %arg17[%517, %c0_234] : memref<64x512xf32, #tpu.memory_space<vmem>>, vector<8x512xf32>
    %519 = arith.addf %518, %513 : vector<8x512xf32>
    %c0_235 = arith.constant 0 : index
    %c0_236 = arith.constant 0 : index
    %520 = vector.load %arg19[%c0_235, %c0_236] : memref<8x256xf32, #tpu.memory_space<vmem>>, vector<8x128xf32>
    %521 = vector.extract_strided_slice %516 {offsets = [0, 0], sizes = [8, 128], strides = [1, 1]} : vector<8x512xf32> to vector<8x128xf32>
    %522 = arith.negf %521 : vector<8x128xf32>
    %523 = math.exp %522 : vector<8x128xf32>
    %cst_237 = arith.constant 1.000000e+00 : f32
    %524 = vector.broadcast %cst_237 : f32 to vector<8x128xf32>
    %525 = arith.addf %524, %523 : vector<8x128xf32>
    %526 = arith.divf %524, %525 : vector<8x128xf32>
    %527 = vector.extract_strided_slice %516 {offsets = [0, 128], sizes = [8, 128], strides = [1, 1]} : vector<8x512xf32> to vector<8x128xf32>
    %528 = arith.negf %527 : vector<8x128xf32>
    %529 = math.exp %528 : vector<8x128xf32>
    %cst_238 = arith.constant 1.000000e+00 : f32
    %530 = vector.broadcast %cst_238 : f32 to vector<8x128xf32>
    %531 = arith.addf %530, %529 : vector<8x128xf32>
    %532 = arith.divf %530, %531 : vector<8x128xf32>
    %533 = vector.extract_strided_slice %516 {offsets = [0, 256], sizes = [8, 128], strides = [1, 1]} : vector<8x512xf32> to vector<8x128xf32>
    %534 = math.tanh %533 : vector<8x128xf32>
    %535 = vector.extract_strided_slice %516 {offsets = [0, 384], sizes = [8, 128], strides = [1, 1]} : vector<8x512xf32> to vector<8x128xf32>
    %536 = arith.negf %535 : vector<8x128xf32>
    %537 = math.exp %536 : vector<8x128xf32>
    %cst_239 = arith.constant 1.000000e+00 : f32
    %538 = vector.broadcast %cst_239 : f32 to vector<8x128xf32>
    %539 = arith.addf %538, %537 : vector<8x128xf32>
    %540 = arith.divf %538, %539 : vector<8x128xf32>
    %541 = arith.mulf %532, %520 : vector<8x128xf32>
    %542 = arith.mulf %526, %534 : vector<8x128xf32>
    %543 = arith.addf %541, %542 : vector<8x128xf32>
    %544 = math.tanh %543 : vector<8x128xf32>
    %545 = arith.mulf %540, %544 : vector<8x128xf32>
    %c0_240 = arith.constant 0 : index
    %c128_241 = arith.constant 128 : index
    %546 = vector.load %arg19[%c0_240, %c128_241] : memref<8x256xf32, #tpu.memory_space<vmem>>, vector<8x128xf32>
    %547 = vector.extract_strided_slice %519 {offsets = [0, 0], sizes = [8, 128], strides = [1, 1]} : vector<8x512xf32> to vector<8x128xf32>
    %548 = arith.negf %547 : vector<8x128xf32>
    %549 = math.exp %548 : vector<8x128xf32>
    %cst_242 = arith.constant 1.000000e+00 : f32
    %550 = vector.broadcast %cst_242 : f32 to vector<8x128xf32>
    %551 = arith.addf %550, %549 : vector<8x128xf32>
    %552 = arith.divf %550, %551 : vector<8x128xf32>
    %553 = vector.extract_strided_slice %519 {offsets = [0, 128], sizes = [8, 128], strides = [1, 1]} : vector<8x512xf32> to vector<8x128xf32>
    %554 = arith.negf %553 : vector<8x128xf32>
    %555 = math.exp %554 : vector<8x128xf32>
    %cst_243 = arith.constant 1.000000e+00 : f32
    %556 = vector.broadcast %cst_243 : f32 to vector<8x128xf32>
    %557 = arith.addf %556, %555 : vector<8x128xf32>
    %558 = arith.divf %556, %557 : vector<8x128xf32>
    %559 = vector.extract_strided_slice %519 {offsets = [0, 256], sizes = [8, 128], strides = [1, 1]} : vector<8x512xf32> to vector<8x128xf32>
    %560 = math.tanh %559 : vector<8x128xf32>
    %561 = vector.extract_strided_slice %519 {offsets = [0, 384], sizes = [8, 128], strides = [1, 1]} : vector<8x512xf32> to vector<8x128xf32>
    %562 = arith.negf %561 : vector<8x128xf32>
    %563 = math.exp %562 : vector<8x128xf32>
    %cst_244 = arith.constant 1.000000e+00 : f32
    %564 = vector.broadcast %cst_244 : f32 to vector<8x128xf32>
    %565 = arith.addf %564, %563 : vector<8x128xf32>
    %566 = arith.divf %564, %565 : vector<8x128xf32>
    %567 = arith.mulf %558, %546 : vector<8x128xf32>
    %568 = arith.mulf %552, %560 : vector<8x128xf32>
    %569 = arith.addf %567, %568 : vector<8x128xf32>
    %570 = math.tanh %569 : vector<8x128xf32>
    %571 = arith.mulf %566, %570 : vector<8x128xf32>
    %c0_245 = arith.constant 0 : index
    %c0_246 = arith.constant 0 : index
    %572 = vector.load %arg19[%c0_245, %c0_246] : memref<8x256xf32, #tpu.memory_space<vmem>>, vector<8x128xf32>
    tpu.vector_store %arg19[%c0_245, %c0_246], %543 {strides = array<i32>} : memref<8x256xf32, #tpu.memory_space<vmem>>, vector<8x128xf32>,
    %c0_247 = arith.constant 0 : index
    %c128_248 = arith.constant 128 : index
    %573 = vector.load %arg19[%c0_247, %c128_248] : memref<8x256xf32, #tpu.memory_space<vmem>>, vector<8x128xf32>
    tpu.vector_store %arg19[%c0_247, %c128_248], %569 {strides = array<i32>} : memref<8x256xf32, #tpu.memory_space<vmem>>, vector<8x128xf32>,
    %574 = arith.truncf %545 : vector<8x128xf32> to vector<8x128xbf16>
    %c0_249 = arith.constant 0 : index
    %c0_250 = arith.constant 0 : index
    %575 = vector.load %arg18[%c0_249, %c0_250] : memref<8x256xbf16, #tpu.memory_space<vmem>>, vector<8x128xbf16>
    tpu.vector_store %arg18[%c0_249, %c0_250], %574 {strides = array<i32>} : memref<8x256xbf16, #tpu.memory_space<vmem>>, vector<8x128xbf16>,
    %576 = arith.truncf %571 : vector<8x128xf32> to vector<8x128xbf16>
    %c0_251 = arith.constant 0 : index
    %c128_252 = arith.constant 128 : index
    %577 = vector.load %arg18[%c0_251, %c128_252] : memref<8x256xbf16, #tpu.memory_space<vmem>>, vector<8x128xbf16>
    tpu.vector_store %arg18[%c0_251, %c128_252], %576 {strides = array<i32>} : memref<8x256xbf16, #tpu.memory_space<vmem>>, vector<8x128xbf16>,
    %578 = arith.index_cast %506 : i32 to index
    %c0_253 = arith.constant 0 : index
    %579 = vector.load %arg14[%578, %c0_253] : memref<64x128xf32, #tpu.memory_space<vmem>>, vector<8x128xf32>
    tpu.vector_store %arg14[%578, %c0_253], %545 {strides = array<i32>} : memref<64x128xf32, #tpu.memory_space<vmem>>, vector<8x128xf32>,
    %580 = arith.index_cast %509 : i32 to index
    %c0_254 = arith.constant 0 : index
    %581 = vector.load %arg15[%580, %c0_254] : memref<64x128xf32, #tpu.memory_space<vmem>>, vector<8x128xf32>
    tpu.vector_store %arg15[%580, %c0_254], %571 {strides = array<i32>} : memref<64x128xf32, #tpu.memory_space<vmem>>, vector<8x128xf32>,
    %c7_i32_255 = arith.constant 7 : i32
    %c8_i32_256 = arith.constant 8 : i32
    %582 = arith.muli %c7_i32_255, %c8_i32_256 : i32
    %583 = tpu.assume_multiple %582, 8 : i32
    %c7_i32_257 = arith.constant 7 : i32
    %584 = arith.subi %c7_i32_257, %c7_i32_255 : i32
    %c8_i32_258 = arith.constant 8 : i32
    %585 = arith.muli %584, %c8_i32_258 : i32
    %586 = tpu.assume_multiple %585, 8 : i32
    %c0_259 = arith.constant 0 : index
    %c0_260 = arith.constant 0 : index
    %587 = vector.load %arg18[%c0_259, %c0_260] : memref<8x256xbf16, #tpu.memory_space<vmem>>, vector<8x128xbf16>
    %cst_261 = arith.constant dense<0.000000e+00> : vector<8x512xf32>
    %588 = tpu.matmul %587, %41, %cst_261 {dimension_numbers = #tpu.dot_dimension_numbers<[1], [0], [0], [1], [0, 0, 1, 1], [], []>} : vector<8x128xbf16>, vector<128x512xbf16>, vector<8x512xf32> -> vector<8x512xf32>
    %c0_262 = arith.constant 0 : index
    %c128_263 = arith.constant 128 : index
    %589 = vector.load %arg18[%c0_262, %c128_263] : memref<8x256xbf16, #tpu.memory_space<vmem>>, vector<8x128xbf16>
    %cst_264 = arith.constant dense<0.000000e+00> : vector<8x512xf32>
    %590 = tpu.matmul %589, %42, %cst_264 {dimension_numbers = #tpu.dot_dimension_numbers<[1], [0], [0], [1], [0, 0, 1, 1], [], []>} : vector<8x128xbf16>, vector<128x512xbf16>, vector<8x512xf32> -> vector<8x512xf32>
    %591 = arith.index_cast %583 : i32 to index
    %c0_265 = arith.constant 0 : index
    %592 = vector.load %arg16[%591, %c0_265] : memref<64x512xf32, #tpu.memory_space<vmem>>, vector<8x512xf32>
    %593 = arith.addf %592, %588 : vector<8x512xf32>
    %594 = arith.index_cast %586 : i32 to index
    %c0_266 = arith.constant 0 : index
    %595 = vector.load %arg17[%594, %c0_266] : memref<64x512xf32, #tpu.memory_space<vmem>>, vector<8x512xf32>
    %596 = arith.addf %595, %590 : vector<8x512xf32>
    %c0_267 = arith.constant 0 : index
    %c0_268 = arith.constant 0 : index
    %597 = vector.load %arg19[%c0_267, %c0_268] : memref<8x256xf32, #tpu.memory_space<vmem>>, vector<8x128xf32>
    %598 = vector.extract_strided_slice %593 {offsets = [0, 0], sizes = [8, 128], strides = [1, 1]} : vector<8x512xf32> to vector<8x128xf32>
    %599 = arith.negf %598 : vector<8x128xf32>
    %600 = math.exp %599 : vector<8x128xf32>
    %cst_269 = arith.constant 1.000000e+00 : f32
    %601 = vector.broadcast %cst_269 : f32 to vector<8x128xf32>
    %602 = arith.addf %601, %600 : vector<8x128xf32>
    %603 = arith.divf %601, %602 : vector<8x128xf32>
    %604 = vector.extract_strided_slice %593 {offsets = [0, 128], sizes = [8, 128], strides = [1, 1]} : vector<8x512xf32> to vector<8x128xf32>
    %605 = arith.negf %604 : vector<8x128xf32>
    %606 = math.exp %605 : vector<8x128xf32>
    %cst_270 = arith.constant 1.000000e+00 : f32
    %607 = vector.broadcast %cst_270 : f32 to vector<8x128xf32>
    %608 = arith.addf %607, %606 : vector<8x128xf32>
    %609 = arith.divf %607, %608 : vector<8x128xf32>
    %610 = vector.extract_strided_slice %593 {offsets = [0, 256], sizes = [8, 128], strides = [1, 1]} : vector<8x512xf32> to vector<8x128xf32>
    %611 = math.tanh %610 : vector<8x128xf32>
    %612 = vector.extract_strided_slice %593 {offsets = [0, 384], sizes = [8, 128], strides = [1, 1]} : vector<8x512xf32> to vector<8x128xf32>
    %613 = arith.negf %612 : vector<8x128xf32>
    %614 = math.exp %613 : vector<8x128xf32>
    %cst_271 = arith.constant 1.000000e+00 : f32
    %615 = vector.broadcast %cst_271 : f32 to vector<8x128xf32>
    %616 = arith.addf %615, %614 : vector<8x128xf32>
    %617 = arith.divf %615, %616 : vector<8x128xf32>
    %618 = arith.mulf %609, %597 : vector<8x128xf32>
    %619 = arith.mulf %603, %611 : vector<8x128xf32>
    %620 = arith.addf %618, %619 : vector<8x128xf32>
    %621 = math.tanh %620 : vector<8x128xf32>
    %622 = arith.mulf %617, %621 : vector<8x128xf32>
    %c0_272 = arith.constant 0 : index
    %c128_273 = arith.constant 128 : index
    %623 = vector.load %arg19[%c0_272, %c128_273] : memref<8x256xf32, #tpu.memory_space<vmem>>, vector<8x128xf32>
    %624 = vector.extract_strided_slice %596 {offsets = [0, 0], sizes = [8, 128], strides = [1, 1]} : vector<8x512xf32> to vector<8x128xf32>
    %625 = arith.negf %624 : vector<8x128xf32>
    %626 = math.exp %625 : vector<8x128xf32>
    %cst_274 = arith.constant 1.000000e+00 : f32
    %627 = vector.broadcast %cst_274 : f32 to vector<8x128xf32>
    %628 = arith.addf %627, %626 : vector<8x128xf32>
    %629 = arith.divf %627, %628 : vector<8x128xf32>
    %630 = vector.extract_strided_slice %596 {offsets = [0, 128], sizes = [8, 128], strides = [1, 1]} : vector<8x512xf32> to vector<8x128xf32>
    %631 = arith.negf %630 : vector<8x128xf32>
    %632 = math.exp %631 : vector<8x128xf32>
    %cst_275 = arith.constant 1.000000e+00 : f32
    %633 = vector.broadcast %cst_275 : f32 to vector<8x128xf32>
    %634 = arith.addf %633, %632 : vector<8x128xf32>
    %635 = arith.divf %633, %634 : vector<8x128xf32>
    %636 = vector.extract_strided_slice %596 {offsets = [0, 256], sizes = [8, 128], strides = [1, 1]} : vector<8x512xf32> to vector<8x128xf32>
    %637 = math.tanh %636 : vector<8x128xf32>
    %638 = vector.extract_strided_slice %596 {offsets = [0, 384], sizes = [8, 128], strides = [1, 1]} : vector<8x512xf32> to vector<8x128xf32>
    %639 = arith.negf %638 : vector<8x128xf32>
    %640 = math.exp %639 : vector<8x128xf32>
    %cst_276 = arith.constant 1.000000e+00 : f32
    %641 = vector.broadcast %cst_276 : f32 to vector<8x128xf32>
    %642 = arith.addf %641, %640 : vector<8x128xf32>
    %643 = arith.divf %641, %642 : vector<8x128xf32>
    %644 = arith.mulf %635, %623 : vector<8x128xf32>
    %645 = arith.mulf %629, %637 : vector<8x128xf32>
    %646 = arith.addf %644, %645 : vector<8x128xf32>
    %647 = math.tanh %646 : vector<8x128xf32>
    %648 = arith.mulf %643, %647 : vector<8x128xf32>
    %c0_277 = arith.constant 0 : index
    %c0_278 = arith.constant 0 : index
    %649 = vector.load %arg19[%c0_277, %c0_278] : memref<8x256xf32, #tpu.memory_space<vmem>>, vector<8x128xf32>
    tpu.vector_store %arg19[%c0_277, %c0_278], %620 {strides = array<i32>} : memref<8x256xf32, #tpu.memory_space<vmem>>, vector<8x128xf32>,
    %c0_279 = arith.constant 0 : index
    %c128_280 = arith.constant 128 : index
    %650 = vector.load %arg19[%c0_279, %c128_280] : memref<8x256xf32, #tpu.memory_space<vmem>>, vector<8x128xf32>
    tpu.vector_store %arg19[%c0_279, %c128_280], %646 {strides = array<i32>} : memref<8x256xf32, #tpu.memory_space<vmem>>, vector<8x128xf32>,
    %651 = arith.truncf %622 : vector<8x128xf32> to vector<8x128xbf16>
    %c0_281 = arith.constant 0 : index
    %c0_282 = arith.constant 0 : index
    %652 = vector.load %arg18[%c0_281, %c0_282] : memref<8x256xbf16, #tpu.memory_space<vmem>>, vector<8x128xbf16>
    tpu.vector_store %arg18[%c0_281, %c0_282], %651 {strides = array<i32>} : memref<8x256xbf16, #tpu.memory_space<vmem>>, vector<8x128xbf16>,
    %653 = arith.truncf %648 : vector<8x128xf32> to vector<8x128xbf16>
    %c0_283 = arith.constant 0 : index
    %c128_284 = arith.constant 128 : index
    %654 = vector.load %arg18[%c0_283, %c128_284] : memref<8x256xbf16, #tpu.memory_space<vmem>>, vector<8x128xbf16>
    tpu.vector_store %arg18[%c0_283, %c128_284], %653 {strides = array<i32>} : memref<8x256xbf16, #tpu.memory_space<vmem>>, vector<8x128xbf16>,
    %655 = arith.index_cast %583 : i32 to index
    %c0_285 = arith.constant 0 : index
    %656 = vector.load %arg14[%655, %c0_285] : memref<64x128xf32, #tpu.memory_space<vmem>>, vector<8x128xf32>
    tpu.vector_store %arg14[%655, %c0_285], %622 {strides = array<i32>} : memref<64x128xf32, #tpu.memory_space<vmem>>, vector<8x128xf32>,
    %657 = arith.index_cast %586 : i32 to index
    %c0_286 = arith.constant 0 : index
    %658 = vector.load %arg15[%657, %c0_286] : memref<64x128xf32, #tpu.memory_space<vmem>>, vector<8x128xf32>
    tpu.vector_store %arg15[%657, %c0_286], %648 {strides = array<i32>} : memref<64x128xf32, #tpu.memory_space<vmem>>, vector<8x128xf32>,
    %c8_i32_287 = arith.constant 8 : i32
    %c0_288 = arith.constant 0 : index
    %c0_289 = arith.constant 0 : index
    %659 = vector.load %arg14[%c0_288, %c0_289] : memref<64x128xf32, #tpu.memory_space<vmem>>, vector<64x128xf32>
    %c0_290 = arith.constant 0 : index
    %c0_291 = arith.constant 0 : index
    %660 = vector.load %arg4[%c0_290, %c0_291] : memref<64x1xf32, #tpu.memory_space<vmem>>, vector<64x1xf32>
    %661 = vector.broadcast %660 : vector<64x1xf32> to vector<64x128xf32>
    %662 = arith.mulf %659, %661 : vector<64x128xf32>
    %c0_292 = arith.constant 0 : index
    %c0_293 = arith.constant 0 : index
    %663 = vector.load %arg14[%c0_292, %c0_293] : memref<64x128xf32, #tpu.memory_space<vmem>>, vector<64x128xf32>
    tpu.vector_store %arg14[%c0_292, %c0_293], %662 {strides = array<i32>} : memref<64x128xf32, #tpu.memory_space<vmem>>, vector<64x128xf32>,
    %c0_294 = arith.constant 0 : index
    %c0_295 = arith.constant 0 : index
    %664 = vector.load %arg15[%c0_294, %c0_295] : memref<64x128xf32, #tpu.memory_space<vmem>>, vector<64x128xf32>
    %c0_296 = arith.constant 0 : index
    %c0_297 = arith.constant 0 : index
    %665 = vector.load %arg7[%c0_296, %c0_297] : memref<64x1xf32, #tpu.memory_space<vmem>>, vector<64x1xf32>
    %666 = vector.broadcast %665 : vector<64x1xf32> to vector<64x128xf32>
    %667 = arith.mulf %664, %666 : vector<64x128xf32>
    %c0_298 = arith.constant 0 : index
    %c0_299 = arith.constant 0 : index
    %668 = vector.load %arg15[%c0_298, %c0_299] : memref<64x128xf32, #tpu.memory_space<vmem>>, vector<64x128xf32>
    tpu.vector_store %arg15[%c0_298, %c0_299], %667 {strides = array<i32>} : memref<64x128xf32, #tpu.memory_space<vmem>>, vector<64x128xf32>,
    return
  }
  func.func @transform_0(%arg0: i32, %arg1: i32) -> (i32, i32) {
    %c1_i32 = arith.constant 1 : i32
    %0 = arith.muli %arg0, %c1_i32 : i32
    %1 = arith.addi %0, %arg1 : i32
    %c0_i32 = arith.constant 0 : i32
    %c0_i32_0 = arith.constant 0 : i32
    return %1, %c0_i32 : i32, i32
  }
  func.func @transform_1(%arg0: i32, %arg1: i32) -> (i32, i32) {
    %c1_i32 = arith.constant 1 : i32
    %0 = arith.muli %arg0, %c1_i32 : i32
    %1 = arith.addi %0, %arg1 : i32
    %c0_i32 = arith.constant 0 : i32
    %c0_i32_0 = arith.constant 0 : i32
    return %1, %c0_i32 : i32, i32
  }
  func.func @transform_2(%arg0: i32, %arg1: i32) -> (i32, i32) {
    %c1_i32 = arith.constant 1 : i32
    %0 = arith.muli %arg0, %c1_i32 : i32
    %1 = arith.addi %0, %arg1 : i32
    %c0_i32 = arith.constant 0 : i32
    %c0_i32_0 = arith.constant 0 : i32
    return %1, %c0_i32 : i32, i32
  }
  func.func @transform_3(%arg0: i32, %arg1: i32) -> (i32, i32) {
    %c1_i32 = arith.constant 1 : i32
    %0 = arith.muli %arg0, %c1_i32 : i32
    %c0_i32 = arith.constant 0 : i32
    %1 = arith.subi %c0_i32, %arg1 : i32
    %2 = arith.addi %0, %1 : i32
    %c0_i32_0 = arith.constant 0 : i32
    %c0_i32_1 = arith.constant 0 : i32
    return %2, %c0_i32_0 : i32, i32
  }
  func.func @transform_4(%arg0: i32, %arg1: i32) -> (i32, i32) {
    %c1_i32 = arith.constant 1 : i32
    %0 = arith.muli %arg0, %c1_i32 : i32
    %c0_i32 = arith.constant 0 : i32
    %1 = arith.subi %c0_i32, %arg1 : i32
    %2 = arith.addi %0, %1 : i32
    %c0_i32_0 = arith.constant 0 : i32
    %c0_i32_1 = arith.constant 0 : i32
    return %2, %c0_i32_0 : i32, i32
  }
  func.func @transform_5(%arg0: i32, %arg1: i32) -> (i32, i32) {
    %c1_i32 = arith.constant 1 : i32
    %0 = arith.muli %arg0, %c1_i32 : i32
    %c0_i32 = arith.constant 0 : i32
    %1 = arith.subi %c0_i32, %arg1 : i32
    %2 = arith.addi %0, %1 : i32
    %c0_i32_0 = arith.constant 0 : i32
    %c0_i32_1 = arith.constant 0 : i32
    return %2, %c0_i32_0 : i32, i32
  }
  func.func @transform_6(%arg0: i32, %arg1: i32) -> (i32, i32) {
    %c0_i32 = arith.constant 0 : i32
    %c0_i32_0 = arith.constant 0 : i32
    %c0_i32_1 = arith.constant 0 : i32
    return %c0_i32, %c0_i32_0 : i32, i32
  }
  func.func @transform_7(%arg0: i32, %arg1: i32) -> (i32, i32) {
    %c0_i32 = arith.constant 0 : i32
    %c0_i32_0 = arith.constant 0 : i32
    %c0_i32_1 = arith.constant 0 : i32
    return %c0_i32, %c0_i32_0 : i32, i32
  }
  func.func @transform_8(%arg0: i32, %arg1: i32) -> (i32, i32) {
    %c0_i32 = arith.constant 0 : i32
    %c0_i32_0 = arith.constant 0 : i32
    %c0_i32_1 = arith.constant 0 : i32
    return %c0_i32, %c0_i32_0 : i32, i32
  }
  func.func @transform_9(%arg0: i32, %arg1: i32) -> (i32, i32) {
    %c0_i32 = arith.constant 0 : i32
    %c0_i32_0 = arith.constant 0 : i32
    %c0_i32_1 = arith.constant 0 : i32
    return %c0_i32, %c0_i32_0 : i32, i32
  }
  func.func @transform_10(%arg0: i32, %arg1: i32) -> (i32, i32) {
    %c0_i32 = arith.constant 0 : i32
    %c0_i32_0 = arith.constant 0 : i32
    %c0_i32_1 = arith.constant 0 : i32
    return %c0_i32, %c0_i32_0 : i32, i32
  }
  func.func @transform_11(%arg0: i32, %arg1: i32) -> (i32, i32) {
    %c0_i32 = arith.constant 0 : i32
    %c0_i32_0 = arith.constant 0 : i32
    %c0_i32_1 = arith.constant 0 : i32
    return %c0_i32, %c0_i32_0 : i32, i32
  }
  func.func @transform_12(%arg0: i32, %arg1: i32) -> (i32, i32) {
    %c1_i32 = arith.constant 1 : i32
    %0 = arith.muli %arg0, %c1_i32 : i32
    %1 = arith.addi %0, %arg1 : i32
    %c0_i32 = arith.constant 0 : i32
    %c0_i32_0 = arith.constant 0 : i32
    return %1, %c0_i32 : i32, i32
  }
  func.func @transform_13(%arg0: i32, %arg1: i32) -> (i32, i32) {
    %c1_i32 = arith.constant 1 : i32
    %0 = arith.muli %arg0, %c1_i32 : i32
    %c0_i32 = arith.constant 0 : i32
    %1 = arith.subi %c0_i32, %arg1 : i32
    %2 = arith.addi %0, %1 : i32
    %c0_i32_0 = arith.constant 0 : i32
    %c0_i32_1 = arith.constant 0 : i32
    return %2, %c0_i32_0 : i32, i32
  }
}

</mosaic_0001>

<llo_original>
// kernel: rnn_shared_forward.2
$region0: #{rnn_shared_forward.2}
  #allocation0 [shape = 'u32[]', space=smem, size = 0x4, offset = 0x4, fixed_abs, tag = 'smem constant byte address 0x4 - core index']
  #allocation1 [shape = 'u32[144,128]{1,0:T(1,128)}', space=vmem, size = 0x12000, scoped, tag = 'internal scratch']
  %s0 = inlined_call_operand.vmem [shape: bf16[4,64,8], index: 0, kind: input, shape index: {}]
  %s1 = inlined_call_operand.vmem [shape: bf16[8,384], index: 1, kind: input, shape index: {}]
  %s2 = inlined_call_operand.vmem [shape: f32[1,128], index: 2, kind: input, shape index: {}]
  %s3 = inlined_call_operand.vmem [shape: bf16[64,128], index: 3, kind: output, shape index: {}]
  %s4 = sld [smem:[#allocation0]]
  $region22: #{rnn_shared_forward.2} parent=0
    _
  %s6 = ssub.s32 1, %s4
  %s7 = scalar_select 0, %s6, %s4
  // Predicated region
  $region2: #{rnn_shared_forward.2} parent=0 // pred_check
    _
  $region3: #{rnn_shared_forward.2} parent=0 // pred_check_branch
    %9 = sbr.rel (0) target = $region5
  $region4: #{rnn_shared_forward.2} parent=0 // pred_region
    _
  $region5: #{rnn_shared_forward.2} parent=0 // pred_fallthru
    _
  // Predicated region
  $region6: #{rnn_shared_forward.2} parent=0 // pred_check
    _
  $region7: #{rnn_shared_forward.2} parent=0 // pred_check_branch
    %11 = sbr.rel (0) target = $region9
  $region8: #{rnn_shared_forward.2} parent=0 // pred_region
    _
  $region9: #{rnn_shared_forward.2} parent=0 // pred_fallthru
    _
  // Predicated region
  $region10: #{rnn_shared_forward.2} parent=0 // pred_check
    _
  $region11: #{rnn_shared_forward.2} parent=0 // pred_check_branch
    %13 = sbr.rel (0) target = $region13
  $region12: #{rnn_shared_forward.2} parent=0 // pred_region
    _
  $region13: #{rnn_shared_forward.2} parent=0 // pred_fallthru
    _
  %v15 = vld [vmem:[%s0] sm:$0xf]
  %v16 = vld [vmem:[%s0 + $0x4] sm:$0xf]
  %v17 = vld [vmem:[%s0 + $0x8] sm:$0xf]
  %v18 = vld [vmem:[%s0 + $0xc] sm:$0xf]
  %v19 = vld [vmem:[%s0 + $0x10] sm:$0xf]
  %v20 = vld [vmem:[%s0 + $0x14] sm:$0xf]
  %v21 = vld [vmem:[%s0 + $0x18] sm:$0xf]
  %v22 = vld [vmem:[%s0 + $0x1c] sm:$0xf]
  %v23 = vld [vmem:[%s0 + $0x20] sm:$0xf]
  %v24 = vld [vmem:[%s0 + $0x24] sm:$0xf]
  %v25 = vld [vmem:[%s0 + $0x28] sm:$0xf]
  %v26 = vld [vmem:[%s0 + $0x2c] sm:$0xf]
  %v27 = vld [vmem:[%s0 + $0x30] sm:$0xf]
  %v28 = vld [vmem:[%s0 + $0x34] sm:$0xf]
  %v29 = vld [vmem:[%s0 + $0x38] sm:$0xf]
  %v30 = vld [vmem:[%s0 + $0x3c] sm:$0xf]
  %v31 = vld [vmem:[%s0 + $0x40] sm:$0xf]
  %v32 = vld [vmem:[%s0 + $0x44] sm:$0xf]
  %v33 = vld [vmem:[%s0 + $0x48] sm:$0xf]
  %v34 = vld [vmem:[%s0 + $0x4c] sm:$0xf]
  %v35 = vld [vmem:[%s0 + $0x50] sm:$0xf]
  %v36 = vld [vmem:[%s0 + $0x54] sm:$0xf]
  %v37 = vld [vmem:[%s0 + $0x58] sm:$0xf]
  %v38 = vld [vmem:[%s0 + $0x5c] sm:$0xf]
  %v39 = vld [vmem:[%s0 + $0x60] sm:$0xf]
  %v40 = vld [vmem:[%s0 + $0x64] sm:$0xf]
  %v41 = vld [vmem:[%s0 + $0x68] sm:$0xf]
  %v42 = vld [vmem:[%s0 + $0x6c] sm:$0xf]
  %v43 = vld [vmem:[%s0 + $0x70] sm:$0xf]
  %v44 = vld [vmem:[%s0 + $0x74] sm:$0xf]
  %v45 = vld [vmem:[%s0 + $0x78] sm:$0xf]
  %v46 = vld [vmem:[%s0 + $0x7c] sm:$0xf]
  %v47 = vld [vmem:[%s1] sm:$0xff]
  %v48 = vld [vmem:[%s1 + $0x8] sm:$0xf]
  %v81 = vunpack.c.l.b16 %v15
  %v82 = vunpack.c.l.b16 %v16
  %v83 = vunpack.c.l.b16 %v17
  %v84 = vunpack.c.l.b16 %v18
  %v85 = vunpack.c.l.b16 %v19
  %v86 = vunpack.c.l.b16 %v20
  %v87 = vunpack.c.l.b16 %v21
  %v88 = vunpack.c.l.b16 %v22
  %v89 = vunpack.c.l.b16 %v23
  %v90 = vunpack.c.l.b16 %v24
  %v91 = vunpack.c.l.b16 %v25
  %v92 = vunpack.c.l.b16 %v26
  %v93 = vunpack.c.l.b16 %v27
  %v94 = vunpack.c.l.b16 %v28
  %v95 = vunpack.c.l.b16 %v29
  %v96 = vunpack.c.l.b16 %v30
  %v97 = vunpack.c.l.b16 %v31
  %v98 = vunpack.c.l.b16 %v32
  %v99 = vunpack.c.l.b16 %v33
  %v100 = vunpack.c.l.b16 %v34
  %v101 = vunpack.c.l.b16 %v35
  %v102 = vunpack.c.l.b16 %v36
  %v103 = vunpack.c.l.b16 %v37
  %v104 = vunpack.c.l.b16 %v38
  %v105 = vunpack.c.l.b16 %v39
  %v106 = vunpack.c.l.b16 %v40
  %v107 = vunpack.c.l.b16 %v41
  %v108 = vunpack.c.l.b16 %v42
  %v109 = vunpack.c.l.b16 %v43
  %v110 = vunpack.c.l.b16 %v44
  %v111 = vunpack.c.l.b16 %v45
  %v112 = vunpack.c.l.b16 %v46
  %v113 = vpack.c.b16 %v82, %v81
  %v114 = vpack.c.b16 %v84, %v83
  %v115 = vpack.c.b16 %v86, %v85
  %v116 = vpack.c.b16 %v88, %v87
  %v117 = vpack.c.b16 %v90, %v89
  %v118 = vpack.c.b16 %v92, %v91
  %v119 = vpack.c.b16 %v94, %v93
  %v120 = vpack.c.b16 %v96, %v95
  %v121 = vpack.c.b16 %v98, %v97
  %v122 = vpack.c.b16 %v100, %v99
  %v123 = vpack.c.b16 %v102, %v101
  %v124 = vpack.c.b16 %v104, %v103
  %v125 = vpack.c.b16 %v106, %v105
  %v126 = vpack.c.b16 %v108, %v107
  %v127 = vpack.c.b16 %v110, %v109
  %v128 = vpack.c.b16 %v112, %v111
  %v131 = vunpack.c.l.b16 %v47
  %v132 = vunpack.c.h.b16 %v47
  %v133 = vunpack.c.l.b16 %v48
  %v134 = vpack.c.b16 %v131, %v131
  %v135 = vpack.c.b16 %v132, %v132
  %v136 = vpack.c.b16 %v133, %v133
  %vm137 = vcmask 64512
  %v139 = vsel %vm137, %v113, 0
  %v142 = vsel %vm137, %v114, 0
  %v145 = vsel %vm137, %v115, 0
  %v148 = vsel %vm137, %v116, 0
  %v151 = vsel %vm137, %v117, 0
  %v154 = vsel %vm137, %v118, 0
  %v157 = vsel %vm137, %v119, 0
  %v160 = vsel %vm137, %v120, 0
  %v163 = vsel %vm137, %v121, 0
  %v166 = vsel %vm137, %v122, 0
  %v169 = vsel %vm137, %v123, 0
  %v172 = vsel %vm137, %v124, 0
  %v175 = vsel %vm137, %v125, 0
  %v178 = vsel %vm137, %v126, 0
  %v181 = vsel %vm137, %v127, 0
  %v184 = vsel %vm137, %v128, 0
  %vm186 = vcmask 1043456
  %v188 = vsel %vm186, %v134, 0
  %v191 = vsel %vm186, %v135, 0
  %v194 = vsel %vm186, %v136, 0
  %196 = vmatprep.subr.bf16.mxu0 %v191
  %197 = vmatpush1.bf16.msra.mxu0 %v188
  %198 = vmatprep.subr.bf16.mxu0 0
  %199 = vmatpush1.bf16.msra.mxu0 0
  %200 = vmatprep.subr.bf16.mxu0 0
  %201 = vmatpush1.bf16.msra.mxu0 0
  %202 = vmatprep.subr.bf16.mxu0 0
  %203 = vmatpush1.bf16.msra.mxu0 0
  %204 = vmatprep.subr.bf16.mxu0 0
  %205 = vmatpush1.bf16.msra.mxu0 0
  %206 = vmatprep.subr.bf16.mxu0 0
  %207 = vmatpush1.bf16.msra.mxu0 0
  %208 = vmatprep.subr.bf16.mxu0 0
  %209 = vmatpush1.bf16.msra.mxu0 0
  %210 = vmatprep.subr.bf16.mxu0 0
  %211 = vmatpush1.bf16.msra.mxu0 0
  %212 = vmatprep.subr.bf16.mxu0 0
  %213 = vmatpush1.bf16.msra.mxu0 0
  %214 = vmatprep.subr.bf16.mxu0 0
  %215 = vmatpush1.bf16.msra.mxu0 0
  %216 = vmatprep.subr.bf16.mxu0 0
  %217 = vmatpush1.bf16.msra.mxu0 0
  %218 = vmatprep.subr.bf16.mxu0 0
  %219 = vmatpush1.bf16.msra.mxu0 0
  %220 = vmatprep.subr.bf16.mxu0 0
  %221 = vmatpush1.bf16.msra.mxu0 0
  %222 = vmatprep.subr.bf16.mxu0 0
  %223 = vmatpush1.bf16.msra.mxu0 0
  %224 = vmatprep.subr.bf16.mxu0 0
  %225 = vmatpush1.bf16.msra.mxu0 0
  %226 = vmatprep.subr.bf16.mxu0 0
  %227 = vmatpush1.bf16.msra.mxu0 0
  %228 = vmatprep.mubr.bf16.mxu0 0
  %229 = vmatmul.mubr.bf16.gmra.mrb[0].mxu0 %v139
  %v230 = vpop.f32.mrb[0].mxu0
  %v231 = vadd.f32 0.0, %v230
  %v232 = vpop.f32.mrb[0].mxu0
  %v233 = vadd.f32 0.0, %v232
  %v234 = vpop.f32.mrb[0].mxu0
  %v235 = vadd.f32 0.0, %v234
  %v236 = vpop.f32.mrb[0].mxu0
  %v237 = vadd.f32 0.0, %v236
  %238 = vmatprep.mubr.bf16.mxu0 0
  %239 = vmatmul.mubr.bf16.gmra.mrb[0].mxu0 %v142
  %v240 = vpop.f32.mrb[0].mxu0
  %v241 = vadd.f32 0.0, %v240
  %v242 = vpop.f32.mrb[0].mxu0
  %v243 = vadd.f32 0.0, %v242
  %v244 = vpop.f32.mrb[0].mxu0
  %v245 = vadd.f32 0.0, %v244
  %v246 = vpop.f32.mrb[0].mxu0
  %v247 = vadd.f32 0.0, %v246
  %248 = vmatprep.mubr.bf16.mxu0 0
  %249 = vmatmul.mubr.bf16.gmra.mrb[0].mxu0 %v145
  %v250 = vpop.f32.mrb[0].mxu0
  %v251 = vadd.f32 0.0, %v250
  %v252 = vpop.f32.mrb[0].mxu0
  %v253 = vadd.f32 0.0, %v252
  %v254 = vpop.f32.mrb[0].mxu0
  %v255 = vadd.f32 0.0, %v254
  %v256 = vpop.f32.mrb[0].mxu0
  %v257 = vadd.f32 0.0, %v256
  %258 = vmatprep.mubr.bf16.mxu0 0
  %259 = vmatmul.mubr.bf16.gmra.mrb[0].mxu0 %v148
  %v260 = vpop.f32.mrb[0].mxu0
  %v261 = vadd.f32 0.0, %v260
  %v262 = vpop.f32.mrb[0].mxu0
  %v263 = vadd.f32 0.0, %v262
  %v264 = vpop.f32.mrb[0].mxu0
  %v265 = vadd.f32 0.0, %v264
  %v266 = vpop.f32.mrb[0].mxu0
  %v267 = vadd.f32 0.0, %v266
  %268 = vmatprep.mubr.bf16.mxu0 0
  %269 = vmatmul.mubr.bf16.gmra.mrb[0].mxu0 %v151
  %v270 = vpop.f32.mrb[0].mxu0
  %v271 = vadd.f32 0.0, %v270
  %v272 = vpop.f32.mrb[0].mxu0
  %v273 = vadd.f32 0.0, %v272
  %v274 = vpop.f32.mrb[0].mxu0
  %v275 = vadd.f32 0.0, %v274
  %v276 = vpop.f32.mrb[0].mxu0
  %v277 = vadd.f32 0.0, %v276
  %278 = vmatprep.mubr.bf16.mxu0 0
  %279 = vmatmul.mubr.bf16.gmra.mrb[0].mxu0 %v154
  %v280 = vpop.f32.mrb[0].mxu0
  %v281 = vadd.f32 0.0, %v280
  %v282 = vpop.f32.mrb[0].mxu0
  %v283 = vadd.f32 0.0, %v282
  %v284 = vpop.f32.mrb[0].mxu0
  %v285 = vadd.f32 0.0, %v284
  %v286 = vpop.f32.mrb[0].mxu0
  %v287 = vadd.f32 0.0, %v286
  %288 = vmatprep.mubr.bf16.mxu0 0
  %289 = vmatmul.mubr.bf16.gmra.mrb[0].mxu0 %v157
  %v290 = vpop.f32.mrb[0].mxu0
  %v291 = vadd.f32 0.0, %v290
  %v292 = vpop.f32.mrb[0].mxu0
  %v293 = vadd.f32 0.0, %v292
  %v294 = vpop.f32.mrb[0].mxu0
  %v295 = vadd.f32 0.0, %v294
  %v296 = vpop.f32.mrb[0].mxu0
  %v297 = vadd.f32 0.0, %v296
  %298 = vmatprep.mubr.bf16.mxu0 0
  %299 = vmatmul.mubr.bf16.gmra.mrb[0].mxu0 %v160
  %v300 = vpop.f32.mrb[0].mxu0
  %v301 = vadd.f32 0.0, %v300
  %v302 = vpop.f32.mrb[0].mxu0
  %v303 = vadd.f32 0.0, %v302
  %v304 = vpop.f32.mrb[0].mxu0
  %v305 = vadd.f32 0.0, %v304
  %v306 = vpop.f32.mrb[0].mxu0
  %v307 = vadd.f32 0.0, %v306
  %308 = vmatprep.mubr.bf16.mxu0 0
  %309 = vmatmul.mubr.bf16.gmra.mrb[0].mxu0 %v163
  %v310 = vpop.f32.mrb[0].mxu0
  %v311 = vadd.f32 0.0, %v310
  %v312 = vpop.f32.mrb[0].mxu0
  %v313 = vadd.f32 0.0, %v312
  %v314 = vpop.f32.mrb[0].mxu0
  %v315 = vadd.f32 0.0, %v314
  %v316 = vpop.f32.mrb[0].mxu0
  %v317 = vadd.f32 0.0, %v316
  %318 = vmatprep.mubr.bf16.mxu0 0
  %319 = vmatmul.mubr.bf16.gmra.mrb[0].mxu0 %v166
  %v320 = vpop.f32.mrb[0].mxu0
  %v321 = vadd.f32 0.0, %v320
  %v322 = vpop.f32.mrb[0].mxu0
  %v323 = vadd.f32 0.0, %v322
  %v324 = vpop.f32.mrb[0].mxu0
  %v325 = vadd.f32 0.0, %v324
  %v326 = vpop.f32.mrb[0].mxu0
  %v327 = vadd.f32 0.0, %v326
  %328 = vmatprep.mubr.bf16.mxu0 0
  %329 = vmatmul.mubr.bf16.gmra.mrb[0].mxu0 %v169
  %v330 = vpop.f32.mrb[0].mxu0
  %v331 = vadd.f32 0.0, %v330
  %v332 = vpop.f32.mrb[0].mxu0
  %v333 = vadd.f32 0.0, %v332
  %v334 = vpop.f32.mrb[0].mxu0
  %v335 = vadd.f32 0.0, %v334
  %v336 = vpop.f32.mrb[0].mxu0
  %v337 = vadd.f32 0.0, %v336
  %338 = vmatprep.mubr.bf16.mxu0 0
  %339 = vmatmul.mubr.bf16.gmra.mrb[0].mxu0 %v172
  %v340 = vpop.f32.mrb[0].mxu0
  %v341 = vadd.f32 0.0, %v340
  %v342 = vpop.f32.mrb[0].mxu0
  %v343 = vadd.f32 0.0, %v342
  %v344 = vpop.f32.mrb[0].mxu0
  %v345 = vadd.f32 0.0, %v344
  %v346 = vpop.f32.mrb[0].mxu0
  %v347 = vadd.f32 0.0, %v346
  %348 = vmatprep.mubr.bf16.mxu0 0
  %349 = vmatmul.mubr.bf16.gmra.mrb[0].mxu0 %v175
  %v350 = vpop.f32.mrb[0].mxu0
  %v351 = vadd.f32 0.0, %v350
  %v352 = vpop.f32.mrb[0].mxu0
  %v353 = vadd.f32 0.0, %v352
  %v354 = vpop.f32.mrb[0].mxu0
  %v355 = vadd.f32 0.0, %v354
  %v356 = vpop.f32.mrb[0].mxu0
  %v357 = vadd.f32 0.0, %v356
  %358 = vmatprep.mubr.bf16.mxu0 0
  %359 = vmatmul.mubr.bf16.gmra.mrb[0].mxu0 %v178
  %v360 = vpop.f32.mrb[0].mxu0
  %v361 = vadd.f32 0.0, %v360
  %v362 = vpop.f32.mrb[0].mxu0
  %v363 = vadd.f32 0.0, %v362
  %v364 = vpop.f32.mrb[0].mxu0
  %v365 = vadd.f32 0.0, %v364
  %v366 = vpop.f32.mrb[0].mxu0
  %v367 = vadd.f32 0.0, %v366
  %368 = vmatprep.mubr.bf16.mxu0 0
  %369 = vmatmul.mubr.bf16.gmra.mrb[0].mxu0 %v181
  %v370 = vpop.f32.mrb[0].mxu0
  %v371 = vadd.f32 0.0, %v370
  %v372 = vpop.f32.mrb[0].mxu0
  %v373 = vadd.f32 0.0, %v372
  %v374 = vpop.f32.mrb[0].mxu0
  %v375 = vadd.f32 0.0, %v374
  %v376 = vpop.f32.mrb[0].mxu0
  %v377 = vadd.f32 0.0, %v376
  %378 = vmatprep.mubr.bf16.mxu0 0
  %379 = vmatmul.mubr.bf16.gmra.mrb[0].mxu0 %v184
  %v380 = vpop.f32.mrb[0].mxu0
  %v381 = vadd.f32 0.0, %v380
  %v382 = vpop.f32.mrb[0].mxu0
  %v383 = vadd.f32 0.0, %v382
  %v384 = vpop.f32.mrb[0].mxu0
  %v385 = vadd.f32 0.0, %v384
  %v386 = vpop.f32.mrb[0].mxu0
  %v387 = vadd.f32 0.0, %v386
  %388 = vdwg.mxu0
  %389 = vmatprep.subr.bf16.mxu0 0
  %390 = vmatpush1.bf16.msra.mxu0 %v194
  %391 = vmatprep.subr.bf16.mxu0 0
  %392 = vmatpush1.bf16.msra.mxu0 0
  %393 = vmatprep.subr.bf16.mxu0 0
  %394 = vmatpush1.bf16.msra.mxu0 0
  %395 = vmatprep.subr.bf16.mxu0 0
  %396 = vmatpush1.bf16.msra.mxu0 0
  %397 = vmatprep.subr.bf16.mxu0 0
  %398 = vmatpush1.bf16.msra.mxu0 0
  %399 = vmatprep.subr.bf16.mxu0 0
  %400 = vmatpush1.bf16.msra.mxu0 0
  %401 = vmatprep.subr.bf16.mxu0 0
  %402 = vmatpush1.bf16.msra.mxu0 0
  %403 = vmatprep.subr.bf16.mxu0 0
  %404 = vmatpush1.bf16.msra.mxu0 0
  %405 = vmatprep.subr.bf16.mxu0 0
  %406 = vmatpush1.bf16.msra.mxu0 0
  %407 = vmatprep.subr.bf16.mxu0 0
  %408 = vmatpush1.bf16.msra.mxu0 0
  %409 = vmatprep.subr.bf16.mxu0 0
  %410 = vmatpush1.bf16.msra.mxu0 0
  %411 = vmatprep.subr.bf16.mxu0 0
  %412 = vmatpush1.bf16.msra.mxu0 0
  %413 = vmatprep.subr.bf16.mxu0 0
  %414 = vmatpush1.bf16.msra.mxu0 0
  %415 = vmatprep.subr.bf16.mxu0 0
  %416 = vmatpush1.bf16.msra.mxu0 0
  %417 = vmatprep.subr.bf16.mxu0 0
  %418 = vmatpush1.bf16.msra.mxu0 0
  %419 = vmatprep.subr.bf16.mxu0 0
  %420 = vmatpush1.bf16.msra.mxu0 0
  %421 = vmatprep.mubr.bf16.mxu0 0
  %422 = vmatmul.mubr.bf16.gmra.mrb[0].mxu0 %v139
  %v423 = vpop.f32.mrb[0].mxu0
  %v424 = vadd.f32 0.0, %v423
  %v425 = vpop.f32.mrb[0].mxu0
  %v426 = vpop.f32.mrb[0].mxu0
  %v427 = vadd.f32 0.0, %v426
  %v428 = vpop.f32.mrb[0].mxu0
  %429 = vmatprep.mubr.bf16.mxu0 0
  %430 = vmatmul.mubr.bf16.gmra.mrb[0].mxu0 %v142
  %v431 = vpop.f32.mrb[0].mxu0
  %v432 = vadd.f32 0.0, %v431
  %v433 = vpop.f32.mrb[0].mxu0
  %v434 = vpop.f32.mrb[0].mxu0
  %v435 = vadd.f32 0.0, %v434
  %v436 = vpop.f32.mrb[0].mxu0
  %437 = vmatprep.mubr.bf16.mxu0 0
  %438 = vmatmul.mubr.bf16.gmra.mrb[0].mxu0 %v145
  %v439 = vpop.f32.mrb[0].mxu0
  %v440 = vadd.f32 0.0, %v439
  %v441 = vpop.f32.mrb[0].mxu0
  %v442 = vpop.f32.mrb[0].mxu0
  %v443 = vadd.f32 0.0, %v442
  %v444 = vpop.f32.mrb[0].mxu0
  %445 = vmatprep.mubr.bf16.mxu0 0
  %446 = vmatmul.mubr.bf16.gmra.mrb[0].mxu0 %v148
  %v447 = vpop.f32.mrb[0].mxu0
  %v448 = vadd.f32 0.0, %v447
  %v449 = vpop.f32.mrb[0].mxu0
  %v450 = vpop.f32.mrb[0].mxu0
  %v451 = vadd.f32 0.0, %v450
  %v452 = vpop.f32.mrb[0].mxu0
  %453 = vmatprep.mubr.bf16.mxu0 0
  %454 = vmatmul.mubr.bf16.gmra.mrb[0].mxu0 %v151
  %v455 = vpop.f32.mrb[0].mxu0
  %v456 = vadd.f32 0.0, %v455
  %v457 = vpop.f32.mrb[0].mxu0
  %v458 = vpop.f32.mrb[0].mxu0
  %v459 = vadd.f32 0.0, %v458
  %v460 = vpop.f32.mrb[0].mxu0
  %461 = vmatprep.mubr.bf16.mxu0 0
  %462 = vmatmul.mubr.bf16.gmra.mrb[0].mxu0 %v154
  %v463 = vpop.f32.mrb[0].mxu0
  %v464 = vadd.f32 0.0, %v463
  %v465 = vpop.f32.mrb[0].mxu0
  %v466 = vpop.f32.mrb[0].mxu0
  %v467 = vadd.f32 0.0, %v466
  %v468 = vpop.f32.mrb[0].mxu0
  %469 = vmatprep.mubr.bf16.mxu0 0
  %470 = vmatmul.mubr.bf16.gmra.mrb[0].mxu0 %v157
  %v471 = vpop.f32.mrb[0].mxu0
  %v472 = vadd.f32 0.0, %v471
  %v473 = vpop.f32.mrb[0].mxu0
  %v474 = vpop.f32.mrb[0].mxu0
  %v475 = vadd.f32 0.0, %v474
  %v476 = vpop.f32.mrb[0].mxu0
  %477 = vmatprep.mubr.bf16.mxu0 0
  %478 = vmatmul.mubr.bf16.gmra.mrb[0].mxu0 %v160
  %v479 = vpop.f32.mrb[0].mxu0
  %v480 = vadd.f32 0.0, %v479
  %v481 = vpop.f32.mrb[0].mxu0
  %v482 = vpop.f32.mrb[0].mxu0
  %v483 = vadd.f32 0.0, %v482
  %v484 = vpop.f32.mrb[0].mxu0
  %485 = vmatprep.mubr.bf16.mxu0 0
  %486 = vmatmul.mubr.bf16.gmra.mrb[0].mxu0 %v163
  %v487 = vpop.f32.mrb[0].mxu0
  %v488 = vadd.f32 0.0, %v487
  %v489 = vpop.f32.mrb[0].mxu0
  %v490 = vpop.f32.mrb[0].mxu0
  %v491 = vadd.f32 0.0, %v490
  %v492 = vpop.f32.mrb[0].mxu0
  %493 = vmatprep.mubr.bf16.mxu0 0
  %494 = vmatmul.mubr.bf16.gmra.mrb[0].mxu0 %v166
  %v495 = vpop.f32.mrb[0].mxu0
  %v496 = vadd.f32 0.0, %v495
  %v497 = vpop.f32.mrb[0].mxu0
  %v498 = vpop.f32.mrb[0].mxu0
  %v499 = vadd.f32 0.0, %v498
  %v500 = vpop.f32.mrb[0].mxu0
  %501 = vmatprep.mubr.bf16.mxu0 0
  %502 = vmatmul.mubr.bf16.gmra.mrb[0].mxu0 %v169
  %v503 = vpop.f32.mrb[0].mxu0
  %v504 = vadd.f32 0.0, %v503
  %v505 = vpop.f32.mrb[0].mxu0
  %v506 = vpop.f32.mrb[0].mxu0
  %v507 = vadd.f32 0.0, %v506
  %v508 = vpop.f32.mrb[0].mxu0
  %509 = vmatprep.mubr.bf16.mxu0 0
  %510 = vmatmul.mubr.bf16.gmra.mrb[0].mxu0 %v172
  %v511 = vpop.f32.mrb[0].mxu0
  %v512 = vadd.f32 0.0, %v511
  %v513 = vpop.f32.mrb[0].mxu0
  %v514 = vpop.f32.mrb[0].mxu0
  %v515 = vadd.f32 0.0, %v514
  %v516 = vpop.f32.mrb[0].mxu0
  %517 = vmatprep.mubr.bf16.mxu0 0
  %518 = vmatmul.mubr.bf16.gmra.mrb[0].mxu0 %v175
  %v519 = vpop.f32.mrb[0].mxu0
  %v520 = vadd.f32 0.0, %v519
  %v521 = vpop.f32.mrb[0].mxu0
  %v522 = vpop.f32.mrb[0].mxu0
  %v523 = vadd.f32 0.0, %v522
  %v524 = vpop.f32.mrb[0].mxu0
  %525 = vmatprep.mubr.bf16.mxu0 0
  %526 = vmatmul.mubr.bf16.gmra.mrb[0].mxu0 %v178
  %v527 = vpop.f32.mrb[0].mxu0
  %v528 = vadd.f32 0.0, %v527
  %v529 = vpop.f32.mrb[0].mxu0
  %v530 = vpop.f32.mrb[0].mxu0
  %v531 = vadd.f32 0.0, %v530
  %v532 = vpop.f32.mrb[0].mxu0
  %533 = vmatprep.mubr.bf16.mxu0 0
  %534 = vmatmul.mubr.bf16.gmra.mrb[0].mxu0 %v181
  %v535 = vpop.f32.mrb[0].mxu0
  %v536 = vadd.f32 0.0, %v535
  %v537 = vpop.f32.mrb[0].mxu0
  %v538 = vpop.f32.mrb[0].mxu0
  %v539 = vadd.f32 0.0, %v538
  %v540 = vpop.f32.mrb[0].mxu0
  %541 = vmatprep.mubr.bf16.mxu0 0
  %542 = vmatmul.mubr.bf16.gmra.mrb[0].mxu0 %v184
  %v543 = vpop.f32.mrb[0].mxu0
  %v544 = vadd.f32 0.0, %v543
  %v545 = vpop.f32.mrb[0].mxu0
  %v546 = vpop.f32.mrb[0].mxu0
  %v547 = vadd.f32 0.0, %v546
  %v548 = vpop.f32.mrb[0].mxu0
  %549 = vdwg.mxu0
  %v550 = vadd.f32 %v233, %v456
  %v551 = vadd.f32 %v237, %v459
  %v552 = vadd.f32 %v243, %v464
  %v553 = vadd.f32 %v247, %v467
  %v554 = vadd.f32 %v253, %v472
  %v555 = vadd.f32 %v257, %v475
  %v556 = vadd.f32 %v263, %v480
  %v557 = vadd.f32 %v267, %v483
  %v558 = vmax.f32 %v424, %v550
  %v559 = vmax.f32 %v427, %v551
  %v560 = vmax.f32 %v432, %v552
  %v561 = vmax.f32 %v435, %v553
  %v562 = vmax.f32 %v440, %v554
  %v563 = vmax.f32 %v443, %v555
  %v564 = vmax.f32 %v448, %v556
  %v565 = vmax.f32 %v451, %v557
  %v566 = vadd.f32 %v231, %v273
  %v567 = vadd.f32 %v235, %v277
  %v568 = vadd.f32 %v241, %v283
  %v569 = vadd.f32 %v245, %v287
  %v570 = vadd.f32 %v251, %v293
  %v571 = vadd.f32 %v255, %v297
  %v572 = vadd.f32 %v261, %v303
  %v573 = vadd.f32 %v265, %v307
  %v574 = vadd.f32 %v566, %v488
  %v575 = vadd.f32 %v567, %v491
  %v576 = vadd.f32 %v568, %v496
  %v577 = vadd.f32 %v569, %v499
  %v578 = vadd.f32 %v570, %v504
  %v579 = vadd.f32 %v571, %v507
  %v580 = vadd.f32 %v572, %v512
  %v581 = vadd.f32 %v573, %v515
  %v582 = vmax.f32 %v558, %v574
  %v583 = vmax.f32 %v559, %v575
  %v584 = vmax.f32 %v560, %v576
  %v585 = vmax.f32 %v561, %v577
  %v586 = vmax.f32 %v562, %v578
  %v587 = vmax.f32 %v563, %v579
  %v588 = vmax.f32 %v564, %v580
  %v589 = vmax.f32 %v565, %v581
  %v590 = vadd.f32 %v271, %v313
  %v591 = vadd.f32 %v275, %v317
  %v592 = vadd.f32 %v281, %v323
  %v593 = vadd.f32 %v285, %v327
  %v594 = vadd.f32 %v291, %v333
  %v595 = vadd.f32 %v295, %v337
  %v596 = vadd.f32 %v301, %v343
  %v597 = vadd.f32 %v305, %v347
  %v598 = vadd.f32 %v590, %v520
  %v599 = vadd.f32 %v591, %v523
  %v600 = vadd.f32 %v592, %v528
  %v601 = vadd.f32 %v593, %v531
  %v602 = vadd.f32 %v594, %v536
  %v603 = vadd.f32 %v595, %v539
  %v604 = vadd.f32 %v596, %v544
  %v605 = vadd.f32 %v597, %v547
  %v606 = vmax.f32 %v582, %v598
  %v607 = vmax.f32 %v583, %v599
  %v608 = vmax.f32 %v584, %v600
  %v609 = vmax.f32 %v585, %v601
  %v610 = vmax.f32 %v586, %v602
  %v611 = vmax.f32 %v587, %v603
  %v612 = vmax.f32 %v588, %v604
  %v613 = vmax.f32 %v589, %v605
  %v614 = vadd.f32 %v311, %v353
  %v615 = vadd.f32 %v315, %v357
  %v616 = vadd.f32 %v321, %v363
  %v617 = vadd.f32 %v325, %v367
  %v618 = vadd.f32 %v331, %v373
  %v619 = vadd.f32 %v335, %v377
  %v620 = vadd.f32 %v341, %v383
  %v621 = vadd.f32 %v345, %v387
  %v622 = vmax.f32 %v606, %v614
  %v623 = vmax.f32 %v607, %v615
  %v624 = vmax.f32 %v608, %v616
  %v625 = vmax.f32 %v609, %v617
  %v626 = vmax.f32 %v610, %v618
  %v627 = vmax.f32 %v611, %v619
  %v628 = vmax.f32 %v612, %v620
  %v629 = vmax.f32 %v613, %v621
  %v630 = vmax.f32 %v622, %v351
  %v631 = vmax.f32 %v623, %v355
  %v632 = vmax.f32 %v624, %v361
  %v633 = vmax.f32 %v625, %v365
  %v634 = vmax.f32 %v626, %v371
  %v635 = vmax.f32 %v627, %v375
  %v636 = vmax.f32 %v628, %v381
  %v637 = vmax.f32 %v629, %v385
  %v638 = vld [vmem:[%s2] sm:$0x1]
  %v640 = vlaneseq
  %v641 = vshrl.u32 %v640, 7
  %v642 = vsub.s32 0, %v641
  %v643 = vrot.slane %v638, %v642
  %v645 = vadd.f32 %v630, %v643
  %v646 = vadd.f32 %v631, %v643
  %v647 = vadd.f32 %v632, %v643
  %v648 = vadd.f32 %v633, %v643
  %v649 = vadd.f32 %v634, %v643
  %v650 = vadd.f32 %v635, %v643
  %v651 = vadd.f32 %v636, %v643
  %v652 = vadd.f32 %v637, %v643
  %v653 = vtanh.pop %v645
  %v654 = vtanh.pop %v646
  %v655 = vtanh.pop %v647
  %v656 = vtanh.pop %v648
  %v657 = vtanh.pop %v649
  %v658 = vtanh.pop %v650
  %v659 = vtanh.pop %v651
  %v660 = vtanh.pop %v652
  %v661 = vpack.c.bf16 %v654, %v653
  %v662 = vpack.c.bf16 %v656, %v655
  %v663 = vpack.c.bf16 %v658, %v657
  %v664 = vpack.c.bf16 %v660, %v659
  %v669 = vunpack.c.l.b16 %v661
  %v670 = vunpack.c.h.b16 %v661
  %v671 = vunpack.c.l.b16 %v662
  %v672 = vunpack.c.h.b16 %v662
  %v673 = vunpack.c.l.b16 %v663
  %v674 = vunpack.c.h.b16 %v663
  %v675 = vunpack.c.l.b16 %v664
  %v676 = vunpack.c.h.b16 %v664
  %v677 = vpack.c.b16 %v669, %v669
  %v678 = vpack.c.b16 %v670, %v670
  %v679 = vpack.c.b16 %v671, %v671
  %v680 = vpack.c.b16 %v672, %v672
  %v681 = vpack.c.b16 %v673, %v673
  %v682 = vpack.c.b16 %v674, %v674
  %v683 = vpack.c.b16 %v675, %v675
  %v684 = vpack.c.b16 %v676, %v676
  %693 = vst [vmem:[%s3] sm:$0xf] %v677
  %694 = vst [vmem:[%s3 + $0x4] sm:$0xf] %v678
  %695 = vst [vmem:[%s3 + $0x8] sm:$0xf] %v679
  %696 = vst [vmem:[%s3 + $0xc] sm:$0xf] %v680
  %697 = vst [vmem:[%s3 + $0x10] sm:$0xf] %v681
  %698 = vst [vmem:[%s3 + $0x14] sm:$0xf] %v682
  %699 = vst [vmem:[%s3 + $0x18] sm:$0xf] %v683
  %700 = vst [vmem:[%s3 + $0x1c] sm:$0xf] %v684
  // Predicated region
  $region14: #{rnn_shared_forward.2} parent=0 // pred_check
    _
  $region15: #{rnn_shared_forward.2} parent=0 // pred_check_branch
    %702 = sbr.rel (0) target = $region17
  $region16: #{rnn_shared_forward.2} parent=0 // pred_region
    _
  $region17: #{rnn_shared_forward.2} parent=0 // pred_fallthru
    _
  // Predicated region
  $region18: #{rnn_shared_forward.2} parent=0 // pred_check
    _
  $region19: #{rnn_shared_forward.2} parent=0 // pred_check_branch
    %704 = sbr.rel (0) target = $region21
  $region20: #{rnn_shared_forward.2} parent=0 // pred_region
    _
  $region21: #{rnn_shared_forward.2} parent=0 // pred_fallthru
    _

// kernel: rnn_shared_forward.3
$region0: #{rnn_shared_forward.3}
  #allocation0 [shape = 'u32[]', space=smem, size = 0x4, offset = 0x4, fixed_abs, tag = 'smem constant byte address 0x4 - core index']
  #allocation1 [shape = 'u32[144,128]{1,0:T(1,128)}', space=vmem, size = 0x12000, scoped, tag = 'internal scratch']
  #allocation2 [shape = 'f32[64,512]{1,0:T(8,128)}', space=vmem, size = 0x20000, scoped, tag = 'scratch operand']
  #allocation3 [shape = 'f32[64,512]{1,0:T(8,128)}', space=vmem, size = 0x20000, scoped, tag = 'scratch operand']
  #allocation4 [shape = 'bf16[8,256]{1,0:T(8,128)(2,1)}', space=vmem, size = 0x1000, scoped, tag = 'scratch operand']
  #allocation5 [shape = 'f32[8,256]{1,0:T(8,128)}', space=vmem, size = 0x2000, scoped, tag = 'scratch operand']
  %s0 = inlined_call_operand.vmem [shape: bf16[64,16], index: 0, kind: input, shape index: {}, may-alias: {0,3}]
  %s1 = inlined_call_operand.vmem [shape: bf16[64,128], index: 1, kind: input, shape index: {}, may-alias: {1,4}]
  %s2 = inlined_call_operand.vmem [shape: f32[64,1], index: 2, kind: input, shape index: {}, may-alias: {2,5}]
  %s3 = inlined_call_operand.vmem [shape: bf16[64,16], index: 3, kind: input, shape index: {}, may-alias: {0,3}]
  %s4 = inlined_call_operand.vmem [shape: bf16[64,128], index: 4, kind: input, shape index: {}, may-alias: {1,4}]
  %s5 = inlined_call_operand.vmem [shape: f32[64,1], index: 5, kind: input, shape index: {}, may-alias: {2,5}]
  %s6 = inlined_call_operand.vmem [shape: bf16[16,1024], index: 6, kind: input, shape index: {}]
  %s7 = inlined_call_operand.vmem [shape: bf16[128,1024], index: 7, kind: input, shape index: {}]
  %s8 = inlined_call_operand.vmem [shape: f32[1,1024], index: 8, kind: input, shape index: {}]
  %s9 = inlined_call_operand.vmem [shape: f32[1,512], index: 9, kind: input, shape index: {}]
  %s10 = inlined_call_operand.vmem [shape: bf16[128,512], index: 10, kind: input, shape index: {}]
  %s11 = inlined_call_operand.vmem [shape: bf16[128,512], index: 11, kind: input, shape index: {}]
  %s12 = inlined_call_operand.vmem [shape: f32[64,128], index: 12, kind: output, shape index: {0}]
  %s13 = inlined_call_operand.vmem [shape: f32[64,128], index: 13, kind: output, shape index: {1}]
  %14 = xla_tuple %s12, %s13
  %s15 = sld [smem:[#allocation0]]
  $region70: #{rnn_shared_forward.3} parent=0
    _
  %s17 = ssub.s32 1, %s15
  %s18 = scalar_select 0, %s17, %s15
  // Predicated region
  $region2: #{rnn_shared_forward.3} parent=0 // pred_check
    _
  $region3: #{rnn_shared_forward.3} parent=0 // pred_check_branch
    %20 = sbr.rel (0) target = $region5
  $region4: #{rnn_shared_forward.3} parent=0 // pred_region
    %s21 = sadd.s32 0, 0
    %s22 = smul.u32 8, %s21
    %p23 = scmp.lt.s32.totalorder %s22, 7
    %s24 = scalar_select %p23, %s22, 7
    %s25 = smul.addr %s24, 4
    %s26 = scalar_lea.vmem %s0, %s25
    %s27 = sadd.s32 0, 0
    %s28 = smul.u32 8, %s27
  $region5: #{rnn_shared_forward.3} parent=0 // pred_fallthru
    _
  // Predicated region
  $region6: #{rnn_shared_forward.3} parent=0 // pred_check
    _
  $region7: #{rnn_shared_forward.3} parent=0 // pred_check_branch
    %30 = sbr.rel (0) target = $region9
  $region8: #{rnn_shared_forward.3} parent=0 // pred_region
    %s31 = sadd.s32 0, 0
    %s32 = smul.u32 8, %s31
    %p33 = scmp.lt.s32.totalorder %s32, 7
    %s34 = scalar_select %p33, %s32, 7
    %s35 = smul.addr %s34, 4
    %s36 = scalar_lea.vmem %s1, %s35
    %s37 = sadd.s32 0, 0
    %s38 = smul.u32 8, %s37
  $region9: #{rnn_shared_forward.3} parent=0 // pred_fallthru
    _
  // Predicated region
  $region10: #{rnn_shared_forward.3} parent=0 // pred_check
    _
  $region11: #{rnn_shared_forward.3} parent=0 // pred_check_branch
    %40 = sbr.rel (0) target = $region13
  $region12: #{rnn_shared_forward.3} parent=0 // pred_region
    %s41 = sadd.s32 0, 0
    %s42 = smul.u32 8, %s41
    %p43 = scmp.lt.s32.totalorder %s42, 7
    %s44 = scalar_select %p43, %s42, 7
    %s45 = smul.addr %s44, 8
    %s46 = scalar_lea.vmem %s2, %s45
    %s47 = sadd.s32 0, 0
    %s48 = smul.u32 8, %s47
  $region13: #{rnn_shared_forward.3} parent=0 // pred_fallthru
    _
  // Predicated region
  $region14: #{rnn_shared_forward.3} parent=0 // pred_check
    _
  $region15: #{rnn_shared_forward.3} parent=0 // pred_check_branch
    %50 = sbr.rel (0) target = $region17
  $region16: #{rnn_shared_forward.3} parent=0 // pred_region
    %s51 = ssub.s32 0, 0
    %s52 = sadd.s32 0, %s51
    %s53 = smul.u32 8, %s52
    %p54 = scmp.lt.s32.totalorder %s53, 7
    %s55 = scalar_select %p54, %s53, 7
    %s56 = smul.addr %s55, 4
    %s57 = scalar_lea.vmem %s3, %s56
    %s58 = ssub.s32 0, 0
    %s59 = sadd.s32 0, %s58
    %s60 = smul.u32 8, %s59
  $region17: #{rnn_shared_forward.3} parent=0 // pred_fallthru
    _
  // Predicated region
  $region18: #{rnn_shared_forward.3} parent=0 // pred_check
    _
  $region19: #{rnn_shared_forward.3} parent=0 // pred_check_branch
    %62 = sbr.rel (0) target = $region21
  $region20: #{rnn_shared_forward.3} parent=0 // pred_region
    %s63 = ssub.s32 0, 0
    %s64 = sadd.s32 0, %s63
    %s65 = smul.u32 8, %s64
    %p66 = scmp.lt.s32.totalorder %s65, 7
    %s67 = scalar_select %p66, %s65, 7
    %s68 = smul.addr %s67, 4
    %s69 = scalar_lea.vmem %s4, %s68
    %s70 = ssub.s32 0, 0
    %s71 = sadd.s32 0, %s70
    %s72 = smul.u32 8, %s71
  $region21: #{rnn_shared_forward.3} parent=0 // pred_fallthru
    _
  // Predicated region
  $region22: #{rnn_shared_forward.3} parent=0 // pred_check
    _
  $region23: #{rnn_shared_forward.3} parent=0 // pred_check_branch
    %74 = sbr.rel (0) target = $region25
  $region24: #{rnn_shared_forward.3} parent=0 // pred_region
    %s75 = ssub.s32 0, 0
    %s76 = sadd.s32 0, %s75
    %s77 = smul.u32 8, %s76
    %p78 = scmp.lt.s32.totalorder %s77, 7
    %s79 = scalar_select %p78, %s77, 7
    %s80 = smul.addr %s79, 8
    %s81 = scalar_lea.vmem %s5, %s80
    %s82 = ssub.s32 0, 0
    %s83 = sadd.s32 0, %s82
    %s84 = smul.u32 8, %s83
  $region25: #{rnn_shared_forward.3} parent=0 // pred_fallthru
    _
  // Predicated region
  $region26: #{rnn_shared_forward.3} parent=0 // pred_check
    _
  $region27: #{rnn_shared_forward.3} parent=0 // pred_check_branch
    %86 = sbr.rel (0) target = $region29
  $region28: #{rnn_shared_forward.3} parent=0 // pred_region
    _
  $region29: #{rnn_shared_forward.3} parent=0 // pred_fallthru
    _
  // Predicated region
  $region30: #{rnn_shared_forward.3} parent=0 // pred_check
    _
  $region31: #{rnn_shared_forward.3} parent=0 // pred_check_branch
    %88 = sbr.rel (0) target = $region33
  $region32: #{rnn_shared_forward.3} parent=0 // pred_region
    _
  $region33: #{rnn_shared_forward.3} parent=0 // pred_fallthru
    _
  // Predicated region
  $region34: #{rnn_shared_forward.3} parent=0 // pred_check
    _
  $region35: #{rnn_shared_forward.3} parent=0 // pred_check_branch
    %90 = sbr.rel (0) target = $region37
  $region36: #{rnn_shared_forward.3} parent=0 // pred_region
    _
  $region37: #{rnn_shared_forward.3} parent=0 // pred_fallthru
    _
  // Predicated region
  $region38: #{rnn_shared_forward.3} parent=0 // pred_check
    _
  $region39: #{rnn_shared_forward.3} parent=0 // pred_check_branch
    %92 = sbr.rel (0) target = $region41
  $region40: #{rnn_shared_forward.3} parent=0 // pred_region
    _
  $region41: #{rnn_shared_forward.3} parent=0 // pred_fallthru
    _
  // Predicated region
  $region42: #{rnn_shared_forward.3} parent=0 // pred_check
    _
  $region43: #{rnn_shared_forward.3} parent=0 // pred_check_branch
    %94 = sbr.rel (0) target = $region45
  $region44: #{rnn_shared_forward.3} parent=0 // pred_region
    _
  $region45: #{rnn_shared_forward.3} parent=0 // pred_fallthru
    _
  // Predicated region
  $region46: #{rnn_shared_forward.3} parent=0 // pred_check
    _
  $region47: #{rnn_shared_forward.3} parent=0 // pred_check_branch
    %96 = sbr.rel (0) target = $region49
  $region48: #{rnn_shared_forward.3} parent=0 // pred_region
    _
  $region49: #{rnn_shared_forward.3} parent=0 // pred_fallthru
    _
  %s97 = sadd.s32 0, 0
  %s98 = smul.u32 8, %s97
  %p99 = scmp.lt.s32.totalorder %s98, 7
  %s100 = scalar_select %p99, %s98, 7
  %s101 = smul.addr %s100, 4
  %s102 = scalar_lea.vmem %s0, %s101
  %s103 = sadd.s32 0, 0
  %s104 = smul.u32 8, %s103
  %p105 = scmp.lt.s32.totalorder %s104, 7
  %s106 = scalar_select %p105, %s104, 7
  %s107 = smul.addr %s106, 4
  %s108 = scalar_lea.vmem %s1, %s107
  %s109 = sadd.s32 0, 0
  %s110 = smul.u32 8, %s109
  %p111 = scmp.lt.s32.totalorder %s110, 7
  %s112 = scalar_select %p111, %s110, 7
  %s113 = smul.addr %s112, 8
  %s114 = scalar_lea.vmem %s2, %s113
  %s115 = ssub.s32 0, 0
  %s116 = sadd.s32 0, %s115
  %s117 = smul.u32 8, %s116
  %p118 = scmp.lt.s32.totalorder %s117, 7
  %s119 = scalar_select %p118, %s117, 7
  %s120 = smul.addr %s119, 4
  %s121 = scalar_lea.vmem %s3, %s120
  %s122 = ssub.s32 0, 0
  %s123 = sadd.s32 0, %s122
  %s124 = smul.u32 8, %s123
  %p125 = scmp.lt.s32.totalorder %s124, 7
  %s126 = scalar_select %p125, %s124, 7
  %s127 = smul.addr %s126, 4
  %s128 = scalar_lea.vmem %s4, %s127
  %s129 = ssub.s32 0, 0
  %s130 = sadd.s32 0, %s129
  %s131 = smul.u32 8, %s130
  %p132 = scmp.lt.s32.totalorder %s131, 7
  %s133 = scalar_select %p132, %s131, 7
  %s134 = smul.addr %s133, 8
  %s135 = scalar_lea.vmem %s5, %s134
  %s136 = sadd.s32 0, 0
  %s137 = smul.u32 8, %s136
  %p138 = scmp.lt.s32.totalorder %s137, 7
  %s139 = scalar_select %p138, %s137, 7
  %s140 = smul.addr %s139, 8
  %s141 = scalar_lea.vmem %s12, %s140
  %s142 = ssub.s32 0, 0
  %s143 = sadd.s32 0, %s142
  %s144 = smul.u32 8, %s143
  %p145 = scmp.lt.s32.totalorder %s144, 7
  %s146 = scalar_select %p145, %s144, 7
  %s147 = smul.addr %s146, 8
  %s148 = scalar_lea.vmem %s13, %s147
  %s149 = sadd.s32 0, 0
  %s150 = smul.u32 8, %s149
  %p151 = scmp.lt.s32.totalorder %s150, 7
  %s152 = scalar_select %p151, %s150, 7
  %s153 = smul.addr %s152, 4
  %s154 = scalar_lea.vmem %s0, %s153
  %s155 = sadd.s32 0, 0
  %s156 = smul.u32 8, %s155
  %s157 = sadd.s32 0, 0
  %s158 = smul.u32 8, %s157
  %p159 = scmp.lt.s32.totalorder %s158, 7
  %s160 = scalar_select %p159, %s158, 7
  %s161 = smul.addr %s160, 4
  %s162 = scalar_lea.vmem %s1, %s161
  %s163 = sadd.s32 0, 0
  %s164 = smul.u32 8, %s163
  %s165 = sadd.s32 0, 0
  %s166 = smul.u32 8, %s165
  %p167 = scmp.lt.s32.totalorder %s166, 7
  %s168 = scalar_select %p167, %s166, 7
  %s169 = smul.addr %s168, 8
  %s170 = scalar_lea.vmem %s2, %s169
  %s171 = sadd.s32 0, 0
  %s172 = smul.u32 8, %s171
  %s173 = ssub.s32 0, 0
  %s174 = sadd.s32 0, %s173
  %s175 = smul.u32 8, %s174
  %p176 = scmp.lt.s32.totalorder %s175, 7
  %s177 = scalar_select %p176, %s175, 7
  %s178 = smul.addr %s177, 4
  %s179 = scalar_lea.vmem %s3, %s178
  %s180 = ssub.s32 0, 0
  %s181 = sadd.s32 0, %s180
  %s182 = smul.u32 8, %s181
  %s183 = ssub.s32 0, 0
  %s184 = sadd.s32 0, %s183
  %s185 = smul.u32 8, %s184
  %p186 = scmp.lt.s32.totalorder %s185, 7
  %s187 = scalar_select %p186, %s185, 7
  %s188 = smul.addr %s187, 4
  %s189 = scalar_lea.vmem %s4, %s188
  %s190 = ssub.s32 0, 0
  %s191 = sadd.s32 0, %s190
  %s192 = smul.u32 8, %s191
  %s193 = ssub.s32 0, 0
  %s194 = sadd.s32 0, %s193
  %s195 = smul.u32 8, %s194
  %p196 = scmp.lt.s32.totalorder %s195, 7
  %s197 = scalar_select %p196, %s195, 7
  %s198 = smul.addr %s197, 8
  %s199 = scalar_lea.vmem %s5, %s198
  %s200 = ssub.s32 0, 0
  %s201 = sadd.s32 0, %s200
  %s202 = smul.u32 8, %s201
  %s203 = sadd.s32 0, 0
  %s204 = smul.u32 8, %s203
  %p205 = scmp.lt.s32.totalorder %s204, 7
  %s206 = scalar_select %p205, %s204, 7
  %s207 = smul.addr %s206, 8
  %s208 = scalar_lea.vmem %s12, %s207
  %s209 = sadd.s32 0, 0
  %s210 = smul.u32 8, %s209
  %s211 = ssub.s32 0, 0
  %s212 = sadd.s32 0, %s211
  %s213 = smul.u32 8, %s212
  %p214 = scmp.lt.s32.totalorder %s213, 7
  %s215 = scalar_select %p214, %s213, 7
  %s216 = smul.addr %s215, 8
  %s217 = scalar_lea.vmem %s13, %s216
  %s218 = ssub.s32 0, 0
  %s219 = sadd.s32 0, %s218
  %s220 = smul.u32 8, %s219
  %p222 = scmp.eq.s32.totalorder 0, 0
  // Predicated region
  $region50: #{rnn_shared_forward.3} parent=0 // pred_check
    %p223 = pneg %p222
  $region51: #{rnn_shared_forward.3} parent=0 // pred_check_branch
    %225 = sbr.rel (%p223) target = $region53
  $region52: #{rnn_shared_forward.3} parent=0 // pred_region
    %226 = vst [vmem:[#allocation4] sm:$0xff] 0
    %227 = vst [vmem:[#allocation5] sm:$0xff] 0.0
    %228 = vst [vmem:[#allocation5 + $0x8] sm:$0xff] 0.0
  $region53: #{rnn_shared_forward.3} parent=0 // pred_fallthru
    _
  %v229 = vld [vmem:[%s154] sm:$0xf]
  %v230 = vld [vmem:[%s154 + $0x4] sm:$0xf]
  %v231 = vld [vmem:[%s154 + $0x8] sm:$0xf]
  %v232 = vld [vmem:[%s154 + $0xc] sm:$0xf]
  %v233 = vld [vmem:[%s154 + $0x10] sm:$0xf]
  %v234 = vld [vmem:[%s154 + $0x14] sm:$0xf]
  %v235 = vld [vmem:[%s154 + $0x18] sm:$0xf]
  %v236 = vld [vmem:[%s154 + $0x1c] sm:$0xf]
  %v237 = vld [vmem:[%s6] sm:$0xff]
  %v238 = vld [vmem:[%s6 + $0x8] sm:$0xff]
  %v239 = vld [vmem:[%s6 + $0x20] sm:$0xff]
  %v240 = vld [vmem:[%s6 + $0x28] sm:$0xff]
  %v241 = vld [vmem:[%s162] sm:$0xf]
  %v242 = vld [vmem:[%s162 + $0x4] sm:$0xf]
  %v243 = vld [vmem:[%s162 + $0x8] sm:$0xf]
  %v244 = vld [vmem:[%s162 + $0xc] sm:$0xf]
  %v245 = vld [vmem:[%s162 + $0x10] sm:$0xf]
  %v246 = vld [vmem:[%s162 + $0x14] sm:$0xf]
  %v247 = vld [vmem:[%s162 + $0x18] sm:$0xf]
  %v248 = vld [vmem:[%s162 + $0x1c] sm:$0xf]
  %v249 = vld [vmem:[%s7] sm:$0xff]
  %v250 = vld [vmem:[%s7 + $0x8] sm:$0xff]
  %v251 = vld [vmem:[%s7 + $0x20] sm:$0xff]
  %v252 = vld [vmem:[%s7 + $0x28] sm:$0xff]
  %v253 = vld [vmem:[%s7 + $0x40] sm:$0xff]
  %v254 = vld [vmem:[%s7 + $0x48] sm:$0xff]
  %v255 = vld [vmem:[%s7 + $0x60] sm:$0xff]
  %v256 = vld [vmem:[%s7 + $0x68] sm:$0xff]
  %v257 = vld [vmem:[%s7 + $0x80] sm:$0xff]
  %v258 = vld [vmem:[%s7 + $0x88] sm:$0xff]
  %v259 = vld [vmem:[%s7 + $0xa0] sm:$0xff]
  %v260 = vld [vmem:[%s7 + $0xa8] sm:$0xff]
  %v261 = vld [vmem:[%s7 + $0xc0] sm:$0xff]
  %v262 = vld [vmem:[%s7 + $0xc8] sm:$0xff]
  %v263 = vld [vmem:[%s7 + $0xe0] sm:$0xff]
  %v264 = vld [vmem:[%s7 + $0xe8] sm:$0xff]
  %v265 = vld [vmem:[%s7 + $0x100] sm:$0xff]
  %v266 = vld [vmem:[%s7 + $0x108] sm:$0xff]
  %v267 = vld [vmem:[%s7 + $0x120] sm:$0xff]
  %v268 = vld [vmem:[%s7 + $0x128] sm:$0xff]
  %v269 = vld [vmem:[%s7 + $0x140] sm:$0xff]
  %v270 = vld [vmem:[%s7 + $0x148] sm:$0xff]
  %v271 = vld [vmem:[%s7 + $0x160] sm:$0xff]
  %v272 = vld [vmem:[%s7 + $0x168] sm:$0xff]
  %v273 = vld [vmem:[%s7 + $0x180] sm:$0xff]
  %v274 = vld [vmem:[%s7 + $0x188] sm:$0xff]
  %v275 = vld [vmem:[%s7 + $0x1a0] sm:$0xff]
  %v276 = vld [vmem:[%s7 + $0x1a8] sm:$0xff]
  %v277 = vld [vmem:[%s7 + $0x1c0] sm:$0xff]
  %v278 = vld [vmem:[%s7 + $0x1c8] sm:$0xff]
  %v279 = vld [vmem:[%s7 + $0x1e0] sm:$0xff]
  %v280 = vld [vmem:[%s7 + $0x1e8] sm:$0xff]
  %v289 = vunpack.c.l.b16 %v241
  %v290 = vunpack.c.l.b16 %v242
  %v291 = vunpack.c.l.b16 %v243
  %v292 = vunpack.c.l.b16 %v244
  %v293 = vunpack.c.l.b16 %v245
  %v294 = vunpack.c.l.b16 %v246
  %v295 = vunpack.c.l.b16 %v247
  %v296 = vunpack.c.l.b16 %v248
  %v297 = vpack.c.b16 %v290, %v289
  %v298 = vpack.c.b16 %v292, %v291
  %v299 = vpack.c.b16 %v294, %v293
  %v300 = vpack.c.b16 %v296, %v295
  %v337 = vunpack.c.l.b16 %v249
  %v338 = vunpack.c.h.b16 %v249
  %v339 = vunpack.c.l.b16 %v250
  %v340 = vunpack.c.h.b16 %v250
  %v341 = vunpack.c.l.b16 %v251
  %v342 = vunpack.c.h.b16 %v251
  %v343 = vunpack.c.l.b16 %v252
  %v344 = vunpack.c.h.b16 %v252
  %v345 = vunpack.c.l.b16 %v253
  %v346 = vunpack.c.h.b16 %v253
  %v347 = vunpack.c.l.b16 %v254
  %v348 = vunpack.c.h.b16 %v254
  %v349 = vunpack.c.l.b16 %v255
  %v350 = vunpack.c.h.b16 %v255
  %v351 = vunpack.c.l.b16 %v256
  %v352 = vunpack.c.h.b16 %v256
  %v353 = vunpack.c.l.b16 %v257
  %v354 = vunpack.c.h.b16 %v257
  %v355 = vunpack.c.l.b16 %v258
  %v356 = vunpack.c.h.b16 %v258
  %v357 = vunpack.c.l.b16 %v259
  %v358 = vunpack.c.h.b16 %v259
  %v359 = vunpack.c.l.b16 %v260
  %v360 = vunpack.c.h.b16 %v260
  %v361 = vunpack.c.l.b16 %v261
  %v362 = vunpack.c.h.b16 %v261
  %v363 = vunpack.c.l.b16 %v262
  %v364 = vunpack.c.h.b16 %v262
  %v365 = vunpack.c.l.b16 %v263
  %v366 = vunpack.c.h.b16 %v263
  %v367 = vunpack.c.l.b16 %v264
  %v368 = vunpack.c.h.b16 %v264
  %v369 = vunpack.c.l.b16 %v265
  %v370 = vunpack.c.h.b16 %v265
  %v371 = vunpack.c.l.b16 %v266
  %v372 = vunpack.c.h.b16 %v266
  %v373 = vunpack.c.l.b16 %v267
  %v374 = vunpack.c.h.b16 %v267
  %v375 = vunpack.c.l.b16 %v268
  %v376 = vunpack.c.h.b16 %v268
  %v377 = vunpack.c.l.b16 %v269
  %v378 = vunpack.c.h.b16 %v269
  %v379 = vunpack.c.l.b16 %v270
  %v380 = vunpack.c.h.b16 %v270
  %v381 = vunpack.c.l.b16 %v271
  %v382 = vunpack.c.h.b16 %v271
  %v383 = vunpack.c.l.b16 %v272
  %v384 = vunpack.c.h.b16 %v272
  %v385 = vunpack.c.l.b16 %v273
  %v386 = vunpack.c.h.b16 %v273
  %v387 = vunpack.c.l.b16 %v274
  %v388 = vunpack.c.h.b16 %v274
  %v389 = vunpack.c.l.b16 %v275
  %v390 = vunpack.c.h.b16 %v275
  %v391 = vunpack.c.l.b16 %v276
  %v392 = vunpack.c.h.b16 %v276
  %v393 = vunpack.c.l.b16 %v277
  %v394 = vunpack.c.h.b16 %v277
  %v395 = vunpack.c.l.b16 %v278
  %v396 = vunpack.c.h.b16 %v278
  %v397 = vunpack.c.l.b16 %v279
  %v398 = vunpack.c.h.b16 %v279
  %v399 = vunpack.c.l.b16 %v280
  %v400 = vunpack.c.h.b16 %v280
  %v401 = vpack.c.b16 %v341, %v337
  %v402 = vpack.c.b16 %v342, %v338
  %v403 = vpack.c.b16 %v343, %v339
  %v404 = vpack.c.b16 %v344, %v340
  %v405 = vpack.c.b16 %v349, %v345
  %v406 = vpack.c.b16 %v350, %v346
  %v407 = vpack.c.b16 %v351, %v347
  %v408 = vpack.c.b16 %v352, %v348
  %v409 = vpack.c.b16 %v357, %v353
  %v410 = vpack.c.b16 %v358, %v354
  %v411 = vpack.c.b16 %v359, %v355
  %v412 = vpack.c.b16 %v360, %v356
  %v413 = vpack.c.b16 %v365, %v361
  %v414 = vpack.c.b16 %v366, %v362
  %v415 = vpack.c.b16 %v367, %v363
  %v416 = vpack.c.b16 %v368, %v364
  %v417 = vpack.c.b16 %v373, %v369
  %v418 = vpack.c.b16 %v374, %v370
  %v419 = vpack.c.b16 %v375, %v371
  %v420 = vpack.c.b16 %v376, %v372
  %v421 = vpack.c.b16 %v381, %v377
  %v422 = vpack.c.b16 %v382, %v378
  %v423 = vpack.c.b16 %v383, %v379
  %v424 = vpack.c.b16 %v384, %v380
  %v425 = vpack.c.b16 %v389, %v385
  %v426 = vpack.c.b16 %v390, %v386
  %v427 = vpack.c.b16 %v391, %v387
  %v428 = vpack.c.b16 %v392, %v388
  %v429 = vpack.c.b16 %v397, %v393
  %v430 = vpack.c.b16 %v398, %v394
  %v431 = vpack.c.b16 %v399, %v395
  %v432 = vpack.c.b16 %v400, %v396
  %465 = vmatprep.subr.bf16.mxu0 %v402
  %466 = vmatpush1.bf16.msra.mxu0 %v401
  %467 = vmatprep.subr.bf16.mxu0 %v406
  %468 = vmatpush1.bf16.msra.mxu0 %v405
  %469 = vmatprep.subr.bf16.mxu0 %v410
  %470 = vmatpush1.bf16.msra.mxu0 %v409
  %471 = vmatprep.subr.bf16.mxu0 %v414
  %472 = vmatpush1.bf16.msra.mxu0 %v413
  %473 = vmatprep.subr.bf16.mxu0 %v418
  %474 = vmatpush1.bf16.msra.mxu0 %v417
  %475 = vmatprep.subr.bf16.mxu0 %v422
  %476 = vmatpush1.bf16.msra.mxu0 %v421
  %477 = vmatprep.subr.bf16.mxu0 %v426
  %478 = vmatpush1.bf16.msra.mxu0 %v425
  %479 = vmatprep.subr.bf16.mxu0 %v430
  %480 = vmatpush1.bf16.msra.mxu0 %v429
  %481 = vmatprep.subr.bf16.mxu0 0
  %482 = vmatpush1.bf16.msra.mxu0 0
  %483 = vmatprep.subr.bf16.mxu0 0
  %484 = vmatpush1.bf16.msra.mxu0 0
  %485 = vmatprep.subr.bf16.mxu0 0
  %486 = vmatpush1.bf16.msra.mxu0 0
  %487 = vmatprep.subr.bf16.mxu0 0
  %488 = vmatpush1.bf16.msra.mxu0 0
  %489 = vmatprep.subr.bf16.mxu0 0
  %490 = vmatpush1.bf16.msra.mxu0 0
  %491 = vmatprep.subr.bf16.mxu0 0
  %492 = vmatpush1.bf16.msra.mxu0 0
  %493 = vmatprep.subr.bf16.mxu0 0
  %494 = vmatpush1.bf16.msra.mxu0 0
  %495 = vmatprep.subr.bf16.mxu0 0
  %496 = vmatpush1.bf16.msra.mxu0 0
  %497 = vmatprep.mubr.bf16.mxu0 0
  %498 = vmatmul.mubr.bf16.gmra.mrb[0].mxu0 %v297
  %v499 = vpop.f32.mrb[0].mxu0
  %v500 = vadd.f32 0.0, %v499
  %v501 = vpop.f32.mrb[0].mxu0
  %v502 = vadd.f32 0.0, %v501
  %v503 = vpop.f32.mrb[0].mxu0
  %v504 = vadd.f32 0.0, %v503
  %v505 = vpop.f32.mrb[0].mxu0
  %v506 = vadd.f32 0.0, %v505
  %507 = vmatprep.mubr.bf16.mxu0 0
  %508 = vmatmul.mubr.bf16.gmra.mrb[0].mxu0 %v298
  %v509 = vpop.f32.mrb[0].mxu0
  %v510 = vadd.f32 0.0, %v509
  %v511 = vpop.f32.mrb[0].mxu0
  %v512 = vadd.f32 0.0, %v511
  %v513 = vpop.f32.mrb[0].mxu0
  %v514 = vadd.f32 0.0, %v513
  %v515 = vpop.f32.mrb[0].mxu0
  %v516 = vadd.f32 0.0, %v515
  %517 = vmatprep.mubr.bf16.mxu0 0
  %518 = vmatmul.mubr.bf16.gmra.mrb[0].mxu0 %v299
  %v519 = vpop.f32.mrb[0].mxu0
  %v520 = vadd.f32 0.0, %v519
  %v521 = vpop.f32.mrb[0].mxu0
  %v522 = vadd.f32 0.0, %v521
  %v523 = vpop.f32.mrb[0].mxu0
  %v524 = vadd.f32 0.0, %v523
  %v525 = vpop.f32.mrb[0].mxu0
  %v526 = vadd.f32 0.0, %v525
  %527 = vmatprep.mubr.bf16.mxu0 0
  %528 = vmatmul.mubr.bf16.gmra.mrb[0].mxu0 %v300
  %v529 = vpop.f32.mrb[0].mxu0
  %v530 = vadd.f32 0.0, %v529
  %v531 = vpop.f32.mrb[0].mxu0
  %v532 = vadd.f32 0.0, %v531
  %v533 = vpop.f32.mrb[0].mxu0
  %v534 = vadd.f32 0.0, %v533
  %v535 = vpop.f32.mrb[0].mxu0
  %v536 = vadd.f32 0.0, %v535
  %537 = vdwg.mxu0
  %538 = vmatprep.subr.bf16.mxu0 %v404
  %539 = vmatpush1.bf16.msra.mxu0 %v403
  %540 = vmatprep.subr.bf16.mxu0 %v408
  %541 = vmatpush1.bf16.msra.mxu0 %v407
  %542 = vmatprep.subr.bf16.mxu0 %v412
  %543 = vmatpush1.bf16.msra.mxu0 %v411
  %544 = vmatprep.subr.bf16.mxu0 %v416
  %545 = vmatpush1.bf16.msra.mxu0 %v415
  %546 = vmatprep.subr.bf16.mxu0 %v420
  %547 = vmatpush1.bf16.msra.mxu0 %v419
  %548 = vmatprep.subr.bf16.mxu0 %v424
  %549 = vmatpush1.bf16.msra.mxu0 %v423
  %550 = vmatprep.subr.bf16.mxu0 %v428
  %551 = vmatpush1.bf16.msra.mxu0 %v427
  %552 = vmatprep.subr.bf16.mxu0 %v432
  %553 = vmatpush1.bf16.msra.mxu0 %v431
  %554 = vmatprep.subr.bf16.mxu0 0
  %555 = vmatpush1.bf16.msra.mxu0 0
  %556 = vmatprep.subr.bf16.mxu0 0
  %557 = vmatpush1.bf16.msra.mxu0 0
  %558 = vmatprep.subr.bf16.mxu0 0
  %559 = vmatpush1.bf16.msra.mxu0 0
  %560 = vmatprep.subr.bf16.mxu0 0
  %561 = vmatpush1.bf16.msra.mxu0 0
  %562 = vmatprep.subr.bf16.mxu0 0
  %563 = vmatpush1.bf16.msra.mxu0 0
  %564 = vmatprep.subr.bf16.mxu0 0
  %565 = vmatpush1.bf16.msra.mxu0 0
  %566 = vmatprep.subr.bf16.mxu0 0
  %567 = vmatpush1.bf16.msra.mxu0 0
  %568 = vmatprep.subr.bf16.mxu0 0
  %569 = vmatpush1.bf16.msra.mxu0 0
  %570 = vmatprep.mubr.bf16.mxu0 0
  %571 = vmatmul.mubr.bf16.gmra.mrb[0].mxu0 %v297
  %v572 = vpop.f32.mrb[0].mxu0
  %v573 = vadd.f32 0.0, %v572
  %v574 = vpop.f32.mrb[0].mxu0
  %v575 = vadd.f32 0.0, %v574
  %v576 = vpop.f32.mrb[0].mxu0
  %v577 = vadd.f32 0.0, %v576
  %v578 = vpop.f32.mrb[0].mxu0
  %v579 = vadd.f32 0.0, %v578
  %580 = vmatprep.mubr.bf16.mxu0 0
  %581 = vmatmul.mubr.bf16.gmra.mrb[0].mxu0 %v298
  %v582 = vpop.f32.mrb[0].mxu0
  %v583 = vadd.f32 0.0, %v582
  %v584 = vpop.f32.mrb[0].mxu0
  %v585 = vadd.f32 0.0, %v584
  %v586 = vpop.f32.mrb[0].mxu0
  %v587 = vadd.f32 0.0, %v586
  %v588 = vpop.f32.mrb[0].mxu0
  %v589 = vadd.f32 0.0, %v588
  %590 = vmatprep.mubr.bf16.mxu0 0
  %591 = vmatmul.mubr.bf16.gmra.mrb[0].mxu0 %v299
  %v592 = vpop.f32.mrb[0].mxu0
  %v593 = vadd.f32 0.0, %v592
  %v594 = vpop.f32.mrb[0].mxu0
  %v595 = vadd.f32 0.0, %v594
  %v596 = vpop.f32.mrb[0].mxu0
  %v597 = vadd.f32 0.0, %v596
  %v598 = vpop.f32.mrb[0].mxu0
  %v599 = vadd.f32 0.0, %v598
  %600 = vmatprep.mubr.bf16.mxu0 0
  %601 = vmatmul.mubr.bf16.gmra.mrb[0].mxu0 %v300
  %v602 = vpop.f32.mrb[0].mxu0
  %v603 = vadd.f32 0.0, %v602
  %v604 = vpop.f32.mrb[0].mxu0
  %v605 = vadd.f32 0.0, %v604
  %v606 = vpop.f32.mrb[0].mxu0
  %v607 = vadd.f32 0.0, %v606
  %v608 = vpop.f32.mrb[0].mxu0
  %v609 = vadd.f32 0.0, %v608
  %610 = vdwg.mxu0
  %v619 = vunpack.c.l.b16 %v229
  %v620 = vunpack.c.l.b16 %v230
  %v621 = vunpack.c.l.b16 %v231
  %v622 = vunpack.c.l.b16 %v232
  %v623 = vunpack.c.l.b16 %v233
  %v624 = vunpack.c.l.b16 %v234
  %v625 = vunpack.c.l.b16 %v235
  %v626 = vunpack.c.l.b16 %v236
  %v627 = vpack.c.b16 %v620, %v619
  %v628 = vpack.c.b16 %v622, %v621
  %v629 = vpack.c.b16 %v624, %v623
  %v630 = vpack.c.b16 %v626, %v625
  %v635 = vunpack.c.l.b16 %v237
  %v636 = vunpack.c.h.b16 %v237
  %v637 = vunpack.c.l.b16 %v238
  %v638 = vunpack.c.h.b16 %v238
  %v639 = vunpack.c.l.b16 %v239
  %v640 = vunpack.c.h.b16 %v239
  %v641 = vunpack.c.l.b16 %v240
  %v642 = vunpack.c.h.b16 %v240
  %v643 = vpack.c.b16 %v639, %v635
  %v644 = vpack.c.b16 %v640, %v636
  %v645 = vpack.c.b16 %v641, %v637
  %v646 = vpack.c.b16 %v642, %v638
  %vm651 = vcmask 130048
  %v653 = vsel %vm651, %v627, 0
  %v656 = vsel %vm651, %v628, 0
  %v659 = vsel %vm651, %v629, 0
  %v662 = vsel %vm651, %v630, 0
  %664 = vmatprep.subr.bf16.mxu0 %v644
  %665 = vmatpush1.bf16.msra.mxu0 %v643
  %666 = vmatprep.subr.bf16.mxu0 0
  %667 = vmatpush1.bf16.msra.mxu0 0
  %668 = vmatprep.subr.bf16.mxu0 0
  %669 = vmatpush1.bf16.msra.mxu0 0
  %670 = vmatprep.subr.bf16.mxu0 0
  %671 = vmatpush1.bf16.msra.mxu0 0
  %672 = vmatprep.subr.bf16.mxu0 0
  %673 = vmatpush1.bf16.msra.mxu0 0
  %674 = vmatprep.subr.bf16.mxu0 0
  %675 = vmatpush1.bf16.msra.mxu0 0
  %676 = vmatprep.subr.bf16.mxu0 0
  %677 = vmatpush1.bf16.msra.mxu0 0
  %678 = vmatprep.subr.bf16.mxu0 0
  %679 = vmatpush1.bf16.msra.mxu0 0
  %680 = vmatprep.subr.bf16.mxu0 0
  %681 = vmatpush1.bf16.msra.mxu0 0
  %682 = vmatprep.subr.bf16.mxu0 0
  %683 = vmatpush1.bf16.msra.mxu0 0
  %684 = vmatprep.subr.bf16.mxu0 0
  %685 = vmatpush1.bf16.msra.mxu0 0
  %686 = vmatprep.subr.bf16.mxu0 0
  %687 = vmatpush1.bf16.msra.mxu0 0
  %688 = vmatprep.subr.bf16.mxu0 0
  %689 = vmatpush1.bf16.msra.mxu0 0
  %690 = vmatprep.subr.bf16.mxu0 0
  %691 = vmatpush1.bf16.msra.mxu0 0
  %692 = vmatprep.subr.bf16.mxu0 0
  %693 = vmatpush1.bf16.msra.mxu0 0
  %694 = vmatprep.subr.bf16.mxu0 0
  %695 = vmatpush1.bf16.msra.mxu0 0
  %696 = vmatprep.mubr.bf16.mxu0 0
  %697 = vmatmul.mubr.bf16.gmra.mrb[0].mxu0 %v653
  %v698 = vpop.f32.mrb[0].mxu0
  %v699 = vadd.f32 %v500, %v698
  %v700 = vpop.f32.mrb[0].mxu0
  %v701 = vadd.f32 %v502, %v700
  %v702 = vpop.f32.mrb[0].mxu0
  %v703 = vadd.f32 %v504, %v702
  %v704 = vpop.f32.mrb[0].mxu0
  %v705 = vadd.f32 %v506, %v704
  %706 = vmatprep.mubr.bf16.mxu0 0
  %707 = vmatmul.mubr.bf16.gmra.mrb[0].mxu0 %v656
  %v708 = vpop.f32.mrb[0].mxu0
  %v709 = vadd.f32 %v510, %v708
  %v710 = vpop.f32.mrb[0].mxu0
  %v711 = vadd.f32 %v512, %v710
  %v712 = vpop.f32.mrb[0].mxu0
  %v713 = vadd.f32 %v514, %v712
  %v714 = vpop.f32.mrb[0].mxu0
  %v715 = vadd.f32 %v516, %v714
  %716 = vmatprep.mubr.bf16.mxu0 0
  %717 = vmatmul.mubr.bf16.gmra.mrb[0].mxu0 %v659
  %v718 = vpop.f32.mrb[0].mxu0
  %v719 = vadd.f32 %v520, %v718
  %v720 = vpop.f32.mrb[0].mxu0
  %v721 = vadd.f32 %v522, %v720
  %v722 = vpop.f32.mrb[0].mxu0
  %v723 = vadd.f32 %v524, %v722
  %v724 = vpop.f32.mrb[0].mxu0
  %v725 = vadd.f32 %v526, %v724
  %726 = vmatprep.mubr.bf16.mxu0 0
  %727 = vmatmul.mubr.bf16.gmra.mrb[0].mxu0 %v662
  %v728 = vpop.f32.mrb[0].mxu0
  %v729 = vadd.f32 %v530, %v728
  %v730 = vpop.f32.mrb[0].mxu0
  %v731 = vadd.f32 %v532, %v730
  %v732 = vpop.f32.mrb[0].mxu0
  %v733 = vadd.f32 %v534, %v732
  %v734 = vpop.f32.mrb[0].mxu0
  %v735 = vadd.f32 %v536, %v734
  %736 = vdwg.mxu0
  %737 = vmatprep.subr.bf16.mxu0 %v646
  %738 = vmatpush1.bf16.msra.mxu0 %v645
  %739 = vmatprep.subr.bf16.mxu0 0
  %740 = vmatpush1.bf16.msra.mxu0 0
  %741 = vmatprep.subr.bf16.mxu0 0
  %742 = vmatpush1.bf16.msra.mxu0 0
  %743 = vmatprep.subr.bf16.mxu0 0
  %744 = vmatpush1.bf16.msra.mxu0 0
  %745 = vmatprep.subr.bf16.mxu0 0
  %746 = vmatpush1.bf16.msra.mxu0 0
  %747 = vmatprep.subr.bf16.mxu0 0
  %748 = vmatpush1.bf16.msra.mxu0 0
  %749 = vmatprep.subr.bf16.mxu0 0
  %750 = vmatpush1.bf16.msra.mxu0 0
  %751 = vmatprep.subr.bf16.mxu0 0
  %752 = vmatpush1.bf16.msra.mxu0 0
  %753 = vmatprep.subr.bf16.mxu0 0
  %754 = vmatpush1.bf16.msra.mxu0 0
  %755 = vmatprep.subr.bf16.mxu0 0
  %756 = vmatpush1.bf16.msra.mxu0 0
  %757 = vmatprep.subr.bf16.mxu0 0
  %758 = vmatpush1.bf16.msra.mxu0 0
  %759 = vmatprep.subr.bf16.mxu0 0
  %760 = vmatpush1.bf16.msra.mxu0 0
  %761 = vmatprep.subr.bf16.mxu0 0
  %762 = vmatpush1.bf16.msra.mxu0 0
  %763 = vmatprep.subr.bf16.mxu0 0
  %764 = vmatpush1.bf16.msra.mxu0 0
  %765 = vmatprep.subr.bf16.mxu0 0
  %766 = vmatpush1.bf16.msra.mxu0 0
  %767 = vmatprep.subr.bf16.mxu0 0
  %768 = vmatpush1.bf16.msra.mxu0 0
  %769 = vmatprep.mubr.bf16.mxu0 0
  %770 = vmatmul.mubr.bf16.gmra.mrb[0].mxu0 %v653
  %v771 = vpop.f32.mrb[0].mxu0
  %v772 = vadd.f32 %v573, %v771
  %v773 = vpop.f32.mrb[0].mxu0
  %v774 = vadd.f32 %v575, %v773
  %v775 = vpop.f32.mrb[0].mxu0
  %v776 = vadd.f32 %v577, %v775
  %v777 = vpop.f32.mrb[0].mxu0
  %v778 = vadd.f32 %v579, %v777
  %779 = vmatprep.mubr.bf16.mxu0 0
  %780 = vmatmul.mubr.bf16.gmra.mrb[0].mxu0 %v656
  %v781 = vpop.f32.mrb[0].mxu0
  %v782 = vadd.f32 %v583, %v781
  %v783 = vpop.f32.mrb[0].mxu0
  %v784 = vadd.f32 %v585, %v783
  %v785 = vpop.f32.mrb[0].mxu0
  %v786 = vadd.f32 %v587, %v785
  %v787 = vpop.f32.mrb[0].mxu0
  %v788 = vadd.f32 %v589, %v787
  %789 = vmatprep.mubr.bf16.mxu0 0
  %790 = vmatmul.mubr.bf16.gmra.mrb[0].mxu0 %v659
  %v791 = vpop.f32.mrb[0].mxu0
  %v792 = vadd.f32 %v593, %v791
  %v793 = vpop.f32.mrb[0].mxu0
  %v794 = vadd.f32 %v595, %v793
  %v795 = vpop.f32.mrb[0].mxu0
  %v796 = vadd.f32 %v597, %v795
  %v797 = vpop.f32.mrb[0].mxu0
  %v798 = vadd.f32 %v599, %v797
  %799 = vmatprep.mubr.bf16.mxu0 0
  %800 = vmatmul.mubr.bf16.gmra.mrb[0].mxu0 %v662
  %v801 = vpop.f32.mrb[0].mxu0
  %v802 = vadd.f32 %v603, %v801
  %v803 = vpop.f32.mrb[0].mxu0
  %v804 = vadd.f32 %v605, %v803
  %v805 = vpop.f32.mrb[0].mxu0
  %v806 = vadd.f32 %v607, %v805
  %v807 = vpop.f32.mrb[0].mxu0
  %v808 = vadd.f32 %v609, %v807
  %809 = vdwg.mxu0
  %v810 = vld [vmem:[%s8] sm:$0xf]
  %v812 = vlaneseq
  %v813 = vshrl.u32 %v812, 7
  %v814 = vsub.s32 0, %v813
  %v815 = vrot.slane %v810, %v814
  %v816 = vlaneseq
  %v817 = vshrl.u32 %v816, 7
  %v818 = vsub.s32 1, %v817
  %v819 = vrot.slane %v810, %v818
  %v820 = vlaneseq
  %v821 = vshrl.u32 %v820, 7
  %v822 = vsub.s32 2, %v821
  %v823 = vrot.slane %v810, %v822
  %v824 = vlaneseq
  %v825 = vshrl.u32 %v824, 7
  %v826 = vsub.s32 3, %v825
  %v827 = vrot.slane %v810, %v826
  %v832 = vadd.f32 %v699, %v815
  %v833 = vadd.f32 %v701, %v819
  %v834 = vadd.f32 %v772, %v823
  %v835 = vadd.f32 %v774, %v827
  %v836 = vadd.f32 %v703, %v815
  %v837 = vadd.f32 %v705, %v819
  %v838 = vadd.f32 %v776, %v823
  %v839 = vadd.f32 %v778, %v827
  %v840 = vadd.f32 %v709, %v815
  %v841 = vadd.f32 %v711, %v819
  %v842 = vadd.f32 %v782, %v823
  %v843 = vadd.f32 %v784, %v827
  %v844 = vadd.f32 %v713, %v815
  %v845 = vadd.f32 %v715, %v819
  %v846 = vadd.f32 %v786, %v823
  %v847 = vadd.f32 %v788, %v827
  %v848 = vadd.f32 %v719, %v815
  %v849 = vadd.f32 %v721, %v819
  %v850 = vadd.f32 %v792, %v823
  %v851 = vadd.f32 %v794, %v827
  %v852 = vadd.f32 %v723, %v815
  %v853 = vadd.f32 %v725, %v819
  %v854 = vadd.f32 %v796, %v823
  %v855 = vadd.f32 %v798, %v827
  %v856 = vadd.f32 %v729, %v815
  %v857 = vadd.f32 %v731, %v819
  %v858 = vadd.f32 %v802, %v823
  %v859 = vadd.f32 %v804, %v827
  %v860 = vadd.f32 %v733, %v815
  %v861 = vadd.f32 %v735, %v819
  %v862 = vadd.f32 %v806, %v823
  %v863 = vadd.f32 %v808, %v827
  %v864 = vld [vmem:[%s170] sm:$0xff]
  %v865 = vld [vmem:[%s170 + $0x8] sm:$0xff]
  %v866 = vld [vmem:[%s170 + $0x10] sm:$0xff]
  %v867 = vld [vmem:[%s170 + $0x18] sm:$0xff]
  %v868 = vld [vmem:[%s170 + $0x20] sm:$0xff]
  %v869 = vld [vmem:[%s170 + $0x28] sm:$0xff]
  %v870 = vld [vmem:[%s170 + $0x30] sm:$0xff]
  %v871 = vld [vmem:[%s170 + $0x38] sm:$0xff]
  %v872 = vsub.f32 1.0, %v864
  %v873 = vsub.f32 1.0, %v865
  %v874 = vsub.f32 1.0, %v866
  %v875 = vsub.f32 1.0, %v867
  %v876 = vsub.f32 1.0, %v868
  %v877 = vsub.f32 1.0, %v869
  %v878 = vsub.f32 1.0, %v870
  %v879 = vsub.f32 1.0, %v871
  %v880 = vld [vmem:[%s9] sm:$0xf]
  %882 = vset.pattern.permute.xlu0 0
  %883 = vperm.xlu0 %882, %v872
  %v884 = vpop.permute.xlu0 %883
  %887 = vset.pattern.permute.xlu0 0
  %888 = vperm.xlu0 %887, %v873
  %v889 = vpop.permute.xlu0 %888
  %892 = vset.pattern.permute.xlu0 0
  %893 = vperm.xlu0 %892, %v874
  %v894 = vpop.permute.xlu0 %893
  %897 = vset.pattern.permute.xlu0 0
  %898 = vperm.xlu0 %897, %v875
  %v899 = vpop.permute.xlu0 %898
  %902 = vset.pattern.permute.xlu0 0
  %903 = vperm.xlu0 %902, %v876
  %v904 = vpop.permute.xlu0 %903
  %907 = vset.pattern.permute.xlu0 0
  %908 = vperm.xlu0 %907, %v877
  %v909 = vpop.permute.xlu0 %908
  %912 = vset.pattern.permute.xlu0 0
  %913 = vperm.xlu0 %912, %v878
  %v914 = vpop.permute.xlu0 %913
  %917 = vset.pattern.permute.xlu0 0
  %918 = vperm.xlu0 %917, %v879
  %v919 = vpop.permute.xlu0 %918
  %v922 = vlaneseq
  %v923 = vshrl.u32 %v922, 7
  %v924 = vsub.s32 0, %v923
  %v925 = vrot.slane %v880, %v924
  %v926 = vlaneseq
  %v927 = vshrl.u32 %v926, 7
  %v928 = vsub.s32 1, %v927
  %v929 = vrot.slane %v880, %v928
  %v930 = vlaneseq
  %v931 = vshrl.u32 %v930, 7
  %v932 = vsub.s32 2, %v931
  %v933 = vrot.slane %v880, %v932
  %v934 = vlaneseq
  %v935 = vshrl.u32 %v934, 7
  %v936 = vsub.s32 3, %v935
  %v937 = vrot.slane %v880, %v936
  %v942 = vmul.f32 %v884, %v925
  %v943 = vmul.f32 %v884, %v929
  %v944 = vmul.f32 %v884, %v933
  %v945 = vmul.f32 %v884, %v937
  %v946 = vmul.f32 %v889, %v925
  %v947 = vmul.f32 %v889, %v929
  %v948 = vmul.f32 %v889, %v933
  %v949 = vmul.f32 %v889, %v937
  %v950 = vmul.f32 %v894, %v925
  %v951 = vmul.f32 %v894, %v929
  %v952 = vmul.f32 %v894, %v933
  %v953 = vmul.f32 %v894, %v937
  %v954 = vmul.f32 %v899, %v925
  %v955 = vmul.f32 %v899, %v929
  %v956 = vmul.f32 %v899, %v933
  %v957 = vmul.f32 %v899, %v937
  %v958 = vmul.f32 %v904, %v925
  %v959 = vmul.f32 %v904, %v929
  %v960 = vmul.f32 %v904, %v933
  %v961 = vmul.f32 %v904, %v937
  %v962 = vmul.f32 %v909, %v925
  %v963 = vmul.f32 %v909, %v929
  %v964 = vmul.f32 %v909, %v933
  %v965 = vmul.f32 %v909, %v937
  %v966 = vmul.f32 %v914, %v925
  %v967 = vmul.f32 %v914, %v929
  %v968 = vmul.f32 %v914, %v933
  %v969 = vmul.f32 %v914, %v937
  %v970 = vmul.f32 %v919, %v925
  %v971 = vmul.f32 %v919, %v929
  %v972 = vmul.f32 %v919, %v933
  %v973 = vmul.f32 %v919, %v937
  %v974 = vadd.f32 %v832, %v942
  %v975 = vadd.f32 %v833, %v943
  %v976 = vadd.f32 %v834, %v944
  %v977 = vadd.f32 %v835, %v945
  %v978 = vadd.f32 %v836, %v946
  %v979 = vadd.f32 %v837, %v947
  %v980 = vadd.f32 %v838, %v948
  %v981 = vadd.f32 %v839, %v949
  %v982 = vadd.f32 %v840, %v950
  %v983 = vadd.f32 %v841, %v951
  %v984 = vadd.f32 %v842, %v952
  %v985 = vadd.f32 %v843, %v953
  %v986 = vadd.f32 %v844, %v954
  %v987 = vadd.f32 %v845, %v955
  %v988 = vadd.f32 %v846, %v956
  %v989 = vadd.f32 %v847, %v957
  %v990 = vadd.f32 %v848, %v958
  %v991 = vadd.f32 %v849, %v959
  %v992 = vadd.f32 %v850, %v960
  %v993 = vadd.f32 %v851, %v961
  %v994 = vadd.f32 %v852, %v962
  %v995 = vadd.f32 %v853, %v963
  %v996 = vadd.f32 %v854, %v964
  %v997 = vadd.f32 %v855, %v965
  %v998 = vadd.f32 %v856, %v966
  %v999 = vadd.f32 %v857, %v967
  %v1000 = vadd.f32 %v858, %v968
  %v1001 = vadd.f32 %v859, %v969
  %v1002 = vadd.f32 %v860, %v970
  %v1003 = vadd.f32 %v861, %v971
  %v1004 = vadd.f32 %v862, %v972
  %v1005 = vadd.f32 %v863, %v973
  %1006 = vst [vmem:[#allocation2] sm:$0xff] %v974
  %1007 = vst [vmem:[#allocation2 + $0x8] sm:$0xff] %v975
  %1008 = vst [vmem:[#allocation2 + $0x10] sm:$0xff] %v976
  %1009 = vst [vmem:[#allocation2 + $0x18] sm:$0xff] %v977
  %1010 = vst [vmem:[#allocation2 + $0x20] sm:$0xff] %v978
  %1011 = vst [vmem:[#allocation2 + $0x28] sm:$0xff] %v979
  %1012 = vst [vmem:[#allocation2 + $0x30] sm:$0xff] %v980
  %1013 = vst [vmem:[#allocation2 + $0x38] sm:$0xff] %v981
  %1014 = vst [vmem:[#allocation2 + $0x40] sm:$0xff] %v982
  %1015 = vst [vmem:[#allocation2 + $0x48] sm:$0xff] %v983
  %1016 = vst [vmem:[#allocation2 + $0x50] sm:$0xff] %v984
  %1017 = vst [vmem:[#allocation2 + $0x58] sm:$0xff] %v985
  %1018 = vst [vmem:[#allocation2 + $0x60] sm:$0xff] %v986
  %1019 = vst [vmem:[#allocation2 + $0x68] sm:$0xff] %v987
  %1020 = vst [vmem:[#allocation2 + $0x70] sm:$0xff] %v988
  %1021 = vst [vmem:[#allocation2 + $0x78] sm:$0xff] %v989
  %1022 = vst [vmem:[#allocation2 + $0x80] sm:$0xff] %v990
  %1023 = vst [vmem:[#allocation2 + $0x88] sm:$0xff] %v991
  %1024 = vst [vmem:[#allocation2 + $0x90] sm:$0xff] %v992
  %1025 = vst [vmem:[#allocation2 + $0x98] sm:$0xff] %v993
  %1026 = vst [vmem:[#allocation2 + $0xa0] sm:$0xff] %v994
  %1027 = vst [vmem:[#allocation2 + $0xa8] sm:$0xff] %v995
  %1028 = vst [vmem:[#allocation2 + $0xb0] sm:$0xff] %v996
  %1029 = vst [vmem:[#allocation2 + $0xb8] sm:$0xff] %v997
  %1030 = vst [vmem:[#allocation2 + $0xc0] sm:$0xff] %v998
  %1031 = vst [vmem:[#allocation2 + $0xc8] sm:$0xff] %v999
  %1032 = vst [vmem:[#allocation2 + $0xd0] sm:$0xff] %v1000
  %1033 = vst [vmem:[#allocation2 + $0xd8] sm:$0xff] %v1001
  %1034 = vst [vmem:[#allocation2 + $0xe0] sm:$0xff] %v1002
  %1035 = vst [vmem:[#allocation2 + $0xe8] sm:$0xff] %v1003
  %1036 = vst [vmem:[#allocation2 + $0xf0] sm:$0xff] %v1004
  %1037 = vst [vmem:[#allocation2 + $0xf8] sm:$0xff] %v1005
  %v1038 = vld [vmem:[%s179] sm:$0xf]
  %v1039 = vld [vmem:[%s179 + $0x4] sm:$0xf]
  %v1040 = vld [vmem:[%s179 + $0x8] sm:$0xf]
  %v1041 = vld [vmem:[%s179 + $0xc] sm:$0xf]
  %v1042 = vld [vmem:[%s179 + $0x10] sm:$0xf]
  %v1043 = vld [vmem:[%s179 + $0x14] sm:$0xf]
  %v1044 = vld [vmem:[%s179 + $0x18] sm:$0xf]
  %v1045 = vld [vmem:[%s179 + $0x1c] sm:$0xf]
  %v1046 = vld [vmem:[%s6 + $0x10] sm:$0xff]
  %v1047 = vld [vmem:[%s6 + $0x18] sm:$0xff]
  %v1048 = vld [vmem:[%s6 + $0x30] sm:$0xff]
  %v1049 = vld [vmem:[%s6 + $0x38] sm:$0xff]
  %v1050 = vld [vmem:[%s189] sm:$0xf]
  %v1051 = vld [vmem:[%s189 + $0x4] sm:$0xf]
  %v1052 = vld [vmem:[%s189 + $0x8] sm:$0xf]
  %v1053 = vld [vmem:[%s189 + $0xc] sm:$0xf]
  %v1054 = vld [vmem:[%s189 + $0x10] sm:$0xf]
  %v1055 = vld [vmem:[%s189 + $0x14] sm:$0xf]
  %v1056 = vld [vmem:[%s189 + $0x18] sm:$0xf]
  %v1057 = vld [vmem:[%s189 + $0x1c] sm:$0xf]
  %v1058 = vld [vmem:[%s7 + $0x10] sm:$0xff]
  %v1059 = vld [vmem:[%s7 + $0x18] sm:$0xff]
  %v1060 = vld [vmem:[%s7 + $0x30] sm:$0xff]
  %v1061 = vld [vmem:[%s7 + $0x38] sm:$0xff]
  %v1062 = vld [vmem:[%s7 + $0x50] sm:$0xff]
  %v1063 = vld [vmem:[%s7 + $0x58] sm:$0xff]
  %v1064 = vld [vmem:[%s7 + $0x70] sm:$0xff]
  %v1065 = vld [vmem:[%s7 + $0x78] sm:$0xff]
  %v1066 = vld [vmem:[%s7 + $0x90] sm:$0xff]
  %v1067 = vld [vmem:[%s7 + $0x98] sm:$0xff]
  %v1068 = vld [vmem:[%s7 + $0xb0] sm:$0xff]
  %v1069 = vld [vmem:[%s7 + $0xb8] sm:$0xff]
  %v1070 = vld [vmem:[%s7 + $0xd0] sm:$0xff]
  %v1071 = vld [vmem:[%s7 + $0xd8] sm:$0xff]
  %v1072 = vld [vmem:[%s7 + $0xf0] sm:$0xff]
  %v1073 = vld [vmem:[%s7 + $0xf8] sm:$0xff]
  %v1074 = vld [vmem:[%s7 + $0x110] sm:$0xff]
  %v1075 = vld [vmem:[%s7 + $0x118] sm:$0xff]
  %v1076 = vld [vmem:[%s7 + $0x130] sm:$0xff]
  %v1077 = vld [vmem:[%s7 + $0x138] sm:$0xff]
  %v1078 = vld [vmem:[%s7 + $0x150] sm:$0xff]
  %v1079 = vld [vmem:[%s7 + $0x158] sm:$0xff]
  %v1080 = vld [vmem:[%s7 + $0x170] sm:$0xff]
  %v1081 = vld [vmem:[%s7 + $0x178] sm:$0xff]
  %v1082 = vld [vmem:[%s7 + $0x190] sm:$0xff]
  %v1083 = vld [vmem:[%s7 + $0x198] sm:$0xff]
  %v1084 = vld [vmem:[%s7 + $0x1b0] sm:$0xff]
  %v1085 = vld [vmem:[%s7 + $0x1b8] sm:$0xff]
  %v1086 = vld [vmem:[%s7 + $0x1d0] sm:$0xff]
  %v1087 = vld [vmem:[%s7 + $0x1d8] sm:$0xff]
  %v1088 = vld [vmem:[%s7 + $0x1f0] sm:$0xff]
  %v1089 = vld [vmem:[%s7 + $0x1f8] sm:$0xff]
  %v1098 = vunpack.c.l.b16 %v1050
  %v1099 = vunpack.c.l.b16 %v1051
  %v1100 = vunpack.c.l.b16 %v1052
  %v1101 = vunpack.c.l.b16 %v1053
  %v1102 = vunpack.c.l.b16 %v1054
  %v1103 = vunpack.c.l.b16 %v1055
  %v1104 = vunpack.c.l.b16 %v1056
  %v1105 = vunpack.c.l.b16 %v1057
  %v1106 = vpack.c.b16 %v1099, %v1098
  %v1107 = vpack.c.b16 %v1101, %v1100
  %v1108 = vpack.c.b16 %v1103, %v1102
  %v1109 = vpack.c.b16 %v1105, %v1104
  %v1146 = vunpack.c.l.b16 %v1058
  %v1147 = vunpack.c.h.b16 %v1058
  %v1148 = vunpack.c.l.b16 %v1059
  %v1149 = vunpack.c.h.b16 %v1059
  %v1150 = vunpack.c.l.b16 %v1060
  %v1151 = vunpack.c.h.b16 %v1060
  %v1152 = vunpack.c.l.b16 %v1061
  %v1153 = vunpack.c.h.b16 %v1061
  %v1154 = vunpack.c.l.b16 %v1062
  %v1155 = vunpack.c.h.b16 %v1062
  %v1156 = vunpack.c.l.b16 %v1063
  %v1157 = vunpack.c.h.b16 %v1063
  %v1158 = vunpack.c.l.b16 %v1064
  %v1159 = vunpack.c.h.b16 %v1064
  %v1160 = vunpack.c.l.b16 %v1065
  %v1161 = vunpack.c.h.b16 %v1065
  %v1162 = vunpack.c.l.b16 %v1066
  %v1163 = vunpack.c.h.b16 %v1066
  %v1164 = vunpack.c.l.b16 %v1067
  %v1165 = vunpack.c.h.b16 %v1067
  %v1166 = vunpack.c.l.b16 %v1068
  %v1167 = vunpack.c.h.b16 %v1068
  %v1168 = vunpack.c.l.b16 %v1069
  %v1169 = vunpack.c.h.b16 %v1069
  %v1170 = vunpack.c.l.b16 %v1070
  %v1171 = vunpack.c.h.b16 %v1070
  %v1172 = vunpack.c.l.b16 %v1071
  %v1173 = vunpack.c.h.b16 %v1071
  %v1174 = vunpack.c.l.b16 %v1072
  %v1175 = vunpack.c.h.b16 %v1072
  %v1176 = vunpack.c.l.b16 %v1073
  %v1177 = vunpack.c.h.b16 %v1073
  %v1178 = vunpack.c.l.b16 %v1074
  %v1179 = vunpack.c.h.b16 %v1074
  %v1180 = vunpack.c.l.b16 %v1075
  %v1181 = vunpack.c.h.b16 %v1075
  %v1182 = vunpack.c.l.b16 %v1076
  %v1183 = vunpack.c.h.b16 %v1076
  %v1184 = vunpack.c.l.b16 %v1077
  %v1185 = vunpack.c.h.b16 %v1077
  %v1186 = vunpack.c.l.b16 %v1078
  %v1187 = vunpack.c.h.b16 %v1078
  %v1188 = vunpack.c.l.b16 %v1079
  %v1189 = vunpack.c.h.b16 %v1079
  %v1190 = vunpack.c.l.b16 %v1080
  %v1191 = vunpack.c.h.b16 %v1080
  %v1192 = vunpack.c.l.b16 %v1081
  %v1193 = vunpack.c.h.b16 %v1081
  %v1194 = vunpack.c.l.b16 %v1082
  %v1195 = vunpack.c.h.b16 %v1082
  %v1196 = vunpack.c.l.b16 %v1083
  %v1197 = vunpack.c.h.b16 %v1083
  %v1198 = vunpack.c.l.b16 %v1084
  %v1199 = vunpack.c.h.b16 %v1084
  %v1200 = vunpack.c.l.b16 %v1085
  %v1201 = vunpack.c.h.b16 %v1085
  %v1202 = vunpack.c.l.b16 %v1086
  %v1203 = vunpack.c.h.b16 %v1086
  %v1204 = vunpack.c.l.b16 %v1087
  %v1205 = vunpack.c.h.b16 %v1087
  %v1206 = vunpack.c.l.b16 %v1088
  %v1207 = vunpack.c.h.b16 %v1088
  %v1208 = vunpack.c.l.b16 %v1089
  %v1209 = vunpack.c.h.b16 %v1089
  %v1210 = vpack.c.b16 %v1150, %v1146
  %v1211 = vpack.c.b16 %v1151, %v1147
  %v1212 = vpack.c.b16 %v1152, %v1148
  %v1213 = vpack.c.b16 %v1153, %v1149
  %v1214 = vpack.c.b16 %v1158, %v1154
  %v1215 = vpack.c.b16 %v1159, %v1155
  %v1216 = vpack.c.b16 %v1160, %v1156
  %v1217 = vpack.c.b16 %v1161, %v1157
  %v1218 = vpack.c.b16 %v1166, %v1162
  %v1219 = vpack.c.b16 %v1167, %v1163
  %v1220 = vpack.c.b16 %v1168, %v1164
  %v1221 = vpack.c.b16 %v1169, %v1165
  %v1222 = vpack.c.b16 %v1174, %v1170
  %v1223 = vpack.c.b16 %v1175, %v1171
  %v1224 = vpack.c.b16 %v1176, %v1172
  %v1225 = vpack.c.b16 %v1177, %v1173
  %v1226 = vpack.c.b16 %v1182, %v1178
  %v1227 = vpack.c.b16 %v1183, %v1179
  %v1228 = vpack.c.b16 %v1184, %v1180
  %v1229 = vpack.c.b16 %v1185, %v1181
  %v1230 = vpack.c.b16 %v1190, %v1186
  %v1231 = vpack.c.b16 %v1191, %v1187
  %v1232 = vpack.c.b16 %v1192, %v1188
  %v1233 = vpack.c.b16 %v1193, %v1189
  %v1234 = vpack.c.b16 %v1198, %v1194
  %v1235 = vpack.c.b16 %v1199, %v1195
  %v1236 = vpack.c.b16 %v1200, %v1196
  %v1237 = vpack.c.b16 %v1201, %v1197
  %v1238 = vpack.c.b16 %v1206, %v1202
  %v1239 = vpack.c.b16 %v1207, %v1203
  %v1240 = vpack.c.b16 %v1208, %v1204
  %v1241 = vpack.c.b16 %v1209, %v1205
  %1274 = vmatprep.subr.bf16.mxu0 %v1211
  %1275 = vmatpush1.bf16.msra.mxu0 %v1210
  %1276 = vmatprep.subr.bf16.mxu0 %v1215
  %1277 = vmatpush1.bf16.msra.mxu0 %v1214
  %1278 = vmatprep.subr.bf16.mxu0 %v1219
  %1279 = vmatpush1.bf16.msra.mxu0 %v1218
  %1280 = vmatprep.subr.bf16.mxu0 %v1223
  %1281 = vmatpush1.bf16.msra.mxu0 %v1222
  %1282 = vmatprep.subr.bf16.mxu0 %v1227
  %1283 = vmatpush1.bf16.msra.mxu0 %v1226
  %1284 = vmatprep.subr.bf16.mxu0 %v1231
  %1285 = vmatpush1.bf16.msra.mxu0 %v1230
  %1286 = vmatprep.subr.bf16.mxu0 %v1235
  %1287 = vmatpush1.bf16.msra.mxu0 %v1234
  %1288 = vmatprep.subr.bf16.mxu0 %v1239
  %1289 = vmatpush1.bf16.msra.mxu0 %v1238
  %1290 = vmatprep.subr.bf16.mxu0 0
  %1291 = vmatpush1.bf16.msra.mxu0 0
  %1292 = vmatprep.subr.bf16.mxu0 0
  %1293 = vmatpush1.bf16.msra.mxu0 0
  %1294 = vmatprep.subr.bf16.mxu0 0
  %1295 = vmatpush1.bf16.msra.mxu0 0
  %1296 = vmatprep.subr.bf16.mxu0 0
  %1297 = vmatpush1.bf16.msra.mxu0 0
  %1298 = vmatprep.subr.bf16.mxu0 0
  %1299 = vmatpush1.bf16.msra.mxu0 0
  %1300 = vmatprep.subr.bf16.mxu0 0
  %1301 = vmatpush1.bf16.msra.mxu0 0
  %1302 = vmatprep.subr.bf16.mxu0 0
  %1303 = vmatpush1.bf16.msra.mxu0 0
  %1304 = vmatprep.subr.bf16.mxu0 0
  %1305 = vmatpush1.bf16.msra.mxu0 0
  %1306 = vmatprep.mubr.bf16.mxu0 0
  %1307 = vmatmul.mubr.bf16.gmra.mrb[0].mxu0 %v1106
  %v1308 = vpop.f32.mrb[0].mxu0
  %v1309 = vadd.f32 0.0, %v1308
  %v1310 = vpop.f32.mrb[0].mxu0
  %v1311 = vadd.f32 0.0, %v1310
  %v1312 = vpop.f32.mrb[0].mxu0
  %v1313 = vadd.f32 0.0, %v1312
  %v1314 = vpop.f32.mrb[0].mxu0
  %v1315 = vadd.f32 0.0, %v1314
  %1316 = vmatprep.mubr.bf16.mxu0 0
  %1317 = vmatmul.mubr.bf16.gmra.mrb[0].mxu0 %v1107
  %v1318 = vpop.f32.mrb[0].mxu0
  %v1319 = vadd.f32 0.0, %v1318
  %v1320 = vpop.f32.mrb[0].mxu0
  %v1321 = vadd.f32 0.0, %v1320
  %v1322 = vpop.f32.mrb[0].mxu0
  %v1323 = vadd.f32 0.0, %v1322
  %v1324 = vpop.f32.mrb[0].mxu0
  %v1325 = vadd.f32 0.0, %v1324
  %1326 = vmatprep.mubr.bf16.mxu0 0
  %1327 = vmatmul.mubr.bf16.gmra.mrb[0].mxu0 %v1108
  %v1328 = vpop.f32.mrb[0].mxu0
  %v1329 = vadd.f32 0.0, %v1328
  %v1330 = vpop.f32.mrb[0].mxu0
  %v1331 = vadd.f32 0.0, %v1330
  %v1332 = vpop.f32.mrb[0].mxu0
  %v1333 = vadd.f32 0.0, %v1332
  %v1334 = vpop.f32.mrb[0].mxu0
  %v1335 = vadd.f32 0.0, %v1334
  %1336 = vmatprep.mubr.bf16.mxu0 0
  %1337 = vmatmul.mubr.bf16.gmra.mrb[0].mxu0 %v1109
  %v1338 = vpop.f32.mrb[0].mxu0
  %v1339 = vadd.f32 0.0, %v1338
  %v1340 = vpop.f32.mrb[0].mxu0
  %v1341 = vadd.f32 0.0, %v1340
  %v1342 = vpop.f32.mrb[0].mxu0
  %v1343 = vadd.f32 0.0, %v1342
  %v1344 = vpop.f32.mrb[0].mxu0
  %v1345 = vadd.f32 0.0, %v1344
  %1346 = vdwg.mxu0
  %1347 = vmatprep.subr.bf16.mxu0 %v1213
  %1348 = vmatpush1.bf16.msra.mxu0 %v1212
  %1349 = vmatprep.subr.bf16.mxu0 %v1217
  %1350 = vmatpush1.bf16.msra.mxu0 %v1216
  %1351 = vmatprep.subr.bf16.mxu0 %v1221
  %1352 = vmatpush1.bf16.msra.mxu0 %v1220
  %1353 = vmatprep.subr.bf16.mxu0 %v1225
  %1354 = vmatpush1.bf16.msra.mxu0 %v1224
  %1355 = vmatprep.subr.bf16.mxu0 %v1229
  %1356 = vmatpush1.bf16.msra.mxu0 %v1228
  %1357 = vmatprep.subr.bf16.mxu0 %v1233
  %1358 = vmatpush1.bf16.msra.mxu0 %v1232
  %1359 = vmatprep.subr.bf16.mxu0 %v1237
  %1360 = vmatpush1.bf16.msra.mxu0 %v1236
  %1361 = vmatprep.subr.bf16.mxu0 %v1241
  %1362 = vmatpush1.bf16.msra.mxu0 %v1240
  %1363 = vmatprep.subr.bf16.mxu0 0
  %1364 = vmatpush1.bf16.msra.mxu0 0
  %1365 = vmatprep.subr.bf16.mxu0 0
  %1366 = vmatpush1.bf16.msra.mxu0 0
  %1367 = vmatprep.subr.bf16.mxu0 0
  %1368 = vmatpush1.bf16.msra.mxu0 0
  %1369 = vmatprep.subr.bf16.mxu0 0
  %1370 = vmatpush1.bf16.msra.mxu0 0
  %1371 = vmatprep.subr.bf16.mxu0 0
  %1372 = vmatpush1.bf16.msra.mxu0 0
  %1373 = vmatprep.subr.bf16.mxu0 0
  %1374 = vmatpush1.bf16.msra.mxu0 0
  %1375 = vmatprep.subr.bf16.mxu0 0
  %1376 = vmatpush1.bf16.msra.mxu0 0
  %1377 = vmatprep.subr.bf16.mxu0 0
  %1378 = vmatpush1.bf16.msra.mxu0 0
  %1379 = vmatprep.mubr.bf16.mxu0 0
  %1380 = vmatmul.mubr.bf16.gmra.mrb[0].mxu0 %v1106
  %v1381 = vpop.f32.mrb[0].mxu0
  %v1382 = vadd.f32 0.0, %v1381
  %v1383 = vpop.f32.mrb[0].mxu0
  %v1384 = vadd.f32 0.0, %v1383
  %v1385 = vpop.f32.mrb[0].mxu0
  %v1386 = vadd.f32 0.0, %v1385
  %v1387 = vpop.f32.mrb[0].mxu0
  %v1388 = vadd.f32 0.0, %v1387
  %1389 = vmatprep.mubr.bf16.mxu0 0
  %1390 = vmatmul.mubr.bf16.gmra.mrb[0].mxu0 %v1107
  %v1391 = vpop.f32.mrb[0].mxu0
  %v1392 = vadd.f32 0.0, %v1391
  %v1393 = vpop.f32.mrb[0].mxu0
  %v1394 = vadd.f32 0.0, %v1393
  %v1395 = vpop.f32.mrb[0].mxu0
  %v1396 = vadd.f32 0.0, %v1395
  %v1397 = vpop.f32.mrb[0].mxu0
  %v1398 = vadd.f32 0.0, %v1397
  %1399 = vmatprep.mubr.bf16.mxu0 0
  %1400 = vmatmul.mubr.bf16.gmra.mrb[0].mxu0 %v1108
  %v1401 = vpop.f32.mrb[0].mxu0
  %v1402 = vadd.f32 0.0, %v1401
  %v1403 = vpop.f32.mrb[0].mxu0
  %v1404 = vadd.f32 0.0, %v1403
  %v1405 = vpop.f32.mrb[0].mxu0
  %v1406 = vadd.f32 0.0, %v1405
  %v1407 = vpop.f32.mrb[0].mxu0
  %v1408 = vadd.f32 0.0, %v1407
  %1409 = vmatprep.mubr.bf16.mxu0 0
  %1410 = vmatmul.mubr.bf16.gmra.mrb[0].mxu0 %v1109
  %v1411 = vpop.f32.mrb[0].mxu0
  %v1412 = vadd.f32 0.0, %v1411
  %v1413 = vpop.f32.mrb[0].mxu0
  %v1414 = vadd.f32 0.0, %v1413
  %v1415 = vpop.f32.mrb[0].mxu0
  %v1416 = vadd.f32 0.0, %v1415
  %v1417 = vpop.f32.mrb[0].mxu0
  %v1418 = vadd.f32 0.0, %v1417
  %1419 = vdwg.mxu0
  %v1428 = vunpack.c.l.b16 %v1038
  %v1429 = vunpack.c.l.b16 %v1039
  %v1430 = vunpack.c.l.b16 %v1040
  %v1431 = vunpack.c.l.b16 %v1041
  %v1432 = vunpack.c.l.b16 %v1042
  %v1433 = vunpack.c.l.b16 %v1043
  %v1434 = vunpack.c.l.b16 %v1044
  %v1435 = vunpack.c.l.b16 %v1045
  %v1436 = vpack.c.b16 %v1429, %v1428
  %v1437 = vpack.c.b16 %v1431, %v1430
  %v1438 = vpack.c.b16 %v1433, %v1432
  %v1439 = vpack.c.b16 %v1435, %v1434
  %v1444 = vunpack.c.l.b16 %v1046
  %v1445 = vunpack.c.h.b16 %v1046
  %v1446 = vunpack.c.l.b16 %v1047
  %v1447 = vunpack.c.h.b16 %v1047
  %v1448 = vunpack.c.l.b16 %v1048
  %v1449 = vunpack.c.h.b16 %v1048
  %v1450 = vunpack.c.l.b16 %v1049
  %v1451 = vunpack.c.h.b16 %v1049
  %v1452 = vpack.c.b16 %v1448, %v1444
  %v1453 = vpack.c.b16 %v1449, %v1445
  %v1454 = vpack.c.b16 %v1450, %v1446
  %v1455 = vpack.c.b16 %v1451, %v1447
  %v1461 = vsel %vm651, %v1436, 0
  %v1464 = vsel %vm651, %v1437, 0
  %v1467 = vsel %vm651, %v1438, 0
  %v1470 = vsel %vm651, %v1439, 0
  %1472 = vmatprep.subr.bf16.mxu0 %v1453
  %1473 = vmatpush1.bf16.msra.mxu0 %v1452
  %1474 = vmatprep.subr.bf16.mxu0 0
  %1475 = vmatpush1.bf16.msra.mxu0 0
  %1476 = vmatprep.subr.bf16.mxu0 0
  %1477 = vmatpush1.bf16.msra.mxu0 0
  %1478 = vmatprep.subr.bf16.mxu0 0
  %1479 = vmatpush1.bf16.msra.mxu0 0
  %1480 = vmatprep.subr.bf16.mxu0 0
  %1481 = vmatpush1.bf16.msra.mxu0 0
  %1482 = vmatprep.subr.bf16.mxu0 0
  %1483 = vmatpush1.bf16.msra.mxu0 0
  %1484 = vmatprep.subr.bf16.mxu0 0
  %1485 = vmatpush1.bf16.msra.mxu0 0
  %1486 = vmatprep.subr.bf16.mxu0 0
  %1487 = vmatpush1.bf16.msra.mxu0 0
  %1488 = vmatprep.subr.bf16.mxu0 0
  %1489 = vmatpush1.bf16.msra.mxu0 0
  %1490 = vmatprep.subr.bf16.mxu0 0
  %1491 = vmatpush1.bf16.msra.mxu0 0
  %1492 = vmatprep.subr.bf16.mxu0 0
  %1493 = vmatpush1.bf16.msra.mxu0 0
  %1494 = vmatprep.subr.bf16.mxu0 0
  %1495 = vmatpush1.bf16.msra.mxu0 0
  %1496 = vmatprep.subr.bf16.mxu0 0
  %1497 = vmatpush1.bf16.msra.mxu0 0
  %1498 = vmatprep.subr.bf16.mxu0 0
  %1499 = vmatpush1.bf16.msra.mxu0 0
  %1500 = vmatprep.subr.bf16.mxu0 0
  %1501 = vmatpush1.bf16.msra.mxu0 0
  %1502 = vmatprep.subr.bf16.mxu0 0
  %1503 = vmatpush1.bf16.msra.mxu0 0
  %1504 = vmatprep.mubr.bf16.mxu0 0
  %1505 = vmatmul.mubr.bf16.gmra.mrb[0].mxu0 %v1461
  %v1506 = vpop.f32.mrb[0].mxu0
  %v1507 = vadd.f32 %v1309, %v1506
  %v1508 = vpop.f32.mrb[0].mxu0
  %v1509 = vadd.f32 %v1311, %v1508
  %v1510 = vpop.f32.mrb[0].mxu0
  %v1511 = vadd.f32 %v1313, %v1510
  %v1512 = vpop.f32.mrb[0].mxu0
  %v1513 = vadd.f32 %v1315, %v1512
  %1514 = vmatprep.mubr.bf16.mxu0 0
  %1515 = vmatmul.mubr.bf16.gmra.mrb[0].mxu0 %v1464
  %v1516 = vpop.f32.mrb[0].mxu0
  %v1517 = vadd.f32 %v1319, %v1516
  %v1518 = vpop.f32.mrb[0].mxu0
  %v1519 = vadd.f32 %v1321, %v1518
  %v1520 = vpop.f32.mrb[0].mxu0
  %v1521 = vadd.f32 %v1323, %v1520
  %v1522 = vpop.f32.mrb[0].mxu0
  %v1523 = vadd.f32 %v1325, %v1522
  %1524 = vmatprep.mubr.bf16.mxu0 0
  %1525 = vmatmul.mubr.bf16.gmra.mrb[0].mxu0 %v1467
  %v1526 = vpop.f32.mrb[0].mxu0
  %v1527 = vadd.f32 %v1329, %v1526
  %v1528 = vpop.f32.mrb[0].mxu0
  %v1529 = vadd.f32 %v1331, %v1528
  %v1530 = vpop.f32.mrb[0].mxu0
  %v1531 = vadd.f32 %v1333, %v1530
  %v1532 = vpop.f32.mrb[0].mxu0
  %v1533 = vadd.f32 %v1335, %v1532
  %1534 = vmatprep.mubr.bf16.mxu0 0
  %1535 = vmatmul.mubr.bf16.gmra.mrb[0].mxu0 %v1470
  %v1536 = vpop.f32.mrb[0].mxu0
  %v1537 = vadd.f32 %v1339, %v1536
  %v1538 = vpop.f32.mrb[0].mxu0
  %v1539 = vadd.f32 %v1341, %v1538
  %v1540 = vpop.f32.mrb[0].mxu0
  %v1541 = vadd.f32 %v1343, %v1540
  %v1542 = vpop.f32.mrb[0].mxu0
  %v1543 = vadd.f32 %v1345, %v1542
  %1544 = vdwg.mxu0
  %1545 = vmatprep.subr.bf16.mxu0 %v1455
  %1546 = vmatpush1.bf16.msra.mxu0 %v1454
  %1547 = vmatprep.subr.bf16.mxu0 0
  %1548 = vmatpush1.bf16.msra.mxu0 0
  %1549 = vmatprep.subr.bf16.mxu0 0
  %1550 = vmatpush1.bf16.msra.mxu0 0
  %1551 = vmatprep.subr.bf16.mxu0 0
  %1552 = vmatpush1.bf16.msra.mxu0 0
  %1553 = vmatprep.subr.bf16.mxu0 0
  %1554 = vmatpush1.bf16.msra.mxu0 0
  %1555 = vmatprep.subr.bf16.mxu0 0
  %1556 = vmatpush1.bf16.msra.mxu0 0
  %1557 = vmatprep.subr.bf16.mxu0 0
  %1558 = vmatpush1.bf16.msra.mxu0 0
  %1559 = vmatprep.subr.bf16.mxu0 0
  %1560 = vmatpush1.bf16.msra.mxu0 0
  %1561 = vmatprep.subr.bf16.mxu0 0
  %1562 = vmatpush1.bf16.msra.mxu0 0
  %1563 = vmatprep.subr.bf16.mxu0 0
  %1564 = vmatpush1.bf16.msra.mxu0 0
  %1565 = vmatprep.subr.bf16.mxu0 0
  %1566 = vmatpush1.bf16.msra.mxu0 0
  %1567 = vmatprep.subr.bf16.mxu0 0
  %1568 = vmatpush1.bf16.msra.mxu0 0
  %1569 = vmatprep.subr.bf16.mxu0 0
  %1570 = vmatpush1.bf16.msra.mxu0 0
  %1571 = vmatprep.subr.bf16.mxu0 0
  %1572 = vmatpush1.bf16.msra.mxu0 0
  %1573 = vmatprep.subr.bf16.mxu0 0
  %1574 = vmatpush1.bf16.msra.mxu0 0
  %1575 = vmatprep.subr.bf16.mxu0 0
  %1576 = vmatpush1.bf16.msra.mxu0 0
  %1577 = vmatprep.mubr.bf16.mxu0 0
  %1578 = vmatmul.mubr.bf16.gmra.mrb[0].mxu0 %v1461
  %v1579 = vpop.f32.mrb[0].mxu0
  %v1580 = vadd.f32 %v1382, %v1579
  %v1581 = vpop.f32.mrb[0].mxu0
  %v1582 = vadd.f32 %v1384, %v1581
  %v1583 = vpop.f32.mrb[0].mxu0
  %v1584 = vadd.f32 %v1386, %v1583
  %v1585 = vpop.f32.mrb[0].mxu0
  %v1586 = vadd.f32 %v1388, %v1585
  %1587 = vmatprep.mubr.bf16.mxu0 0
  %1588 = vmatmul.mubr.bf16.gmra.mrb[0].mxu0 %v1464
  %v1589 = vpop.f32.mrb[0].mxu0
  %v1590 = vadd.f32 %v1392, %v1589
  %v1591 = vpop.f32.mrb[0].mxu0
  %v1592 = vadd.f32 %v1394, %v1591
  %v1593 = vpop.f32.mrb[0].mxu0
  %v1594 = vadd.f32 %v1396, %v1593
  %v1595 = vpop.f32.mrb[0].mxu0
  %v1596 = vadd.f32 %v1398, %v1595
  %1597 = vmatprep.mubr.bf16.mxu0 0
  %1598 = vmatmul.mubr.bf16.gmra.mrb[0].mxu0 %v1467
  %v1599 = vpop.f32.mrb[0].mxu0
  %v1600 = vadd.f32 %v1402, %v1599
  %v1601 = vpop.f32.mrb[0].mxu0
  %v1602 = vadd.f32 %v1404, %v1601
  %v1603 = vpop.f32.mrb[0].mxu0
  %v1604 = vadd.f32 %v1406, %v1603
  %v1605 = vpop.f32.mrb[0].mxu0
  %v1606 = vadd.f32 %v1408, %v1605
  %1607 = vmatprep.mubr.bf16.mxu0 0
  %1608 = vmatmul.mubr.bf16.gmra.mrb[0].mxu0 %v1470
  %v1609 = vpop.f32.mrb[0].mxu0
  %v1610 = vadd.f32 %v1412, %v1609
  %v1611 = vpop.f32.mrb[0].mxu0
  %v1612 = vadd.f32 %v1414, %v1611
  %v1613 = vpop.f32.mrb[0].mxu0
  %v1614 = vadd.f32 %v1416, %v1613
  %v1615 = vpop.f32.mrb[0].mxu0
  %v1616 = vadd.f32 %v1418, %v1615
  %1617 = vdwg.mxu0
  %v1618 = vld [vmem:[%s8 + $0x4] sm:$0xf]
  %v1620 = vlaneseq
  %v1621 = vshrl.u32 %v1620, 7
  %v1622 = vsub.s32 0, %v1621
  %v1623 = vrot.slane %v1618, %v1622
  %v1624 = vlaneseq
  %v1625 = vshrl.u32 %v1624, 7
  %v1626 = vsub.s32 1, %v1625
  %v1627 = vrot.slane %v1618, %v1626
  %v1628 = vlaneseq
  %v1629 = vshrl.u32 %v1628, 7
  %v1630 = vsub.s32 2, %v1629
  %v1631 = vrot.slane %v1618, %v1630
  %v1632 = vlaneseq
  %v1633 = vshrl.u32 %v1632, 7
  %v1634 = vsub.s32 3, %v1633
  %v1635 = vrot.slane %v1618, %v1634
  %v1640 = vadd.f32 %v1507, %v1623
  %v1641 = vadd.f32 %v1509, %v1627
  %v1642 = vadd.f32 %v1580, %v1631
  %v1643 = vadd.f32 %v1582, %v1635
  %v1644 = vadd.f32 %v1511, %v1623
  %v1645 = vadd.f32 %v1513, %v1627
  %v1646 = vadd.f32 %v1584, %v1631
  %v1647 = vadd.f32 %v1586, %v1635
  %v1648 = vadd.f32 %v1517, %v1623
  %v1649 = vadd.f32 %v1519, %v1627
  %v1650 = vadd.f32 %v1590, %v1631
  %v1651 = vadd.f32 %v1592, %v1635
  %v1652 = vadd.f32 %v1521, %v1623
  %v1653 = vadd.f32 %v1523, %v1627
  %v1654 = vadd.f32 %v1594, %v1631
  %v1655 = vadd.f32 %v1596, %v1635
  %v1656 = vadd.f32 %v1527, %v1623
  %v1657 = vadd.f32 %v1529, %v1627
  %v1658 = vadd.f32 %v1600, %v1631
  %v1659 = vadd.f32 %v1602, %v1635
  %v1660 = vadd.f32 %v1531, %v1623
  %v1661 = vadd.f32 %v1533, %v1627
  %v1662 = vadd.f32 %v1604, %v1631
  %v1663 = vadd.f32 %v1606, %v1635
  %v1664 = vadd.f32 %v1537, %v1623
  %v1665 = vadd.f32 %v1539, %v1627
  %v1666 = vadd.f32 %v1610, %v1631
  %v1667 = vadd.f32 %v1612, %v1635
  %v1668 = vadd.f32 %v1541, %v1623
  %v1669 = vadd.f32 %v1543, %v1627
  %v1670 = vadd.f32 %v1614, %v1631
  %v1671 = vadd.f32 %v1616, %v1635
  %v1672 = vld [vmem:[%s199] sm:$0xff]
  %v1673 = vld [vmem:[%s199 + $0x8] sm:$0xff]
  %v1674 = vld [vmem:[%s199 + $0x10] sm:$0xff]
  %v1675 = vld [vmem:[%s199 + $0x18] sm:$0xff]
  %v1676 = vld [vmem:[%s199 + $0x20] sm:$0xff]
  %v1677 = vld [vmem:[%s199 + $0x28] sm:$0xff]
  %v1678 = vld [vmem:[%s199 + $0x30] sm:$0xff]
  %v1679 = vld [vmem:[%s199 + $0x38] sm:$0xff]
  %v1680 = vsub.f32 1.0, %v1672
  %v1681 = vsub.f32 1.0, %v1673
  %v1682 = vsub.f32 1.0, %v1674
  %v1683 = vsub.f32 1.0, %v1675
  %v1684 = vsub.f32 1.0, %v1676
  %v1685 = vsub.f32 1.0, %v1677
  %v1686 = vsub.f32 1.0, %v1678
  %v1687 = vsub.f32 1.0, %v1679
  %v1688 = vld [vmem:[%s9] sm:$0xf]
  %1690 = vset.pattern.permute.xlu0 0
  %1691 = vperm.xlu0 %1690, %v1680
  %v1692 = vpop.permute.xlu0 %1691
  %1695 = vset.pattern.permute.xlu0 0
  %1696 = vperm.xlu0 %1695, %v1681
  %v1697 = vpop.permute.xlu0 %1696
  %1700 = vset.pattern.permute.xlu0 0
  %1701 = vperm.xlu0 %1700, %v1682
  %v1702 = vpop.permute.xlu0 %1701
  %1705 = vset.pattern.permute.xlu0 0
  %1706 = vperm.xlu0 %1705, %v1683
  %v1707 = vpop.permute.xlu0 %1706
  %1710 = vset.pattern.permute.xlu0 0
  %1711 = vperm.xlu0 %1710, %v1684
  %v1712 = vpop.permute.xlu0 %1711
  %1715 = vset.pattern.permute.xlu0 0
  %1716 = vperm.xlu0 %1715, %v1685
  %v1717 = vpop.permute.xlu0 %1716
  %1720 = vset.pattern.permute.xlu0 0
  %1721 = vperm.xlu0 %1720, %v1686
  %v1722 = vpop.permute.xlu0 %1721
  %1725 = vset.pattern.permute.xlu0 0
  %1726 = vperm.xlu0 %1725, %v1687
  %v1727 = vpop.permute.xlu0 %1726
  %v1730 = vlaneseq
  %v1731 = vshrl.u32 %v1730, 7
  %v1732 = vsub.s32 0, %v1731
  %v1733 = vrot.slane %v1688, %v1732
  %v1734 = vlaneseq
  %v1735 = vshrl.u32 %v1734, 7
  %v1736 = vsub.s32 1, %v1735
  %v1737 = vrot.slane %v1688, %v1736
  %v1738 = vlaneseq
  %v1739 = vshrl.u32 %v1738, 7
  %v1740 = vsub.s32 2, %v1739
  %v1741 = vrot.slane %v1688, %v1740
  %v1742 = vlaneseq
  %v1743 = vshrl.u32 %v1742, 7
  %v1744 = vsub.s32 3, %v1743
  %v1745 = vrot.slane %v1688, %v1744
  %v1750 = vmul.f32 %v1692, %v1733
  %v1751 = vmul.f32 %v1692, %v1737
  %v1752 = vmul.f32 %v1692, %v1741
  %v1753 = vmul.f32 %v1692, %v1745
  %v1754 = vmul.f32 %v1697, %v1733
  %v1755 = vmul.f32 %v1697, %v1737
  %v1756 = vmul.f32 %v1697, %v1741
  %v1757 = vmul.f32 %v1697, %v1745
  %v1758 = vmul.f32 %v1702, %v1733
  %v1759 = vmul.f32 %v1702, %v1737
  %v1760 = vmul.f32 %v1702, %v1741
  %v1761 = vmul.f32 %v1702, %v1745
  %v1762 = vmul.f32 %v1707, %v1733
  %v1763 = vmul.f32 %v1707, %v1737
  %v1764 = vmul.f32 %v1707, %v1741
  %v1765 = vmul.f32 %v1707, %v1745
  %v1766 = vmul.f32 %v1712, %v1733
  %v1767 = vmul.f32 %v1712, %v1737
  %v1768 = vmul.f32 %v1712, %v1741
  %v1769 = vmul.f32 %v1712, %v1745
  %v1770 = vmul.f32 %v1717, %v1733
  %v1771 = vmul.f32 %v1717, %v1737
  %v1772 = vmul.f32 %v1717, %v1741
  %v1773 = vmul.f32 %v1717, %v1745
  %v1774 = vmul.f32 %v1722, %v1733
  %v1775 = vmul.f32 %v1722, %v1737
  %v1776 = vmul.f32 %v1722, %v1741
  %v1777 = vmul.f32 %v1722, %v1745
  %v1778 = vmul.f32 %v1727, %v1733
  %v1779 = vmul.f32 %v1727, %v1737
  %v1780 = vmul.f32 %v1727, %v1741
  %v1781 = vmul.f32 %v1727, %v1745
  %v1782 = vadd.f32 %v1640, %v1750
  %v1783 = vadd.f32 %v1641, %v1751
  %v1784 = vadd.f32 %v1642, %v1752
  %v1785 = vadd.f32 %v1643, %v1753
  %v1786 = vadd.f32 %v1644, %v1754
  %v1787 = vadd.f32 %v1645, %v1755
  %v1788 = vadd.f32 %v1646, %v1756
  %v1789 = vadd.f32 %v1647, %v1757
  %v1790 = vadd.f32 %v1648, %v1758
  %v1791 = vadd.f32 %v1649, %v1759
  %v1792 = vadd.f32 %v1650, %v1760
  %v1793 = vadd.f32 %v1651, %v1761
  %v1794 = vadd.f32 %v1652, %v1762
  %v1795 = vadd.f32 %v1653, %v1763
  %v1796 = vadd.f32 %v1654, %v1764
  %v1797 = vadd.f32 %v1655, %v1765
  %v1798 = vadd.f32 %v1656, %v1766
  %v1799 = vadd.f32 %v1657, %v1767
  %v1800 = vadd.f32 %v1658, %v1768
  %v1801 = vadd.f32 %v1659, %v1769
  %v1802 = vadd.f32 %v1660, %v1770
  %v1803 = vadd.f32 %v1661, %v1771
  %v1804 = vadd.f32 %v1662, %v1772
  %v1805 = vadd.f32 %v1663, %v1773
  %v1806 = vadd.f32 %v1664, %v1774
  %v1807 = vadd.f32 %v1665, %v1775
  %v1808 = vadd.f32 %v1666, %v1776
  %v1809 = vadd.f32 %v1667, %v1777
  %v1810 = vadd.f32 %v1668, %v1778
  %v1811 = vadd.f32 %v1669, %v1779
  %v1812 = vadd.f32 %v1670, %v1780
  %v1813 = vadd.f32 %v1671, %v1781
  %1814 = vst [vmem:[#allocation3] sm:$0xff] %v1782
  %1815 = vst [vmem:[#allocation3 + $0x8] sm:$0xff] %v1783
  %1816 = vst [vmem:[#allocation3 + $0x10] sm:$0xff] %v1784
  %1817 = vst [vmem:[#allocation3 + $0x18] sm:$0xff] %v1785
  %1818 = vst [vmem:[#allocation3 + $0x20] sm:$0xff] %v1786
  %1819 = vst [vmem:[#allocation3 + $0x28] sm:$0xff] %v1787
  %1820 = vst [vmem:[#allocation3 + $0x30] sm:$0xff] %v1788
  %1821 = vst [vmem:[#allocation3 + $0x38] sm:$0xff] %v1789
  %1822 = vst [vmem:[#allocation3 + $0x40] sm:$0xff] %v1790
  %1823 = vst [vmem:[#allocation3 + $0x48] sm:$0xff] %v1791
  %1824 = vst [vmem:[#allocation3 + $0x50] sm:$0xff] %v1792
  %1825 = vst [vmem:[#allocation3 + $0x58] sm:$0xff] %v1793
  %1826 = vst [vmem:[#allocation3 + $0x60] sm:$0xff] %v1794
  %1827 = vst [vmem:[#allocation3 + $0x68] sm:$0xff] %v1795
  %1828 = vst [vmem:[#allocation3 + $0x70] sm:$0xff] %v1796
  %1829 = vst [vmem:[#allocation3 + $0x78] sm:$0xff] %v1797
  %1830 = vst [vmem:[#allocation3 + $0x80] sm:$0xff] %v1798
  %1831 = vst [vmem:[#allocation3 + $0x88] sm:$0xff] %v1799
  %1832 = vst [vmem:[#allocation3 + $0x90] sm:$0xff] %v1800
  %1833 = vst [vmem:[#allocation3 + $0x98] sm:$0xff] %v1801
  %1834 = vst [vmem:[#allocation3 + $0xa0] sm:$0xff] %v1802
  %1835 = vst [vmem:[#allocation3 + $0xa8] sm:$0xff] %v1803
  %1836 = vst [vmem:[#allocation3 + $0xb0] sm:$0xff] %v1804
  %1837 = vst [vmem:[#allocation3 + $0xb8] sm:$0xff] %v1805
  %1838 = vst [vmem:[#allocation3 + $0xc0] sm:$0xff] %v1806
  %1839 = vst [vmem:[#allocation3 + $0xc8] sm:$0xff] %v1807
  %1840 = vst [vmem:[#allocation3 + $0xd0] sm:$0xff] %v1808
  %1841 = vst [vmem:[#allocation3 + $0xd8] sm:$0xff] %v1809
  %1842 = vst [vmem:[#allocation3 + $0xe0] sm:$0xff] %v1810
  %1843 = vst [vmem:[#allocation3 + $0xe8] sm:$0xff] %v1811
  %1844 = vst [vmem:[#allocation3 + $0xf0] sm:$0xff] %v1812
  %1845 = vst [vmem:[#allocation3 + $0xf8] sm:$0xff] %v1813
  %v1846 = vld [vmem:[%s10] sm:$0xff]
  %v1847 = vld [vmem:[%s10 + $0x8] sm:$0xff]
  %v1848 = vld [vmem:[%s10 + $0x10] sm:$0xff]
  %v1849 = vld [vmem:[%s10 + $0x18] sm:$0xff]
  %v1850 = vld [vmem:[%s10 + $0x20] sm:$0xff]
  %v1851 = vld [vmem:[%s10 + $0x28] sm:$0xff]
  %v1852 = vld [vmem:[%s10 + $0x30] sm:$0xff]
  %v1853 = vld [vmem:[%s10 + $0x38] sm:$0xff]
  %v1854 = vld [vmem:[%s10 + $0x40] sm:$0xff]
  %v1855 = vld [vmem:[%s10 + $0x48] sm:$0xff]
  %v1856 = vld [vmem:[%s10 + $0x50] sm:$0xff]
  %v1857 = vld [vmem:[%s10 + $0x58] sm:$0xff]
  %v1858 = vld [vmem:[%s10 + $0x60] sm:$0xff]
  %v1859 = vld [vmem:[%s10 + $0x68] sm:$0xff]
  %v1860 = vld [vmem:[%s10 + $0x70] sm:$0xff]
  %v1861 = vld [vmem:[%s10 + $0x78] sm:$0xff]
  %v1862 = vld [vmem:[%s10 + $0x80] sm:$0xff]
  %v1863 = vld [vmem:[%s10 + $0x88] sm:$0xff]
  %v1864 = vld [vmem:[%s10 + $0x90] sm:$0xff]
  %v1865 = vld [vmem:[%s10 + $0x98] sm:$0xff]
  %v1866 = vld [vmem:[%s10 + $0xa0] sm:$0xff]
  %v1867 = vld [vmem:[%s10 + $0xa8] sm:$0xff]
  %v1868 = vld [vmem:[%s10 + $0xb0] sm:$0xff]
  %v1869 = vld [vmem:[%s10 + $0xb8] sm:$0xff]
  %v1870 = vld [vmem:[%s10 + $0xc0] sm:$0xff]
  %v1871 = vld [vmem:[%s10 + $0xc8] sm:$0xff]
  %v1872 = vld [vmem:[%s10 + $0xd0] sm:$0xff]
  %v1873 = vld [vmem:[%s10 + $0xd8] sm:$0xff]
  %v1874 = vld [vmem:[%s10 + $0xe0] sm:$0xff]
  %v1875 = vld [vmem:[%s10 + $0xe8] sm:$0xff]
  %v1876 = vld [vmem:[%s10 + $0xf0] sm:$0xff]
  %v1877 = vld [vmem:[%s10 + $0xf8] sm:$0xff]
  %v1878 = vld [vmem:[%s11] sm:$0xff]
  %v1879 = vld [vmem:[%s11 + $0x8] sm:$0xff]
  %v1880 = vld [vmem:[%s11 + $0x10] sm:$0xff]
  %v1881 = vld [vmem:[%s11 + $0x18] sm:$0xff]
  %v1882 = vld [vmem:[%s11 + $0x20] sm:$0xff]
  %v1883 = vld [vmem:[%s11 + $0x28] sm:$0xff]
  %v1884 = vld [vmem:[%s11 + $0x30] sm:$0xff]
  %v1885 = vld [vmem:[%s11 + $0x38] sm:$0xff]
  %v1886 = vld [vmem:[%s11 + $0x40] sm:$0xff]
  %v1887 = vld [vmem:[%s11 + $0x48] sm:$0xff]
  %v1888 = vld [vmem:[%s11 + $0x50] sm:$0xff]
  %v1889 = vld [vmem:[%s11 + $0x58] sm:$0xff]
  %v1890 = vld [vmem:[%s11 + $0x60] sm:$0xff]
  %v1891 = vld [vmem:[%s11 + $0x68] sm:$0xff]
  %v1892 = vld [vmem:[%s11 + $0x70] sm:$0xff]
  %v1893 = vld [vmem:[%s11 + $0x78] sm:$0xff]
  %v1894 = vld [vmem:[%s11 + $0x80] sm:$0xff]
  %v1895 = vld [vmem:[%s11 + $0x88] sm:$0xff]
  %v1896 = vld [vmem:[%s11 + $0x90] sm:$0xff]
  %v1897 = vld [vmem:[%s11 + $0x98] sm:$0xff]
  %v1898 = vld [vmem:[%s11 + $0xa0] sm:$0xff]
  %v1899 = vld [vmem:[%s11 + $0xa8] sm:$0xff]
  %v1900 = vld [vmem:[%s11 + $0xb0] sm:$0xff]
  %v1901 = vld [vmem:[%s11 + $0xb8] sm:$0xff]
  %v1902 = vld [vmem:[%s11 + $0xc0] sm:$0xff]
  %v1903 = vld [vmem:[%s11 + $0xc8] sm:$0xff]
  %v1904 = vld [vmem:[%s11 + $0xd0] sm:$0xff]
  %v1905 = vld [vmem:[%s11 + $0xd8] sm:$0xff]
  %v1906 = vld [vmem:[%s11 + $0xe0] sm:$0xff]
  %v1907 = vld [vmem:[%s11 + $0xe8] sm:$0xff]
  %v1908 = vld [vmem:[%s11 + $0xf0] sm:$0xff]
  %v1909 = vld [vmem:[%s11 + $0xf8] sm:$0xff]
  %v1910 = vld [vmem:[#allocation4] sm:$0xf]
  %v1943 = vunpack.c.l.b16 %v1846
  %v1944 = vunpack.c.h.b16 %v1846
  %v1945 = vunpack.c.l.b16 %v1847
  %v1946 = vunpack.c.h.b16 %v1847
  %v1947 = vunpack.c.l.b16 %v1848
  %v1948 = vunpack.c.h.b16 %v1848
  %v1949 = vunpack.c.l.b16 %v1849
  %v1950 = vunpack.c.h.b16 %v1849
  %v1951 = vunpack.c.l.b16 %v1850
  %v1952 = vunpack.c.h.b16 %v1850
  %v1953 = vunpack.c.l.b16 %v1851
  %v1954 = vunpack.c.h.b16 %v1851
  %v1955 = vunpack.c.l.b16 %v1852
  %v1956 = vunpack.c.h.b16 %v1852
  %v1957 = vunpack.c.l.b16 %v1853
  %v1958 = vunpack.c.h.b16 %v1853
  %v1959 = vunpack.c.l.b16 %v1854
  %v1960 = vunpack.c.h.b16 %v1854
  %v1961 = vunpack.c.l.b16 %v1855
  %v1962 = vunpack.c.h.b16 %v1855
  %v1963 = vunpack.c.l.b16 %v1856
  %v1964 = vunpack.c.h.b16 %v1856
  %v1965 = vunpack.c.l.b16 %v1857
  %v1966 = vunpack.c.h.b16 %v1857
  %v1967 = vunpack.c.l.b16 %v1858
  %v1968 = vunpack.c.h.b16 %v1858
  %v1969 = vunpack.c.l.b16 %v1859
  %v1970 = vunpack.c.h.b16 %v1859
  %v1971 = vunpack.c.l.b16 %v1860
  %v1972 = vunpack.c.h.b16 %v1860
  %v1973 = vunpack.c.l.b16 %v1861
  %v1974 = vunpack.c.h.b16 %v1861
  %v1975 = vunpack.c.l.b16 %v1862
  %v1976 = vunpack.c.h.b16 %v1862
  %v1977 = vunpack.c.l.b16 %v1863
  %v1978 = vunpack.c.h.b16 %v1863
  %v1979 = vunpack.c.l.b16 %v1864
  %v1980 = vunpack.c.h.b16 %v1864
  %v1981 = vunpack.c.l.b16 %v1865
  %v1982 = vunpack.c.h.b16 %v1865
  %v1983 = vunpack.c.l.b16 %v1866
  %v1984 = vunpack.c.h.b16 %v1866
  %v1985 = vunpack.c.l.b16 %v1867
  %v1986 = vunpack.c.h.b16 %v1867
  %v1987 = vunpack.c.l.b16 %v1868
  %v1988 = vunpack.c.h.b16 %v1868
  %v1989 = vunpack.c.l.b16 %v1869
  %v1990 = vunpack.c.h.b16 %v1869
  %v1991 = vunpack.c.l.b16 %v1870
  %v1992 = vunpack.c.h.b16 %v1870
  %v1993 = vunpack.c.l.b16 %v1871
  %v1994 = vunpack.c.h.b16 %v1871
  %v1995 = vunpack.c.l.b16 %v1872
  %v1996 = vunpack.c.h.b16 %v1872
  %v1997 = vunpack.c.l.b16 %v1873
  %v1998 = vunpack.c.h.b16 %v1873
  %v1999 = vunpack.c.l.b16 %v1874
  %v2000 = vunpack.c.h.b16 %v1874
  %v2001 = vunpack.c.l.b16 %v1875
  %v2002 = vunpack.c.h.b16 %v1875
  %v2003 = vunpack.c.l.b16 %v1876
  %v2004 = vunpack.c.h.b16 %v1876
  %v2005 = vunpack.c.l.b16 %v1877
  %v2006 = vunpack.c.h.b16 %v1877
  %v2007 = vpack.c.b16 %v1947, %v1943
  %v2008 = vpack.c.b16 %v1948, %v1944
  %v2009 = vpack.c.b16 %v1949, %v1945
  %v2010 = vpack.c.b16 %v1950, %v1946
  %v2011 = vpack.c.b16 %v1955, %v1951
  %v2012 = vpack.c.b16 %v1956, %v1952
  %v2013 = vpack.c.b16 %v1957, %v1953
  %v2014 = vpack.c.b16 %v1958, %v1954
  %v2015 = vpack.c.b16 %v1963, %v1959
  %v2016 = vpack.c.b16 %v1964, %v1960
  %v2017 = vpack.c.b16 %v1965, %v1961
  %v2018 = vpack.c.b16 %v1966, %v1962
  %v2019 = vpack.c.b16 %v1971, %v1967
  %v2020 = vpack.c.b16 %v1972, %v1968
  %v2021 = vpack.c.b16 %v1973, %v1969
  %v2022 = vpack.c.b16 %v1974, %v1970
  %v2023 = vpack.c.b16 %v1979, %v1975
  %v2024 = vpack.c.b16 %v1980, %v1976
  %v2025 = vpack.c.b16 %v1981, %v1977
  %v2026 = vpack.c.b16 %v1982, %v1978
  %v2027 = vpack.c.b16 %v1987, %v1983
  %v2028 = vpack.c.b16 %v1988, %v1984
  %v2029 = vpack.c.b16 %v1989, %v1985
  %v2030 = vpack.c.b16 %v1990, %v1986
  %v2031 = vpack.c.b16 %v1995, %v1991
  %v2032 = vpack.c.b16 %v1996, %v1992
  %v2033 = vpack.c.b16 %v1997, %v1993
  %v2034 = vpack.c.b16 %v1998, %v1994
  %v2035 = vpack.c.b16 %v2003, %v1999
  %v2036 = vpack.c.b16 %v2004, %v2000
  %v2037 = vpack.c.b16 %v2005, %v2001
  %v2038 = vpack.c.b16 %v2006, %v2002
  %2071 = vmatprep.subr.bf16.mxu0 %v2008
  %2072 = vmatpush1.bf16.msra.mxu0 %v2007
  %2073 = vmatprep.subr.bf16.mxu0 %v2012
  %2074 = vmatpush1.bf16.msra.mxu0 %v2011
  %2075 = vmatprep.subr.bf16.mxu0 %v2016
  %2076 = vmatpush1.bf16.msra.mxu0 %v2015
  %2077 = vmatprep.subr.bf16.mxu0 %v2020
  %2078 = vmatpush1.bf16.msra.mxu0 %v2019
  %2079 = vmatprep.subr.bf16.mxu0 %v2024
  %2080 = vmatpush1.bf16.msra.mxu0 %v2023
  %2081 = vmatprep.subr.bf16.mxu0 %v2028
  %2082 = vmatpush1.bf16.msra.mxu0 %v2027
  %2083 = vmatprep.subr.bf16.mxu0 %v2032
  %2084 = vmatpush1.bf16.msra.mxu0 %v2031
  %2085 = vmatprep.subr.bf16.mxu0 %v2036
  %2086 = vmatpush1.bf16.msra.mxu0 %v2035
  %2087 = vmatprep.subr.bf16.mxu0 0
  %2088 = vmatpush1.bf16.msra.mxu0 0
  %2089 = vmatprep.subr.bf16.mxu0 0
  %2090 = vmatpush1.bf16.msra.mxu0 0
  %2091 = vmatprep.subr.bf16.mxu0 0
  %2092 = vmatpush1.bf16.msra.mxu0 0
  %2093 = vmatprep.subr.bf16.mxu0 0
  %2094 = vmatpush1.bf16.msra.mxu0 0
  %2095 = vmatprep.subr.bf16.mxu0 0
  %2096 = vmatpush1.bf16.msra.mxu0 0
  %2097 = vmatprep.subr.bf16.mxu0 0
  %2098 = vmatpush1.bf16.msra.mxu0 0
  %2099 = vmatprep.subr.bf16.mxu0 0
  %2100 = vmatpush1.bf16.msra.mxu0 0
  %2101 = vmatprep.subr.bf16.mxu0 0
  %2102 = vmatpush1.bf16.msra.mxu0 0
  %2103 = vmatprep.mubr.bf16.mxu0 0
  %2104 = vmatmul.mubr.bf16.gmra.mrb[0].mxu0 %v1910
  %v2105 = vpop.f32.mrb[0].mxu0
  %v2106 = vadd.f32 0.0, %v2105
  %v2107 = vpop.f32.mrb[0].mxu0
  %v2108 = vadd.f32 0.0, %v2107
  %v2109 = vpop.f32.mrb[0].mxu0
  %v2110 = vpop.f32.mrb[0].mxu0
  %2111 = vdwg.mxu0
  %2112 = vmatprep.subr.bf16.mxu0 %v2010
  %2113 = vmatpush1.bf16.msra.mxu0 %v2009
  %2114 = vmatprep.subr.bf16.mxu0 %v2014
  %2115 = vmatpush1.bf16.msra.mxu0 %v2013
  %2116 = vmatprep.subr.bf16.mxu0 %v2018
  %2117 = vmatpush1.bf16.msra.mxu0 %v2017
  %2118 = vmatprep.subr.bf16.mxu0 %v2022
  %2119 = vmatpush1.bf16.msra.mxu0 %v2021
  %2120 = vmatprep.subr.bf16.mxu0 %v2026
  %2121 = vmatpush1.bf16.msra.mxu0 %v2025
  %2122 = vmatprep.subr.bf16.mxu0 %v2030
  %2123 = vmatpush1.bf16.msra.mxu0 %v2029
  %2124 = vmatprep.subr.bf16.mxu0 %v2034
  %2125 = vmatpush1.bf16.msra.mxu0 %v2033
  %2126 = vmatprep.subr.bf16.mxu0 %v2038
  %2127 = vmatpush1.bf16.msra.mxu0 %v2037
  %2128 = vmatprep.subr.bf16.mxu0 0
  %2129 = vmatpush1.bf16.msra.mxu0 0
  %2130 = vmatprep.subr.bf16.mxu0 0
  %2131 = vmatpush1.bf16.msra.mxu0 0
  %2132 = vmatprep.subr.bf16.mxu0 0
  %2133 = vmatpush1.bf16.msra.mxu0 0
  %2134 = vmatprep.subr.bf16.mxu0 0
  %2135 = vmatpush1.bf16.msra.mxu0 0
  %2136 = vmatprep.subr.bf16.mxu0 0
  %2137 = vmatpush1.bf16.msra.mxu0 0
  %2138 = vmatprep.subr.bf16.mxu0 0
  %2139 = vmatpush1.bf16.msra.mxu0 0
  %2140 = vmatprep.subr.bf16.mxu0 0
  %2141 = vmatpush1.bf16.msra.mxu0 0
  %2142 = vmatprep.subr.bf16.mxu0 0
  %2143 = vmatpush1.bf16.msra.mxu0 0
  %2144 = vmatprep.mubr.bf16.mxu0 0
  %2145 = vmatmul.mubr.bf16.gmra.mrb[0].mxu0 %v1910
  %v2146 = vpop.f32.mrb[0].mxu0
  %v2147 = vadd.f32 0.0, %v2146
  %v2148 = vpop.f32.mrb[0].mxu0
  %v2149 = vadd.f32 0.0, %v2148
  %v2150 = vpop.f32.mrb[0].mxu0
  %v2151 = vpop.f32.mrb[0].mxu0
  %2152 = vdwg.mxu0
  %v2153 = vld [vmem:[#allocation4 + $0x4] sm:$0xf]
  %v2186 = vunpack.c.l.b16 %v1878
  %v2187 = vunpack.c.h.b16 %v1878
  %v2188 = vunpack.c.l.b16 %v1879
  %v2189 = vunpack.c.h.b16 %v1879
  %v2190 = vunpack.c.l.b16 %v1880
  %v2191 = vunpack.c.h.b16 %v1880
  %v2192 = vunpack.c.l.b16 %v1881
  %v2193 = vunpack.c.h.b16 %v1881
  %v2194 = vunpack.c.l.b16 %v1882
  %v2195 = vunpack.c.h.b16 %v1882
  %v2196 = vunpack.c.l.b16 %v1883
  %v2197 = vunpack.c.h.b16 %v1883
  %v2198 = vunpack.c.l.b16 %v1884
  %v2199 = vunpack.c.h.b16 %v1884
  %v2200 = vunpack.c.l.b16 %v1885
  %v2201 = vunpack.c.h.b16 %v1885
  %v2202 = vunpack.c.l.b16 %v1886
  %v2203 = vunpack.c.h.b16 %v1886
  %v2204 = vunpack.c.l.b16 %v1887
  %v2205 = vunpack.c.h.b16 %v1887
  %v2206 = vunpack.c.l.b16 %v1888
  %v2207 = vunpack.c.h.b16 %v1888
  %v2208 = vunpack.c.l.b16 %v1889
  %v2209 = vunpack.c.h.b16 %v1889
  %v2210 = vunpack.c.l.b16 %v1890
  %v2211 = vunpack.c.h.b16 %v1890
  %v2212 = vunpack.c.l.b16 %v1891
  %v2213 = vunpack.c.h.b16 %v1891
  %v2214 = vunpack.c.l.b16 %v1892
  %v2215 = vunpack.c.h.b16 %v1892
  %v2216 = vunpack.c.l.b16 %v1893
  %v2217 = vunpack.c.h.b16 %v1893
  %v2218 = vunpack.c.l.b16 %v1894
  %v2219 = vunpack.c.h.b16 %v1894
  %v2220 = vunpack.c.l.b16 %v1895
  %v2221 = vunpack.c.h.b16 %v1895
  %v2222 = vunpack.c.l.b16 %v1896
  %v2223 = vunpack.c.h.b16 %v1896
  %v2224 = vunpack.c.l.b16 %v1897
  %v2225 = vunpack.c.h.b16 %v1897
  %v2226 = vunpack.c.l.b16 %v1898
  %v2227 = vunpack.c.h.b16 %v1898
  %v2228 = vunpack.c.l.b16 %v1899
  %v2229 = vunpack.c.h.b16 %v1899
  %v2230 = vunpack.c.l.b16 %v1900
  %v2231 = vunpack.c.h.b16 %v1900
  %v2232 = vunpack.c.l.b16 %v1901
  %v2233 = vunpack.c.h.b16 %v1901
  %v2234 = vunpack.c.l.b16 %v1902
  %v2235 = vunpack.c.h.b16 %v1902
  %v2236 = vunpack.c.l.b16 %v1903
  %v2237 = vunpack.c.h.b16 %v1903
  %v2238 = vunpack.c.l.b16 %v1904
  %v2239 = vunpack.c.h.b16 %v1904
  %v2240 = vunpack.c.l.b16 %v1905
  %v2241 = vunpack.c.h.b16 %v1905
  %v2242 = vunpack.c.l.b16 %v1906
  %v2243 = vunpack.c.h.b16 %v1906
  %v2244 = vunpack.c.l.b16 %v1907
  %v2245 = vunpack.c.h.b16 %v1907
  %v2246 = vunpack.c.l.b16 %v1908
  %v2247 = vunpack.c.h.b16 %v1908
  %v2248 = vunpack.c.l.b16 %v1909
  %v2249 = vunpack.c.h.b16 %v1909
  %v2250 = vpack.c.b16 %v2190, %v2186
  %v2251 = vpack.c.b16 %v2191, %v2187
  %v2252 = vpack.c.b16 %v2192, %v2188
  %v2253 = vpack.c.b16 %v2193, %v2189
  %v2254 = vpack.c.b16 %v2198, %v2194
  %v2255 = vpack.c.b16 %v2199, %v2195
  %v2256 = vpack.c.b16 %v2200, %v2196
  %v2257 = vpack.c.b16 %v2201, %v2197
  %v2258 = vpack.c.b16 %v2206, %v2202
  %v2259 = vpack.c.b16 %v2207, %v2203
  %v2260 = vpack.c.b16 %v2208, %v2204
  %v2261 = vpack.c.b16 %v2209, %v2205
  %v2262 = vpack.c.b16 %v2214, %v2210
  %v2263 = vpack.c.b16 %v2215, %v2211
  %v2264 = vpack.c.b16 %v2216, %v2212
  %v2265 = vpack.c.b16 %v2217, %v2213
  %v2266 = vpack.c.b16 %v2222, %v2218
  %v2267 = vpack.c.b16 %v2223, %v2219
  %v2268 = vpack.c.b16 %v2224, %v2220
  %v2269 = vpack.c.b16 %v2225, %v2221
  %v2270 = vpack.c.b16 %v2230, %v2226
  %v2271 = vpack.c.b16 %v2231, %v2227
  %v2272 = vpack.c.b16 %v2232, %v2228
  %v2273 = vpack.c.b16 %v2233, %v2229
  %v2274 = vpack.c.b16 %v2238, %v2234
  %v2275 = vpack.c.b16 %v2239, %v2235
  %v2276 = vpack.c.b16 %v2240, %v2236
  %v2277 = vpack.c.b16 %v2241, %v2237
  %v2278 = vpack.c.b16 %v2246, %v2242
  %v2279 = vpack.c.b16 %v2247, %v2243
  %v2280 = vpack.c.b16 %v2248, %v2244
  %v2281 = vpack.c.b16 %v2249, %v2245
  %2314 = vmatprep.subr.bf16.mxu0 %v2251
  %2315 = vmatpush1.bf16.msra.mxu0 %v2250
  %2316 = vmatprep.subr.bf16.mxu0 %v2255
  %2317 = vmatpush1.bf16.msra.mxu0 %v2254
  %2318 = vmatprep.subr.bf16.mxu0 %v2259
  %2319 = vmatpush1.bf16.msra.mxu0 %v2258
  %2320 = vmatprep.subr.bf16.mxu0 %v2263
  %2321 = vmatpush1.bf16.msra.mxu0 %v2262
  %2322 = vmatprep.subr.bf16.mxu0 %v2267
  %2323 = vmatpush1.bf16.msra.mxu0 %v2266
  %2324 = vmatprep.subr.bf16.mxu0 %v2271
  %2325 = vmatpush1.bf16.msra.mxu0 %v2270
  %2326 = vmatprep.subr.bf16.mxu0 %v2275
  %2327 = vmatpush1.bf16.msra.mxu0 %v2274
  %2328 = vmatprep.subr.bf16.mxu0 %v2279
  %2329 = vmatpush1.bf16.msra.mxu0 %v2278
  %2330 = vmatprep.subr.bf16.mxu0 0
  %2331 = vmatpush1.bf16.msra.mxu0 0
  %2332 = vmatprep.subr.bf16.mxu0 0
  %2333 = vmatpush1.bf16.msra.mxu0 0
  %2334 = vmatprep.subr.bf16.mxu0 0
  %2335 = vmatpush1.bf16.msra.mxu0 0
  %2336 = vmatprep.subr.bf16.mxu0 0
  %2337 = vmatpush1.bf16.msra.mxu0 0
  %2338 = vmatprep.subr.bf16.mxu0 0
  %2339 = vmatpush1.bf16.msra.mxu0 0
  %2340 = vmatprep.subr.bf16.mxu0 0
  %2341 = vmatpush1.bf16.msra.mxu0 0
  %2342 = vmatprep.subr.bf16.mxu0 0
  %2343 = vmatpush1.bf16.msra.mxu0 0
  %2344 = vmatprep.subr.bf16.mxu0 0
  %2345 = vmatpush1.bf16.msra.mxu0 0
  %2346 = vmatprep.mubr.bf16.mxu0 0
  %2347 = vmatmul.mubr.bf16.gmra.mrb[0].mxu0 %v2153
  %v2348 = vpop.f32.mrb[0].mxu0
  %v2349 = vadd.f32 0.0, %v2348
  %v2350 = vpop.f32.mrb[0].mxu0
  %v2351 = vadd.f32 0.0, %v2350
  %v2352 = vpop.f32.mrb[0].mxu0
  %v2353 = vpop.f32.mrb[0].mxu0
  %2354 = vdwg.mxu0
  %2355 = vmatprep.subr.bf16.mxu0 %v2253
  %2356 = vmatpush1.bf16.msra.mxu0 %v2252
  %2357 = vmatprep.subr.bf16.mxu0 %v2257
  %2358 = vmatpush1.bf16.msra.mxu0 %v2256
  %2359 = vmatprep.subr.bf16.mxu0 %v2261
  %2360 = vmatpush1.bf16.msra.mxu0 %v2260
  %2361 = vmatprep.subr.bf16.mxu0 %v2265
  %2362 = vmatpush1.bf16.msra.mxu0 %v2264
  %2363 = vmatprep.subr.bf16.mxu0 %v2269
  %2364 = vmatpush1.bf16.msra.mxu0 %v2268
  %2365 = vmatprep.subr.bf16.mxu0 %v2273
  %2366 = vmatpush1.bf16.msra.mxu0 %v2272
  %2367 = vmatprep.subr.bf16.mxu0 %v2277
  %2368 = vmatpush1.bf16.msra.mxu0 %v2276
  %2369 = vmatprep.subr.bf16.mxu0 %v2281
  %2370 = vmatpush1.bf16.msra.mxu0 %v2280
  %2371 = vmatprep.subr.bf16.mxu0 0
  %2372 = vmatpush1.bf16.msra.mxu0 0
  %2373 = vmatprep.subr.bf16.mxu0 0
  %2374 = vmatpush1.bf16.msra.mxu0 0
  %2375 = vmatprep.subr.bf16.mxu0 0
  %2376 = vmatpush1.bf16.msra.mxu0 0
  %2377 = vmatprep.subr.bf16.mxu0 0
  %2378 = vmatpush1.bf16.msra.mxu0 0
  %2379 = vmatprep.subr.bf16.mxu0 0
  %2380 = vmatpush1.bf16.msra.mxu0 0
  %2381 = vmatprep.subr.bf16.mxu0 0
  %2382 = vmatpush1.bf16.msra.mxu0 0
  %2383 = vmatprep.subr.bf16.mxu0 0
  %2384 = vmatpush1.bf16.msra.mxu0 0
  %2385 = vmatprep.subr.bf16.mxu0 0
  %2386 = vmatpush1.bf16.msra.mxu0 0
  %2387 = vmatprep.mubr.bf16.mxu0 0
  %2388 = vmatmul.mubr.bf16.gmra.mrb[0].mxu0 %v2153
  %v2389 = vpop.f32.mrb[0].mxu0
  %v2390 = vadd.f32 0.0, %v2389
  %v2391 = vpop.f32.mrb[0].mxu0
  %v2392 = vadd.f32 0.0, %v2391
  %v2393 = vpop.f32.mrb[0].mxu0
  %v2394 = vpop.f32.mrb[0].mxu0
  %2395 = vdwg.mxu0
  %s2396 = smul.u32 0, 4
  %s2397 = smul.addr %s2396, 8
  %s2398 = scalar_lea.vmem [#allocation2], %s2397
  %v2399 = vld [vmem:[%s2398] sm:$0xff]
  %v2400 = vld [vmem:[%s2398 + $0x8] sm:$0xff]
  %v2401 = vld [vmem:[%s2398 + $0x10] sm:$0xff]
  %v2402 = vld [vmem:[%s2398 + $0x18] sm:$0xff]
  %v2403 = vadd.f32 %v2399, %v2106
  %v2404 = vadd.f32 %v2400, %v2108
  %v2405 = vadd.f32 %v2401, %v2147
  %v2406 = vadd.f32 %v2402, %v2149
  %s2407 = smul.u32 7, 4
  %s2408 = smul.addr %s2407, 8
  %s2409 = scalar_lea.vmem [#allocation3], %s2408
  %v2410 = vld [vmem:[%s2409] sm:$0xff]
  %v2411 = vld [vmem:[%s2409 + $0x8] sm:$0xff]
  %v2412 = vld [vmem:[%s2409 + $0x10] sm:$0xff]
  %v2413 = vld [vmem:[%s2409 + $0x18] sm:$0xff]
  %v2414 = vadd.f32 %v2410, %v2349
  %v2415 = vadd.f32 %v2411, %v2351
  %v2416 = vadd.f32 %v2412, %v2390
  %v2417 = vadd.f32 %v2413, %v2392
  %v2418 = vld [vmem:[#allocation5] sm:$0xff]
  %v2419 = vxor.u32 %v2403, 2147483648
  %v2420 = vmul.f32 %v2419, 1.442695
  %v2421 = vpow.pop %v2420
  %v2422 = vadd.f32 %v2421, 1.0
  %v2423 = vrcp.pop %v2422
  %v2424 = vmul.f32 1.0, %v2423
  %v2425 = vxor.u32 %v2404, 2147483648
  %v2426 = vmul.f32 %v2425, 1.442695
  %v2427 = vpow.pop %v2426
  %v2428 = vadd.f32 %v2427, 1.0
  %v2429 = vrcp.pop %v2428
  %v2430 = vmul.f32 1.0, %v2429
  %v2431 = vtanh.pop %v2405
  %v2432 = vxor.u32 %v2406, 2147483648
  %v2433 = vmul.f32 %v2432, 1.442695
  %v2434 = vpow.pop %v2433
  %v2435 = vadd.f32 %v2434, 1.0
  %v2436 = vrcp.pop %v2435
  %v2437 = vmul.f32 1.0, %v2436
  %v2438 = vmul.f32 %v2430, %v2418
  %v2439 = vmul.f32 %v2424, %v2431
  %v2440 = vadd.f32 %v2438, %v2439
  %v2441 = vtanh.pop %v2440
  %v2442 = vmul.f32 %v2437, %v2441
  %v2443 = vld [vmem:[#allocation5 + $0x8] sm:$0xff]
  %v2444 = vxor.u32 %v2414, 2147483648
  %v2445 = vmul.f32 %v2444, 1.442695
  %v2446 = vpow.pop %v2445
  %v2447 = vadd.f32 %v2446, 1.0
  %v2448 = vrcp.pop %v2447
  %v2449 = vmul.f32 1.0, %v2448
  %v2450 = vxor.u32 %v2415, 2147483648
  %v2451 = vmul.f32 %v2450, 1.442695
  %v2452 = vpow.pop %v2451
  %v2453 = vadd.f32 %v2452, 1.0
  %v2454 = vrcp.pop %v2453
  %v2455 = vmul.f32 1.0, %v2454
  %v2456 = vtanh.pop %v2416
  %v2457 = vxor.u32 %v2417, 2147483648
  %v2458 = vmul.f32 %v2457, 1.442695
  %v2459 = vpow.pop %v2458
  %v2460 = vadd.f32 %v2459, 1.0
  %v2461 = vrcp.pop %v2460
  %v2462 = vmul.f32 1.0, %v2461
  %v2463 = vmul.f32 %v2455, %v2443
  %v2464 = vmul.f32 %v2449, %v2456
  %v2465 = vadd.f32 %v2463, %v2464
  %v2466 = vtanh.pop %v2465
  %v2467 = vmul.f32 %v2462, %v2466
  %2468 = vst [vmem:[#allocation5] sm:$0xff] %v2440
  %2469 = vst [vmem:[#allocation5 + $0x8] sm:$0xff] %v2465
  %v2470 = vpack.c.bf16 %v2442, %v2442
  %2471 = vst [vmem:[#allocation4] sm:$0xf] %v2470
  %v2472 = vpack.c.bf16 %v2467, %v2467
  %2473 = vst [vmem:[#allocation4 + $0x4] sm:$0xf] %v2472
  %2474 = vst [vmem:[%s208] sm:$0xff] %v2442
  %s2475 = scalar_lea.vmem %s217, 56
  %2476 = vst [vmem:[%s2475] sm:$0xff] %v2467
  %v2477 = vld [vmem:[#allocation4] sm:$0xf]
  %2478 = vmatprep.subr.bf16.mxu0 %v2008
  %2479 = vmatpush1.bf16.msra.mxu0 %v2007
  %2480 = vmatprep.subr.bf16.mxu0 %v2012
  %2481 = vmatpush1.bf16.msra.mxu0 %v2011
  %2482 = vmatprep.subr.bf16.mxu0 %v2016
  %2483 = vmatpush1.bf16.msra.mxu0 %v2015
  %2484 = vmatprep.subr.bf16.mxu0 %v2020
  %2485 = vmatpush1.bf16.msra.mxu0 %v2019
  %2486 = vmatprep.subr.bf16.mxu0 %v2024
  %2487 = vmatpush1.bf16.msra.mxu0 %v2023
  %2488 = vmatprep.subr.bf16.mxu0 %v2028
  %2489 = vmatpush1.bf16.msra.mxu0 %v2027
  %2490 = vmatprep.subr.bf16.mxu0 %v2032
  %2491 = vmatpush1.bf16.msra.mxu0 %v2031
  %2492 = vmatprep.subr.bf16.mxu0 %v2036
  %2493 = vmatpush1.bf16.msra.mxu0 %v2035
  %2494 = vmatprep.subr.bf16.mxu0 0
  %2495 = vmatpush1.bf16.msra.mxu0 0
  %2496 = vmatprep.subr.bf16.mxu0 0
  %2497 = vmatpush1.bf16.msra.mxu0 0
  %2498 = vmatprep.subr.bf16.mxu0 0
  %2499 = vmatpush1.bf16.msra.mxu0 0
  %2500 = vmatprep.subr.bf16.mxu0 0
  %2501 = vmatpush1.bf16.msra.mxu0 0
  %2502 = vmatprep.subr.bf16.mxu0 0
  %2503 = vmatpush1.bf16.msra.mxu0 0
  %2504 = vmatprep.subr.bf16.mxu0 0
  %2505 = vmatpush1.bf16.msra.mxu0 0
  %2506 = vmatprep.subr.bf16.mxu0 0
  %2507 = vmatpush1.bf16.msra.mxu0 0
  %2508 = vmatprep.subr.bf16.mxu0 0
  %2509 = vmatpush1.bf16.msra.mxu0 0
  %2510 = vmatprep.mubr.bf16.mxu0 0
  %2511 = vmatmul.mubr.bf16.gmra.mrb[0].mxu0 %v2477
  %v2512 = vpop.f32.mrb[0].mxu0
  %v2513 = vadd.f32 0.0, %v2512
  %v2514 = vpop.f32.mrb[0].mxu0
  %v2515 = vadd.f32 0.0, %v2514
  %v2516 = vpop.f32.mrb[0].mxu0
  %v2517 = vpop.f32.mrb[0].mxu0
  %2518 = vdwg.mxu0
  %2519 = vmatprep.subr.bf16.mxu0 %v2010
  %2520 = vmatpush1.bf16.msra.mxu0 %v2009
  %2521 = vmatprep.subr.bf16.mxu0 %v2014
  %2522 = vmatpush1.bf16.msra.mxu0 %v2013
  %2523 = vmatprep.subr.bf16.mxu0 %v2018
  %2524 = vmatpush1.bf16.msra.mxu0 %v2017
  %2525 = vmatprep.subr.bf16.mxu0 %v2022
  %2526 = vmatpush1.bf16.msra.mxu0 %v2021
  %2527 = vmatprep.subr.bf16.mxu0 %v2026
  %2528 = vmatpush1.bf16.msra.mxu0 %v2025
  %2529 = vmatprep.subr.bf16.mxu0 %v2030
  %2530 = vmatpush1.bf16.msra.mxu0 %v2029
  %2531 = vmatprep.subr.bf16.mxu0 %v2034
  %2532 = vmatpush1.bf16.msra.mxu0 %v2033
  %2533 = vmatprep.subr.bf16.mxu0 %v2038
  %2534 = vmatpush1.bf16.msra.mxu0 %v2037
  %2535 = vmatprep.subr.bf16.mxu0 0
  %2536 = vmatpush1.bf16.msra.mxu0 0
  %2537 = vmatprep.subr.bf16.mxu0 0
  %2538 = vmatpush1.bf16.msra.mxu0 0
  %2539 = vmatprep.subr.bf16.mxu0 0
  %2540 = vmatpush1.bf16.msra.mxu0 0
  %2541 = vmatprep.subr.bf16.mxu0 0
  %2542 = vmatpush1.bf16.msra.mxu0 0
  %2543 = vmatprep.subr.bf16.mxu0 0
  %2544 = vmatpush1.bf16.msra.mxu0 0
  %2545 = vmatprep.subr.bf16.mxu0 0
  %2546 = vmatpush1.bf16.msra.mxu0 0
  %2547 = vmatprep.subr.bf16.mxu0 0
  %2548 = vmatpush1.bf16.msra.mxu0 0
  %2549 = vmatprep.subr.bf16.mxu0 0
  %2550 = vmatpush1.bf16.msra.mxu0 0
  %2551 = vmatprep.mubr.bf16.mxu0 0
  %2552 = vmatmul.mubr.bf16.gmra.mrb[0].mxu0 %v2477
  %v2553 = vpop.f32.mrb[0].mxu0
  %v2554 = vadd.f32 0.0, %v2553
  %v2555 = vpop.f32.mrb[0].mxu0
  %v2556 = vadd.f32 0.0, %v2555
  %v2557 = vpop.f32.mrb[0].mxu0
  %v2558 = vpop.f32.mrb[0].mxu0
  %2559 = vdwg.mxu0
  %v2560 = vld [vmem:[#allocation4 + $0x4] sm:$0xf]
  %2561 = vmatprep.subr.bf16.mxu0 %v2251
  %2562 = vmatpush1.bf16.msra.mxu0 %v2250
  %2563 = vmatprep.subr.bf16.mxu0 %v2255
  %2564 = vmatpush1.bf16.msra.mxu0 %v2254
  %2565 = vmatprep.subr.bf16.mxu0 %v2259
  %2566 = vmatpush1.bf16.msra.mxu0 %v2258
  %2567 = vmatprep.subr.bf16.mxu0 %v2263
  %2568 = vmatpush1.bf16.msra.mxu0 %v2262
  %2569 = vmatprep.subr.bf16.mxu0 %v2267
  %2570 = vmatpush1.bf16.msra.mxu0 %v2266
  %2571 = vmatprep.subr.bf16.mxu0 %v2271
  %2572 = vmatpush1.bf16.msra.mxu0 %v2270
  %2573 = vmatprep.subr.bf16.mxu0 %v2275
  %2574 = vmatpush1.bf16.msra.mxu0 %v2274
  %2575 = vmatprep.subr.bf16.mxu0 %v2279
  %2576 = vmatpush1.bf16.msra.mxu0 %v2278
  %2577 = vmatprep.subr.bf16.mxu0 0
  %2578 = vmatpush1.bf16.msra.mxu0 0
  %2579 = vmatprep.subr.bf16.mxu0 0
  %2580 = vmatpush1.bf16.msra.mxu0 0
  %2581 = vmatprep.subr.bf16.mxu0 0
  %2582 = vmatpush1.bf16.msra.mxu0 0
  %2583 = vmatprep.subr.bf16.mxu0 0
  %2584 = vmatpush1.bf16.msra.mxu0 0
  %2585 = vmatprep.subr.bf16.mxu0 0
  %2586 = vmatpush1.bf16.msra.mxu0 0
  %2587 = vmatprep.subr.bf16.mxu0 0
  %2588 = vmatpush1.bf16.msra.mxu0 0
  %2589 = vmatprep.subr.bf16.mxu0 0
  %2590 = vmatpush1.bf16.msra.mxu0 0
  %2591 = vmatprep.subr.bf16.mxu0 0
  %2592 = vmatpush1.bf16.msra.mxu0 0
  %2593 = vmatprep.mubr.bf16.mxu0 0
  %2594 = vmatmul.mubr.bf16.gmra.mrb[0].mxu0 %v2560
  %v2595 = vpop.f32.mrb[0].mxu0
  %v2596 = vadd.f32 0.0, %v2595
  %v2597 = vpop.f32.mrb[0].mxu0
  %v2598 = vadd.f32 0.0, %v2597
  %v2599 = vpop.f32.mrb[0].mxu0
  %v2600 = vpop.f32.mrb[0].mxu0
  %2601 = vdwg.mxu0
  %2602 = vmatprep.subr.bf16.mxu0 %v2253
  %2603 = vmatpush1.bf16.msra.mxu0 %v2252
  %2604 = vmatprep.subr.bf16.mxu0 %v2257
  %2605 = vmatpush1.bf16.msra.mxu0 %v2256
  %2606 = vmatprep.subr.bf16.mxu0 %v2261
  %2607 = vmatpush1.bf16.msra.mxu0 %v2260
  %2608 = vmatprep.subr.bf16.mxu0 %v2265
  %2609 = vmatpush1.bf16.msra.mxu0 %v2264
  %2610 = vmatprep.subr.bf16.mxu0 %v2269
  %2611 = vmatpush1.bf16.msra.mxu0 %v2268
  %2612 = vmatprep.subr.bf16.mxu0 %v2273
  %2613 = vmatpush1.bf16.msra.mxu0 %v2272
  %2614 = vmatprep.subr.bf16.mxu0 %v2277
  %2615 = vmatpush1.bf16.msra.mxu0 %v2276
  %2616 = vmatprep.subr.bf16.mxu0 %v2281
  %2617 = vmatpush1.bf16.msra.mxu0 %v2280
  %2618 = vmatprep.subr.bf16.mxu0 0
  %2619 = vmatpush1.bf16.msra.mxu0 0
  %2620 = vmatprep.subr.bf16.mxu0 0
  %2621 = vmatpush1.bf16.msra.mxu0 0
  %2622 = vmatprep.subr.bf16.mxu0 0
  %2623 = vmatpush1.bf16.msra.mxu0 0
  %2624 = vmatprep.subr.bf16.mxu0 0
  %2625 = vmatpush1.bf16.msra.mxu0 0
  %2626 = vmatprep.subr.bf16.mxu0 0
  %2627 = vmatpush1.bf16.msra.mxu0 0
  %2628 = vmatprep.subr.bf16.mxu0 0
  %2629 = vmatpush1.bf16.msra.mxu0 0
  %2630 = vmatprep.subr.bf16.mxu0 0
  %2631 = vmatpush1.bf16.msra.mxu0 0
  %2632 = vmatprep.subr.bf16.mxu0 0
  %2633 = vmatpush1.bf16.msra.mxu0 0
  %2634 = vmatprep.mubr.bf16.mxu0 0
  %2635 = vmatmul.mubr.bf16.gmra.mrb[0].mxu0 %v2560
  %v2636 = vpop.f32.mrb[0].mxu0
  %v2637 = vadd.f32 0.0, %v2636
  %v2638 = vpop.f32.mrb[0].mxu0
  %v2639 = vadd.f32 0.0, %v2638
  %v2640 = vpop.f32.mrb[0].mxu0
  %v2641 = vpop.f32.mrb[0].mxu0
  %2642 = vdwg.mxu0
  %s2643 = smul.u32 1, 4
  %s2644 = smul.addr %s2643, 8
  %s2645 = scalar_lea.vmem [#allocation2], %s2644
  %v2646 = vld [vmem:[%s2645] sm:$0xff]
  %v2647 = vld [vmem:[%s2645 + $0x8] sm:$0xff]
  %v2648 = vld [vmem:[%s2645 + $0x10] sm:$0xff]
  %v2649 = vld [vmem:[%s2645 + $0x18] sm:$0xff]
  %v2650 = vadd.f32 %v2646, %v2513
  %v2651 = vadd.f32 %v2647, %v2515
  %v2652 = vadd.f32 %v2648, %v2554
  %v2653 = vadd.f32 %v2649, %v2556
  %s2654 = smul.u32 6, 4
  %s2655 = smul.addr %s2654, 8
  %s2656 = scalar_lea.vmem [#allocation3], %s2655
  %v2657 = vld [vmem:[%s2656] sm:$0xff]
  %v2658 = vld [vmem:[%s2656 + $0x8] sm:$0xff]
  %v2659 = vld [vmem:[%s2656 + $0x10] sm:$0xff]
  %v2660 = vld [vmem:[%s2656 + $0x18] sm:$0xff]
  %v2661 = vadd.f32 %v2657, %v2596
  %v2662 = vadd.f32 %v2658, %v2598
  %v2663 = vadd.f32 %v2659, %v2637
  %v2664 = vadd.f32 %v2660, %v2639
  %v2665 = vld [vmem:[#allocation5] sm:$0xff]
  %v2666 = vxor.u32 %v2650, 2147483648
  %v2667 = vmul.f32 %v2666, 1.442695
  %v2668 = vpow.pop %v2667
  %v2669 = vadd.f32 %v2668, 1.0
  %v2670 = vrcp.pop %v2669
  %v2671 = vmul.f32 1.0, %v2670
  %v2672 = vxor.u32 %v2651, 2147483648
  %v2673 = vmul.f32 %v2672, 1.442695
  %v2674 = vpow.pop %v2673
  %v2675 = vadd.f32 %v2674, 1.0
  %v2676 = vrcp.pop %v2675
  %v2677 = vmul.f32 1.0, %v2676
  %v2678 = vtanh.pop %v2652
  %v2679 = vxor.u32 %v2653, 2147483648
  %v2680 = vmul.f32 %v2679, 1.442695
  %v2681 = vpow.pop %v2680
  %v2682 = vadd.f32 %v2681, 1.0
  %v2683 = vrcp.pop %v2682
  %v2684 = vmul.f32 1.0, %v2683
  %v2685 = vmul.f32 %v2677, %v2665
  %v2686 = vmul.f32 %v2671, %v2678
  %v2687 = vadd.f32 %v2685, %v2686
  %v2688 = vtanh.pop %v2687
  %v2689 = vmul.f32 %v2684, %v2688
  %v2690 = vld [vmem:[#allocation5 + $0x8] sm:$0xff]
  %v2691 = vxor.u32 %v2661, 2147483648
  %v2692 = vmul.f32 %v2691, 1.442695
  %v2693 = vpow.pop %v2692
  %v2694 = vadd.f32 %v2693, 1.0
  %v2695 = vrcp.pop %v2694
  %v2696 = vmul.f32 1.0, %v2695
  %v2697 = vxor.u32 %v2662, 2147483648
  %v2698 = vmul.f32 %v2697, 1.442695
  %v2699 = vpow.pop %v2698
  %v2700 = vadd.f32 %v2699, 1.0
  %v2701 = vrcp.pop %v2700
  %v2702 = vmul.f32 1.0, %v2701
  %v2703 = vtanh.pop %v2663
  %v2704 = vxor.u32 %v2664, 2147483648
  %v2705 = vmul.f32 %v2704, 1.442695
  %v2706 = vpow.pop %v2705
  %v2707 = vadd.f32 %v2706, 1.0
  %v2708 = vrcp.pop %v2707
  %v2709 = vmul.f32 1.0, %v2708
  %v2710 = vmul.f32 %v2702, %v2690
  %v2711 = vmul.f32 %v2696, %v2703
  %v2712 = vadd.f32 %v2710, %v2711
  %v2713 = vtanh.pop %v2712
  %v2714 = vmul.f32 %v2709, %v2713
  %2715 = vst [vmem:[#allocation5] sm:$0xff] %v2687
  %2716 = vst [vmem:[#allocation5 + $0x8] sm:$0xff] %v2712
  %v2717 = vpack.c.bf16 %v2689, %v2689
  %2718 = vst [vmem:[#allocation4] sm:$0xf] %v2717
  %v2719 = vpack.c.bf16 %v2714, %v2714
  %2720 = vst [vmem:[#allocation4 + $0x4] sm:$0xf] %v2719
  %s2721 = scalar_lea.vmem %s208, 8
  %2722 = vst [vmem:[%s2721] sm:$0xff] %v2689
  %s2723 = scalar_lea.vmem %s217, 48
  %2724 = vst [vmem:[%s2723] sm:$0xff] %v2714
  %v2725 = vld [vmem:[#allocation4] sm:$0xf]
  %2726 = vmatprep.subr.bf16.mxu0 %v2008
  %2727 = vmatpush1.bf16.msra.mxu0 %v2007
  %2728 = vmatprep.subr.bf16.mxu0 %v2012
  %2729 = vmatpush1.bf16.msra.mxu0 %v2011
  %2730 = vmatprep.subr.bf16.mxu0 %v2016
  %2731 = vmatpush1.bf16.msra.mxu0 %v2015
  %2732 = vmatprep.subr.bf16.mxu0 %v2020
  %2733 = vmatpush1.bf16.msra.mxu0 %v2019
  %2734 = vmatprep.subr.bf16.mxu0 %v2024
  %2735 = vmatpush1.bf16.msra.mxu0 %v2023
  %2736 = vmatprep.subr.bf16.mxu0 %v2028
  %2737 = vmatpush1.bf16.msra.mxu0 %v2027
  %2738 = vmatprep.subr.bf16.mxu0 %v2032
  %2739 = vmatpush1.bf16.msra.mxu0 %v2031
  %2740 = vmatprep.subr.bf16.mxu0 %v2036
  %2741 = vmatpush1.bf16.msra.mxu0 %v2035
  %2742 = vmatprep.subr.bf16.mxu0 0
  %2743 = vmatpush1.bf16.msra.mxu0 0
  %2744 = vmatprep.subr.bf16.mxu0 0
  %2745 = vmatpush1.bf16.msra.mxu0 0
  %2746 = vmatprep.subr.bf16.mxu0 0
  %2747 = vmatpush1.bf16.msra.mxu0 0
  %2748 = vmatprep.subr.bf16.mxu0 0
  %2749 = vmatpush1.bf16.msra.mxu0 0
  %2750 = vmatprep.subr.bf16.mxu0 0
  %2751 = vmatpush1.bf16.msra.mxu0 0
  %2752 = vmatprep.subr.bf16.mxu0 0
  %2753 = vmatpush1.bf16.msra.mxu0 0
  %2754 = vmatprep.subr.bf16.mxu0 0
  %2755 = vmatpush1.bf16.msra.mxu0 0
  %2756 = vmatprep.subr.bf16.mxu0 0
  %2757 = vmatpush1.bf16.msra.mxu0 0
  %2758 = vmatprep.mubr.bf16.mxu0 0
  %2759 = vmatmul.mubr.bf16.gmra.mrb[0].mxu0 %v2725
  %v2760 = vpop.f32.mrb[0].mxu0
  %v2761 = vadd.f32 0.0, %v2760
  %v2762 = vpop.f32.mrb[0].mxu0
  %v2763 = vadd.f32 0.0, %v2762
  %v2764 = vpop.f32.mrb[0].mxu0
  %v2765 = vpop.f32.mrb[0].mxu0
  %2766 = vdwg.mxu0
  %2767 = vmatprep.subr.bf16.mxu0 %v2010
  %2768 = vmatpush1.bf16.msra.mxu0 %v2009
  %2769 = vmatprep.subr.bf16.mxu0 %v2014
  %2770 = vmatpush1.bf16.msra.mxu0 %v2013
  %2771 = vmatprep.subr.bf16.mxu0 %v2018
  %2772 = vmatpush1.bf16.msra.mxu0 %v2017
  %2773 = vmatprep.subr.bf16.mxu0 %v2022
  %2774 = vmatpush1.bf16.msra.mxu0 %v2021
  %2775 = vmatprep.subr.bf16.mxu0 %v2026
  %2776 = vmatpush1.bf16.msra.mxu0 %v2025
  %2777 = vmatprep.subr.bf16.mxu0 %v2030
  %2778 = vmatpush1.bf16.msra.mxu0 %v2029
  %2779 = vmatprep.subr.bf16.mxu0 %v2034
  %2780 = vmatpush1.bf16.msra.mxu0 %v2033
  %2781 = vmatprep.subr.bf16.mxu0 %v2038
  %2782 = vmatpush1.bf16.msra.mxu0 %v2037
  %2783 = vmatprep.subr.bf16.mxu0 0
  %2784 = vmatpush1.bf16.msra.mxu0 0
  %2785 = vmatprep.subr.bf16.mxu0 0
  %2786 = vmatpush1.bf16.msra.mxu0 0
  %2787 = vmatprep.subr.bf16.mxu0 0
  %2788 = vmatpush1.bf16.msra.mxu0 0
  %2789 = vmatprep.subr.bf16.mxu0 0
  %2790 = vmatpush1.bf16.msra.mxu0 0
  %2791 = vmatprep.subr.bf16.mxu0 0
  %2792 = vmatpush1.bf16.msra.mxu0 0
  %2793 = vmatprep.subr.bf16.mxu0 0
  %2794 = vmatpush1.bf16.msra.mxu0 0
  %2795 = vmatprep.subr.bf16.mxu0 0
  %2796 = vmatpush1.bf16.msra.mxu0 0
  %2797 = vmatprep.subr.bf16.mxu0 0
  %2798 = vmatpush1.bf16.msra.mxu0 0
  %2799 = vmatprep.mubr.bf16.mxu0 0
  %2800 = vmatmul.mubr.bf16.gmra.mrb[0].mxu0 %v2725
  %v2801 = vpop.f32.mrb[0].mxu0
  %v2802 = vadd.f32 0.0, %v2801
  %v2803 = vpop.f32.mrb[0].mxu0
  %v2804 = vadd.f32 0.0, %v2803
  %v2805 = vpop.f32.mrb[0].mxu0
  %v2806 = vpop.f32.mrb[0].mxu0
  %2807 = vdwg.mxu0
  %v2808 = vld [vmem:[#allocation4 + $0x4] sm:$0xf]
  %2809 = vmatprep.subr.bf16.mxu0 %v2251
  %2810 = vmatpush1.bf16.msra.mxu0 %v2250
  %2811 = vmatprep.subr.bf16.mxu0 %v2255
  %2812 = vmatpush1.bf16.msra.mxu0 %v2254
  %2813 = vmatprep.subr.bf16.mxu0 %v2259
  %2814 = vmatpush1.bf16.msra.mxu0 %v2258
  %2815 = vmatprep.subr.bf16.mxu0 %v2263
  %2816 = vmatpush1.bf16.msra.mxu0 %v2262
  %2817 = vmatprep.subr.bf16.mxu0 %v2267
  %2818 = vmatpush1.bf16.msra.mxu0 %v2266
  %2819 = vmatprep.subr.bf16.mxu0 %v2271
  %2820 = vmatpush1.bf16.msra.mxu0 %v2270
  %2821 = vmatprep.subr.bf16.mxu0 %v2275
  %2822 = vmatpush1.bf16.msra.mxu0 %v2274
  %2823 = vmatprep.subr.bf16.mxu0 %v2279
  %2824 = vmatpush1.bf16.msra.mxu0 %v2278
  %2825 = vmatprep.subr.bf16.mxu0 0
  %2826 = vmatpush1.bf16.msra.mxu0 0
  %2827 = vmatprep.subr.bf16.mxu0 0
  %2828 = vmatpush1.bf16.msra.mxu0 0
  %2829 = vmatprep.subr.bf16.mxu0 0
  %2830 = vmatpush1.bf16.msra.mxu0 0
  %2831 = vmatprep.subr.bf16.mxu0 0
  %2832 = vmatpush1.bf16.msra.mxu0 0
  %2833 = vmatprep.subr.bf16.mxu0 0
  %2834 = vmatpush1.bf16.msra.mxu0 0
  %2835 = vmatprep.subr.bf16.mxu0 0
  %2836 = vmatpush1.bf16.msra.mxu0 0
  %2837 = vmatprep.subr.bf16.mxu0 0
  %2838 = vmatpush1.bf16.msra.mxu0 0
  %2839 = vmatprep.subr.bf16.mxu0 0
  %2840 = vmatpush1.bf16.msra.mxu0 0
  %2841 = vmatprep.mubr.bf16.mxu0 0
  %2842 = vmatmul.mubr.bf16.gmra.mrb[0].mxu0 %v2808
  %v2843 = vpop.f32.mrb[0].mxu0
  %v2844 = vadd.f32 0.0, %v2843
  %v2845 = vpop.f32.mrb[0].mxu0
  %v2846 = vadd.f32 0.0, %v2845
  %v2847 = vpop.f32.mrb[0].mxu0
  %v2848 = vpop.f32.mrb[0].mxu0
  %2849 = vdwg.mxu0
  %2850 = vmatprep.subr.bf16.mxu0 %v2253
  %2851 = vmatpush1.bf16.msra.mxu0 %v2252
  %2852 = vmatprep.subr.bf16.mxu0 %v2257
  %2853 = vmatpush1.bf16.msra.mxu0 %v2256
  %2854 = vmatprep.subr.bf16.mxu0 %v2261
  %2855 = vmatpush1.bf16.msra.mxu0 %v2260
  %2856 = vmatprep.subr.bf16.mxu0 %v2265
  %2857 = vmatpush1.bf16.msra.mxu0 %v2264
  %2858 = vmatprep.subr.bf16.mxu0 %v2269
  %2859 = vmatpush1.bf16.msra.mxu0 %v2268
  %2860 = vmatprep.subr.bf16.mxu0 %v2273
  %2861 = vmatpush1.bf16.msra.mxu0 %v2272
  %2862 = vmatprep.subr.bf16.mxu0 %v2277
  %2863 = vmatpush1.bf16.msra.mxu0 %v2276
  %2864 = vmatprep.subr.bf16.mxu0 %v2281
  %2865 = vmatpush1.bf16.msra.mxu0 %v2280
  %2866 = vmatprep.subr.bf16.mxu0 0
  %2867 = vmatpush1.bf16.msra.mxu0 0
  %2868 = vmatprep.subr.bf16.mxu0 0
  %2869 = vmatpush1.bf16.msra.mxu0 0
  %2870 = vmatprep.subr.bf16.mxu0 0
  %2871 = vmatpush1.bf16.msra.mxu0 0
  %2872 = vmatprep.subr.bf16.mxu0 0
  %2873 = vmatpush1.bf16.msra.mxu0 0
  %2874 = vmatprep.subr.bf16.mxu0 0
  %2875 = vmatpush1.bf16.msra.mxu0 0
  %2876 = vmatprep.subr.bf16.mxu0 0
  %2877 = vmatpush1.bf16.msra.mxu0 0
  %2878 = vmatprep.subr.bf16.mxu0 0
  %2879 = vmatpush1.bf16.msra.mxu0 0
  %2880 = vmatprep.subr.bf16.mxu0 0
  %2881 = vmatpush1.bf16.msra.mxu0 0
  %2882 = vmatprep.mubr.bf16.mxu0 0
  %2883 = vmatmul.mubr.bf16.gmra.mrb[0].mxu0 %v2808
  %v2884 = vpop.f32.mrb[0].mxu0
  %v2885 = vadd.f32 0.0, %v2884
  %v2886 = vpop.f32.mrb[0].mxu0
  %v2887 = vadd.f32 0.0, %v2886
  %v2888 = vpop.f32.mrb[0].mxu0
  %v2889 = vpop.f32.mrb[0].mxu0
  %2890 = vdwg.mxu0
  %s2891 = smul.u32 2, 4
  %s2892 = smul.addr %s2891, 8
  %s2893 = scalar_lea.vmem [#allocation2], %s2892
  %v2894 = vld [vmem:[%s2893] sm:$0xff]
  %v2895 = vld [vmem:[%s2893 + $0x8] sm:$0xff]
  %v2896 = vld [vmem:[%s2893 + $0x10] sm:$0xff]
  %v2897 = vld [vmem:[%s2893 + $0x18] sm:$0xff]
  %v2898 = vadd.f32 %v2894, %v2761
  %v2899 = vadd.f32 %v2895, %v2763
  %v2900 = vadd.f32 %v2896, %v2802
  %v2901 = vadd.f32 %v2897, %v2804
  %s2902 = smul.u32 5, 4
  %s2903 = smul.addr %s2902, 8
  %s2904 = scalar_lea.vmem [#allocation3], %s2903
  %v2905 = vld [vmem:[%s2904] sm:$0xff]
  %v2906 = vld [vmem:[%s2904 + $0x8] sm:$0xff]
  %v2907 = vld [vmem:[%s2904 + $0x10] sm:$0xff]
  %v2908 = vld [vmem:[%s2904 + $0x18] sm:$0xff]
  %v2909 = vadd.f32 %v2905, %v2844
  %v2910 = vadd.f32 %v2906, %v2846
  %v2911 = vadd.f32 %v2907, %v2885
  %v2912 = vadd.f32 %v2908, %v2887
  %v2913 = vld [vmem:[#allocation5] sm:$0xff]
  %v2914 = vxor.u32 %v2898, 2147483648
  %v2915 = vmul.f32 %v2914, 1.442695
  %v2916 = vpow.pop %v2915
  %v2917 = vadd.f32 %v2916, 1.0
  %v2918 = vrcp.pop %v2917
  %v2919 = vmul.f32 1.0, %v2918
  %v2920 = vxor.u32 %v2899, 2147483648
  %v2921 = vmul.f32 %v2920, 1.442695
  %v2922 = vpow.pop %v2921
  %v2923 = vadd.f32 %v2922, 1.0
  %v2924 = vrcp.pop %v2923
  %v2925 = vmul.f32 1.0, %v2924
  %v2926 = vtanh.pop %v2900
  %v2927 = vxor.u32 %v2901, 2147483648
  %v2928 = vmul.f32 %v2927, 1.442695
  %v2929 = vpow.pop %v2928
  %v2930 = vadd.f32 %v2929, 1.0
  %v2931 = vrcp.pop %v2930
  %v2932 = vmul.f32 1.0, %v2931
  %v2933 = vmul.f32 %v2925, %v2913
  %v2934 = vmul.f32 %v2919, %v2926
  %v2935 = vadd.f32 %v2933, %v2934
  %v2936 = vtanh.pop %v2935
  %v2937 = vmul.f32 %v2932, %v2936
  %v2938 = vld [vmem:[#allocation5 + $0x8] sm:$0xff]
  %v2939 = vxor.u32 %v2909, 2147483648
  %v2940 = vmul.f32 %v2939, 1.442695
  %v2941 = vpow.pop %v2940
  %v2942 = vadd.f32 %v2941, 1.0
  %v2943 = vrcp.pop %v2942
  %v2944 = vmul.f32 1.0, %v2943
  %v2945 = vxor.u32 %v2910, 2147483648
  %v2946 = vmul.f32 %v2945, 1.442695
  %v2947 = vpow.pop %v2946
  %v2948 = vadd.f32 %v2947, 1.0
  %v2949 = vrcp.pop %v2948
  %v2950 = vmul.f32 1.0, %v2949
  %v2951 = vtanh.pop %v2911
  %v2952 = vxor.u32 %v2912, 2147483648
  %v2953 = vmul.f32 %v2952, 1.442695
  %v2954 = vpow.pop %v2953
  %v2955 = vadd.f32 %v2954, 1.0
  %v2956 = vrcp.pop %v2955
  %v2957 = vmul.f32 1.0, %v2956
  %v2958 = vmul.f32 %v2950, %v2938
  %v2959 = vmul.f32 %v2944, %v2951
  %v2960 = vadd.f32 %v2958, %v2959
  %v2961 = vtanh.pop %v2960
  %v2962 = vmul.f32 %v2957, %v2961
  %2963 = vst [vmem:[#allocation5] sm:$0xff] %v2935
  %2964 = vst [vmem:[#allocation5 + $0x8] sm:$0xff] %v2960
  %v2965 = vpack.c.bf16 %v2937, %v2937
  %2966 = vst [vmem:[#allocation4] sm:$0xf] %v2965
  %v2967 = vpack.c.bf16 %v2962, %v2962
  %2968 = vst [vmem:[#allocation4 + $0x4] sm:$0xf] %v2967
  %s2969 = scalar_lea.vmem %s208, 16
  %2970 = vst [vmem:[%s2969] sm:$0xff] %v2937
  %s2971 = scalar_lea.vmem %s217, 40
  %2972 = vst [vmem:[%s2971] sm:$0xff] %v2962
  %v2973 = vld [vmem:[#allocation4] sm:$0xf]
  %2974 = vmatprep.subr.bf16.mxu0 %v2008
  %2975 = vmatpush1.bf16.msra.mxu0 %v2007
  %2976 = vmatprep.subr.bf16.mxu0 %v2012
  %2977 = vmatpush1.bf16.msra.mxu0 %v2011
  %2978 = vmatprep.subr.bf16.mxu0 %v2016
  %2979 = vmatpush1.bf16.msra.mxu0 %v2015
  %2980 = vmatprep.subr.bf16.mxu0 %v2020
  %2981 = vmatpush1.bf16.msra.mxu0 %v2019
  %2982 = vmatprep.subr.bf16.mxu0 %v2024
  %2983 = vmatpush1.bf16.msra.mxu0 %v2023
  %2984 = vmatprep.subr.bf16.mxu0 %v2028
  %2985 = vmatpush1.bf16.msra.mxu0 %v2027
  %2986 = vmatprep.subr.bf16.mxu0 %v2032
  %2987 = vmatpush1.bf16.msra.mxu0 %v2031
  %2988 = vmatprep.subr.bf16.mxu0 %v2036
  %2989 = vmatpush1.bf16.msra.mxu0 %v2035
  %2990 = vmatprep.subr.bf16.mxu0 0
  %2991 = vmatpush1.bf16.msra.mxu0 0
  %2992 = vmatprep.subr.bf16.mxu0 0
  %2993 = vmatpush1.bf16.msra.mxu0 0
  %2994 = vmatprep.subr.bf16.mxu0 0
  %2995 = vmatpush1.bf16.msra.mxu0 0
  %2996 = vmatprep.subr.bf16.mxu0 0
  %2997 = vmatpush1.bf16.msra.mxu0 0
  %2998 = vmatprep.subr.bf16.mxu0 0
  %2999 = vmatpush1.bf16.msra.mxu0 0
  %3000 = vmatprep.subr.bf16.mxu0 0
  %3001 = vmatpush1.bf16.msra.mxu0 0
  %3002 = vmatprep.subr.bf16.mxu0 0
  %3003 = vmatpush1.bf16.msra.mxu0 0
  %3004 = vmatprep.subr.bf16.mxu0 0
  %3005 = vmatpush1.bf16.msra.mxu0 0
  %3006 = vmatprep.mubr.bf16.mxu0 0
  %3007 = vmatmul.mubr.bf16.gmra.mrb[0].mxu0 %v2973
  %v3008 = vpop.f32.mrb[0].mxu0
  %v3009 = vadd.f32 0.0, %v3008
  %v3010 = vpop.f32.mrb[0].mxu0
  %v3011 = vadd.f32 0.0, %v3010
  %v3012 = vpop.f32.mrb[0].mxu0
  %v3013 = vpop.f32.mrb[0].mxu0
  %3014 = vdwg.mxu0
  %3015 = vmatprep.subr.bf16.mxu0 %v2010
  %3016 = vmatpush1.bf16.msra.mxu0 %v2009
  %3017 = vmatprep.subr.bf16.mxu0 %v2014
  %3018 = vmatpush1.bf16.msra.mxu0 %v2013
  %3019 = vmatprep.subr.bf16.mxu0 %v2018
  %3020 = vmatpush1.bf16.msra.mxu0 %v2017
  %3021 = vmatprep.subr.bf16.mxu0 %v2022
  %3022 = vmatpush1.bf16.msra.mxu0 %v2021
  %3023 = vmatprep.subr.bf16.mxu0 %v2026
  %3024 = vmatpush1.bf16.msra.mxu0 %v2025
  %3025 = vmatprep.subr.bf16.mxu0 %v2030
  %3026 = vmatpush1.bf16.msra.mxu0 %v2029
  %3027 = vmatprep.subr.bf16.mxu0 %v2034
  %3028 = vmatpush1.bf16.msra.mxu0 %v2033
  %3029 = vmatprep.subr.bf16.mxu0 %v2038
  %3030 = vmatpush1.bf16.msra.mxu0 %v2037
  %3031 = vmatprep.subr.bf16.mxu0 0
  %3032 = vmatpush1.bf16.msra.mxu0 0
  %3033 = vmatprep.subr.bf16.mxu0 0
  %3034 = vmatpush1.bf16.msra.mxu0 0
  %3035 = vmatprep.subr.bf16.mxu0 0
  %3036 = vmatpush1.bf16.msra.mxu0 0
  %3037 = vmatprep.subr.bf16.mxu0 0
  %3038 = vmatpush1.bf16.msra.mxu0 0
  %3039 = vmatprep.subr.bf16.mxu0 0
  %3040 = vmatpush1.bf16.msra.mxu0 0
  %3041 = vmatprep.subr.bf16.mxu0 0
  %3042 = vmatpush1.bf16.msra.mxu0 0
  %3043 = vmatprep.subr.bf16.mxu0 0
  %3044 = vmatpush1.bf16.msra.mxu0 0
  %3045 = vmatprep.subr.bf16.mxu0 0
  %3046 = vmatpush1.bf16.msra.mxu0 0
  %3047 = vmatprep.mubr.bf16.mxu0 0
  %3048 = vmatmul.mubr.bf16.gmra.mrb[0].mxu0 %v2973
  %v3049 = vpop.f32.mrb[0].mxu0
  %v3050 = vadd.f32 0.0, %v3049
  %v3051 = vpop.f32.mrb[0].mxu0
  %v3052 = vadd.f32 0.0, %v3051
  %v3053 = vpop.f32.mrb[0].mxu0
  %v3054 = vpop.f32.mrb[0].mxu0
  %3055 = vdwg.mxu0
  %v3056 = vld [vmem:[#allocation4 + $0x4] sm:$0xf]
  %3057 = vmatprep.subr.bf16.mxu0 %v2251
  %3058 = vmatpush1.bf16.msra.mxu0 %v2250
  %3059 = vmatprep.subr.bf16.mxu0 %v2255
  %3060 = vmatpush1.bf16.msra.mxu0 %v2254
  %3061 = vmatprep.subr.bf16.mxu0 %v2259
  %3062 = vmatpush1.bf16.msra.mxu0 %v2258
  %3063 = vmatprep.subr.bf16.mxu0 %v2263
  %3064 = vmatpush1.bf16.msra.mxu0 %v2262
  %3065 = vmatprep.subr.bf16.mxu0 %v2267
  %3066 = vmatpush1.bf16.msra.mxu0 %v2266
  %3067 = vmatprep.subr.bf16.mxu0 %v2271
  %3068 = vmatpush1.bf16.msra.mxu0 %v2270
  %3069 = vmatprep.subr.bf16.mxu0 %v2275
  %3070 = vmatpush1.bf16.msra.mxu0 %v2274
  %3071 = vmatprep.subr.bf16.mxu0 %v2279
  %3072 = vmatpush1.bf16.msra.mxu0 %v2278
  %3073 = vmatprep.subr.bf16.mxu0 0
  %3074 = vmatpush1.bf16.msra.mxu0 0
  %3075 = vmatprep.subr.bf16.mxu0 0
  %3076 = vmatpush1.bf16.msra.mxu0 0
  %3077 = vmatprep.subr.bf16.mxu0 0
  %3078 = vmatpush1.bf16.msra.mxu0 0
  %3079 = vmatprep.subr.bf16.mxu0 0
  %3080 = vmatpush1.bf16.msra.mxu0 0
  %3081 = vmatprep.subr.bf16.mxu0 0
  %3082 = vmatpush1.bf16.msra.mxu0 0
  %3083 = vmatprep.subr.bf16.mxu0 0
  %3084 = vmatpush1.bf16.msra.mxu0 0
  %3085 = vmatprep.subr.bf16.mxu0 0
  %3086 = vmatpush1.bf16.msra.mxu0 0
  %3087 = vmatprep.subr.bf16.mxu0 0
  %3088 = vmatpush1.bf16.msra.mxu0 0
  %3089 = vmatprep.mubr.bf16.mxu0 0
  %3090 = vmatmul.mubr.bf16.gmra.mrb[0].mxu0 %v3056
  %v3091 = vpop.f32.mrb[0].mxu0
  %v3092 = vadd.f32 0.0, %v3091
  %v3093 = vpop.f32.mrb[0].mxu0
  %v3094 = vadd.f32 0.0, %v3093
  %v3095 = vpop.f32.mrb[0].mxu0
  %v3096 = vpop.f32.mrb[0].mxu0
  %3097 = vdwg.mxu0
  %3098 = vmatprep.subr.bf16.mxu0 %v2253
  %3099 = vmatpush1.bf16.msra.mxu0 %v2252
  %3100 = vmatprep.subr.bf16.mxu0 %v2257
  %3101 = vmatpush1.bf16.msra.mxu0 %v2256
  %3102 = vmatprep.subr.bf16.mxu0 %v2261
  %3103 = vmatpush1.bf16.msra.mxu0 %v2260
  %3104 = vmatprep.subr.bf16.mxu0 %v2265
  %3105 = vmatpush1.bf16.msra.mxu0 %v2264
  %3106 = vmatprep.subr.bf16.mxu0 %v2269
  %3107 = vmatpush1.bf16.msra.mxu0 %v2268
  %3108 = vmatprep.subr.bf16.mxu0 %v2273
  %3109 = vmatpush1.bf16.msra.mxu0 %v2272
  %3110 = vmatprep.subr.bf16.mxu0 %v2277
  %3111 = vmatpush1.bf16.msra.mxu0 %v2276
  %3112 = vmatprep.subr.bf16.mxu0 %v2281
  %3113 = vmatpush1.bf16.msra.mxu0 %v2280
  %3114 = vmatprep.subr.bf16.mxu0 0
  %3115 = vmatpush1.bf16.msra.mxu0 0
  %3116 = vmatprep.subr.bf16.mxu0 0
  %3117 = vmatpush1.bf16.msra.mxu0 0
  %3118 = vmatprep.subr.bf16.mxu0 0
  %3119 = vmatpush1.bf16.msra.mxu0 0
  %3120 = vmatprep.subr.bf16.mxu0 0
  %3121 = vmatpush1.bf16.msra.mxu0 0
  %3122 = vmatprep.subr.bf16.mxu0 0
  %3123 = vmatpush1.bf16.msra.mxu0 0
  %3124 = vmatprep.subr.bf16.mxu0 0
  %3125 = vmatpush1.bf16.msra.mxu0 0
  %3126 = vmatprep.subr.bf16.mxu0 0
  %3127 = vmatpush1.bf16.msra.mxu0 0
  %3128 = vmatprep.subr.bf16.mxu0 0
  %3129 = vmatpush1.bf16.msra.mxu0 0
  %3130 = vmatprep.mubr.bf16.mxu0 0
  %3131 = vmatmul.mubr.bf16.gmra.mrb[0].mxu0 %v3056
  %v3132 = vpop.f32.mrb[0].mxu0
  %v3133 = vadd.f32 0.0, %v3132
  %v3134 = vpop.f32.mrb[0].mxu0
  %v3135 = vadd.f32 0.0, %v3134
  %v3136 = vpop.f32.mrb[0].mxu0
  %v3137 = vpop.f32.mrb[0].mxu0
  %3138 = vdwg.mxu0
  %s3139 = smul.u32 3, 4
  %s3140 = smul.addr %s3139, 8
  %s3141 = scalar_lea.vmem [#allocation2], %s3140
  %v3142 = vld [vmem:[%s3141] sm:$0xff]
  %v3143 = vld [vmem:[%s3141 + $0x8] sm:$0xff]
  %v3144 = vld [vmem:[%s3141 + $0x10] sm:$0xff]
  %v3145 = vld [vmem:[%s3141 + $0x18] sm:$0xff]
  %v3146 = vadd.f32 %v3142, %v3009
  %v3147 = vadd.f32 %v3143, %v3011
  %v3148 = vadd.f32 %v3144, %v3050
  %v3149 = vadd.f32 %v3145, %v3052
  %s3150 = smul.u32 4, 4
  %s3151 = smul.addr %s3150, 8
  %s3152 = scalar_lea.vmem [#allocation3], %s3151
  %v3153 = vld [vmem:[%s3152] sm:$0xff]
  %v3154 = vld [vmem:[%s3152 + $0x8] sm:$0xff]
  %v3155 = vld [vmem:[%s3152 + $0x10] sm:$0xff]
  %v3156 = vld [vmem:[%s3152 + $0x18] sm:$0xff]
  %v3157 = vadd.f32 %v3153, %v3092
  %v3158 = vadd.f32 %v3154, %v3094
  %v3159 = vadd.f32 %v3155, %v3133
  %v3160 = vadd.f32 %v3156, %v3135
  %v3161 = vld [vmem:[#allocation5] sm:$0xff]
  %v3162 = vxor.u32 %v3146, 2147483648
  %v3163 = vmul.f32 %v3162, 1.442695
  %v3164 = vpow.pop %v3163
  %v3165 = vadd.f32 %v3164, 1.0
  %v3166 = vrcp.pop %v3165
  %v3167 = vmul.f32 1.0, %v3166
  %v3168 = vxor.u32 %v3147, 2147483648
  %v3169 = vmul.f32 %v3168, 1.442695
  %v3170 = vpow.pop %v3169
  %v3171 = vadd.f32 %v3170, 1.0
  %v3172 = vrcp.pop %v3171
  %v3173 = vmul.f32 1.0, %v3172
  %v3174 = vtanh.pop %v3148
  %v3175 = vxor.u32 %v3149, 2147483648
  %v3176 = vmul.f32 %v3175, 1.442695
  %v3177 = vpow.pop %v3176
  %v3178 = vadd.f32 %v3177, 1.0
  %v3179 = vrcp.pop %v3178
  %v3180 = vmul.f32 1.0, %v3179
  %v3181 = vmul.f32 %v3173, %v3161
  %v3182 = vmul.f32 %v3167, %v3174
  %v3183 = vadd.f32 %v3181, %v3182
  %v3184 = vtanh.pop %v3183
  %v3185 = vmul.f32 %v3180, %v3184
  %v3186 = vld [vmem:[#allocation5 + $0x8] sm:$0xff]
  %v3187 = vxor.u32 %v3157, 2147483648
  %v3188 = vmul.f32 %v3187, 1.442695
  %v3189 = vpow.pop %v3188
  %v3190 = vadd.f32 %v3189, 1.0
  %v3191 = vrcp.pop %v3190
  %v3192 = vmul.f32 1.0, %v3191
  %v3193 = vxor.u32 %v3158, 2147483648
  %v3194 = vmul.f32 %v3193, 1.442695
  %v3195 = vpow.pop %v3194
  %v3196 = vadd.f32 %v3195, 1.0
  %v3197 = vrcp.pop %v3196
  %v3198 = vmul.f32 1.0, %v3197
  %v3199 = vtanh.pop %v3159
  %v3200 = vxor.u32 %v3160, 2147483648
  %v3201 = vmul.f32 %v3200, 1.442695
  %v3202 = vpow.pop %v3201
  %v3203 = vadd.f32 %v3202, 1.0
  %v3204 = vrcp.pop %v3203
  %v3205 = vmul.f32 1.0, %v3204
  %v3206 = vmul.f32 %v3198, %v3186
  %v3207 = vmul.f32 %v3192, %v3199
  %v3208 = vadd.f32 %v3206, %v3207
  %v3209 = vtanh.pop %v3208
  %v3210 = vmul.f32 %v3205, %v3209
  %3211 = vst [vmem:[#allocation5] sm:$0xff] %v3183
  %3212 = vst [vmem:[#allocation5 + $0x8] sm:$0xff] %v3208
  %v3213 = vpack.c.bf16 %v3185, %v3185
  %3214 = vst [vmem:[#allocation4] sm:$0xf] %v3213
  %v3215 = vpack.c.bf16 %v3210, %v3210
  %3216 = vst [vmem:[#allocation4 + $0x4] sm:$0xf] %v3215
  %s3217 = scalar_lea.vmem %s208, 24
  %3218 = vst [vmem:[%s3217] sm:$0xff] %v3185
  %s3219 = scalar_lea.vmem %s217, 32
  %3220 = vst [vmem:[%s3219] sm:$0xff] %v3210
  %v3221 = vld [vmem:[#allocation4] sm:$0xf]
  %3222 = vmatprep.subr.bf16.mxu0 %v2008
  %3223 = vmatpush1.bf16.msra.mxu0 %v2007
  %3224 = vmatprep.subr.bf16.mxu0 %v2012
  %3225 = vmatpush1.bf16.msra.mxu0 %v2011
  %3226 = vmatprep.subr.bf16.mxu0 %v2016
  %3227 = vmatpush1.bf16.msra.mxu0 %v2015
  %3228 = vmatprep.subr.bf16.mxu0 %v2020
  %3229 = vmatpush1.bf16.msra.mxu0 %v2019
  %3230 = vmatprep.subr.bf16.mxu0 %v2024
  %3231 = vmatpush1.bf16.msra.mxu0 %v2023
  %3232 = vmatprep.subr.bf16.mxu0 %v2028
  %3233 = vmatpush1.bf16.msra.mxu0 %v2027
  %3234 = vmatprep.subr.bf16.mxu0 %v2032
  %3235 = vmatpush1.bf16.msra.mxu0 %v2031
  %3236 = vmatprep.subr.bf16.mxu0 %v2036
  %3237 = vmatpush1.bf16.msra.mxu0 %v2035
  %3238 = vmatprep.subr.bf16.mxu0 0
  %3239 = vmatpush1.bf16.msra.mxu0 0
  %3240 = vmatprep.subr.bf16.mxu0 0
  %3241 = vmatpush1.bf16.msra.mxu0 0
  %3242 = vmatprep.subr.bf16.mxu0 0
  %3243 = vmatpush1.bf16.msra.mxu0 0
  %3244 = vmatprep.subr.bf16.mxu0 0
  %3245 = vmatpush1.bf16.msra.mxu0 0
  %3246 = vmatprep.subr.bf16.mxu0 0
  %3247 = vmatpush1.bf16.msra.mxu0 0
  %3248 = vmatprep.subr.bf16.mxu0 0
  %3249 = vmatpush1.bf16.msra.mxu0 0
  %3250 = vmatprep.subr.bf16.mxu0 0
  %3251 = vmatpush1.bf16.msra.mxu0 0
  %3252 = vmatprep.subr.bf16.mxu0 0
  %3253 = vmatpush1.bf16.msra.mxu0 0
  %3254 = vmatprep.mubr.bf16.mxu0 0
  %3255 = vmatmul.mubr.bf16.gmra.mrb[0].mxu0 %v3221
  %v3256 = vpop.f32.mrb[0].mxu0
  %v3257 = vadd.f32 0.0, %v3256
  %v3258 = vpop.f32.mrb[0].mxu0
  %v3259 = vadd.f32 0.0, %v3258
  %v3260 = vpop.f32.mrb[0].mxu0
  %v3261 = vpop.f32.mrb[0].mxu0
  %3262 = vdwg.mxu0
  %3263 = vmatprep.subr.bf16.mxu0 %v2010
  %3264 = vmatpush1.bf16.msra.mxu0 %v2009
  %3265 = vmatprep.subr.bf16.mxu0 %v2014
  %3266 = vmatpush1.bf16.msra.mxu0 %v2013
  %3267 = vmatprep.subr.bf16.mxu0 %v2018
  %3268 = vmatpush1.bf16.msra.mxu0 %v2017
  %3269 = vmatprep.subr.bf16.mxu0 %v2022
  %3270 = vmatpush1.bf16.msra.mxu0 %v2021
  %3271 = vmatprep.subr.bf16.mxu0 %v2026
  %3272 = vmatpush1.bf16.msra.mxu0 %v2025
  %3273 = vmatprep.subr.bf16.mxu0 %v2030
  %3274 = vmatpush1.bf16.msra.mxu0 %v2029
  %3275 = vmatprep.subr.bf16.mxu0 %v2034
  %3276 = vmatpush1.bf16.msra.mxu0 %v2033
  %3277 = vmatprep.subr.bf16.mxu0 %v2038
  %3278 = vmatpush1.bf16.msra.mxu0 %v2037
  %3279 = vmatprep.subr.bf16.mxu0 0
  %3280 = vmatpush1.bf16.msra.mxu0 0
  %3281 = vmatprep.subr.bf16.mxu0 0
  %3282 = vmatpush1.bf16.msra.mxu0 0
  %3283 = vmatprep.subr.bf16.mxu0 0
  %3284 = vmatpush1.bf16.msra.mxu0 0
  %3285 = vmatprep.subr.bf16.mxu0 0
  %3286 = vmatpush1.bf16.msra.mxu0 0
  %3287 = vmatprep.subr.bf16.mxu0 0
  %3288 = vmatpush1.bf16.msra.mxu0 0
  %3289 = vmatprep.subr.bf16.mxu0 0
  %3290 = vmatpush1.bf16.msra.mxu0 0
  %3291 = vmatprep.subr.bf16.mxu0 0
  %3292 = vmatpush1.bf16.msra.mxu0 0
  %3293 = vmatprep.subr.bf16.mxu0 0
  %3294 = vmatpush1.bf16.msra.mxu0 0
  %3295 = vmatprep.mubr.bf16.mxu0 0
  %3296 = vmatmul.mubr.bf16.gmra.mrb[0].mxu0 %v3221
  %v3297 = vpop.f32.mrb[0].mxu0
  %v3298 = vadd.f32 0.0, %v3297
  %v3299 = vpop.f32.mrb[0].mxu0
  %v3300 = vadd.f32 0.0, %v3299
  %v3301 = vpop.f32.mrb[0].mxu0
  %v3302 = vpop.f32.mrb[0].mxu0
  %3303 = vdwg.mxu0
  %v3304 = vld [vmem:[#allocation4 + $0x4] sm:$0xf]
  %3305 = vmatprep.subr.bf16.mxu0 %v2251
  %3306 = vmatpush1.bf16.msra.mxu0 %v2250
  %3307 = vmatprep.subr.bf16.mxu0 %v2255
  %3308 = vmatpush1.bf16.msra.mxu0 %v2254
  %3309 = vmatprep.subr.bf16.mxu0 %v2259
  %3310 = vmatpush1.bf16.msra.mxu0 %v2258
  %3311 = vmatprep.subr.bf16.mxu0 %v2263
  %3312 = vmatpush1.bf16.msra.mxu0 %v2262
  %3313 = vmatprep.subr.bf16.mxu0 %v2267
  %3314 = vmatpush1.bf16.msra.mxu0 %v2266
  %3315 = vmatprep.subr.bf16.mxu0 %v2271
  %3316 = vmatpush1.bf16.msra.mxu0 %v2270
  %3317 = vmatprep.subr.bf16.mxu0 %v2275
  %3318 = vmatpush1.bf16.msra.mxu0 %v2274
  %3319 = vmatprep.subr.bf16.mxu0 %v2279
  %3320 = vmatpush1.bf16.msra.mxu0 %v2278
  %3321 = vmatprep.subr.bf16.mxu0 0
  %3322 = vmatpush1.bf16.msra.mxu0 0
  %3323 = vmatprep.subr.bf16.mxu0 0
  %3324 = vmatpush1.bf16.msra.mxu0 0
  %3325 = vmatprep.subr.bf16.mxu0 0
  %3326 = vmatpush1.bf16.msra.mxu0 0
  %3327 = vmatprep.subr.bf16.mxu0 0
  %3328 = vmatpush1.bf16.msra.mxu0 0
  %3329 = vmatprep.subr.bf16.mxu0 0
  %3330 = vmatpush1.bf16.msra.mxu0 0
  %3331 = vmatprep.subr.bf16.mxu0 0
  %3332 = vmatpush1.bf16.msra.mxu0 0
  %3333 = vmatprep.subr.bf16.mxu0 0
  %3334 = vmatpush1.bf16.msra.mxu0 0
  %3335 = vmatprep.subr.bf16.mxu0 0
  %3336 = vmatpush1.bf16.msra.mxu0 0
  %3337 = vmatprep.mubr.bf16.mxu0 0
  %3338 = vmatmul.mubr.bf16.gmra.mrb[0].mxu0 %v3304
  %v3339 = vpop.f32.mrb[0].mxu0
  %v3340 = vadd.f32 0.0, %v3339
  %v3341 = vpop.f32.mrb[0].mxu0
  %v3342 = vadd.f32 0.0, %v3341
  %v3343 = vpop.f32.mrb[0].mxu0
  %v3344 = vpop.f32.mrb[0].mxu0
  %3345 = vdwg.mxu0
  %3346 = vmatprep.subr.bf16.mxu0 %v2253
  %3347 = vmatpush1.bf16.msra.mxu0 %v2252
  %3348 = vmatprep.subr.bf16.mxu0 %v2257
  %3349 = vmatpush1.bf16.msra.mxu0 %v2256
  %3350 = vmatprep.subr.bf16.mxu0 %v2261
  %3351 = vmatpush1.bf16.msra.mxu0 %v2260
  %3352 = vmatprep.subr.bf16.mxu0 %v2265
  %3353 = vmatpush1.bf16.msra.mxu0 %v2264
  %3354 = vmatprep.subr.bf16.mxu0 %v2269
  %3355 = vmatpush1.bf16.msra.mxu0 %v2268
  %3356 = vmatprep.subr.bf16.mxu0 %v2273
  %3357 = vmatpush1.bf16.msra.mxu0 %v2272
  %3358 = vmatprep.subr.bf16.mxu0 %v2277
  %3359 = vmatpush1.bf16.msra.mxu0 %v2276
  %3360 = vmatprep.subr.bf16.mxu0 %v2281
  %3361 = vmatpush1.bf16.msra.mxu0 %v2280
  %3362 = vmatprep.subr.bf16.mxu0 0
  %3363 = vmatpush1.bf16.msra.mxu0 0
  %3364 = vmatprep.subr.bf16.mxu0 0
  %3365 = vmatpush1.bf16.msra.mxu0 0
  %3366 = vmatprep.subr.bf16.mxu0 0
  %3367 = vmatpush1.bf16.msra.mxu0 0
  %3368 = vmatprep.subr.bf16.mxu0 0
  %3369 = vmatpush1.bf16.msra.mxu0 0
  %3370 = vmatprep.subr.bf16.mxu0 0
  %3371 = vmatpush1.bf16.msra.mxu0 0
  %3372 = vmatprep.subr.bf16.mxu0 0
  %3373 = vmatpush1.bf16.msra.mxu0 0
  %3374 = vmatprep.subr.bf16.mxu0 0
  %3375 = vmatpush1.bf16.msra.mxu0 0
  %3376 = vmatprep.subr.bf16.mxu0 0
  %3377 = vmatpush1.bf16.msra.mxu0 0
  %3378 = vmatprep.mubr.bf16.mxu0 0
  %3379 = vmatmul.mubr.bf16.gmra.mrb[0].mxu0 %v3304
  %v3380 = vpop.f32.mrb[0].mxu0
  %v3381 = vadd.f32 0.0, %v3380
  %v3382 = vpop.f32.mrb[0].mxu0
  %v3383 = vadd.f32 0.0, %v3382
  %v3384 = vpop.f32.mrb[0].mxu0
  %v3385 = vpop.f32.mrb[0].mxu0
  %3386 = vdwg.mxu0
  %s3387 = smul.addr %s3150, 8
  %s3388 = scalar_lea.vmem [#allocation2], %s3387
  %v3389 = vld [vmem:[%s3388] sm:$0xff]
  %v3390 = vld [vmem:[%s3388 + $0x8] sm:$0xff]
  %v3391 = vld [vmem:[%s3388 + $0x10] sm:$0xff]
  %v3392 = vld [vmem:[%s3388 + $0x18] sm:$0xff]
  %v3393 = vadd.f32 %v3389, %v3257
  %v3394 = vadd.f32 %v3390, %v3259
  %v3395 = vadd.f32 %v3391, %v3298
  %v3396 = vadd.f32 %v3392, %v3300
  %s3397 = smul.addr %s3139, 8
  %s3398 = scalar_lea.vmem [#allocation3], %s3397
  %v3399 = vld [vmem:[%s3398] sm:$0xff]
  %v3400 = vld [vmem:[%s3398 + $0x8] sm:$0xff]
  %v3401 = vld [vmem:[%s3398 + $0x10] sm:$0xff]
  %v3402 = vld [vmem:[%s3398 + $0x18] sm:$0xff]
  %v3403 = vadd.f32 %v3399, %v3340
  %v3404 = vadd.f32 %v3400, %v3342
  %v3405 = vadd.f32 %v3401, %v3381
  %v3406 = vadd.f32 %v3402, %v3383
  %v3407 = vld [vmem:[#allocation5] sm:$0xff]
  %v3408 = vxor.u32 %v3393, 2147483648
  %v3409 = vmul.f32 %v3408, 1.442695
  %v3410 = vpow.pop %v3409
  %v3411 = vadd.f32 %v3410, 1.0
  %v3412 = vrcp.pop %v3411
  %v3413 = vmul.f32 1.0, %v3412
  %v3414 = vxor.u32 %v3394, 2147483648
  %v3415 = vmul.f32 %v3414, 1.442695
  %v3416 = vpow.pop %v3415
  %v3417 = vadd.f32 %v3416, 1.0
  %v3418 = vrcp.pop %v3417
  %v3419 = vmul.f32 1.0, %v3418
  %v3420 = vtanh.pop %v3395
  %v3421 = vxor.u32 %v3396, 2147483648
  %v3422 = vmul.f32 %v3421, 1.442695
  %v3423 = vpow.pop %v3422
  %v3424 = vadd.f32 %v3423, 1.0
  %v3425 = vrcp.pop %v3424
  %v3426 = vmul.f32 1.0, %v3425
  %v3427 = vmul.f32 %v3419, %v3407
  %v3428 = vmul.f32 %v3413, %v3420
  %v3429 = vadd.f32 %v3427, %v3428
  %v3430 = vtanh.pop %v3429
  %v3431 = vmul.f32 %v3426, %v3430
  %v3432 = vld [vmem:[#allocation5 + $0x8] sm:$0xff]
  %v3433 = vxor.u32 %v3403, 2147483648
  %v3434 = vmul.f32 %v3433, 1.442695
  %v3435 = vpow.pop %v3434
  %v3436 = vadd.f32 %v3435, 1.0
  %v3437 = vrcp.pop %v3436
  %v3438 = vmul.f32 1.0, %v3437
  %v3439 = vxor.u32 %v3404, 2147483648
  %v3440 = vmul.f32 %v3439, 1.442695
  %v3441 = vpow.pop %v3440
  %v3442 = vadd.f32 %v3441, 1.0
  %v3443 = vrcp.pop %v3442
  %v3444 = vmul.f32 1.0, %v3443
  %v3445 = vtanh.pop %v3405
  %v3446 = vxor.u32 %v3406, 2147483648
  %v3447 = vmul.f32 %v3446, 1.442695
  %v3448 = vpow.pop %v3447
  %v3449 = vadd.f32 %v3448, 1.0
  %v3450 = vrcp.pop %v3449
  %v3451 = vmul.f32 1.0, %v3450
  %v3452 = vmul.f32 %v3444, %v3432
  %v3453 = vmul.f32 %v3438, %v3445
  %v3454 = vadd.f32 %v3452, %v3453
  %v3455 = vtanh.pop %v3454
  %v3456 = vmul.f32 %v3451, %v3455
  %3457 = vst [vmem:[#allocation5] sm:$0xff] %v3429
  %3458 = vst [vmem:[#allocation5 + $0x8] sm:$0xff] %v3454
  %v3459 = vpack.c.bf16 %v3431, %v3431
  %3460 = vst [vmem:[#allocation4] sm:$0xf] %v3459
  %v3461 = vpack.c.bf16 %v3456, %v3456
  %3462 = vst [vmem:[#allocation4 + $0x4] sm:$0xf] %v3461
  %s3463 = scalar_lea.vmem %s208, 32
  %3464 = vst [vmem:[%s3463] sm:$0xff] %v3431
  %s3465 = scalar_lea.vmem %s217, 24
  %3466 = vst [vmem:[%s3465] sm:$0xff] %v3456
  %v3467 = vld [vmem:[#allocation4] sm:$0xf]
  %3468 = vmatprep.subr.bf16.mxu0 %v2008
  %3469 = vmatpush1.bf16.msra.mxu0 %v2007
  %3470 = vmatprep.subr.bf16.mxu0 %v2012
  %3471 = vmatpush1.bf16.msra.mxu0 %v2011
  %3472 = vmatprep.subr.bf16.mxu0 %v2016
  %3473 = vmatpush1.bf16.msra.mxu0 %v2015
  %3474 = vmatprep.subr.bf16.mxu0 %v2020
  %3475 = vmatpush1.bf16.msra.mxu0 %v2019
  %3476 = vmatprep.subr.bf16.mxu0 %v2024
  %3477 = vmatpush1.bf16.msra.mxu0 %v2023
  %3478 = vmatprep.subr.bf16.mxu0 %v2028
  %3479 = vmatpush1.bf16.msra.mxu0 %v2027
  %3480 = vmatprep.subr.bf16.mxu0 %v2032
  %3481 = vmatpush1.bf16.msra.mxu0 %v2031
  %3482 = vmatprep.subr.bf16.mxu0 %v2036
  %3483 = vmatpush1.bf16.msra.mxu0 %v2035
  %3484 = vmatprep.subr.bf16.mxu0 0
  %3485 = vmatpush1.bf16.msra.mxu0 0
  %3486 = vmatprep.subr.bf16.mxu0 0
  %3487 = vmatpush1.bf16.msra.mxu0 0
  %3488 = vmatprep.subr.bf16.mxu0 0
  %3489 = vmatpush1.bf16.msra.mxu0 0
  %3490 = vmatprep.subr.bf16.mxu0 0
  %3491 = vmatpush1.bf16.msra.mxu0 0
  %3492 = vmatprep.subr.bf16.mxu0 0
  %3493 = vmatpush1.bf16.msra.mxu0 0
  %3494 = vmatprep.subr.bf16.mxu0 0
  %3495 = vmatpush1.bf16.msra.mxu0 0
  %3496 = vmatprep.subr.bf16.mxu0 0
  %3497 = vmatpush1.bf16.msra.mxu0 0
  %3498 = vmatprep.subr.bf16.mxu0 0
  %3499 = vmatpush1.bf16.msra.mxu0 0
  %3500 = vmatprep.mubr.bf16.mxu0 0
  %3501 = vmatmul.mubr.bf16.gmra.mrb[0].mxu0 %v3467
  %v3502 = vpop.f32.mrb[0].mxu0
  %v3503 = vadd.f32 0.0, %v3502
  %v3504 = vpop.f32.mrb[0].mxu0
  %v3505 = vadd.f32 0.0, %v3504
  %v3506 = vpop.f32.mrb[0].mxu0
  %v3507 = vpop.f32.mrb[0].mxu0
  %3508 = vdwg.mxu0
  %3509 = vmatprep.subr.bf16.mxu0 %v2010
  %3510 = vmatpush1.bf16.msra.mxu0 %v2009
  %3511 = vmatprep.subr.bf16.mxu0 %v2014
  %3512 = vmatpush1.bf16.msra.mxu0 %v2013
  %3513 = vmatprep.subr.bf16.mxu0 %v2018
  %3514 = vmatpush1.bf16.msra.mxu0 %v2017
  %3515 = vmatprep.subr.bf16.mxu0 %v2022
  %3516 = vmatpush1.bf16.msra.mxu0 %v2021
  %3517 = vmatprep.subr.bf16.mxu0 %v2026
  %3518 = vmatpush1.bf16.msra.mxu0 %v2025
  %3519 = vmatprep.subr.bf16.mxu0 %v2030
  %3520 = vmatpush1.bf16.msra.mxu0 %v2029
  %3521 = vmatprep.subr.bf16.mxu0 %v2034
  %3522 = vmatpush1.bf16.msra.mxu0 %v2033
  %3523 = vmatprep.subr.bf16.mxu0 %v2038
  %3524 = vmatpush1.bf16.msra.mxu0 %v2037
  %3525 = vmatprep.subr.bf16.mxu0 0
  %3526 = vmatpush1.bf16.msra.mxu0 0
  %3527 = vmatprep.subr.bf16.mxu0 0
  %3528 = vmatpush1.bf16.msra.mxu0 0
  %3529 = vmatprep.subr.bf16.mxu0 0
  %3530 = vmatpush1.bf16.msra.mxu0 0
  %3531 = vmatprep.subr.bf16.mxu0 0
  %3532 = vmatpush1.bf16.msra.mxu0 0
  %3533 = vmatprep.subr.bf16.mxu0 0
  %3534 = vmatpush1.bf16.msra.mxu0 0
  %3535 = vmatprep.subr.bf16.mxu0 0
  %3536 = vmatpush1.bf16.msra.mxu0 0
  %3537 = vmatprep.subr.bf16.mxu0 0
  %3538 = vmatpush1.bf16.msra.mxu0 0
  %3539 = vmatprep.subr.bf16.mxu0 0
  %3540 = vmatpush1.bf16.msra.mxu0 0
  %3541 = vmatprep.mubr.bf16.mxu0 0
  %3542 = vmatmul.mubr.bf16.gmra.mrb[0].mxu0 %v3467
  %v3543 = vpop.f32.mrb[0].mxu0
  %v3544 = vadd.f32 0.0, %v3543
  %v3545 = vpop.f32.mrb[0].mxu0
  %v3546 = vadd.f32 0.0, %v3545
  %v3547 = vpop.f32.mrb[0].mxu0
  %v3548 = vpop.f32.mrb[0].mxu0
  %3549 = vdwg.mxu0
  %v3550 = vld [vmem:[#allocation4 + $0x4] sm:$0xf]
  %3551 = vmatprep.subr.bf16.mxu0 %v2251
  %3552 = vmatpush1.bf16.msra.mxu0 %v2250
  %3553 = vmatprep.subr.bf16.mxu0 %v2255
  %3554 = vmatpush1.bf16.msra.mxu0 %v2254
  %3555 = vmatprep.subr.bf16.mxu0 %v2259
  %3556 = vmatpush1.bf16.msra.mxu0 %v2258
  %3557 = vmatprep.subr.bf16.mxu0 %v2263
  %3558 = vmatpush1.bf16.msra.mxu0 %v2262
  %3559 = vmatprep.subr.bf16.mxu0 %v2267
  %3560 = vmatpush1.bf16.msra.mxu0 %v2266
  %3561 = vmatprep.subr.bf16.mxu0 %v2271
  %3562 = vmatpush1.bf16.msra.mxu0 %v2270
  %3563 = vmatprep.subr.bf16.mxu0 %v2275
  %3564 = vmatpush1.bf16.msra.mxu0 %v2274
  %3565 = vmatprep.subr.bf16.mxu0 %v2279
  %3566 = vmatpush1.bf16.msra.mxu0 %v2278
  %3567 = vmatprep.subr.bf16.mxu0 0
  %3568 = vmatpush1.bf16.msra.mxu0 0
  %3569 = vmatprep.subr.bf16.mxu0 0
  %3570 = vmatpush1.bf16.msra.mxu0 0
  %3571 = vmatprep.subr.bf16.mxu0 0
  %3572 = vmatpush1.bf16.msra.mxu0 0
  %3573 = vmatprep.subr.bf16.mxu0 0
  %3574 = vmatpush1.bf16.msra.mxu0 0
  %3575 = vmatprep.subr.bf16.mxu0 0
  %3576 = vmatpush1.bf16.msra.mxu0 0
  %3577 = vmatprep.subr.bf16.mxu0 0
  %3578 = vmatpush1.bf16.msra.mxu0 0
  %3579 = vmatprep.subr.bf16.mxu0 0
  %3580 = vmatpush1.bf16.msra.mxu0 0
  %3581 = vmatprep.subr.bf16.mxu0 0
  %3582 = vmatpush1.bf16.msra.mxu0 0
  %3583 = vmatprep.mubr.bf16.mxu0 0
  %3584 = vmatmul.mubr.bf16.gmra.mrb[0].mxu0 %v3550
  %v3585 = vpop.f32.mrb[0].mxu0
  %v3586 = vadd.f32 0.0, %v3585
  %v3587 = vpop.f32.mrb[0].mxu0
  %v3588 = vadd.f32 0.0, %v3587
  %v3589 = vpop.f32.mrb[0].mxu0
  %v3590 = vpop.f32.mrb[0].mxu0
  %3591 = vdwg.mxu0
  %3592 = vmatprep.subr.bf16.mxu0 %v2253
  %3593 = vmatpush1.bf16.msra.mxu0 %v2252
  %3594 = vmatprep.subr.bf16.mxu0 %v2257
  %3595 = vmatpush1.bf16.msra.mxu0 %v2256
  %3596 = vmatprep.subr.bf16.mxu0 %v2261
  %3597 = vmatpush1.bf16.msra.mxu0 %v2260
  %3598 = vmatprep.subr.bf16.mxu0 %v2265
  %3599 = vmatpush1.bf16.msra.mxu0 %v2264
  %3600 = vmatprep.subr.bf16.mxu0 %v2269
  %3601 = vmatpush1.bf16.msra.mxu0 %v2268
  %3602 = vmatprep.subr.bf16.mxu0 %v2273
  %3603 = vmatpush1.bf16.msra.mxu0 %v2272
  %3604 = vmatprep.subr.bf16.mxu0 %v2277
  %3605 = vmatpush1.bf16.msra.mxu0 %v2276
  %3606 = vmatprep.subr.bf16.mxu0 %v2281
  %3607 = vmatpush1.bf16.msra.mxu0 %v2280
  %3608 = vmatprep.subr.bf16.mxu0 0
  %3609 = vmatpush1.bf16.msra.mxu0 0
  %3610 = vmatprep.subr.bf16.mxu0 0
  %3611 = vmatpush1.bf16.msra.mxu0 0
  %3612 = vmatprep.subr.bf16.mxu0 0
  %3613 = vmatpush1.bf16.msra.mxu0 0
  %3614 = vmatprep.subr.bf16.mxu0 0
  %3615 = vmatpush1.bf16.msra.mxu0 0
  %3616 = vmatprep.subr.bf16.mxu0 0
  %3617 = vmatpush1.bf16.msra.mxu0 0
  %3618 = vmatprep.subr.bf16.mxu0 0
  %3619 = vmatpush1.bf16.msra.mxu0 0
  %3620 = vmatprep.subr.bf16.mxu0 0
  %3621 = vmatpush1.bf16.msra.mxu0 0
  %3622 = vmatprep.subr.bf16.mxu0 0
  %3623 = vmatpush1.bf16.msra.mxu0 0
  %3624 = vmatprep.mubr.bf16.mxu0 0
  %3625 = vmatmul.mubr.bf16.gmra.mrb[0].mxu0 %v3550
  %v3626 = vpop.f32.mrb[0].mxu0
  %v3627 = vadd.f32 0.0, %v3626
  %v3628 = vpop.f32.mrb[0].mxu0
  %v3629 = vadd.f32 0.0, %v3628
  %v3630 = vpop.f32.mrb[0].mxu0
  %v3631 = vpop.f32.mrb[0].mxu0
  %3632 = vdwg.mxu0
  %s3633 = smul.addr %s2902, 8
  %s3634 = scalar_lea.vmem [#allocation2], %s3633
  %v3635 = vld [vmem:[%s3634] sm:$0xff]
  %v3636 = vld [vmem:[%s3634 + $0x8] sm:$0xff]
  %v3637 = vld [vmem:[%s3634 + $0x10] sm:$0xff]
  %v3638 = vld [vmem:[%s3634 + $0x18] sm:$0xff]
  %v3639 = vadd.f32 %v3635, %v3503
  %v3640 = vadd.f32 %v3636, %v3505
  %v3641 = vadd.f32 %v3637, %v3544
  %v3642 = vadd.f32 %v3638, %v3546
  %s3643 = smul.addr %s2891, 8
  %s3644 = scalar_lea.vmem [#allocation3], %s3643
  %v3645 = vld [vmem:[%s3644] sm:$0xff]
  %v3646 = vld [vmem:[%s3644 + $0x8] sm:$0xff]
  %v3647 = vld [vmem:[%s3644 + $0x10] sm:$0xff]
  %v3648 = vld [vmem:[%s3644 + $0x18] sm:$0xff]
  %v3649 = vadd.f32 %v3645, %v3586
  %v3650 = vadd.f32 %v3646, %v3588
  %v3651 = vadd.f32 %v3647, %v3627
  %v3652 = vadd.f32 %v3648, %v3629
  %v3653 = vld [vmem:[#allocation5] sm:$0xff]
  %v3654 = vxor.u32 %v3639, 2147483648
  %v3655 = vmul.f32 %v3654, 1.442695
  %v3656 = vpow.pop %v3655
  %v3657 = vadd.f32 %v3656, 1.0
  %v3658 = vrcp.pop %v3657
  %v3659 = vmul.f32 1.0, %v3658
  %v3660 = vxor.u32 %v3640, 2147483648
  %v3661 = vmul.f32 %v3660, 1.442695
  %v3662 = vpow.pop %v3661
  %v3663 = vadd.f32 %v3662, 1.0
  %v3664 = vrcp.pop %v3663
  %v3665 = vmul.f32 1.0, %v3664
  %v3666 = vtanh.pop %v3641
  %v3667 = vxor.u32 %v3642, 2147483648
  %v3668 = vmul.f32 %v3667, 1.442695
  %v3669 = vpow.pop %v3668
  %v3670 = vadd.f32 %v3669, 1.0
  %v3671 = vrcp.pop %v3670
  %v3672 = vmul.f32 1.0, %v3671
  %v3673 = vmul.f32 %v3665, %v3653
  %v3674 = vmul.f32 %v3659, %v3666
  %v3675 = vadd.f32 %v3673, %v3674
  %v3676 = vtanh.pop %v3675
  %v3677 = vmul.f32 %v3672, %v3676
  %v3678 = vld [vmem:[#allocation5 + $0x8] sm:$0xff]
  %v3679 = vxor.u32 %v3649, 2147483648
  %v3680 = vmul.f32 %v3679, 1.442695
  %v3681 = vpow.pop %v3680
  %v3682 = vadd.f32 %v3681, 1.0
  %v3683 = vrcp.pop %v3682
  %v3684 = vmul.f32 1.0, %v3683
  %v3685 = vxor.u32 %v3650, 2147483648
  %v3686 = vmul.f32 %v3685, 1.442695
  %v3687 = vpow.pop %v3686
  %v3688 = vadd.f32 %v3687, 1.0
  %v3689 = vrcp.pop %v3688
  %v3690 = vmul.f32 1.0, %v3689
  %v3691 = vtanh.pop %v3651
  %v3692 = vxor.u32 %v3652, 2147483648
  %v3693 = vmul.f32 %v3692, 1.442695
  %v3694 = vpow.pop %v3693
  %v3695 = vadd.f32 %v3694, 1.0
  %v3696 = vrcp.pop %v3695
  %v3697 = vmul.f32 1.0, %v3696
  %v3698 = vmul.f32 %v3690, %v3678
  %v3699 = vmul.f32 %v3684, %v3691
  %v3700 = vadd.f32 %v3698, %v3699
  %v3701 = vtanh.pop %v3700
  %v3702 = vmul.f32 %v3697, %v3701
  %3703 = vst [vmem:[#allocation5] sm:$0xff] %v3675
  %3704 = vst [vmem:[#allocation5 + $0x8] sm:$0xff] %v3700
  %v3705 = vpack.c.bf16 %v3677, %v3677
  %3706 = vst [vmem:[#allocation4] sm:$0xf] %v3705
  %v3707 = vpack.c.bf16 %v3702, %v3702
  %3708 = vst [vmem:[#allocation4 + $0x4] sm:$0xf] %v3707
  %s3709 = scalar_lea.vmem %s208, 40
  %3710 = vst [vmem:[%s3709] sm:$0xff] %v3677
  %s3711 = scalar_lea.vmem %s217, 16
  %3712 = vst [vmem:[%s3711] sm:$0xff] %v3702
  %v3713 = vld [vmem:[#allocation4] sm:$0xf]
  %3714 = vmatprep.subr.bf16.mxu0 %v2008
  %3715 = vmatpush1.bf16.msra.mxu0 %v2007
  %3716 = vmatprep.subr.bf16.mxu0 %v2012
  %3717 = vmatpush1.bf16.msra.mxu0 %v2011
  %3718 = vmatprep.subr.bf16.mxu0 %v2016
  %3719 = vmatpush1.bf16.msra.mxu0 %v2015
  %3720 = vmatprep.subr.bf16.mxu0 %v2020
  %3721 = vmatpush1.bf16.msra.mxu0 %v2019
  %3722 = vmatprep.subr.bf16.mxu0 %v2024
  %3723 = vmatpush1.bf16.msra.mxu0 %v2023
  %3724 = vmatprep.subr.bf16.mxu0 %v2028
  %3725 = vmatpush1.bf16.msra.mxu0 %v2027
  %3726 = vmatprep.subr.bf16.mxu0 %v2032
  %3727 = vmatpush1.bf16.msra.mxu0 %v2031
  %3728 = vmatprep.subr.bf16.mxu0 %v2036
  %3729 = vmatpush1.bf16.msra.mxu0 %v2035
  %3730 = vmatprep.subr.bf16.mxu0 0
  %3731 = vmatpush1.bf16.msra.mxu0 0
  %3732 = vmatprep.subr.bf16.mxu0 0
  %3733 = vmatpush1.bf16.msra.mxu0 0
  %3734 = vmatprep.subr.bf16.mxu0 0
  %3735 = vmatpush1.bf16.msra.mxu0 0
  %3736 = vmatprep.subr.bf16.mxu0 0
  %3737 = vmatpush1.bf16.msra.mxu0 0
  %3738 = vmatprep.subr.bf16.mxu0 0
  %3739 = vmatpush1.bf16.msra.mxu0 0
  %3740 = vmatprep.subr.bf16.mxu0 0
  %3741 = vmatpush1.bf16.msra.mxu0 0
  %3742 = vmatprep.subr.bf16.mxu0 0
  %3743 = vmatpush1.bf16.msra.mxu0 0
  %3744 = vmatprep.subr.bf16.mxu0 0
  %3745 = vmatpush1.bf16.msra.mxu0 0
  %3746 = vmatprep.mubr.bf16.mxu0 0
  %3747 = vmatmul.mubr.bf16.gmra.mrb[0].mxu0 %v3713
  %v3748 = vpop.f32.mrb[0].mxu0
  %v3749 = vadd.f32 0.0, %v3748
  %v3750 = vpop.f32.mrb[0].mxu0
  %v3751 = vadd.f32 0.0, %v3750
  %v3752 = vpop.f32.mrb[0].mxu0
  %v3753 = vpop.f32.mrb[0].mxu0
  %3754 = vdwg.mxu0
  %3755 = vmatprep.subr.bf16.mxu0 %v2010
  %3756 = vmatpush1.bf16.msra.mxu0 %v2009
  %3757 = vmatprep.subr.bf16.mxu0 %v2014
  %3758 = vmatpush1.bf16.msra.mxu0 %v2013
  %3759 = vmatprep.subr.bf16.mxu0 %v2018
  %3760 = vmatpush1.bf16.msra.mxu0 %v2017
  %3761 = vmatprep.subr.bf16.mxu0 %v2022
  %3762 = vmatpush1.bf16.msra.mxu0 %v2021
  %3763 = vmatprep.subr.bf16.mxu0 %v2026
  %3764 = vmatpush1.bf16.msra.mxu0 %v2025
  %3765 = vmatprep.subr.bf16.mxu0 %v2030
  %3766 = vmatpush1.bf16.msra.mxu0 %v2029
  %3767 = vmatprep.subr.bf16.mxu0 %v2034
  %3768 = vmatpush1.bf16.msra.mxu0 %v2033
  %3769 = vmatprep.subr.bf16.mxu0 %v2038
  %3770 = vmatpush1.bf16.msra.mxu0 %v2037
  %3771 = vmatprep.subr.bf16.mxu0 0
  %3772 = vmatpush1.bf16.msra.mxu0 0
  %3773 = vmatprep.subr.bf16.mxu0 0
  %3774 = vmatpush1.bf16.msra.mxu0 0
  %3775 = vmatprep.subr.bf16.mxu0 0
  %3776 = vmatpush1.bf16.msra.mxu0 0
  %3777 = vmatprep.subr.bf16.mxu0 0
  %3778 = vmatpush1.bf16.msra.mxu0 0
  %3779 = vmatprep.subr.bf16.mxu0 0
  %3780 = vmatpush1.bf16.msra.mxu0 0
  %3781 = vmatprep.subr.bf16.mxu0 0
  %3782 = vmatpush1.bf16.msra.mxu0 0
  %3783 = vmatprep.subr.bf16.mxu0 0
  %3784 = vmatpush1.bf16.msra.mxu0 0
  %3785 = vmatprep.subr.bf16.mxu0 0
  %3786 = vmatpush1.bf16.msra.mxu0 0
  %3787 = vmatprep.mubr.bf16.mxu0 0
  %3788 = vmatmul.mubr.bf16.gmra.mrb[0].mxu0 %v3713
  %v3789 = vpop.f32.mrb[0].mxu0
  %v3790 = vadd.f32 0.0, %v3789
  %v3791 = vpop.f32.mrb[0].mxu0
  %v3792 = vadd.f32 0.0, %v3791
  %v3793 = vpop.f32.mrb[0].mxu0
  %v3794 = vpop.f32.mrb[0].mxu0
  %3795 = vdwg.mxu0
  %v3796 = vld [vmem:[#allocation4 + $0x4] sm:$0xf]
  %3797 = vmatprep.subr.bf16.mxu0 %v2251
  %3798 = vmatpush1.bf16.msra.mxu0 %v2250
  %3799 = vmatprep.subr.bf16.mxu0 %v2255
  %3800 = vmatpush1.bf16.msra.mxu0 %v2254
  %3801 = vmatprep.subr.bf16.mxu0 %v2259
  %3802 = vmatpush1.bf16.msra.mxu0 %v2258
  %3803 = vmatprep.subr.bf16.mxu0 %v2263
  %3804 = vmatpush1.bf16.msra.mxu0 %v2262
  %3805 = vmatprep.subr.bf16.mxu0 %v2267
  %3806 = vmatpush1.bf16.msra.mxu0 %v2266
  %3807 = vmatprep.subr.bf16.mxu0 %v2271
  %3808 = vmatpush1.bf16.msra.mxu0 %v2270
  %3809 = vmatprep.subr.bf16.mxu0 %v2275
  %3810 = vmatpush1.bf16.msra.mxu0 %v2274
  %3811 = vmatprep.subr.bf16.mxu0 %v2279
  %3812 = vmatpush1.bf16.msra.mxu0 %v2278
  %3813 = vmatprep.subr.bf16.mxu0 0
  %3814 = vmatpush1.bf16.msra.mxu0 0
  %3815 = vmatprep.subr.bf16.mxu0 0
  %3816 = vmatpush1.bf16.msra.mxu0 0
  %3817 = vmatprep.subr.bf16.mxu0 0
  %3818 = vmatpush1.bf16.msra.mxu0 0
  %3819 = vmatprep.subr.bf16.mxu0 0
  %3820 = vmatpush1.bf16.msra.mxu0 0
  %3821 = vmatprep.subr.bf16.mxu0 0
  %3822 = vmatpush1.bf16.msra.mxu0 0
  %3823 = vmatprep.subr.bf16.mxu0 0
  %3824 = vmatpush1.bf16.msra.mxu0 0
  %3825 = vmatprep.subr.bf16.mxu0 0
  %3826 = vmatpush1.bf16.msra.mxu0 0
  %3827 = vmatprep.subr.bf16.mxu0 0
  %3828 = vmatpush1.bf16.msra.mxu0 0
  %3829 = vmatprep.mubr.bf16.mxu0 0
  %3830 = vmatmul.mubr.bf16.gmra.mrb[0].mxu0 %v3796
  %v3831 = vpop.f32.mrb[0].mxu0
  %v3832 = vadd.f32 0.0, %v3831
  %v3833 = vpop.f32.mrb[0].mxu0
  %v3834 = vadd.f32 0.0, %v3833
  %v3835 = vpop.f32.mrb[0].mxu0
  %v3836 = vpop.f32.mrb[0].mxu0
  %3837 = vdwg.mxu0
  %3838 = vmatprep.subr.bf16.mxu0 %v2253
  %3839 = vmatpush1.bf16.msra.mxu0 %v2252
  %3840 = vmatprep.subr.bf16.mxu0 %v2257
  %3841 = vmatpush1.bf16.msra.mxu0 %v2256
  %3842 = vmatprep.subr.bf16.mxu0 %v2261
  %3843 = vmatpush1.bf16.msra.mxu0 %v2260
  %3844 = vmatprep.subr.bf16.mxu0 %v2265
  %3845 = vmatpush1.bf16.msra.mxu0 %v2264
  %3846 = vmatprep.subr.bf16.mxu0 %v2269
  %3847 = vmatpush1.bf16.msra.mxu0 %v2268
  %3848 = vmatprep.subr.bf16.mxu0 %v2273
  %3849 = vmatpush1.bf16.msra.mxu0 %v2272
  %3850 = vmatprep.subr.bf16.mxu0 %v2277
  %3851 = vmatpush1.bf16.msra.mxu0 %v2276
  %3852 = vmatprep.subr.bf16.mxu0 %v2281
  %3853 = vmatpush1.bf16.msra.mxu0 %v2280
  %3854 = vmatprep.subr.bf16.mxu0 0
  %3855 = vmatpush1.bf16.msra.mxu0 0
  %3856 = vmatprep.subr.bf16.mxu0 0
  %3857 = vmatpush1.bf16.msra.mxu0 0
  %3858 = vmatprep.subr.bf16.mxu0 0
  %3859 = vmatpush1.bf16.msra.mxu0 0
  %3860 = vmatprep.subr.bf16.mxu0 0
  %3861 = vmatpush1.bf16.msra.mxu0 0
  %3862 = vmatprep.subr.bf16.mxu0 0
  %3863 = vmatpush1.bf16.msra.mxu0 0
  %3864 = vmatprep.subr.bf16.mxu0 0
  %3865 = vmatpush1.bf16.msra.mxu0 0
  %3866 = vmatprep.subr.bf16.mxu0 0
  %3867 = vmatpush1.bf16.msra.mxu0 0
  %3868 = vmatprep.subr.bf16.mxu0 0
  %3869 = vmatpush1.bf16.msra.mxu0 0
  %3870 = vmatprep.mubr.bf16.mxu0 0
  %3871 = vmatmul.mubr.bf16.gmra.mrb[0].mxu0 %v3796
  %v3872 = vpop.f32.mrb[0].mxu0
  %v3873 = vadd.f32 0.0, %v3872
  %v3874 = vpop.f32.mrb[0].mxu0
  %v3875 = vadd.f32 0.0, %v3874
  %v3876 = vpop.f32.mrb[0].mxu0
  %v3877 = vpop.f32.mrb[0].mxu0
  %3878 = vdwg.mxu0
  %s3879 = smul.addr %s2654, 8
  %s3880 = scalar_lea.vmem [#allocation2], %s3879
  %v3881 = vld [vmem:[%s3880] sm:$0xff]
  %v3882 = vld [vmem:[%s3880 + $0x8] sm:$0xff]
  %v3883 = vld [vmem:[%s3880 + $0x10] sm:$0xff]
  %v3884 = vld [vmem:[%s3880 + $0x18] sm:$0xff]
  %v3885 = vadd.f32 %v3881, %v3749
  %v3886 = vadd.f32 %v3882, %v3751
  %v3887 = vadd.f32 %v3883, %v3790
  %v3888 = vadd.f32 %v3884, %v3792
  %s3889 = smul.addr %s2643, 8
  %s3890 = scalar_lea.vmem [#allocation3], %s3889
  %v3891 = vld [vmem:[%s3890] sm:$0xff]
  %v3892 = vld [vmem:[%s3890 + $0x8] sm:$0xff]
  %v3893 = vld [vmem:[%s3890 + $0x10] sm:$0xff]
  %v3894 = vld [vmem:[%s3890 + $0x18] sm:$0xff]
  %v3895 = vadd.f32 %v3891, %v3832
  %v3896 = vadd.f32 %v3892, %v3834
  %v3897 = vadd.f32 %v3893, %v3873
  %v3898 = vadd.f32 %v3894, %v3875
  %v3899 = vld [vmem:[#allocation5] sm:$0xff]
  %v3900 = vxor.u32 %v3885, 2147483648
  %v3901 = vmul.f32 %v3900, 1.442695
  %v3902 = vpow.pop %v3901
  %v3903 = vadd.f32 %v3902, 1.0
  %v3904 = vrcp.pop %v3903
  %v3905 = vmul.f32 1.0, %v3904
  %v3906 = vxor.u32 %v3886, 2147483648
  %v3907 = vmul.f32 %v3906, 1.442695
  %v3908 = vpow.pop %v3907
  %v3909 = vadd.f32 %v3908, 1.0
  %v3910 = vrcp.pop %v3909
  %v3911 = vmul.f32 1.0, %v3910
  %v3912 = vtanh.pop %v3887
  %v3913 = vxor.u32 %v3888, 2147483648
  %v3914 = vmul.f32 %v3913, 1.442695
  %v3915 = vpow.pop %v3914
  %v3916 = vadd.f32 %v3915, 1.0
  %v3917 = vrcp.pop %v3916
  %v3918 = vmul.f32 1.0, %v3917
  %v3919 = vmul.f32 %v3911, %v3899
  %v3920 = vmul.f32 %v3905, %v3912
  %v3921 = vadd.f32 %v3919, %v3920
  %v3922 = vtanh.pop %v3921
  %v3923 = vmul.f32 %v3918, %v3922
  %v3924 = vld [vmem:[#allocation5 + $0x8] sm:$0xff]
  %v3925 = vxor.u32 %v3895, 2147483648
  %v3926 = vmul.f32 %v3925, 1.442695
  %v3927 = vpow.pop %v3926
  %v3928 = vadd.f32 %v3927, 1.0
  %v3929 = vrcp.pop %v3928
  %v3930 = vmul.f32 1.0, %v3929
  %v3931 = vxor.u32 %v3896, 2147483648
  %v3932 = vmul.f32 %v3931, 1.442695
  %v3933 = vpow.pop %v3932
  %v3934 = vadd.f32 %v3933, 1.0
  %v3935 = vrcp.pop %v3934
  %v3936 = vmul.f32 1.0, %v3935
  %v3937 = vtanh.pop %v3897
  %v3938 = vxor.u32 %v3898, 2147483648
  %v3939 = vmul.f32 %v3938, 1.442695
  %v3940 = vpow.pop %v3939
  %v3941 = vadd.f32 %v3940, 1.0
  %v3942 = vrcp.pop %v3941
  %v3943 = vmul.f32 1.0, %v3942
  %v3944 = vmul.f32 %v3936, %v3924
  %v3945 = vmul.f32 %v3930, %v3937
  %v3946 = vadd.f32 %v3944, %v3945
  %v3947 = vtanh.pop %v3946
  %v3948 = vmul.f32 %v3943, %v3947
  %3949 = vst [vmem:[#allocation5] sm:$0xff] %v3921
  %3950 = vst [vmem:[#allocation5 + $0x8] sm:$0xff] %v3946
  %v3951 = vpack.c.bf16 %v3923, %v3923
  %3952 = vst [vmem:[#allocation4] sm:$0xf] %v3951
  %v3953 = vpack.c.bf16 %v3948, %v3948
  %3954 = vst [vmem:[#allocation4 + $0x4] sm:$0xf] %v3953
  %s3955 = scalar_lea.vmem %s208, 48
  %3956 = vst [vmem:[%s3955] sm:$0xff] %v3923
  %s3957 = scalar_lea.vmem %s217, 8
  %3958 = vst [vmem:[%s3957] sm:$0xff] %v3948
  %v3959 = vld [vmem:[#allocation4] sm:$0xf]
  %3960 = vmatprep.subr.bf16.mxu0 %v2008
  %3961 = vmatpush1.bf16.msra.mxu0 %v2007
  %3962 = vmatprep.subr.bf16.mxu0 %v2012
  %3963 = vmatpush1.bf16.msra.mxu0 %v2011
  %3964 = vmatprep.subr.bf16.mxu0 %v2016
  %3965 = vmatpush1.bf16.msra.mxu0 %v2015
  %3966 = vmatprep.subr.bf16.mxu0 %v2020
  %3967 = vmatpush1.bf16.msra.mxu0 %v2019
  %3968 = vmatprep.subr.bf16.mxu0 %v2024
  %3969 = vmatpush1.bf16.msra.mxu0 %v2023
  %3970 = vmatprep.subr.bf16.mxu0 %v2028
  %3971 = vmatpush1.bf16.msra.mxu0 %v2027
  %3972 = vmatprep.subr.bf16.mxu0 %v2032
  %3973 = vmatpush1.bf16.msra.mxu0 %v2031
  %3974 = vmatprep.subr.bf16.mxu0 %v2036
  %3975 = vmatpush1.bf16.msra.mxu0 %v2035
  %3976 = vmatprep.subr.bf16.mxu0 0
  %3977 = vmatpush1.bf16.msra.mxu0 0
  %3978 = vmatprep.subr.bf16.mxu0 0
  %3979 = vmatpush1.bf16.msra.mxu0 0
  %3980 = vmatprep.subr.bf16.mxu0 0
  %3981 = vmatpush1.bf16.msra.mxu0 0
  %3982 = vmatprep.subr.bf16.mxu0 0
  %3983 = vmatpush1.bf16.msra.mxu0 0
  %3984 = vmatprep.subr.bf16.mxu0 0
  %3985 = vmatpush1.bf16.msra.mxu0 0
  %3986 = vmatprep.subr.bf16.mxu0 0
  %3987 = vmatpush1.bf16.msra.mxu0 0
  %3988 = vmatprep.subr.bf16.mxu0 0
  %3989 = vmatpush1.bf16.msra.mxu0 0
  %3990 = vmatprep.subr.bf16.mxu0 0
  %3991 = vmatpush1.bf16.msra.mxu0 0
  %3992 = vmatprep.mubr.bf16.mxu0 0
  %3993 = vmatmul.mubr.bf16.gmra.mrb[0].mxu0 %v3959
  %v3994 = vpop.f32.mrb[0].mxu0
  %v3995 = vadd.f32 0.0, %v3994
  %v3996 = vpop.f32.mrb[0].mxu0
  %v3997 = vadd.f32 0.0, %v3996
  %v3998 = vpop.f32.mrb[0].mxu0
  %v3999 = vpop.f32.mrb[0].mxu0
  %4000 = vdwg.mxu0
  %4001 = vmatprep.subr.bf16.mxu0 %v2010
  %4002 = vmatpush1.bf16.msra.mxu0 %v2009
  %4003 = vmatprep.subr.bf16.mxu0 %v2014
  %4004 = vmatpush1.bf16.msra.mxu0 %v2013
  %4005 = vmatprep.subr.bf16.mxu0 %v2018
  %4006 = vmatpush1.bf16.msra.mxu0 %v2017
  %4007 = vmatprep.subr.bf16.mxu0 %v2022
  %4008 = vmatpush1.bf16.msra.mxu0 %v2021
  %4009 = vmatprep.subr.bf16.mxu0 %v2026
  %4010 = vmatpush1.bf16.msra.mxu0 %v2025
  %4011 = vmatprep.subr.bf16.mxu0 %v2030
  %4012 = vmatpush1.bf16.msra.mxu0 %v2029
  %4013 = vmatprep.subr.bf16.mxu0 %v2034
  %4014 = vmatpush1.bf16.msra.mxu0 %v2033
  %4015 = vmatprep.subr.bf16.mxu0 %v2038
  %4016 = vmatpush1.bf16.msra.mxu0 %v2037
  %4017 = vmatprep.subr.bf16.mxu0 0
  %4018 = vmatpush1.bf16.msra.mxu0 0
  %4019 = vmatprep.subr.bf16.mxu0 0
  %4020 = vmatpush1.bf16.msra.mxu0 0
  %4021 = vmatprep.subr.bf16.mxu0 0
  %4022 = vmatpush1.bf16.msra.mxu0 0
  %4023 = vmatprep.subr.bf16.mxu0 0
  %4024 = vmatpush1.bf16.msra.mxu0 0
  %4025 = vmatprep.subr.bf16.mxu0 0
  %4026 = vmatpush1.bf16.msra.mxu0 0
  %4027 = vmatprep.subr.bf16.mxu0 0
  %4028 = vmatpush1.bf16.msra.mxu0 0
  %4029 = vmatprep.subr.bf16.mxu0 0
  %4030 = vmatpush1.bf16.msra.mxu0 0
  %4031 = vmatprep.subr.bf16.mxu0 0
  %4032 = vmatpush1.bf16.msra.mxu0 0
  %4033 = vmatprep.mubr.bf16.mxu0 0
  %4034 = vmatmul.mubr.bf16.gmra.mrb[0].mxu0 %v3959
  %v4035 = vpop.f32.mrb[0].mxu0
  %v4036 = vadd.f32 0.0, %v4035
  %v4037 = vpop.f32.mrb[0].mxu0
  %v4038 = vadd.f32 0.0, %v4037
  %v4039 = vpop.f32.mrb[0].mxu0
  %v4040 = vpop.f32.mrb[0].mxu0
  %4041 = vdwg.mxu0
  %v4042 = vld [vmem:[#allocation4 + $0x4] sm:$0xf]
  %4043 = vmatprep.subr.bf16.mxu0 %v2251
  %4044 = vmatpush1.bf16.msra.mxu0 %v2250
  %4045 = vmatprep.subr.bf16.mxu0 %v2255
  %4046 = vmatpush1.bf16.msra.mxu0 %v2254
  %4047 = vmatprep.subr.bf16.mxu0 %v2259
  %4048 = vmatpush1.bf16.msra.mxu0 %v2258
  %4049 = vmatprep.subr.bf16.mxu0 %v2263
  %4050 = vmatpush1.bf16.msra.mxu0 %v2262
  %4051 = vmatprep.subr.bf16.mxu0 %v2267
  %4052 = vmatpush1.bf16.msra.mxu0 %v2266
  %4053 = vmatprep.subr.bf16.mxu0 %v2271
  %4054 = vmatpush1.bf16.msra.mxu0 %v2270
  %4055 = vmatprep.subr.bf16.mxu0 %v2275
  %4056 = vmatpush1.bf16.msra.mxu0 %v2274
  %4057 = vmatprep.subr.bf16.mxu0 %v2279
  %4058 = vmatpush1.bf16.msra.mxu0 %v2278
  %4059 = vmatprep.subr.bf16.mxu0 0
  %4060 = vmatpush1.bf16.msra.mxu0 0
  %4061 = vmatprep.subr.bf16.mxu0 0
  %4062 = vmatpush1.bf16.msra.mxu0 0
  %4063 = vmatprep.subr.bf16.mxu0 0
  %4064 = vmatpush1.bf16.msra.mxu0 0
  %4065 = vmatprep.subr.bf16.mxu0 0
  %4066 = vmatpush1.bf16.msra.mxu0 0
  %4067 = vmatprep.subr.bf16.mxu0 0
  %4068 = vmatpush1.bf16.msra.mxu0 0
  %4069 = vmatprep.subr.bf16.mxu0 0
  %4070 = vmatpush1.bf16.msra.mxu0 0
  %4071 = vmatprep.subr.bf16.mxu0 0
  %4072 = vmatpush1.bf16.msra.mxu0 0
  %4073 = vmatprep.subr.bf16.mxu0 0
  %4074 = vmatpush1.bf16.msra.mxu0 0
  %4075 = vmatprep.mubr.bf16.mxu0 0
  %4076 = vmatmul.mubr.bf16.gmra.mrb[0].mxu0 %v4042
  %v4077 = vpop.f32.mrb[0].mxu0
  %v4078 = vadd.f32 0.0, %v4077
  %v4079 = vpop.f32.mrb[0].mxu0
  %v4080 = vadd.f32 0.0, %v4079
  %v4081 = vpop.f32.mrb[0].mxu0
  %v4082 = vpop.f32.mrb[0].mxu0
  %4083 = vdwg.mxu0
  %4084 = vmatprep.subr.bf16.mxu0 %v2253
  %4085 = vmatpush1.bf16.msra.mxu0 %v2252
  %4086 = vmatprep.subr.bf16.mxu0 %v2257
  %4087 = vmatpush1.bf16.msra.mxu0 %v2256
  %4088 = vmatprep.subr.bf16.mxu0 %v2261
  %4089 = vmatpush1.bf16.msra.mxu0 %v2260
  %4090 = vmatprep.subr.bf16.mxu0 %v2265
  %4091 = vmatpush1.bf16.msra.mxu0 %v2264
  %4092 = vmatprep.subr.bf16.mxu0 %v2269
  %4093 = vmatpush1.bf16.msra.mxu0 %v2268
  %4094 = vmatprep.subr.bf16.mxu0 %v2273
  %4095 = vmatpush1.bf16.msra.mxu0 %v2272
  %4096 = vmatprep.subr.bf16.mxu0 %v2277
  %4097 = vmatpush1.bf16.msra.mxu0 %v2276
  %4098 = vmatprep.subr.bf16.mxu0 %v2281
  %4099 = vmatpush1.bf16.msra.mxu0 %v2280
  %4100 = vmatprep.subr.bf16.mxu0 0
  %4101 = vmatpush1.bf16.msra.mxu0 0
  %4102 = vmatprep.subr.bf16.mxu0 0
  %4103 = vmatpush1.bf16.msra.mxu0 0
  %4104 = vmatprep.subr.bf16.mxu0 0
  %4105 = vmatpush1.bf16.msra.mxu0 0
  %4106 = vmatprep.subr.bf16.mxu0 0
  %4107 = vmatpush1.bf16.msra.mxu0 0
  %4108 = vmatprep.subr.bf16.mxu0 0
  %4109 = vmatpush1.bf16.msra.mxu0 0
  %4110 = vmatprep.subr.bf16.mxu0 0
  %4111 = vmatpush1.bf16.msra.mxu0 0
  %4112 = vmatprep.subr.bf16.mxu0 0
  %4113 = vmatpush1.bf16.msra.mxu0 0
  %4114 = vmatprep.subr.bf16.mxu0 0
  %4115 = vmatpush1.bf16.msra.mxu0 0
  %4116 = vmatprep.mubr.bf16.mxu0 0
  %4117 = vmatmul.mubr.bf16.gmra.mrb[0].mxu0 %v4042
  %v4118 = vpop.f32.mrb[0].mxu0
  %v4119 = vadd.f32 0.0, %v4118
  %v4120 = vpop.f32.mrb[0].mxu0
  %v4121 = vadd.f32 0.0, %v4120
  %v4122 = vpop.f32.mrb[0].mxu0
  %v4123 = vpop.f32.mrb[0].mxu0
  %4124 = vdwg.mxu0
  %s4125 = smul.addr %s2407, 8
  %s4126 = scalar_lea.vmem [#allocation2], %s4125
  %v4127 = vld [vmem:[%s4126] sm:$0xff]
  %v4128 = vld [vmem:[%s4126 + $0x8] sm:$0xff]
  %v4129 = vld [vmem:[%s4126 + $0x10] sm:$0xff]
  %v4130 = vld [vmem:[%s4126 + $0x18] sm:$0xff]
  %v4131 = vadd.f32 %v4127, %v3995
  %v4132 = vadd.f32 %v4128, %v3997
  %v4133 = vadd.f32 %v4129, %v4036
  %v4134 = vadd.f32 %v4130, %v4038
  %s4135 = smul.addr %s2396, 8
  %s4136 = scalar_lea.vmem [#allocation3], %s4135
  %v4137 = vld [vmem:[%s4136] sm:$0xff]
  %v4138 = vld [vmem:[%s4136 + $0x8] sm:$0xff]
  %v4139 = vld [vmem:[%s4136 + $0x10] sm:$0xff]
  %v4140 = vld [vmem:[%s4136 + $0x18] sm:$0xff]
  %v4141 = vadd.f32 %v4137, %v4078
  %v4142 = vadd.f32 %v4138, %v4080
  %v4143 = vadd.f32 %v4139, %v4119
  %v4144 = vadd.f32 %v4140, %v4121
  %v4145 = vld [vmem:[#allocation5] sm:$0xff]
  %v4146 = vxor.u32 %v4131, 2147483648
  %v4147 = vmul.f32 %v4146, 1.442695
  %v4148 = vpow.pop %v4147
  %v4149 = vadd.f32 %v4148, 1.0
  %v4150 = vrcp.pop %v4149
  %v4151 = vmul.f32 1.0, %v4150
  %v4152 = vxor.u32 %v4132, 2147483648
  %v4153 = vmul.f32 %v4152, 1.442695
  %v4154 = vpow.pop %v4153
  %v4155 = vadd.f32 %v4154, 1.0
  %v4156 = vrcp.pop %v4155
  %v4157 = vmul.f32 1.0, %v4156
  %v4158 = vtanh.pop %v4133
  %v4159 = vxor.u32 %v4134, 2147483648
  %v4160 = vmul.f32 %v4159, 1.442695
  %v4161 = vpow.pop %v4160
  %v4162 = vadd.f32 %v4161, 1.0
  %v4163 = vrcp.pop %v4162
  %v4164 = vmul.f32 1.0, %v4163
  %v4165 = vmul.f32 %v4157, %v4145
  %v4166 = vmul.f32 %v4151, %v4158
  %v4167 = vadd.f32 %v4165, %v4166
  %v4168 = vtanh.pop %v4167
  %v4169 = vmul.f32 %v4164, %v4168
  %v4170 = vld [vmem:[#allocation5 + $0x8] sm:$0xff]
  %v4171 = vxor.u32 %v4141, 2147483648
  %v4172 = vmul.f32 %v4171, 1.442695
  %v4173 = vpow.pop %v4172
  %v4174 = vadd.f32 %v4173, 1.0
  %v4175 = vrcp.pop %v4174
  %v4176 = vmul.f32 1.0, %v4175
  %v4177 = vxor.u32 %v4142, 2147483648
  %v4178 = vmul.f32 %v4177, 1.442695
  %v4179 = vpow.pop %v4178
  %v4180 = vadd.f32 %v4179, 1.0
  %v4181 = vrcp.pop %v4180
  %v4182 = vmul.f32 1.0, %v4181
  %v4183 = vtanh.pop %v4143
  %v4184 = vxor.u32 %v4144, 2147483648
  %v4185 = vmul.f32 %v4184, 1.442695
  %v4186 = vpow.pop %v4185
  %v4187 = vadd.f32 %v4186, 1.0
  %v4188 = vrcp.pop %v4187
  %v4189 = vmul.f32 1.0, %v4188
  %v4190 = vmul.f32 %v4182, %v4170
  %v4191 = vmul.f32 %v4176, %v4183
  %v4192 = vadd.f32 %v4190, %v4191
  %v4193 = vtanh.pop %v4192
  %v4194 = vmul.f32 %v4189, %v4193
  %4195 = vst [vmem:[#allocation5] sm:$0xff] %v4167
  %4196 = vst [vmem:[#allocation5 + $0x8] sm:$0xff] %v4192
  %v4197 = vpack.c.bf16 %v4169, %v4169
  %4198 = vst [vmem:[#allocation4] sm:$0xf] %v4197
  %v4199 = vpack.c.bf16 %v4194, %v4194
  %4200 = vst [vmem:[#allocation4 + $0x4] sm:$0xf] %v4199
  %s4201 = scalar_lea.vmem %s208, 56
  %4202 = vst [vmem:[%s4201] sm:$0xff] %v4169
  %4203 = vst [vmem:[%s217] sm:$0xff] %v4194
  %v4204 = vld [vmem:[%s208] sm:$0xff]
  %v4205 = vld [vmem:[%s208 + $0x8] sm:$0xff]
  %v4206 = vld [vmem:[%s208 + $0x10] sm:$0xff]
  %v4207 = vld [vmem:[%s208 + $0x18] sm:$0xff]
  %v4208 = vld [vmem:[%s208 + $0x20] sm:$0xff]
  %v4209 = vld [vmem:[%s208 + $0x28] sm:$0xff]
  %v4210 = vld [vmem:[%s208 + $0x30] sm:$0xff]
  %v4211 = vld [vmem:[%s208 + $0x38] sm:$0xff]
  %v4212 = vld [vmem:[%s170] sm:$0xff]
  %v4213 = vld [vmem:[%s170 + $0x8] sm:$0xff]
  %v4214 = vld [vmem:[%s170 + $0x10] sm:$0xff]
  %v4215 = vld [vmem:[%s170 + $0x18] sm:$0xff]
  %v4216 = vld [vmem:[%s170 + $0x20] sm:$0xff]
  %v4217 = vld [vmem:[%s170 + $0x28] sm:$0xff]
  %v4218 = vld [vmem:[%s170 + $0x30] sm:$0xff]
  %v4219 = vld [vmem:[%s170 + $0x38] sm:$0xff]
  %4221 = vset.pattern.permute.xlu0 0
  %4222 = vperm.xlu0 %4221, %v4212
  %v4223 = vpop.permute.xlu0 %4222
  %4226 = vset.pattern.permute.xlu0 0
  %4227 = vperm.xlu0 %4226, %v4213
  %v4228 = vpop.permute.xlu0 %4227
  %4231 = vset.pattern.permute.xlu0 0
  %4232 = vperm.xlu0 %4231, %v4214
  %v4233 = vpop.permute.xlu0 %4232
  %4236 = vset.pattern.permute.xlu0 0
  %4237 = vperm.xlu0 %4236, %v4215
  %v4238 = vpop.permute.xlu0 %4237
  %4241 = vset.pattern.permute.xlu0 0
  %4242 = vperm.xlu0 %4241, %v4216
  %v4243 = vpop.permute.xlu0 %4242
  %4246 = vset.pattern.permute.xlu0 0
  %4247 = vperm.xlu0 %4246, %v4217
  %v4248 = vpop.permute.xlu0 %4247
  %4251 = vset.pattern.permute.xlu0 0
  %4252 = vperm.xlu0 %4251, %v4218
  %v4253 = vpop.permute.xlu0 %4252
  %4256 = vset.pattern.permute.xlu0 0
  %4257 = vperm.xlu0 %4256, %v4219
  %v4258 = vpop.permute.xlu0 %4257
  %v4260 = vmul.f32 %v4204, %v4223
  %v4261 = vmul.f32 %v4205, %v4228
  %v4262 = vmul.f32 %v4206, %v4233
  %v4263 = vmul.f32 %v4207, %v4238
  %v4264 = vmul.f32 %v4208, %v4243
  %v4265 = vmul.f32 %v4209, %v4248
  %v4266 = vmul.f32 %v4210, %v4253
  %v4267 = vmul.f32 %v4211, %v4258
  %4268 = vst [vmem:[%s208] sm:$0xff] %v4260
  %4269 = vst [vmem:[%s208 + $0x8] sm:$0xff] %v4261
  %4270 = vst [vmem:[%s208 + $0x10] sm:$0xff] %v4262
  %4271 = vst [vmem:[%s208 + $0x18] sm:$0xff] %v4263
  %4272 = vst [vmem:[%s208 + $0x20] sm:$0xff] %v4264
  %4273 = vst [vmem:[%s208 + $0x28] sm:$0xff] %v4265
  %4274 = vst [vmem:[%s208 + $0x30] sm:$0xff] %v4266
  %4275 = vst [vmem:[%s208 + $0x38] sm:$0xff] %v4267
  %v4276 = vld [vmem:[%s217] sm:$0xff]
  %v4277 = vld [vmem:[%s217 + $0x8] sm:$0xff]
  %v4278 = vld [vmem:[%s217 + $0x10] sm:$0xff]
  %v4279 = vld [vmem:[%s217 + $0x18] sm:$0xff]
  %v4280 = vld [vmem:[%s217 + $0x20] sm:$0xff]
  %v4281 = vld [vmem:[%s217 + $0x28] sm:$0xff]
  %v4282 = vld [vmem:[%s217 + $0x30] sm:$0xff]
  %v4283 = vld [vmem:[%s217 + $0x38] sm:$0xff]
  %v4284 = vld [vmem:[%s199] sm:$0xff]
  %v4285 = vld [vmem:[%s199 + $0x8] sm:$0xff]
  %v4286 = vld [vmem:[%s199 + $0x10] sm:$0xff]
  %v4287 = vld [vmem:[%s199 + $0x18] sm:$0xff]
  %v4288 = vld [vmem:[%s199 + $0x20] sm:$0xff]
  %v4289 = vld [vmem:[%s199 + $0x28] sm:$0xff]
  %v4290 = vld [vmem:[%s199 + $0x30] sm:$0xff]
  %v4291 = vld [vmem:[%s199 + $0x38] sm:$0xff]
  %4293 = vset.pattern.permute.xlu0 0
  %4294 = vperm.xlu0 %4293, %v4284
  %v4295 = vpop.permute.xlu0 %4294
  %4298 = vset.pattern.permute.xlu0 0
  %4299 = vperm.xlu0 %4298, %v4285
  %v4300 = vpop.permute.xlu0 %4299
  %4303 = vset.pattern.permute.xlu0 0
  %4304 = vperm.xlu0 %4303, %v4286
  %v4305 = vpop.permute.xlu0 %4304
  %4308 = vset.pattern.permute.xlu0 0
  %4309 = vperm.xlu0 %4308, %v4287
  %v4310 = vpop.permute.xlu0 %4309
  %4313 = vset.pattern.permute.xlu0 0
  %4314 = vperm.xlu0 %4313, %v4288
  %v4315 = vpop.permute.xlu0 %4314
  %4318 = vset.pattern.permute.xlu0 0
  %4319 = vperm.xlu0 %4318, %v4289
  %v4320 = vpop.permute.xlu0 %4319
  %4323 = vset.pattern.permute.xlu0 0
  %4324 = vperm.xlu0 %4323, %v4290
  %v4325 = vpop.permute.xlu0 %4324
  %4328 = vset.pattern.permute.xlu0 0
  %4329 = vperm.xlu0 %4328, %v4291
  %v4330 = vpop.permute.xlu0 %4329
  %v4332 = vmul.f32 %v4276, %v4295
  %v4333 = vmul.f32 %v4277, %v4300
  %v4334 = vmul.f32 %v4278, %v4305
  %v4335 = vmul.f32 %v4279, %v4310
  %v4336 = vmul.f32 %v4280, %v4315
  %v4337 = vmul.f32 %v4281, %v4320
  %v4338 = vmul.f32 %v4282, %v4325
  %v4339 = vmul.f32 %v4283, %v4330
  %4340 = vst [vmem:[%s217] sm:$0xff] %v4332
  %4341 = vst [vmem:[%s217 + $0x8] sm:$0xff] %v4333
  %4342 = vst [vmem:[%s217 + $0x10] sm:$0xff] %v4334
  %4343 = vst [vmem:[%s217 + $0x18] sm:$0xff] %v4335
  %4344 = vst [vmem:[%s217 + $0x20] sm:$0xff] %v4336
  %4345 = vst [vmem:[%s217 + $0x28] sm:$0xff] %v4337
  %4346 = vst [vmem:[%s217 + $0x30] sm:$0xff] %v4338
  %4347 = vst [vmem:[%s217 + $0x38] sm:$0xff] %v4339
  %s4348 = sadd.s32 0, 0
  %s4349 = smul.u32 8, %s4348
  %p4350 = scmp.lt.s32.totalorder %s4349, 7
  %s4351 = scalar_select %p4350, %s4349, 7
  %s4352 = smul.addr %s4351, 8
  %s4353 = scalar_lea.vmem %s12, %s4352
  %s4354 = ssub.s32 0, 0
  %s4355 = sadd.s32 0, %s4354
  %s4356 = smul.u32 8, %s4355
  %p4357 = scmp.lt.s32.totalorder %s4356, 7
  %s4358 = scalar_select %p4357, %s4356, 7
  %s4359 = smul.addr %s4358, 8
  %s4360 = scalar_lea.vmem %s13, %s4359
  // Predicated region
  $region54: #{rnn_shared_forward.3} parent=0 // pred_check
    _
  $region55: #{rnn_shared_forward.3} parent=0 // pred_check_branch
    %4362 = sbr.rel (0) target = $region57
  $region56: #{rnn_shared_forward.3} parent=0 // pred_region
    %s4363 = sadd.s32 0, 0
    %s4364 = smul.u32 8, %s4363
  $region57: #{rnn_shared_forward.3} parent=0 // pred_fallthru
    _
  // Predicated region
  $region58: #{rnn_shared_forward.3} parent=0 // pred_check
    _
  $region59: #{rnn_shared_forward.3} parent=0 // pred_check_branch
    %4366 = sbr.rel (0) target = $region61
  $region60: #{rnn_shared_forward.3} parent=0 // pred_region
    %s4367 = ssub.s32 0, 0
    %s4368 = sadd.s32 0, %s4367
    %s4369 = smul.u32 8, %s4368
  $region61: #{rnn_shared_forward.3} parent=0 // pred_fallthru
    _
  // Predicated region
  $region62: #{rnn_shared_forward.3} parent=0 // pred_check
    _
  $region63: #{rnn_shared_forward.3} parent=0 // pred_check_branch
    %4371 = sbr.rel (0) target = $region65
  $region64: #{rnn_shared_forward.3} parent=0 // pred_region
    %s4372 = sadd.s32 0, 0
    %s4373 = smul.u32 8, %s4372
    %p4374 = scmp.lt.s32.totalorder %s4373, 7
    %s4375 = scalar_select %p4374, %s4373, 7
    %s4376 = smul.addr %s4375, 8
    %s4377 = scalar_lea.vmem %s12, %s4376
  $region65: #{rnn_shared_forward.3} parent=0 // pred_fallthru
    _
  // Predicated region
  $region66: #{rnn_shared_forward.3} parent=0 // pred_check
    _
  $region67: #{rnn_shared_forward.3} parent=0 // pred_check_branch
    %4379 = sbr.rel (0) target = $region69
  $region68: #{rnn_shared_forward.3} parent=0 // pred_region
    %s4380 = ssub.s32 0, 0
    %s4381 = sadd.s32 0, %s4380
    %s4382 = smul.u32 8, %s4381
    %p4383 = scmp.lt.s32.totalorder %s4382, 7
    %s4384 = scalar_select %p4383, %s4382, 7
    %s4385 = smul.addr %s4384, 8
    %s4386 = scalar_lea.vmem %s13, %s4385
  $region69: #{rnn_shared_forward.3} parent=0 // pred_fallthru
    _

</llo_original>
